<compile_context>
chip_gen: v7x
topology: tpu7x:2x2x1
jax: 0.10.0
libtpu: 0.0.40
codegen_flags: <defaults>
</compile_context>

<pallas_src>
import functools

import jax
import jax.numpy as jnp
from jax.experimental import pallas as pl
from jax.experimental.pallas import tpu as pltpu


LANE = 128          # pad hidden size to a multiple of the lane width
SUBLANE_BF16 = 16   # pad batch to a multiple of the bf16 sublane packing
GI_ROW_CHUNK = 512  # row chunk for the hoisted input projection


def _round_up(x, m):
    return (x + m - 1) // m * m


# ---------------------------------------------------------------------------
# In-kernel helpers
# ---------------------------------------------------------------------------
def _input_projection(x_ref, wih, bgi, gi_ref):
    """GI = x @ W_ih^T + b (hoisted off the serial path), stored bf16.

    Computed in static row chunks so the f32 matmul temp never exceeds
    GI_ROW_CHUNK x 3Hp.
    TODO(synk): interleave these chunks with the recurrence (emit_pipeline)
    so the x HBM->VMEM DMA fully overlaps compute on v7x.
    """
    TB = x_ref.shape[0]
    chunk = min(TB, GI_ROW_CHUNK)
    for c0 in range(0, TB, chunk):
        r = min(chunk, TB - c0)
        acc = jnp.dot(x_ref[c0:c0 + r, :], wih,
                      preferred_element_type=jnp.float32) + bgi
        gi_ref[c0:c0 + r, :] = acc.astype(gi_ref.dtype)


def _gru_recurrence(T, d, gi_ref, whh, b_hn, lengths, out_ref=None):
    """Serial GRU recurrence for direction d (0 = fwd, 1 = bwd).

    gi_ref  : (T*B, 3*Hp) bf16  hoisted input projection (gates r|z|n)
    whh     : (Hp, 3*Hp)  bf16  gate-fused hidden->hidden weights
    b_hn    : (1, Hp)     f32   b_hh of the n gate (sits inside r * (.))
    lengths : (B, 1)      i32   valid length per batch row
    out_ref : optional (T*B, Hp) ref -- per-timestep hiddens written in place
    Returns the final hidden state (B, Hp) f32.
    """
    TB, three_hp = gi_ref.shape
    Hp = three_hp // 3
    B = TB // T

    def step(i, h):
        # forward walks t = 0..T-1, backward walks t = T-1..0
        t = jnp.where(d == 0, i, T - 1 - i)
        start = pl.multiple_of(t * B, B)
        gi_t = gi_ref[pl.ds(start, B), :]                      # (B, 3Hp) bf16
        gh = jnp.dot(h.astype(jnp.bfloat16), whh,
                     preferred_element_type=jnp.float32)       # (B, 3Hp) f32
        r = jax.nn.sigmoid(gi_t[:, 0:Hp] + gh[:, 0:Hp])
        z = jax.nn.sigmoid(gi_t[:, Hp:2 * Hp] + gh[:, Hp:2 * Hp])
        n = jnp.tanh(gi_t[:, 2 * Hp:3 * Hp] + r * (gh[:, 2 * Hp:3 * Hp] + b_hn))
        h_new = (1.0 - z) * n + z * h
        # pack_padded_sequence emulation: only valid steps update the hidden
        h_next = jnp.where(t < lengths, h_new, h)
        if out_ref is not None:
            # TODO(synk): forward rows past the valid length carry the last
            # valid hidden instead of pad_packed's zeros; the next layer is
            # length-masked so the module output is unaffected.
            out_ref[pl.ds(start, B), :] = h_next.astype(out_ref.dtype)
        return h_next

    h0 = jnp.zeros((B, Hp), jnp.float32)
    unroll = True if T <= 16 else 8          # partial unroll for long T
    return jax.lax.fori_loop(0, T, step, h0, unroll=unroll)


# ---------------------------------------------------------------------------
# Kernel bodies (one grid step = one direction)
# ---------------------------------------------------------------------------
def _bigru_layer_kernel(T, x_ref, len_ref, wih_ref, whh_ref, bgi_ref, bhn_ref,
                        out_ref, gi_ref):
    d = pl.program_id(0)
    _input_projection(x_ref, wih_ref[0], bgi_ref[0], gi_ref)
    _gru_recurrence(T, d, gi_ref, whh_ref[0], bhn_ref[0], len_ref[...],
                    out_ref=out_ref)


def _bigru_final_kernel(T, x_ref, len_ref, wih_ref, whh_ref, bgi_ref, bhn_ref,
                        wout_ref, out_ref, gi_ref):
    d = pl.program_id(0)
    _input_projection(x_ref, wih_ref[0], bgi_ref[0], gi_ref)
    h = _gru_recurrence(T, d, gi_ref, whh_ref[0], bhn_ref[0], len_ref[...])
    # out_proj fused per direction; the two partials + bias are combined by a
    # trivial JAX add in the wrapper.
    out_ref[0] = jnp.dot(h.astype(jnp.bfloat16), wout_ref[0],
                         preferred_element_type=jnp.float32)


# ---------------------------------------------------------------------------
# pallas_call wrappers
# ---------------------------------------------------------------------------
def _vmem_limit_bytes(block_bytes, scratch_bytes):
    total = 2 * block_bytes + scratch_bytes + (4 << 20)
    return int(min(max(total, 8 << 20), 100 << 20))


def bigru_layer(x2, len2d, wih, whh, bgi, bhn, *, T):
    TB, D = x2.shape
    B = TB // T
    Hp = whh.shape[1]
    blocks = (TB * D * 2 + 4096 + D * 3 * Hp * 2 + Hp * 3 * Hp * 2
              + 3 * Hp * 4 + Hp * 4 + TB * Hp * 2)
    scratch = TB * 3 * Hp * 2
    # TODO(synk): mark the direction-invariant x / lengths specs with
    # pipeline_mode=pl.Buffered(1) once single-buffered pipeline_mode is
    # verified on the target jax version (saves one x-sized VMEM buffer).
    return pl.pallas_call(
        functools.partial(_bigru_layer_kernel, T),
        out_shape=jax.ShapeDtypeStruct((TB, 2 * Hp), jnp.bfloat16),
        grid=(2,),
        in_specs=[
            pl.BlockSpec((TB, D), lambda d: (0, 0)),
            pl.BlockSpec((B, 1), lambda d: (0, 0)),
            pl.BlockSpec((1, D, 3 * Hp), lambda d: (d, 0, 0)),
            pl.BlockSpec((1, Hp, 3 * Hp), lambda d: (d, 0, 0)),
            pl.BlockSpec((1, 1, 3 * Hp), lambda d: (d, 0, 0)),
            pl.BlockSpec((1, 1, Hp), lambda d: (d, 0, 0)),
        ],
        out_specs=pl.BlockSpec((TB, Hp), lambda d: (0, d)),
        scratch_shapes=[pltpu.VMEM((TB, 3 * Hp), jnp.bfloat16)],
        compiler_params=pltpu.CompilerParams(
            dimension_semantics=("parallel",),
            vmem_limit_bytes=_vmem_limit_bytes(blocks, scratch)),
    )(x2, len2d, wih, whh, bgi, bhn)


def bigru_final(x2, len2d, wih, whh, bgi, bhn, woutT, *, T):
    TB, D = x2.shape
    B = TB // T
    Hp = whh.shape[1]
    E = woutT.shape[-1]
    blocks = (TB * D * 2 + 4096 + D * 3 * Hp * 2 + Hp * 3 * Hp * 2
              + 3 * Hp * 4 + Hp * 4 + Hp * E * 2 + B * E * 4)
    scratch = TB * 3 * Hp * 2
    return pl.pallas_call(
        functools.partial(_bigru_final_kernel, T),
        out_shape=jax.ShapeDtypeStruct((2, B, E), jnp.float32),
        grid=(2,),
        in_specs=[
            pl.BlockSpec((TB, D), lambda d: (0, 0)),
            pl.BlockSpec((B, 1), lambda d: (0, 0)),
            pl.BlockSpec((1, D, 3 * Hp), lambda d: (d, 0, 0)),
            pl.BlockSpec((1, Hp, 3 * Hp), lambda d: (d, 0, 0)),
            pl.BlockSpec((1, 1, 3 * Hp), lambda d: (d, 0, 0)),
            pl.BlockSpec((1, 1, Hp), lambda d: (d, 0, 0)),
            pl.BlockSpec((1, Hp, E), lambda d: (d, 0, 0)),
        ],
        out_specs=pl.BlockSpec((1, B, E), lambda d: (d, 0, 0)),
        scratch_shapes=[pltpu.VMEM((TB, 3 * Hp), jnp.bfloat16)],
        compiler_params=pltpu.CompilerParams(
            dimension_semantics=("parallel",),
            vmem_limit_bytes=_vmem_limit_bytes(blocks, scratch)),
    )(x2, len2d, wih, whh, bgi, bhn, woutT)


# ---------------------------------------------------------------------------
# One-time weight packing (done OUTSIDE the per-call forward)
# PyTorch GRU layout (r,z,n stacked) -> gate-fused, H-padded, transposed bf16
# ---------------------------------------------------------------------------
def _pack_dir(w_ih, w_hh, b_ih, b_hh, H, Hp, first_layer):
    D_in = w_ih.shape[1]
    w_ih_g = w_ih.reshape(3, H, D_in)
    w_hh_g = w_hh.reshape(3, H, H)
    b_ih_g = b_ih.reshape(3, 1, H)
    b_hh_g = b_hh.reshape(3, 1, H)

    if first_layer:
        w_in = w_ih_g                                            # (3, H, D_in)
    else:
        # later layers consume the previous layer's [fwd Hp | bwd Hp] slab
        half = D_in // 2
        w_f = jnp.pad(w_ih_g[:, :, :half], ((0, 0), (0, 0), (0, Hp - half)))
        w_b = jnp.pad(w_ih_g[:, :, half:], ((0, 0), (0, 0), (0, Hp - half)))
        w_in = jnp.concatenate([w_f, w_b], axis=2)               # (3, H, 2Hp)

    w_in = jnp.pad(w_in, ((0, 0), (0, Hp - H), (0, 0)))          # (3, Hp, Dp)
    wihT = jnp.transpose(w_in, (2, 0, 1)).reshape(w_in.shape[2], 3 * Hp)

    w_hh_p = jnp.pad(w_hh_g, ((0, 0), (0, Hp - H), (0, Hp - H)))  # (3, Hp, Hp)
    whhT = jnp.transpose(w_hh_p, (2, 0, 1)).reshape(Hp, 3 * Hp)

    # merge b_ih + b_hh for r,z (they add linearly); keep b_hh_n separate
    bgi_g = jnp.concatenate([b_ih_g[0:2] + b_hh_g[0:2], b_ih_g[2:3]], axis=0)
    bgi_g = jnp.pad(bgi_g, ((0, 0), (0, 0), (0, Hp - H)))        # (3, 1, Hp)
    bgi = jnp.transpose(bgi_g, (1, 0, 2)).reshape(1, 3 * Hp)
    bhn = jnp.pad(b_hh_g[2], ((0, 0), (0, Hp - H)))              # (1, Hp)

    return (wihT.astype(jnp.bfloat16), whhT.astype(jnp.bfloat16),
            bgi.astype(jnp.float32), bhn.astype(jnp.float32))


def pack_params(params, num_layers, hidden_size):
    H = hidden_size
    Hp = _round_up(H, LANE)
    layers = []
    for l in range(num_layers):
        pf = _pack_dir(*params["gru"][l]["fwd"], H, Hp, l == 0)
        pb = _pack_dir(*params["gru"][l]["bwd"], H, Hp, l == 0)
        layers.append(tuple(jnp.stack([f, b], axis=0) for f, b in zip(pf, pb)))

    out_w, out_b = params["out_w"], params["out_b"]
    E = out_w.shape[0]
    w_f = jnp.pad(jnp.transpose(out_w[:, 0:H]), ((0, Hp - H), (0, 0)))
    w_b = jnp.pad(jnp.transpose(out_w[:, H:2 * H]), ((0, Hp - H), (0, 0)))
    woutT = jnp.stack([w_f, w_b], axis=0).astype(jnp.bfloat16)    # (2, Hp, E)

    return {
        "rel_embed": params["rel_embed"].astype(jnp.bfloat16),
        "layers": layers,
        "woutT": woutT,
        "out_b": out_b.reshape(1, E).astype(jnp.float32),
    }


# ---------------------------------------------------------------------------
# RelationEncoder forward (inference; dropout = identity). Glue in plain JAX,
# the hot path fully inside the Pallas kernels.
# ---------------------------------------------------------------------------
def relation_encoder_forward(packed, src_tokens, src_lengths):
    T, B = src_tokens.shape
    # The kernels mask every hidden update by length, so the
    # pack_padded_sequence sort / unsort of the PyTorch reference is dropped.

    # Pad batch so dynamic per-timestep row slices stay bf16 sublane-aligned.
    Bp = _round_up(B, SUBLANE_BF16)
    if Bp != B:
        src_tokens = jnp.pad(src_tokens, ((0, 0), (0, Bp - B)))
        src_lengths = jnp.pad(src_lengths, (0, Bp - B))
    lengths = src_lengths.astype(jnp.int32).reshape(Bp, 1)

    # Embedding gather (+ dropout, identity at inference) -- plain JAX glue.
    x = jnp.take(packed["rel_embed"], src_tokens, axis=0)        # (T, Bp, D)
    layer_in = x.reshape(T * Bp, -1)

    n_layers = len(packed["layers"])
    proj_parts = None
    for l, (wih, whh, bgi, bhn) in enumerate(packed["layers"]):
        if l < n_layers - 1:
            layer_in = bigru_layer(layer_in, lengths, wih, whh, bgi, bhn, T=T)
        else:
            proj_parts = bigru_final(layer_in, lengths, wih, whh, bgi, bhn,
                                     packed["woutT"], T=T)
    out = proj_parts[0] + proj_parts[1] + packed["out_b"]
    return out[:B]


# ---------------------------------------------------------------------------
# Deterministic parameter construction (synthetic; mirrors __init__ shapes)
# ---------------------------------------------------------------------------
def make_params(key, vocab_size, padding_idx, rel_dim, embed_dim,
                hidden_size, num_layers):
    keys = jax.random.split(key, 3 + 8 * num_layers)
    ki = iter(range(len(keys)))

    emb = 0.02 * jax.random.normal(keys[next(ki)], (vocab_size, rel_dim),
                                   dtype=jnp.float32)
    emb = emb.at[padding_idx].set(0.0)

    k = 1.0 / jnp.sqrt(hidden_size)
    gru = []
    for l in range(num_layers):
        d_in = rel_dim if l == 0 else 2 * hidden_size
        layer = {}
        for dname in ("fwd", "bwd"):
            w_ih = jax.random.uniform(keys[next(ki)], (3 * hidden_size, d_in),
                                      minval=-k, maxval=k, dtype=jnp.float32)
            w_hh = jax.random.uniform(keys[next(ki)],
                                      (3 * hidden_size, hidden_size),
                                      minval=-k, maxval=k, dtype=jnp.float32)
            b_ih = jax.random.uniform(keys[next(ki)], (3 * hidden_size,),
                                      minval=-k, maxval=k, dtype=jnp.float32)
            b_hh = jax.random.uniform(keys[next(ki)], (3 * hidden_size,),
                                      minval=-k, maxval=k, dtype=jnp.float32)
            layer[dname] = (w_ih, w_hh, b_ih, b_hh)
        gru.append(layer)

    # reset_parameters(): normal(std=0.02) weight, zero bias
    out_w = 0.02 * jax.random.normal(keys[next(ki)],
                                     (embed_dim, 2 * hidden_size),
                                     dtype=jnp.float32)
    out_b = jnp.zeros((embed_dim,), dtype=jnp.float32)

    return {"rel_embed": emb, "gru": gru, "out_w": out_w, "out_b": out_b}


if __name__ == "__main__":
    SEQ_LEN = 8
    BSZ = 8
    VOCAB = 20
    PAD_IDX = 0
    REL_DIM = 16
    EMBED_DIM = 32
    HIDDEN = 32
    NUM_LAYERS = 2

    key = jax.random.PRNGKey(0)
    k_par, k_tok, k_len = jax.random.split(key, 3)

    params = make_params(k_par, VOCAB, PAD_IDX, REL_DIM, EMBED_DIM,
                         HIDDEN, NUM_LAYERS)
    packed = pack_params(params, NUM_LAYERS, HIDDEN)   # one-time packing

    src_lengths = jax.random.randint(k_len, (BSZ,), 1, SEQ_LEN + 1,
                                     dtype=jnp.int32)
    src_tokens = jax.random.randint(k_tok, (SEQ_LEN, BSZ), 1, VOCAB,
                                    dtype=jnp.int32)
    t_idx = jnp.arange(SEQ_LEN, dtype=jnp.int32)[:, None]
    src_tokens = jnp.where(t_idx < src_lengths[None, :], src_tokens, PAD_IDX)

    fwd = jax.jit(relation_encoder_forward)
    out = jax.block_until_ready(fwd(packed, src_tokens, src_lengths))

    assert out.shape == (BSZ, EMBED_DIM), out.shape
    assert bool(jnp.all(jnp.isfinite(out)))
    print("KERNEL_OK")
</pallas_src>

<mosaic_0001>
module attributes {stable_mosaic.version = 11 : i64} {
  func.func @_bigru_layer_kernel(%arg0: i32, %arg1: memref<128x16xbf16, #tpu.memory_space<vmem>>, %arg2: memref<16x1xi32, #tpu.memory_space<vmem>>, %arg3: memref<1x16x384xbf16, #tpu.memory_space<vmem>>, %arg4: memref<1x128x384xbf16, #tpu.memory_space<vmem>>, %arg5: memref<1x1x384xf32, #tpu.memory_space<vmem>>, %arg6: memref<1x1x128xf32, #tpu.memory_space<vmem>>, %arg7: memref<128x128xbf16, #tpu.memory_space<vmem>>, %arg8: memref<128x384xbf16, #tpu.memory_space<vmem>>) attributes {dimension_semantics = [#tpu.dimension_semantics<parallel>], iteration_bounds = array<i64: 2>, scalar_prefetch = 0 : i64, scratch_operands = 1 : i64, tpu.core_type = #tpu.core_type<tc>, window_params = [{pipeline_mode = #tpu.pipeline_mode<synchronous>, transform_indices = @transform_0, window_bounds = array<i64: 128, 16>}, {pipeline_mode = #tpu.pipeline_mode<synchronous>, transform_indices = @transform_1, window_bounds = array<i64: 16, 1>}, {transform_indices = @transform_2, window_bounds = array<i64: 1, 16, 384>}, {transform_indices = @transform_3, window_bounds = array<i64: 1, 128, 384>}, {transform_indices = @transform_4, window_bounds = array<i64: 1, 1, 384>}, {transform_indices = @transform_5, window_bounds = array<i64: 1, 1, 128>}, {transform_indices = @transform_6, window_bounds = array<i64: 128, 128>}]} {
    %c0 = arith.constant 0 : index
    %c0_0 = arith.constant 0 : index
    %c0_1 = arith.constant 0 : index
    %0 = vector.load %arg3[%c0, %c0_0, %c0_1] : memref<1x16x384xbf16, #tpu.memory_space<vmem>>, vector<1x16x384xbf16>
    %1 = vector.shape_cast %0 : vector<1x16x384xbf16> to vector<16x384xbf16>
    %c0_2 = arith.constant 0 : index
    %c0_3 = arith.constant 0 : index
    %c0_4 = arith.constant 0 : index
    %2 = vector.load %arg5[%c0_2, %c0_3, %c0_4] : memref<1x1x384xf32, #tpu.memory_space<vmem>>, vector<1x1x384xf32>
    %3 = vector.shape_cast %2 : vector<1x1x384xf32> to vector<1x384xf32>
    %c0_5 = arith.constant 0 : index
    %c0_6 = arith.constant 0 : index
    %4 = vector.load %arg1[%c0_5, %c0_6] : memref<128x16xbf16, #tpu.memory_space<vmem>>, vector<128x16xbf16>
    %cst = arith.constant dense<0.000000e+00> : vector<128x384xf32>
    %5 = tpu.matmul %4, %1, %cst {dimension_numbers = #tpu.dot_dimension_numbers<[1], [0], [0], [1], [0, 0, 1, 1], [], []>} : vector<128x16xbf16>, vector<16x384xbf16>, vector<128x384xf32> -> vector<128x384xf32>
    %6 = vector.broadcast %3 : vector<1x384xf32> to vector<128x384xf32>
    %7 = arith.addf %5, %6 : vector<128x384xf32>
    %8 = arith.truncf %7 : vector<128x384xf32> to vector<128x384xbf16>
    %c0_7 = arith.constant 0 : index
    %c0_8 = arith.constant 0 : index
    %9 = vector.load %arg8[%c0_7, %c0_8] : memref<128x384xbf16, #tpu.memory_space<vmem>>, vector<128x384xbf16>
    tpu.vector_store %arg8[%c0_7, %c0_8], %8 {strides = array<i32>} : memref<128x384xbf16, #tpu.memory_space<vmem>>, vector<128x384xbf16>,
    %c0_9 = arith.constant 0 : index
    %c0_10 = arith.constant 0 : index
    %c0_11 = arith.constant 0 : index
    %10 = vector.load %arg4[%c0_9, %c0_10, %c0_11] : memref<1x128x384xbf16, #tpu.memory_space<vmem>>, vector<1x128x384xbf16>
    %11 = vector.shape_cast %10 : vector<1x128x384xbf16> to vector<128x384xbf16>
    %c0_12 = arith.constant 0 : index
    %c0_13 = arith.constant 0 : index
    %c0_14 = arith.constant 0 : index
    %12 = vector.load %arg6[%c0_12, %c0_13, %c0_14] : memref<1x1x128xf32, #tpu.memory_space<vmem>>, vector<1x1x128xf32>
    %13 = vector.shape_cast %12 : vector<1x1x128xf32> to vector<1x128xf32>
    %c0_15 = arith.constant 0 : index
    %c0_16 = arith.constant 0 : index
    %14 = vector.load %arg2[%c0_15, %c0_16] : memref<16x1xi32, #tpu.memory_space<vmem>>, vector<16x1xi32>
    %cst_17 = arith.constant 0.000000e+00 : f32
    %15 = vector.broadcast %cst_17 : f32 to vector<16x128xf32>
    %c0_i32 = arith.constant 0 : i32
    %c0_i32_18 = arith.constant 0 : i32
    %16 = arith.cmpi eq, %arg0, %c0_i32_18 : i32
    %c7_i32 = arith.constant 7 : i32
    %17 = arith.subi %c7_i32, %c0_i32 : i32
    %18 = arith.select %16, %c0_i32, %17 : i32
    %c16_i32 = arith.constant 16 : i32
    %19 = arith.muli %18, %c16_i32 : i32
    %20 = tpu.assume_multiple %19, 16 : i32
    %21 = arith.index_cast %20 : i32 to index
    %c0_19 = arith.constant 0 : index
    %22 = vector.load %arg8[%21, %c0_19] : memref<128x384xbf16, #tpu.memory_space<vmem>>, vector<16x384xbf16>
    %23 = arith.truncf %15 : vector<16x128xf32> to vector<16x128xbf16>
    %cst_20 = arith.constant dense<0.000000e+00> : vector<16x384xf32>
    %24 = tpu.matmul %23, %11, %cst_20 {dimension_numbers = #tpu.dot_dimension_numbers<[1], [0], [0], [1], [0, 0, 1, 1], [], []>} : vector<16x128xbf16>, vector<128x384xbf16>, vector<16x384xf32> -> vector<16x384xf32>
    %25 = vector.extract_strided_slice %22 {offsets = [0, 0], sizes = [16, 128], strides = [1, 1]} : vector<16x384xbf16> to vector<16x128xbf16>
    %26 = vector.extract_strided_slice %24 {offsets = [0, 0], sizes = [16, 128], strides = [1, 1]} : vector<16x384xf32> to vector<16x128xf32>
    %27 = arith.extf %25 : vector<16x128xbf16> to vector<16x128xf32>
    %28 = arith.addf %27, %26 : vector<16x128xf32>
    %29 = arith.negf %28 : vector<16x128xf32>
    %30 = math.exp %29 : vector<16x128xf32>
    %cst_21 = arith.constant 1.000000e+00 : f32
    %31 = vector.broadcast %cst_21 : f32 to vector<16x128xf32>
    %32 = arith.addf %31, %30 : vector<16x128xf32>
    %33 = arith.divf %31, %32 : vector<16x128xf32>
    %34 = vector.extract_strided_slice %22 {offsets = [0, 128], sizes = [16, 128], strides = [1, 1]} : vector<16x384xbf16> to vector<16x128xbf16>
    %35 = vector.extract_strided_slice %24 {offsets = [0, 128], sizes = [16, 128], strides = [1, 1]} : vector<16x384xf32> to vector<16x128xf32>
    %36 = arith.extf %34 : vector<16x128xbf16> to vector<16x128xf32>
    %37 = arith.addf %36, %35 : vector<16x128xf32>
    %38 = arith.negf %37 : vector<16x128xf32>
    %39 = math.exp %38 : vector<16x128xf32>
    %cst_22 = arith.constant 1.000000e+00 : f32
    %40 = vector.broadcast %cst_22 : f32 to vector<16x128xf32>
    %41 = arith.addf %40, %39 : vector<16x128xf32>
    %42 = arith.divf %40, %41 : vector<16x128xf32>
    %43 = vector.extract_strided_slice %22 {offsets = [0, 256], sizes = [16, 128], strides = [1, 1]} : vector<16x384xbf16> to vector<16x128xbf16>
    %44 = vector.extract_strided_slice %24 {offsets = [0, 256], sizes = [16, 128], strides = [1, 1]} : vector<16x384xf32> to vector<16x128xf32>
    %45 = vector.broadcast %13 : vector<1x128xf32> to vector<16x128xf32>
    %46 = arith.addf %44, %45 : vector<16x128xf32>
    %47 = arith.mulf %33, %46 : vector<16x128xf32>
    %48 = arith.extf %43 : vector<16x128xbf16> to vector<16x128xf32>
    %49 = arith.addf %48, %47 : vector<16x128xf32>
    %50 = math.tanh %49 : vector<16x128xf32>
    %cst_23 = arith.constant 1.000000e+00 : f32
    %51 = vector.broadcast %cst_23 : f32 to vector<16x128xf32>
    %52 = arith.subf %51, %42 : vector<16x128xf32>
    %53 = arith.mulf %52, %50 : vector<16x128xf32>
    %54 = arith.mulf %42, %15 : vector<16x128xf32>
    %55 = arith.addf %53, %54 : vector<16x128xf32>
    %56 = vector.broadcast %18 : i32 to vector<16x1xi32>
    %57 = arith.cmpi slt, %56, %14 : vector<16x1xi32>
    %58 = vector.shape_cast %57 : vector<16x1xi1> to vector<16x1xi1>
    %59 = vector.broadcast %58 : vector<16x1xi1> to vector<16x128xi1>
    %60 = arith.select %59, %55, %15 : vector<16x128xi1>, vector<16x128xf32>
    %61 = arith.truncf %60 : vector<16x128xf32> to vector<16x128xbf16>
    %62 = arith.index_cast %20 : i32 to index
    %c0_24 = arith.constant 0 : index
    %63 = vector.load %arg7[%62, %c0_24] : memref<128x128xbf16, #tpu.memory_space<vmem>>, vector<16x128xbf16>
    tpu.vector_store %arg7[%62, %c0_24], %61 {strides = array<i32>} : memref<128x128xbf16, #tpu.memory_space<vmem>>, vector<16x128xbf16>,
    %c1_i32 = arith.constant 1 : i32
    %c0_i32_25 = arith.constant 0 : i32
    %64 = arith.cmpi eq, %arg0, %c0_i32_25 : i32
    %c7_i32_26 = arith.constant 7 : i32
    %65 = arith.subi %c7_i32_26, %c1_i32 : i32
    %66 = arith.select %64, %c1_i32, %65 : i32
    %c16_i32_27 = arith.constant 16 : i32
    %67 = arith.muli %66, %c16_i32_27 : i32
    %68 = tpu.assume_multiple %67, 16 : i32
    %69 = arith.index_cast %68 : i32 to index
    %c0_28 = arith.constant 0 : index
    %70 = vector.load %arg8[%69, %c0_28] : memref<128x384xbf16, #tpu.memory_space<vmem>>, vector<16x384xbf16>
    %71 = arith.truncf %60 : vector<16x128xf32> to vector<16x128xbf16>
    %cst_29 = arith.constant dense<0.000000e+00> : vector<16x384xf32>
    %72 = tpu.matmul %71, %11, %cst_29 {dimension_numbers = #tpu.dot_dimension_numbers<[1], [0], [0], [1], [0, 0, 1, 1], [], []>} : vector<16x128xbf16>, vector<128x384xbf16>, vector<16x384xf32> -> vector<16x384xf32>
    %73 = vector.extract_strided_slice %70 {offsets = [0, 0], sizes = [16, 128], strides = [1, 1]} : vector<16x384xbf16> to vector<16x128xbf16>
    %74 = vector.extract_strided_slice %72 {offsets = [0, 0], sizes = [16, 128], strides = [1, 1]} : vector<16x384xf32> to vector<16x128xf32>
    %75 = arith.extf %73 : vector<16x128xbf16> to vector<16x128xf32>
    %76 = arith.addf %75, %74 : vector<16x128xf32>
    %77 = arith.negf %76 : vector<16x128xf32>
    %78 = math.exp %77 : vector<16x128xf32>
    %cst_30 = arith.constant 1.000000e+00 : f32
    %79 = vector.broadcast %cst_30 : f32 to vector<16x128xf32>
    %80 = arith.addf %79, %78 : vector<16x128xf32>
    %81 = arith.divf %79, %80 : vector<16x128xf32>
    %82 = vector.extract_strided_slice %70 {offsets = [0, 128], sizes = [16, 128], strides = [1, 1]} : vector<16x384xbf16> to vector<16x128xbf16>
    %83 = vector.extract_strided_slice %72 {offsets = [0, 128], sizes = [16, 128], strides = [1, 1]} : vector<16x384xf32> to vector<16x128xf32>
    %84 = arith.extf %82 : vector<16x128xbf16> to vector<16x128xf32>
    %85 = arith.addf %84, %83 : vector<16x128xf32>
    %86 = arith.negf %85 : vector<16x128xf32>
    %87 = math.exp %86 : vector<16x128xf32>
    %cst_31 = arith.constant 1.000000e+00 : f32
    %88 = vector.broadcast %cst_31 : f32 to vector<16x128xf32>
    %89 = arith.addf %88, %87 : vector<16x128xf32>
    %90 = arith.divf %88, %89 : vector<16x128xf32>
    %91 = vector.extract_strided_slice %70 {offsets = [0, 256], sizes = [16, 128], strides = [1, 1]} : vector<16x384xbf16> to vector<16x128xbf16>
    %92 = vector.extract_strided_slice %72 {offsets = [0, 256], sizes = [16, 128], strides = [1, 1]} : vector<16x384xf32> to vector<16x128xf32>
    %93 = vector.broadcast %13 : vector<1x128xf32> to vector<16x128xf32>
    %94 = arith.addf %92, %93 : vector<16x128xf32>
    %95 = arith.mulf %81, %94 : vector<16x128xf32>
    %96 = arith.extf %91 : vector<16x128xbf16> to vector<16x128xf32>
    %97 = arith.addf %96, %95 : vector<16x128xf32>
    %98 = math.tanh %97 : vector<16x128xf32>
    %cst_32 = arith.constant 1.000000e+00 : f32
    %99 = vector.broadcast %cst_32 : f32 to vector<16x128xf32>
    %100 = arith.subf %99, %90 : vector<16x128xf32>
    %101 = arith.mulf %100, %98 : vector<16x128xf32>
    %102 = arith.mulf %90, %60 : vector<16x128xf32>
    %103 = arith.addf %101, %102 : vector<16x128xf32>
    %104 = vector.broadcast %66 : i32 to vector<16x1xi32>
    %105 = arith.cmpi slt, %104, %14 : vector<16x1xi32>
    %106 = vector.shape_cast %105 : vector<16x1xi1> to vector<16x1xi1>
    %107 = vector.broadcast %106 : vector<16x1xi1> to vector<16x128xi1>
    %108 = arith.select %107, %103, %60 : vector<16x128xi1>, vector<16x128xf32>
    %109 = arith.truncf %108 : vector<16x128xf32> to vector<16x128xbf16>
    %110 = arith.index_cast %68 : i32 to index
    %c0_33 = arith.constant 0 : index
    %111 = vector.load %arg7[%110, %c0_33] : memref<128x128xbf16, #tpu.memory_space<vmem>>, vector<16x128xbf16>
    tpu.vector_store %arg7[%110, %c0_33], %109 {strides = array<i32>} : memref<128x128xbf16, #tpu.memory_space<vmem>>, vector<16x128xbf16>,
    %c2_i32 = arith.constant 2 : i32
    %c0_i32_34 = arith.constant 0 : i32
    %112 = arith.cmpi eq, %arg0, %c0_i32_34 : i32
    %c7_i32_35 = arith.constant 7 : i32
    %113 = arith.subi %c7_i32_35, %c2_i32 : i32
    %114 = arith.select %112, %c2_i32, %113 : i32
    %c16_i32_36 = arith.constant 16 : i32
    %115 = arith.muli %114, %c16_i32_36 : i32
    %116 = tpu.assume_multiple %115, 16 : i32
    %117 = arith.index_cast %116 : i32 to index
    %c0_37 = arith.constant 0 : index
    %118 = vector.load %arg8[%117, %c0_37] : memref<128x384xbf16, #tpu.memory_space<vmem>>, vector<16x384xbf16>
    %119 = arith.truncf %108 : vector<16x128xf32> to vector<16x128xbf16>
    %cst_38 = arith.constant dense<0.000000e+00> : vector<16x384xf32>
    %120 = tpu.matmul %119, %11, %cst_38 {dimension_numbers = #tpu.dot_dimension_numbers<[1], [0], [0], [1], [0, 0, 1, 1], [], []>} : vector<16x128xbf16>, vector<128x384xbf16>, vector<16x384xf32> -> vector<16x384xf32>
    %121 = vector.extract_strided_slice %118 {offsets = [0, 0], sizes = [16, 128], strides = [1, 1]} : vector<16x384xbf16> to vector<16x128xbf16>
    %122 = vector.extract_strided_slice %120 {offsets = [0, 0], sizes = [16, 128], strides = [1, 1]} : vector<16x384xf32> to vector<16x128xf32>
    %123 = arith.extf %121 : vector<16x128xbf16> to vector<16x128xf32>
    %124 = arith.addf %123, %122 : vector<16x128xf32>
    %125 = arith.negf %124 : vector<16x128xf32>
    %126 = math.exp %125 : vector<16x128xf32>
    %cst_39 = arith.constant 1.000000e+00 : f32
    %127 = vector.broadcast %cst_39 : f32 to vector<16x128xf32>
    %128 = arith.addf %127, %126 : vector<16x128xf32>
    %129 = arith.divf %127, %128 : vector<16x128xf32>
    %130 = vector.extract_strided_slice %118 {offsets = [0, 128], sizes = [16, 128], strides = [1, 1]} : vector<16x384xbf16> to vector<16x128xbf16>
    %131 = vector.extract_strided_slice %120 {offsets = [0, 128], sizes = [16, 128], strides = [1, 1]} : vector<16x384xf32> to vector<16x128xf32>
    %132 = arith.extf %130 : vector<16x128xbf16> to vector<16x128xf32>
    %133 = arith.addf %132, %131 : vector<16x128xf32>
    %134 = arith.negf %133 : vector<16x128xf32>
    %135 = math.exp %134 : vector<16x128xf32>
    %cst_40 = arith.constant 1.000000e+00 : f32
    %136 = vector.broadcast %cst_40 : f32 to vector<16x128xf32>
    %137 = arith.addf %136, %135 : vector<16x128xf32>
    %138 = arith.divf %136, %137 : vector<16x128xf32>
    %139 = vector.extract_strided_slice %118 {offsets = [0, 256], sizes = [16, 128], strides = [1, 1]} : vector<16x384xbf16> to vector<16x128xbf16>
    %140 = vector.extract_strided_slice %120 {offsets = [0, 256], sizes = [16, 128], strides = [1, 1]} : vector<16x384xf32> to vector<16x128xf32>
    %141 = vector.broadcast %13 : vector<1x128xf32> to vector<16x128xf32>
    %142 = arith.addf %140, %141 : vector<16x128xf32>
    %143 = arith.mulf %129, %142 : vector<16x128xf32>
    %144 = arith.extf %139 : vector<16x128xbf16> to vector<16x128xf32>
    %145 = arith.addf %144, %143 : vector<16x128xf32>
    %146 = math.tanh %145 : vector<16x128xf32>
    %cst_41 = arith.constant 1.000000e+00 : f32
    %147 = vector.broadcast %cst_41 : f32 to vector<16x128xf32>
    %148 = arith.subf %147, %138 : vector<16x128xf32>
    %149 = arith.mulf %148, %146 : vector<16x128xf32>
    %150 = arith.mulf %138, %108 : vector<16x128xf32>
    %151 = arith.addf %149, %150 : vector<16x128xf32>
    %152 = vector.broadcast %114 : i32 to vector<16x1xi32>
    %153 = arith.cmpi slt, %152, %14 : vector<16x1xi32>
    %154 = vector.shape_cast %153 : vector<16x1xi1> to vector<16x1xi1>
    %155 = vector.broadcast %154 : vector<16x1xi1> to vector<16x128xi1>
    %156 = arith.select %155, %151, %108 : vector<16x128xi1>, vector<16x128xf32>
    %157 = arith.truncf %156 : vector<16x128xf32> to vector<16x128xbf16>
    %158 = arith.index_cast %116 : i32 to index
    %c0_42 = arith.constant 0 : index
    %159 = vector.load %arg7[%158, %c0_42] : memref<128x128xbf16, #tpu.memory_space<vmem>>, vector<16x128xbf16>
    tpu.vector_store %arg7[%158, %c0_42], %157 {strides = array<i32>} : memref<128x128xbf16, #tpu.memory_space<vmem>>, vector<16x128xbf16>,
    %c3_i32 = arith.constant 3 : i32
    %c0_i32_43 = arith.constant 0 : i32
    %160 = arith.cmpi eq, %arg0, %c0_i32_43 : i32
    %c7_i32_44 = arith.constant 7 : i32
    %161 = arith.subi %c7_i32_44, %c3_i32 : i32
    %162 = arith.select %160, %c3_i32, %161 : i32
    %c16_i32_45 = arith.constant 16 : i32
    %163 = arith.muli %162, %c16_i32_45 : i32
    %164 = tpu.assume_multiple %163, 16 : i32
    %165 = arith.index_cast %164 : i32 to index
    %c0_46 = arith.constant 0 : index
    %166 = vector.load %arg8[%165, %c0_46] : memref<128x384xbf16, #tpu.memory_space<vmem>>, vector<16x384xbf16>
    %167 = arith.truncf %156 : vector<16x128xf32> to vector<16x128xbf16>
    %cst_47 = arith.constant dense<0.000000e+00> : vector<16x384xf32>
    %168 = tpu.matmul %167, %11, %cst_47 {dimension_numbers = #tpu.dot_dimension_numbers<[1], [0], [0], [1], [0, 0, 1, 1], [], []>} : vector<16x128xbf16>, vector<128x384xbf16>, vector<16x384xf32> -> vector<16x384xf32>
    %169 = vector.extract_strided_slice %166 {offsets = [0, 0], sizes = [16, 128], strides = [1, 1]} : vector<16x384xbf16> to vector<16x128xbf16>
    %170 = vector.extract_strided_slice %168 {offsets = [0, 0], sizes = [16, 128], strides = [1, 1]} : vector<16x384xf32> to vector<16x128xf32>
    %171 = arith.extf %169 : vector<16x128xbf16> to vector<16x128xf32>
    %172 = arith.addf %171, %170 : vector<16x128xf32>
    %173 = arith.negf %172 : vector<16x128xf32>
    %174 = math.exp %173 : vector<16x128xf32>
    %cst_48 = arith.constant 1.000000e+00 : f32
    %175 = vector.broadcast %cst_48 : f32 to vector<16x128xf32>
    %176 = arith.addf %175, %174 : vector<16x128xf32>
    %177 = arith.divf %175, %176 : vector<16x128xf32>
    %178 = vector.extract_strided_slice %166 {offsets = [0, 128], sizes = [16, 128], strides = [1, 1]} : vector<16x384xbf16> to vector<16x128xbf16>
    %179 = vector.extract_strided_slice %168 {offsets = [0, 128], sizes = [16, 128], strides = [1, 1]} : vector<16x384xf32> to vector<16x128xf32>
    %180 = arith.extf %178 : vector<16x128xbf16> to vector<16x128xf32>
    %181 = arith.addf %180, %179 : vector<16x128xf32>
    %182 = arith.negf %181 : vector<16x128xf32>
    %183 = math.exp %182 : vector<16x128xf32>
    %cst_49 = arith.constant 1.000000e+00 : f32
    %184 = vector.broadcast %cst_49 : f32 to vector<16x128xf32>
    %185 = arith.addf %184, %183 : vector<16x128xf32>
    %186 = arith.divf %184, %185 : vector<16x128xf32>
    %187 = vector.extract_strided_slice %166 {offsets = [0, 256], sizes = [16, 128], strides = [1, 1]} : vector<16x384xbf16> to vector<16x128xbf16>
    %188 = vector.extract_strided_slice %168 {offsets = [0, 256], sizes = [16, 128], strides = [1, 1]} : vector<16x384xf32> to vector<16x128xf32>
    %189 = vector.broadcast %13 : vector<1x128xf32> to vector<16x128xf32>
    %190 = arith.addf %188, %189 : vector<16x128xf32>
    %191 = arith.mulf %177, %190 : vector<16x128xf32>
    %192 = arith.extf %187 : vector<16x128xbf16> to vector<16x128xf32>
    %193 = arith.addf %192, %191 : vector<16x128xf32>
    %194 = math.tanh %193 : vector<16x128xf32>
    %cst_50 = arith.constant 1.000000e+00 : f32
    %195 = vector.broadcast %cst_50 : f32 to vector<16x128xf32>
    %196 = arith.subf %195, %186 : vector<16x128xf32>
    %197 = arith.mulf %196, %194 : vector<16x128xf32>
    %198 = arith.mulf %186, %156 : vector<16x128xf32>
    %199 = arith.addf %197, %198 : vector<16x128xf32>
    %200 = vector.broadcast %162 : i32 to vector<16x1xi32>
    %201 = arith.cmpi slt, %200, %14 : vector<16x1xi32>
    %202 = vector.shape_cast %201 : vector<16x1xi1> to vector<16x1xi1>
    %203 = vector.broadcast %202 : vector<16x1xi1> to vector<16x128xi1>
    %204 = arith.select %203, %199, %156 : vector<16x128xi1>, vector<16x128xf32>
    %205 = arith.truncf %204 : vector<16x128xf32> to vector<16x128xbf16>
    %206 = arith.index_cast %164 : i32 to index
    %c0_51 = arith.constant 0 : index
    %207 = vector.load %arg7[%206, %c0_51] : memref<128x128xbf16, #tpu.memory_space<vmem>>, vector<16x128xbf16>
    tpu.vector_store %arg7[%206, %c0_51], %205 {strides = array<i32>} : memref<128x128xbf16, #tpu.memory_space<vmem>>, vector<16x128xbf16>,
    %c4_i32 = arith.constant 4 : i32
    %c0_i32_52 = arith.constant 0 : i32
    %208 = arith.cmpi eq, %arg0, %c0_i32_52 : i32
    %c7_i32_53 = arith.constant 7 : i32
    %209 = arith.subi %c7_i32_53, %c4_i32 : i32
    %210 = arith.select %208, %c4_i32, %209 : i32
    %c16_i32_54 = arith.constant 16 : i32
    %211 = arith.muli %210, %c16_i32_54 : i32
    %212 = tpu.assume_multiple %211, 16 : i32
    %213 = arith.index_cast %212 : i32 to index
    %c0_55 = arith.constant 0 : index
    %214 = vector.load %arg8[%213, %c0_55] : memref<128x384xbf16, #tpu.memory_space<vmem>>, vector<16x384xbf16>
    %215 = arith.truncf %204 : vector<16x128xf32> to vector<16x128xbf16>
    %cst_56 = arith.constant dense<0.000000e+00> : vector<16x384xf32>
    %216 = tpu.matmul %215, %11, %cst_56 {dimension_numbers = #tpu.dot_dimension_numbers<[1], [0], [0], [1], [0, 0, 1, 1], [], []>} : vector<16x128xbf16>, vector<128x384xbf16>, vector<16x384xf32> -> vector<16x384xf32>
    %217 = vector.extract_strided_slice %214 {offsets = [0, 0], sizes = [16, 128], strides = [1, 1]} : vector<16x384xbf16> to vector<16x128xbf16>
    %218 = vector.extract_strided_slice %216 {offsets = [0, 0], sizes = [16, 128], strides = [1, 1]} : vector<16x384xf32> to vector<16x128xf32>
    %219 = arith.extf %217 : vector<16x128xbf16> to vector<16x128xf32>
    %220 = arith.addf %219, %218 : vector<16x128xf32>
    %221 = arith.negf %220 : vector<16x128xf32>
    %222 = math.exp %221 : vector<16x128xf32>
    %cst_57 = arith.constant 1.000000e+00 : f32
    %223 = vector.broadcast %cst_57 : f32 to vector<16x128xf32>
    %224 = arith.addf %223, %222 : vector<16x128xf32>
    %225 = arith.divf %223, %224 : vector<16x128xf32>
    %226 = vector.extract_strided_slice %214 {offsets = [0, 128], sizes = [16, 128], strides = [1, 1]} : vector<16x384xbf16> to vector<16x128xbf16>
    %227 = vector.extract_strided_slice %216 {offsets = [0, 128], sizes = [16, 128], strides = [1, 1]} : vector<16x384xf32> to vector<16x128xf32>
    %228 = arith.extf %226 : vector<16x128xbf16> to vector<16x128xf32>
    %229 = arith.addf %228, %227 : vector<16x128xf32>
    %230 = arith.negf %229 : vector<16x128xf32>
    %231 = math.exp %230 : vector<16x128xf32>
    %cst_58 = arith.constant 1.000000e+00 : f32
    %232 = vector.broadcast %cst_58 : f32 to vector<16x128xf32>
    %233 = arith.addf %232, %231 : vector<16x128xf32>
    %234 = arith.divf %232, %233 : vector<16x128xf32>
    %235 = vector.extract_strided_slice %214 {offsets = [0, 256], sizes = [16, 128], strides = [1, 1]} : vector<16x384xbf16> to vector<16x128xbf16>
    %236 = vector.extract_strided_slice %216 {offsets = [0, 256], sizes = [16, 128], strides = [1, 1]} : vector<16x384xf32> to vector<16x128xf32>
    %237 = vector.broadcast %13 : vector<1x128xf32> to vector<16x128xf32>
    %238 = arith.addf %236, %237 : vector<16x128xf32>
    %239 = arith.mulf %225, %238 : vector<16x128xf32>
    %240 = arith.extf %235 : vector<16x128xbf16> to vector<16x128xf32>
    %241 = arith.addf %240, %239 : vector<16x128xf32>
    %242 = math.tanh %241 : vector<16x128xf32>
    %cst_59 = arith.constant 1.000000e+00 : f32
    %243 = vector.broadcast %cst_59 : f32 to vector<16x128xf32>
    %244 = arith.subf %243, %234 : vector<16x128xf32>
    %245 = arith.mulf %244, %242 : vector<16x128xf32>
    %246 = arith.mulf %234, %204 : vector<16x128xf32>
    %247 = arith.addf %245, %246 : vector<16x128xf32>
    %248 = vector.broadcast %210 : i32 to vector<16x1xi32>
    %249 = arith.cmpi slt, %248, %14 : vector<16x1xi32>
    %250 = vector.shape_cast %249 : vector<16x1xi1> to vector<16x1xi1>
    %251 = vector.broadcast %250 : vector<16x1xi1> to vector<16x128xi1>
    %252 = arith.select %251, %247, %204 : vector<16x128xi1>, vector<16x128xf32>
    %253 = arith.truncf %252 : vector<16x128xf32> to vector<16x128xbf16>
    %254 = arith.index_cast %212 : i32 to index
    %c0_60 = arith.constant 0 : index
    %255 = vector.load %arg7[%254, %c0_60] : memref<128x128xbf16, #tpu.memory_space<vmem>>, vector<16x128xbf16>
    tpu.vector_store %arg7[%254, %c0_60], %253 {strides = array<i32>} : memref<128x128xbf16, #tpu.memory_space<vmem>>, vector<16x128xbf16>,
    %c5_i32 = arith.constant 5 : i32
    %c0_i32_61 = arith.constant 0 : i32
    %256 = arith.cmpi eq, %arg0, %c0_i32_61 : i32
    %c7_i32_62 = arith.constant 7 : i32
    %257 = arith.subi %c7_i32_62, %c5_i32 : i32
    %258 = arith.select %256, %c5_i32, %257 : i32
    %c16_i32_63 = arith.constant 16 : i32
    %259 = arith.muli %258, %c16_i32_63 : i32
    %260 = tpu.assume_multiple %259, 16 : i32
    %261 = arith.index_cast %260 : i32 to index
    %c0_64 = arith.constant 0 : index
    %262 = vector.load %arg8[%261, %c0_64] : memref<128x384xbf16, #tpu.memory_space<vmem>>, vector<16x384xbf16>
    %263 = arith.truncf %252 : vector<16x128xf32> to vector<16x128xbf16>
    %cst_65 = arith.constant dense<0.000000e+00> : vector<16x384xf32>
    %264 = tpu.matmul %263, %11, %cst_65 {dimension_numbers = #tpu.dot_dimension_numbers<[1], [0], [0], [1], [0, 0, 1, 1], [], []>} : vector<16x128xbf16>, vector<128x384xbf16>, vector<16x384xf32> -> vector<16x384xf32>
    %265 = vector.extract_strided_slice %262 {offsets = [0, 0], sizes = [16, 128], strides = [1, 1]} : vector<16x384xbf16> to vector<16x128xbf16>
    %266 = vector.extract_strided_slice %264 {offsets = [0, 0], sizes = [16, 128], strides = [1, 1]} : vector<16x384xf32> to vector<16x128xf32>
    %267 = arith.extf %265 : vector<16x128xbf16> to vector<16x128xf32>
    %268 = arith.addf %267, %266 : vector<16x128xf32>
    %269 = arith.negf %268 : vector<16x128xf32>
    %270 = math.exp %269 : vector<16x128xf32>
    %cst_66 = arith.constant 1.000000e+00 : f32
    %271 = vector.broadcast %cst_66 : f32 to vector<16x128xf32>
    %272 = arith.addf %271, %270 : vector<16x128xf32>
    %273 = arith.divf %271, %272 : vector<16x128xf32>
    %274 = vector.extract_strided_slice %262 {offsets = [0, 128], sizes = [16, 128], strides = [1, 1]} : vector<16x384xbf16> to vector<16x128xbf16>
    %275 = vector.extract_strided_slice %264 {offsets = [0, 128], sizes = [16, 128], strides = [1, 1]} : vector<16x384xf32> to vector<16x128xf32>
    %276 = arith.extf %274 : vector<16x128xbf16> to vector<16x128xf32>
    %277 = arith.addf %276, %275 : vector<16x128xf32>
    %278 = arith.negf %277 : vector<16x128xf32>
    %279 = math.exp %278 : vector<16x128xf32>
    %cst_67 = arith.constant 1.000000e+00 : f32
    %280 = vector.broadcast %cst_67 : f32 to vector<16x128xf32>
    %281 = arith.addf %280, %279 : vector<16x128xf32>
    %282 = arith.divf %280, %281 : vector<16x128xf32>
    %283 = vector.extract_strided_slice %262 {offsets = [0, 256], sizes = [16, 128], strides = [1, 1]} : vector<16x384xbf16> to vector<16x128xbf16>
    %284 = vector.extract_strided_slice %264 {offsets = [0, 256], sizes = [16, 128], strides = [1, 1]} : vector<16x384xf32> to vector<16x128xf32>
    %285 = vector.broadcast %13 : vector<1x128xf32> to vector<16x128xf32>
    %286 = arith.addf %284, %285 : vector<16x128xf32>
    %287 = arith.mulf %273, %286 : vector<16x128xf32>
    %288 = arith.extf %283 : vector<16x128xbf16> to vector<16x128xf32>
    %289 = arith.addf %288, %287 : vector<16x128xf32>
    %290 = math.tanh %289 : vector<16x128xf32>
    %cst_68 = arith.constant 1.000000e+00 : f32
    %291 = vector.broadcast %cst_68 : f32 to vector<16x128xf32>
    %292 = arith.subf %291, %282 : vector<16x128xf32>
    %293 = arith.mulf %292, %290 : vector<16x128xf32>
    %294 = arith.mulf %282, %252 : vector<16x128xf32>
    %295 = arith.addf %293, %294 : vector<16x128xf32>
    %296 = vector.broadcast %258 : i32 to vector<16x1xi32>
    %297 = arith.cmpi slt, %296, %14 : vector<16x1xi32>
    %298 = vector.shape_cast %297 : vector<16x1xi1> to vector<16x1xi1>
    %299 = vector.broadcast %298 : vector<16x1xi1> to vector<16x128xi1>
    %300 = arith.select %299, %295, %252 : vector<16x128xi1>, vector<16x128xf32>
    %301 = arith.truncf %300 : vector<16x128xf32> to vector<16x128xbf16>
    %302 = arith.index_cast %260 : i32 to index
    %c0_69 = arith.constant 0 : index
    %303 = vector.load %arg7[%302, %c0_69] : memref<128x128xbf16, #tpu.memory_space<vmem>>, vector<16x128xbf16>
    tpu.vector_store %arg7[%302, %c0_69], %301 {strides = array<i32>} : memref<128x128xbf16, #tpu.memory_space<vmem>>, vector<16x128xbf16>,
    %c6_i32 = arith.constant 6 : i32
    %c0_i32_70 = arith.constant 0 : i32
    %304 = arith.cmpi eq, %arg0, %c0_i32_70 : i32
    %c7_i32_71 = arith.constant 7 : i32
    %305 = arith.subi %c7_i32_71, %c6_i32 : i32
    %306 = arith.select %304, %c6_i32, %305 : i32
    %c16_i32_72 = arith.constant 16 : i32
    %307 = arith.muli %306, %c16_i32_72 : i32
    %308 = tpu.assume_multiple %307, 16 : i32
    %309 = arith.index_cast %308 : i32 to index
    %c0_73 = arith.constant 0 : index
    %310 = vector.load %arg8[%309, %c0_73] : memref<128x384xbf16, #tpu.memory_space<vmem>>, vector<16x384xbf16>
    %311 = arith.truncf %300 : vector<16x128xf32> to vector<16x128xbf16>
    %cst_74 = arith.constant dense<0.000000e+00> : vector<16x384xf32>
    %312 = tpu.matmul %311, %11, %cst_74 {dimension_numbers = #tpu.dot_dimension_numbers<[1], [0], [0], [1], [0, 0, 1, 1], [], []>} : vector<16x128xbf16>, vector<128x384xbf16>, vector<16x384xf32> -> vector<16x384xf32>
    %313 = vector.extract_strided_slice %310 {offsets = [0, 0], sizes = [16, 128], strides = [1, 1]} : vector<16x384xbf16> to vector<16x128xbf16>
    %314 = vector.extract_strided_slice %312 {offsets = [0, 0], sizes = [16, 128], strides = [1, 1]} : vector<16x384xf32> to vector<16x128xf32>
    %315 = arith.extf %313 : vector<16x128xbf16> to vector<16x128xf32>
    %316 = arith.addf %315, %314 : vector<16x128xf32>
    %317 = arith.negf %316 : vector<16x128xf32>
    %318 = math.exp %317 : vector<16x128xf32>
    %cst_75 = arith.constant 1.000000e+00 : f32
    %319 = vector.broadcast %cst_75 : f32 to vector<16x128xf32>
    %320 = arith.addf %319, %318 : vector<16x128xf32>
    %321 = arith.divf %319, %320 : vector<16x128xf32>
    %322 = vector.extract_strided_slice %310 {offsets = [0, 128], sizes = [16, 128], strides = [1, 1]} : vector<16x384xbf16> to vector<16x128xbf16>
    %323 = vector.extract_strided_slice %312 {offsets = [0, 128], sizes = [16, 128], strides = [1, 1]} : vector<16x384xf32> to vector<16x128xf32>
    %324 = arith.extf %322 : vector<16x128xbf16> to vector<16x128xf32>
    %325 = arith.addf %324, %323 : vector<16x128xf32>
    %326 = arith.negf %325 : vector<16x128xf32>
    %327 = math.exp %326 : vector<16x128xf32>
    %cst_76 = arith.constant 1.000000e+00 : f32
    %328 = vector.broadcast %cst_76 : f32 to vector<16x128xf32>
    %329 = arith.addf %328, %327 : vector<16x128xf32>
    %330 = arith.divf %328, %329 : vector<16x128xf32>
    %331 = vector.extract_strided_slice %310 {offsets = [0, 256], sizes = [16, 128], strides = [1, 1]} : vector<16x384xbf16> to vector<16x128xbf16>
    %332 = vector.extract_strided_slice %312 {offsets = [0, 256], sizes = [16, 128], strides = [1, 1]} : vector<16x384xf32> to vector<16x128xf32>
    %333 = vector.broadcast %13 : vector<1x128xf32> to vector<16x128xf32>
    %334 = arith.addf %332, %333 : vector<16x128xf32>
    %335 = arith.mulf %321, %334 : vector<16x128xf32>
    %336 = arith.extf %331 : vector<16x128xbf16> to vector<16x128xf32>
    %337 = arith.addf %336, %335 : vector<16x128xf32>
    %338 = math.tanh %337 : vector<16x128xf32>
    %cst_77 = arith.constant 1.000000e+00 : f32
    %339 = vector.broadcast %cst_77 : f32 to vector<16x128xf32>
    %340 = arith.subf %339, %330 : vector<16x128xf32>
    %341 = arith.mulf %340, %338 : vector<16x128xf32>
    %342 = arith.mulf %330, %300 : vector<16x128xf32>
    %343 = arith.addf %341, %342 : vector<16x128xf32>
    %344 = vector.broadcast %306 : i32 to vector<16x1xi32>
    %345 = arith.cmpi slt, %344, %14 : vector<16x1xi32>
    %346 = vector.shape_cast %345 : vector<16x1xi1> to vector<16x1xi1>
    %347 = vector.broadcast %346 : vector<16x1xi1> to vector<16x128xi1>
    %348 = arith.select %347, %343, %300 : vector<16x128xi1>, vector<16x128xf32>
    %349 = arith.truncf %348 : vector<16x128xf32> to vector<16x128xbf16>
    %350 = arith.index_cast %308 : i32 to index
    %c0_78 = arith.constant 0 : index
    %351 = vector.load %arg7[%350, %c0_78] : memref<128x128xbf16, #tpu.memory_space<vmem>>, vector<16x128xbf16>
    tpu.vector_store %arg7[%350, %c0_78], %349 {strides = array<i32>} : memref<128x128xbf16, #tpu.memory_space<vmem>>, vector<16x128xbf16>,
    %c7_i32_79 = arith.constant 7 : i32
    %c0_i32_80 = arith.constant 0 : i32
    %352 = arith.cmpi eq, %arg0, %c0_i32_80 : i32
    %c7_i32_81 = arith.constant 7 : i32
    %353 = arith.subi %c7_i32_81, %c7_i32_79 : i32
    %354 = arith.select %352, %c7_i32_79, %353 : i32
    %c16_i32_82 = arith.constant 16 : i32
    %355 = arith.muli %354, %c16_i32_82 : i32
    %356 = tpu.assume_multiple %355, 16 : i32
    %357 = arith.index_cast %356 : i32 to index
    %c0_83 = arith.constant 0 : index
    %358 = vector.load %arg8[%357, %c0_83] : memref<128x384xbf16, #tpu.memory_space<vmem>>, vector<16x384xbf16>
    %359 = arith.truncf %348 : vector<16x128xf32> to vector<16x128xbf16>
    %cst_84 = arith.constant dense<0.000000e+00> : vector<16x384xf32>
    %360 = tpu.matmul %359, %11, %cst_84 {dimension_numbers = #tpu.dot_dimension_numbers<[1], [0], [0], [1], [0, 0, 1, 1], [], []>} : vector<16x128xbf16>, vector<128x384xbf16>, vector<16x384xf32> -> vector<16x384xf32>
    %361 = vector.extract_strided_slice %358 {offsets = [0, 0], sizes = [16, 128], strides = [1, 1]} : vector<16x384xbf16> to vector<16x128xbf16>
    %362 = vector.extract_strided_slice %360 {offsets = [0, 0], sizes = [16, 128], strides = [1, 1]} : vector<16x384xf32> to vector<16x128xf32>
    %363 = arith.extf %361 : vector<16x128xbf16> to vector<16x128xf32>
    %364 = arith.addf %363, %362 : vector<16x128xf32>
    %365 = arith.negf %364 : vector<16x128xf32>
    %366 = math.exp %365 : vector<16x128xf32>
    %cst_85 = arith.constant 1.000000e+00 : f32
    %367 = vector.broadcast %cst_85 : f32 to vector<16x128xf32>
    %368 = arith.addf %367, %366 : vector<16x128xf32>
    %369 = arith.divf %367, %368 : vector<16x128xf32>
    %370 = vector.extract_strided_slice %358 {offsets = [0, 128], sizes = [16, 128], strides = [1, 1]} : vector<16x384xbf16> to vector<16x128xbf16>
    %371 = vector.extract_strided_slice %360 {offsets = [0, 128], sizes = [16, 128], strides = [1, 1]} : vector<16x384xf32> to vector<16x128xf32>
    %372 = arith.extf %370 : vector<16x128xbf16> to vector<16x128xf32>
    %373 = arith.addf %372, %371 : vector<16x128xf32>
    %374 = arith.negf %373 : vector<16x128xf32>
    %375 = math.exp %374 : vector<16x128xf32>
    %cst_86 = arith.constant 1.000000e+00 : f32
    %376 = vector.broadcast %cst_86 : f32 to vector<16x128xf32>
    %377 = arith.addf %376, %375 : vector<16x128xf32>
    %378 = arith.divf %376, %377 : vector<16x128xf32>
    %379 = vector.extract_strided_slice %358 {offsets = [0, 256], sizes = [16, 128], strides = [1, 1]} : vector<16x384xbf16> to vector<16x128xbf16>
    %380 = vector.extract_strided_slice %360 {offsets = [0, 256], sizes = [16, 128], strides = [1, 1]} : vector<16x384xf32> to vector<16x128xf32>
    %381 = vector.broadcast %13 : vector<1x128xf32> to vector<16x128xf32>
    %382 = arith.addf %380, %381 : vector<16x128xf32>
    %383 = arith.mulf %369, %382 : vector<16x128xf32>
    %384 = arith.extf %379 : vector<16x128xbf16> to vector<16x128xf32>
    %385 = arith.addf %384, %383 : vector<16x128xf32>
    %386 = math.tanh %385 : vector<16x128xf32>
    %cst_87 = arith.constant 1.000000e+00 : f32
    %387 = vector.broadcast %cst_87 : f32 to vector<16x128xf32>
    %388 = arith.subf %387, %378 : vector<16x128xf32>
    %389 = arith.mulf %388, %386 : vector<16x128xf32>
    %390 = arith.mulf %378, %348 : vector<16x128xf32>
    %391 = arith.addf %389, %390 : vector<16x128xf32>
    %392 = vector.broadcast %354 : i32 to vector<16x1xi32>
    %393 = arith.cmpi slt, %392, %14 : vector<16x1xi32>
    %394 = vector.shape_cast %393 : vector<16x1xi1> to vector<16x1xi1>
    %395 = vector.broadcast %394 : vector<16x1xi1> to vector<16x128xi1>
    %396 = arith.select %395, %391, %348 : vector<16x128xi1>, vector<16x128xf32>
    %397 = arith.truncf %396 : vector<16x128xf32> to vector<16x128xbf16>
    %398 = arith.index_cast %356 : i32 to index
    %c0_88 = arith.constant 0 : index
    %399 = vector.load %arg7[%398, %c0_88] : memref<128x128xbf16, #tpu.memory_space<vmem>>, vector<16x128xbf16>
    tpu.vector_store %arg7[%398, %c0_88], %397 {strides = array<i32>} : memref<128x128xbf16, #tpu.memory_space<vmem>>, vector<16x128xbf16>,
    %c8_i32 = arith.constant 8 : i32
    return
  }
  func.func @transform_0(%arg0: i32) -> (i32, i32) {
    %c0_i32 = arith.constant 0 : i32
    %c0_i32_0 = arith.constant 0 : i32
    %c0_i32_1 = arith.constant 0 : i32
    return %c0_i32, %c0_i32_0 : i32, i32
  }
  func.func @transform_1(%arg0: i32) -> (i32, i32) {
    %c0_i32 = arith.constant 0 : i32
    %c0_i32_0 = arith.constant 0 : i32
    %c0_i32_1 = arith.constant 0 : i32
    return %c0_i32, %c0_i32_0 : i32, i32
  }
  func.func @transform_2(%arg0: i32) -> (i32, i32, i32) {
    %c0_i32 = arith.constant 0 : i32
    %c0_i32_0 = arith.constant 0 : i32
    %c0_i32_1 = arith.constant 0 : i32
    return %arg0, %c0_i32, %c0_i32_0 : i32, i32, i32
  }
  func.func @transform_3(%arg0: i32) -> (i32, i32, i32) {
    %c0_i32 = arith.constant 0 : i32
    %c0_i32_0 = arith.constant 0 : i32
    %c0_i32_1 = arith.constant 0 : i32
    return %arg0, %c0_i32, %c0_i32_0 : i32, i32, i32
  }
  func.func @transform_4(%arg0: i32) -> (i32, i32, i32) {
    %c0_i32 = arith.constant 0 : i32
    %c0_i32_0 = arith.constant 0 : i32
    %c0_i32_1 = arith.constant 0 : i32
    return %arg0, %c0_i32, %c0_i32_0 : i32, i32, i32
  }
  func.func @transform_5(%arg0: i32) -> (i32, i32, i32) {
    %c0_i32 = arith.constant 0 : i32
    %c0_i32_0 = arith.constant 0 : i32
    %c0_i32_1 = arith.constant 0 : i32
    return %arg0, %c0_i32, %c0_i32_0 : i32, i32, i32
  }
  func.func @transform_6(%arg0: i32) -> (i32, i32) {
    %c0_i32 = arith.constant 0 : i32
    %c0_i32_0 = arith.constant 0 : i32
    return %c0_i32, %arg0 : i32, i32
  }
}

module attributes {stable_mosaic.version = 11 : i64} {
  func.func @_bigru_final_kernel(%arg0: i32, %arg1: memref<128x256xbf16, #tpu.memory_space<vmem>>, %arg2: memref<16x1xi32, #tpu.memory_space<vmem>>, %arg3: memref<1x256x384xbf16, #tpu.memory_space<vmem>>, %arg4: memref<1x128x384xbf16, #tpu.memory_space<vmem>>, %arg5: memref<1x1x384xf32, #tpu.memory_space<vmem>>, %arg6: memref<1x1x128xf32, #tpu.memory_space<vmem>>, %arg7: memref<1x128x32xbf16, #tpu.memory_space<vmem>>, %arg8: memref<1x16x32xf32, #tpu.memory_space<vmem>>, %arg9: memref<128x384xbf16, #tpu.memory_space<vmem>>) attributes {dimension_semantics = [#tpu.dimension_semantics<parallel>], iteration_bounds = array<i64: 2>, scalar_prefetch = 0 : i64, scratch_operands = 1 : i64, tpu.core_type = #tpu.core_type<tc>, window_params = [{pipeline_mode = #tpu.pipeline_mode<synchronous>, transform_indices = @transform_0, window_bounds = array<i64: 128, 256>}, {pipeline_mode = #tpu.pipeline_mode<synchronous>, transform_indices = @transform_1, window_bounds = array<i64: 16, 1>}, {transform_indices = @transform_2, window_bounds = array<i64: 1, 256, 384>}, {transform_indices = @transform_3, window_bounds = array<i64: 1, 128, 384>}, {transform_indices = @transform_4, window_bounds = array<i64: 1, 1, 384>}, {transform_indices = @transform_5, window_bounds = array<i64: 1, 1, 128>}, {transform_indices = @transform_6, window_bounds = array<i64: 1, 128, 32>}, {transform_indices = @transform_7, window_bounds = array<i64: 1, 16, 32>}]} {
    %c0 = arith.constant 0 : index
    %c0_0 = arith.constant 0 : index
    %c0_1 = arith.constant 0 : index
    %0 = vector.load %arg3[%c0, %c0_0, %c0_1] : memref<1x256x384xbf16, #tpu.memory_space<vmem>>, vector<1x256x384xbf16>
    %1 = vector.shape_cast %0 : vector<1x256x384xbf16> to vector<256x384xbf16>
    %c0_2 = arith.constant 0 : index
    %c0_3 = arith.constant 0 : index
    %c0_4 = arith.constant 0 : index
    %2 = vector.load %arg5[%c0_2, %c0_3, %c0_4] : memref<1x1x384xf32, #tpu.memory_space<vmem>>, vector<1x1x384xf32>
    %3 = vector.shape_cast %2 : vector<1x1x384xf32> to vector<1x384xf32>
    %c0_5 = arith.constant 0 : index
    %c0_6 = arith.constant 0 : index
    %4 = vector.load %arg1[%c0_5, %c0_6] : memref<128x256xbf16, #tpu.memory_space<vmem>>, vector<128x256xbf16>
    %cst = arith.constant dense<0.000000e+00> : vector<128x384xf32>
    %5 = tpu.matmul %4, %1, %cst {dimension_numbers = #tpu.dot_dimension_numbers<[1], [0], [0], [1], [0, 0, 1, 1], [], []>} : vector<128x256xbf16>, vector<256x384xbf16>, vector<128x384xf32> -> vector<128x384xf32>
    %6 = vector.broadcast %3 : vector<1x384xf32> to vector<128x384xf32>
    %7 = arith.addf %5, %6 : vector<128x384xf32>
    %8 = arith.truncf %7 : vector<128x384xf32> to vector<128x384xbf16>
    %c0_7 = arith.constant 0 : index
    %c0_8 = arith.constant 0 : index
    %9 = vector.load %arg9[%c0_7, %c0_8] : memref<128x384xbf16, #tpu.memory_space<vmem>>, vector<128x384xbf16>
    tpu.vector_store %arg9[%c0_7, %c0_8], %8 {strides = array<i32>} : memref<128x384xbf16, #tpu.memory_space<vmem>>, vector<128x384xbf16>,
    %c0_9 = arith.constant 0 : index
    %c0_10 = arith.constant 0 : index
    %c0_11 = arith.constant 0 : index
    %10 = vector.load %arg4[%c0_9, %c0_10, %c0_11] : memref<1x128x384xbf16, #tpu.memory_space<vmem>>, vector<1x128x384xbf16>
    %11 = vector.shape_cast %10 : vector<1x128x384xbf16> to vector<128x384xbf16>
    %c0_12 = arith.constant 0 : index
    %c0_13 = arith.constant 0 : index
    %c0_14 = arith.constant 0 : index
    %12 = vector.load %arg6[%c0_12, %c0_13, %c0_14] : memref<1x1x128xf32, #tpu.memory_space<vmem>>, vector<1x1x128xf32>
    %13 = vector.shape_cast %12 : vector<1x1x128xf32> to vector<1x128xf32>
    %c0_15 = arith.constant 0 : index
    %c0_16 = arith.constant 0 : index
    %14 = vector.load %arg2[%c0_15, %c0_16] : memref<16x1xi32, #tpu.memory_space<vmem>>, vector<16x1xi32>
    %cst_17 = arith.constant 0.000000e+00 : f32
    %15 = vector.broadcast %cst_17 : f32 to vector<16x128xf32>
    %c0_i32 = arith.constant 0 : i32
    %c0_i32_18 = arith.constant 0 : i32
    %16 = arith.cmpi eq, %arg0, %c0_i32_18 : i32
    %c7_i32 = arith.constant 7 : i32
    %17 = arith.subi %c7_i32, %c0_i32 : i32
    %18 = arith.select %16, %c0_i32, %17 : i32
    %c16_i32 = arith.constant 16 : i32
    %19 = arith.muli %18, %c16_i32 : i32
    %20 = tpu.assume_multiple %19, 16 : i32
    %21 = arith.index_cast %20 : i32 to index
    %c0_19 = arith.constant 0 : index
    %22 = vector.load %arg9[%21, %c0_19] : memref<128x384xbf16, #tpu.memory_space<vmem>>, vector<16x384xbf16>
    %23 = arith.truncf %15 : vector<16x128xf32> to vector<16x128xbf16>
    %cst_20 = arith.constant dense<0.000000e+00> : vector<16x384xf32>
    %24 = tpu.matmul %23, %11, %cst_20 {dimension_numbers = #tpu.dot_dimension_numbers<[1], [0], [0], [1], [0, 0, 1, 1], [], []>} : vector<16x128xbf16>, vector<128x384xbf16>, vector<16x384xf32> -> vector<16x384xf32>
    %25 = vector.extract_strided_slice %22 {offsets = [0, 0], sizes = [16, 128], strides = [1, 1]} : vector<16x384xbf16> to vector<16x128xbf16>
    %26 = vector.extract_strided_slice %24 {offsets = [0, 0], sizes = [16, 128], strides = [1, 1]} : vector<16x384xf32> to vector<16x128xf32>
    %27 = arith.extf %25 : vector<16x128xbf16> to vector<16x128xf32>
    %28 = arith.addf %27, %26 : vector<16x128xf32>
    %29 = arith.negf %28 : vector<16x128xf32>
    %30 = math.exp %29 : vector<16x128xf32>
    %cst_21 = arith.constant 1.000000e+00 : f32
    %31 = vector.broadcast %cst_21 : f32 to vector<16x128xf32>
    %32 = arith.addf %31, %30 : vector<16x128xf32>
    %33 = arith.divf %31, %32 : vector<16x128xf32>
    %34 = vector.extract_strided_slice %22 {offsets = [0, 128], sizes = [16, 128], strides = [1, 1]} : vector<16x384xbf16> to vector<16x128xbf16>
    %35 = vector.extract_strided_slice %24 {offsets = [0, 128], sizes = [16, 128], strides = [1, 1]} : vector<16x384xf32> to vector<16x128xf32>
    %36 = arith.extf %34 : vector<16x128xbf16> to vector<16x128xf32>
    %37 = arith.addf %36, %35 : vector<16x128xf32>
    %38 = arith.negf %37 : vector<16x128xf32>
    %39 = math.exp %38 : vector<16x128xf32>
    %cst_22 = arith.constant 1.000000e+00 : f32
    %40 = vector.broadcast %cst_22 : f32 to vector<16x128xf32>
    %41 = arith.addf %40, %39 : vector<16x128xf32>
    %42 = arith.divf %40, %41 : vector<16x128xf32>
    %43 = vector.extract_strided_slice %22 {offsets = [0, 256], sizes = [16, 128], strides = [1, 1]} : vector<16x384xbf16> to vector<16x128xbf16>
    %44 = vector.extract_strided_slice %24 {offsets = [0, 256], sizes = [16, 128], strides = [1, 1]} : vector<16x384xf32> to vector<16x128xf32>
    %45 = vector.broadcast %13 : vector<1x128xf32> to vector<16x128xf32>
    %46 = arith.addf %44, %45 : vector<16x128xf32>
    %47 = arith.mulf %33, %46 : vector<16x128xf32>
    %48 = arith.extf %43 : vector<16x128xbf16> to vector<16x128xf32>
    %49 = arith.addf %48, %47 : vector<16x128xf32>
    %50 = math.tanh %49 : vector<16x128xf32>
    %cst_23 = arith.constant 1.000000e+00 : f32
    %51 = vector.broadcast %cst_23 : f32 to vector<16x128xf32>
    %52 = arith.subf %51, %42 : vector<16x128xf32>
    %53 = arith.mulf %52, %50 : vector<16x128xf32>
    %54 = arith.mulf %42, %15 : vector<16x128xf32>
    %55 = arith.addf %53, %54 : vector<16x128xf32>
    %56 = vector.broadcast %18 : i32 to vector<16x1xi32>
    %57 = arith.cmpi slt, %56, %14 : vector<16x1xi32>
    %58 = vector.shape_cast %57 : vector<16x1xi1> to vector<16x1xi1>
    %59 = vector.broadcast %58 : vector<16x1xi1> to vector<16x128xi1>
    %60 = arith.select %59, %55, %15 : vector<16x128xi1>, vector<16x128xf32>
    %c1_i32 = arith.constant 1 : i32
    %c0_i32_24 = arith.constant 0 : i32
    %61 = arith.cmpi eq, %arg0, %c0_i32_24 : i32
    %c7_i32_25 = arith.constant 7 : i32
    %62 = arith.subi %c7_i32_25, %c1_i32 : i32
    %63 = arith.select %61, %c1_i32, %62 : i32
    %c16_i32_26 = arith.constant 16 : i32
    %64 = arith.muli %63, %c16_i32_26 : i32
    %65 = tpu.assume_multiple %64, 16 : i32
    %66 = arith.index_cast %65 : i32 to index
    %c0_27 = arith.constant 0 : index
    %67 = vector.load %arg9[%66, %c0_27] : memref<128x384xbf16, #tpu.memory_space<vmem>>, vector<16x384xbf16>
    %68 = arith.truncf %60 : vector<16x128xf32> to vector<16x128xbf16>
    %cst_28 = arith.constant dense<0.000000e+00> : vector<16x384xf32>
    %69 = tpu.matmul %68, %11, %cst_28 {dimension_numbers = #tpu.dot_dimension_numbers<[1], [0], [0], [1], [0, 0, 1, 1], [], []>} : vector<16x128xbf16>, vector<128x384xbf16>, vector<16x384xf32> -> vector<16x384xf32>
    %70 = vector.extract_strided_slice %67 {offsets = [0, 0], sizes = [16, 128], strides = [1, 1]} : vector<16x384xbf16> to vector<16x128xbf16>
    %71 = vector.extract_strided_slice %69 {offsets = [0, 0], sizes = [16, 128], strides = [1, 1]} : vector<16x384xf32> to vector<16x128xf32>
    %72 = arith.extf %70 : vector<16x128xbf16> to vector<16x128xf32>
    %73 = arith.addf %72, %71 : vector<16x128xf32>
    %74 = arith.negf %73 : vector<16x128xf32>
    %75 = math.exp %74 : vector<16x128xf32>
    %cst_29 = arith.constant 1.000000e+00 : f32
    %76 = vector.broadcast %cst_29 : f32 to vector<16x128xf32>
    %77 = arith.addf %76, %75 : vector<16x128xf32>
    %78 = arith.divf %76, %77 : vector<16x128xf32>
    %79 = vector.extract_strided_slice %67 {offsets = [0, 128], sizes = [16, 128], strides = [1, 1]} : vector<16x384xbf16> to vector<16x128xbf16>
    %80 = vector.extract_strided_slice %69 {offsets = [0, 128], sizes = [16, 128], strides = [1, 1]} : vector<16x384xf32> to vector<16x128xf32>
    %81 = arith.extf %79 : vector<16x128xbf16> to vector<16x128xf32>
    %82 = arith.addf %81, %80 : vector<16x128xf32>
    %83 = arith.negf %82 : vector<16x128xf32>
    %84 = math.exp %83 : vector<16x128xf32>
    %cst_30 = arith.constant 1.000000e+00 : f32
    %85 = vector.broadcast %cst_30 : f32 to vector<16x128xf32>
    %86 = arith.addf %85, %84 : vector<16x128xf32>
    %87 = arith.divf %85, %86 : vector<16x128xf32>
    %88 = vector.extract_strided_slice %67 {offsets = [0, 256], sizes = [16, 128], strides = [1, 1]} : vector<16x384xbf16> to vector<16x128xbf16>
    %89 = vector.extract_strided_slice %69 {offsets = [0, 256], sizes = [16, 128], strides = [1, 1]} : vector<16x384xf32> to vector<16x128xf32>
    %90 = vector.broadcast %13 : vector<1x128xf32> to vector<16x128xf32>
    %91 = arith.addf %89, %90 : vector<16x128xf32>
    %92 = arith.mulf %78, %91 : vector<16x128xf32>
    %93 = arith.extf %88 : vector<16x128xbf16> to vector<16x128xf32>
    %94 = arith.addf %93, %92 : vector<16x128xf32>
    %95 = math.tanh %94 : vector<16x128xf32>
    %cst_31 = arith.constant 1.000000e+00 : f32
    %96 = vector.broadcast %cst_31 : f32 to vector<16x128xf32>
    %97 = arith.subf %96, %87 : vector<16x128xf32>
    %98 = arith.mulf %97, %95 : vector<16x128xf32>
    %99 = arith.mulf %87, %60 : vector<16x128xf32>
    %100 = arith.addf %98, %99 : vector<16x128xf32>
    %101 = vector.broadcast %63 : i32 to vector<16x1xi32>
    %102 = arith.cmpi slt, %101, %14 : vector<16x1xi32>
    %103 = vector.shape_cast %102 : vector<16x1xi1> to vector<16x1xi1>
    %104 = vector.broadcast %103 : vector<16x1xi1> to vector<16x128xi1>
    %105 = arith.select %104, %100, %60 : vector<16x128xi1>, vector<16x128xf32>
    %c2_i32 = arith.constant 2 : i32
    %c0_i32_32 = arith.constant 0 : i32
    %106 = arith.cmpi eq, %arg0, %c0_i32_32 : i32
    %c7_i32_33 = arith.constant 7 : i32
    %107 = arith.subi %c7_i32_33, %c2_i32 : i32
    %108 = arith.select %106, %c2_i32, %107 : i32
    %c16_i32_34 = arith.constant 16 : i32
    %109 = arith.muli %108, %c16_i32_34 : i32
    %110 = tpu.assume_multiple %109, 16 : i32
    %111 = arith.index_cast %110 : i32 to index
    %c0_35 = arith.constant 0 : index
    %112 = vector.load %arg9[%111, %c0_35] : memref<128x384xbf16, #tpu.memory_space<vmem>>, vector<16x384xbf16>
    %113 = arith.truncf %105 : vector<16x128xf32> to vector<16x128xbf16>
    %cst_36 = arith.constant dense<0.000000e+00> : vector<16x384xf32>
    %114 = tpu.matmul %113, %11, %cst_36 {dimension_numbers = #tpu.dot_dimension_numbers<[1], [0], [0], [1], [0, 0, 1, 1], [], []>} : vector<16x128xbf16>, vector<128x384xbf16>, vector<16x384xf32> -> vector<16x384xf32>
    %115 = vector.extract_strided_slice %112 {offsets = [0, 0], sizes = [16, 128], strides = [1, 1]} : vector<16x384xbf16> to vector<16x128xbf16>
    %116 = vector.extract_strided_slice %114 {offsets = [0, 0], sizes = [16, 128], strides = [1, 1]} : vector<16x384xf32> to vector<16x128xf32>
    %117 = arith.extf %115 : vector<16x128xbf16> to vector<16x128xf32>
    %118 = arith.addf %117, %116 : vector<16x128xf32>
    %119 = arith.negf %118 : vector<16x128xf32>
    %120 = math.exp %119 : vector<16x128xf32>
    %cst_37 = arith.constant 1.000000e+00 : f32
    %121 = vector.broadcast %cst_37 : f32 to vector<16x128xf32>
    %122 = arith.addf %121, %120 : vector<16x128xf32>
    %123 = arith.divf %121, %122 : vector<16x128xf32>
    %124 = vector.extract_strided_slice %112 {offsets = [0, 128], sizes = [16, 128], strides = [1, 1]} : vector<16x384xbf16> to vector<16x128xbf16>
    %125 = vector.extract_strided_slice %114 {offsets = [0, 128], sizes = [16, 128], strides = [1, 1]} : vector<16x384xf32> to vector<16x128xf32>
    %126 = arith.extf %124 : vector<16x128xbf16> to vector<16x128xf32>
    %127 = arith.addf %126, %125 : vector<16x128xf32>
    %128 = arith.negf %127 : vector<16x128xf32>
    %129 = math.exp %128 : vector<16x128xf32>
    %cst_38 = arith.constant 1.000000e+00 : f32
    %130 = vector.broadcast %cst_38 : f32 to vector<16x128xf32>
    %131 = arith.addf %130, %129 : vector<16x128xf32>
    %132 = arith.divf %130, %131 : vector<16x128xf32>
    %133 = vector.extract_strided_slice %112 {offsets = [0, 256], sizes = [16, 128], strides = [1, 1]} : vector<16x384xbf16> to vector<16x128xbf16>
    %134 = vector.extract_strided_slice %114 {offsets = [0, 256], sizes = [16, 128], strides = [1, 1]} : vector<16x384xf32> to vector<16x128xf32>
    %135 = vector.broadcast %13 : vector<1x128xf32> to vector<16x128xf32>
    %136 = arith.addf %134, %135 : vector<16x128xf32>
    %137 = arith.mulf %123, %136 : vector<16x128xf32>
    %138 = arith.extf %133 : vector<16x128xbf16> to vector<16x128xf32>
    %139 = arith.addf %138, %137 : vector<16x128xf32>
    %140 = math.tanh %139 : vector<16x128xf32>
    %cst_39 = arith.constant 1.000000e+00 : f32
    %141 = vector.broadcast %cst_39 : f32 to vector<16x128xf32>
    %142 = arith.subf %141, %132 : vector<16x128xf32>
    %143 = arith.mulf %142, %140 : vector<16x128xf32>
    %144 = arith.mulf %132, %105 : vector<16x128xf32>
    %145 = arith.addf %143, %144 : vector<16x128xf32>
    %146 = vector.broadcast %108 : i32 to vector<16x1xi32>
    %147 = arith.cmpi slt, %146, %14 : vector<16x1xi32>
    %148 = vector.shape_cast %147 : vector<16x1xi1> to vector<16x1xi1>
    %149 = vector.broadcast %148 : vector<16x1xi1> to vector<16x128xi1>
    %150 = arith.select %149, %145, %105 : vector<16x128xi1>, vector<16x128xf32>
    %c3_i32 = arith.constant 3 : i32
    %c0_i32_40 = arith.constant 0 : i32
    %151 = arith.cmpi eq, %arg0, %c0_i32_40 : i32
    %c7_i32_41 = arith.constant 7 : i32
    %152 = arith.subi %c7_i32_41, %c3_i32 : i32
    %153 = arith.select %151, %c3_i32, %152 : i32
    %c16_i32_42 = arith.constant 16 : i32
    %154 = arith.muli %153, %c16_i32_42 : i32
    %155 = tpu.assume_multiple %154, 16 : i32
    %156 = arith.index_cast %155 : i32 to index
    %c0_43 = arith.constant 0 : index
    %157 = vector.load %arg9[%156, %c0_43] : memref<128x384xbf16, #tpu.memory_space<vmem>>, vector<16x384xbf16>
    %158 = arith.truncf %150 : vector<16x128xf32> to vector<16x128xbf16>
    %cst_44 = arith.constant dense<0.000000e+00> : vector<16x384xf32>
    %159 = tpu.matmul %158, %11, %cst_44 {dimension_numbers = #tpu.dot_dimension_numbers<[1], [0], [0], [1], [0, 0, 1, 1], [], []>} : vector<16x128xbf16>, vector<128x384xbf16>, vector<16x384xf32> -> vector<16x384xf32>
    %160 = vector.extract_strided_slice %157 {offsets = [0, 0], sizes = [16, 128], strides = [1, 1]} : vector<16x384xbf16> to vector<16x128xbf16>
    %161 = vector.extract_strided_slice %159 {offsets = [0, 0], sizes = [16, 128], strides = [1, 1]} : vector<16x384xf32> to vector<16x128xf32>
    %162 = arith.extf %160 : vector<16x128xbf16> to vector<16x128xf32>
    %163 = arith.addf %162, %161 : vector<16x128xf32>
    %164 = arith.negf %163 : vector<16x128xf32>
    %165 = math.exp %164 : vector<16x128xf32>
    %cst_45 = arith.constant 1.000000e+00 : f32
    %166 = vector.broadcast %cst_45 : f32 to vector<16x128xf32>
    %167 = arith.addf %166, %165 : vector<16x128xf32>
    %168 = arith.divf %166, %167 : vector<16x128xf32>
    %169 = vector.extract_strided_slice %157 {offsets = [0, 128], sizes = [16, 128], strides = [1, 1]} : vector<16x384xbf16> to vector<16x128xbf16>
    %170 = vector.extract_strided_slice %159 {offsets = [0, 128], sizes = [16, 128], strides = [1, 1]} : vector<16x384xf32> to vector<16x128xf32>
    %171 = arith.extf %169 : vector<16x128xbf16> to vector<16x128xf32>
    %172 = arith.addf %171, %170 : vector<16x128xf32>
    %173 = arith.negf %172 : vector<16x128xf32>
    %174 = math.exp %173 : vector<16x128xf32>
    %cst_46 = arith.constant 1.000000e+00 : f32
    %175 = vector.broadcast %cst_46 : f32 to vector<16x128xf32>
    %176 = arith.addf %175, %174 : vector<16x128xf32>
    %177 = arith.divf %175, %176 : vector<16x128xf32>
    %178 = vector.extract_strided_slice %157 {offsets = [0, 256], sizes = [16, 128], strides = [1, 1]} : vector<16x384xbf16> to vector<16x128xbf16>
    %179 = vector.extract_strided_slice %159 {offsets = [0, 256], sizes = [16, 128], strides = [1, 1]} : vector<16x384xf32> to vector<16x128xf32>
    %180 = vector.broadcast %13 : vector<1x128xf32> to vector<16x128xf32>
    %181 = arith.addf %179, %180 : vector<16x128xf32>
    %182 = arith.mulf %168, %181 : vector<16x128xf32>
    %183 = arith.extf %178 : vector<16x128xbf16> to vector<16x128xf32>
    %184 = arith.addf %183, %182 : vector<16x128xf32>
    %185 = math.tanh %184 : vector<16x128xf32>
    %cst_47 = arith.constant 1.000000e+00 : f32
    %186 = vector.broadcast %cst_47 : f32 to vector<16x128xf32>
    %187 = arith.subf %186, %177 : vector<16x128xf32>
    %188 = arith.mulf %187, %185 : vector<16x128xf32>
    %189 = arith.mulf %177, %150 : vector<16x128xf32>
    %190 = arith.addf %188, %189 : vector<16x128xf32>
    %191 = vector.broadcast %153 : i32 to vector<16x1xi32>
    %192 = arith.cmpi slt, %191, %14 : vector<16x1xi32>
    %193 = vector.shape_cast %192 : vector<16x1xi1> to vector<16x1xi1>
    %194 = vector.broadcast %193 : vector<16x1xi1> to vector<16x128xi1>
    %195 = arith.select %194, %190, %150 : vector<16x128xi1>, vector<16x128xf32>
    %c4_i32 = arith.constant 4 : i32
    %c0_i32_48 = arith.constant 0 : i32
    %196 = arith.cmpi eq, %arg0, %c0_i32_48 : i32
    %c7_i32_49 = arith.constant 7 : i32
    %197 = arith.subi %c7_i32_49, %c4_i32 : i32
    %198 = arith.select %196, %c4_i32, %197 : i32
    %c16_i32_50 = arith.constant 16 : i32
    %199 = arith.muli %198, %c16_i32_50 : i32
    %200 = tpu.assume_multiple %199, 16 : i32
    %201 = arith.index_cast %200 : i32 to index
    %c0_51 = arith.constant 0 : index
    %202 = vector.load %arg9[%201, %c0_51] : memref<128x384xbf16, #tpu.memory_space<vmem>>, vector<16x384xbf16>
    %203 = arith.truncf %195 : vector<16x128xf32> to vector<16x128xbf16>
    %cst_52 = arith.constant dense<0.000000e+00> : vector<16x384xf32>
    %204 = tpu.matmul %203, %11, %cst_52 {dimension_numbers = #tpu.dot_dimension_numbers<[1], [0], [0], [1], [0, 0, 1, 1], [], []>} : vector<16x128xbf16>, vector<128x384xbf16>, vector<16x384xf32> -> vector<16x384xf32>
    %205 = vector.extract_strided_slice %202 {offsets = [0, 0], sizes = [16, 128], strides = [1, 1]} : vector<16x384xbf16> to vector<16x128xbf16>
    %206 = vector.extract_strided_slice %204 {offsets = [0, 0], sizes = [16, 128], strides = [1, 1]} : vector<16x384xf32> to vector<16x128xf32>
    %207 = arith.extf %205 : vector<16x128xbf16> to vector<16x128xf32>
    %208 = arith.addf %207, %206 : vector<16x128xf32>
    %209 = arith.negf %208 : vector<16x128xf32>
    %210 = math.exp %209 : vector<16x128xf32>
    %cst_53 = arith.constant 1.000000e+00 : f32
    %211 = vector.broadcast %cst_53 : f32 to vector<16x128xf32>
    %212 = arith.addf %211, %210 : vector<16x128xf32>
    %213 = arith.divf %211, %212 : vector<16x128xf32>
    %214 = vector.extract_strided_slice %202 {offsets = [0, 128], sizes = [16, 128], strides = [1, 1]} : vector<16x384xbf16> to vector<16x128xbf16>
    %215 = vector.extract_strided_slice %204 {offsets = [0, 128], sizes = [16, 128], strides = [1, 1]} : vector<16x384xf32> to vector<16x128xf32>
    %216 = arith.extf %214 : vector<16x128xbf16> to vector<16x128xf32>
    %217 = arith.addf %216, %215 : vector<16x128xf32>
    %218 = arith.negf %217 : vector<16x128xf32>
    %219 = math.exp %218 : vector<16x128xf32>
    %cst_54 = arith.constant 1.000000e+00 : f32
    %220 = vector.broadcast %cst_54 : f32 to vector<16x128xf32>
    %221 = arith.addf %220, %219 : vector<16x128xf32>
    %222 = arith.divf %220, %221 : vector<16x128xf32>
    %223 = vector.extract_strided_slice %202 {offsets = [0, 256], sizes = [16, 128], strides = [1, 1]} : vector<16x384xbf16> to vector<16x128xbf16>
    %224 = vector.extract_strided_slice %204 {offsets = [0, 256], sizes = [16, 128], strides = [1, 1]} : vector<16x384xf32> to vector<16x128xf32>
    %225 = vector.broadcast %13 : vector<1x128xf32> to vector<16x128xf32>
    %226 = arith.addf %224, %225 : vector<16x128xf32>
    %227 = arith.mulf %213, %226 : vector<16x128xf32>
    %228 = arith.extf %223 : vector<16x128xbf16> to vector<16x128xf32>
    %229 = arith.addf %228, %227 : vector<16x128xf32>
    %230 = math.tanh %229 : vector<16x128xf32>
    %cst_55 = arith.constant 1.000000e+00 : f32
    %231 = vector.broadcast %cst_55 : f32 to vector<16x128xf32>
    %232 = arith.subf %231, %222 : vector<16x128xf32>
    %233 = arith.mulf %232, %230 : vector<16x128xf32>
    %234 = arith.mulf %222, %195 : vector<16x128xf32>
    %235 = arith.addf %233, %234 : vector<16x128xf32>
    %236 = vector.broadcast %198 : i32 to vector<16x1xi32>
    %237 = arith.cmpi slt, %236, %14 : vector<16x1xi32>
    %238 = vector.shape_cast %237 : vector<16x1xi1> to vector<16x1xi1>
    %239 = vector.broadcast %238 : vector<16x1xi1> to vector<16x128xi1>
    %240 = arith.select %239, %235, %195 : vector<16x128xi1>, vector<16x128xf32>
    %c5_i32 = arith.constant 5 : i32
    %c0_i32_56 = arith.constant 0 : i32
    %241 = arith.cmpi eq, %arg0, %c0_i32_56 : i32
    %c7_i32_57 = arith.constant 7 : i32
    %242 = arith.subi %c7_i32_57, %c5_i32 : i32
    %243 = arith.select %241, %c5_i32, %242 : i32
    %c16_i32_58 = arith.constant 16 : i32
    %244 = arith.muli %243, %c16_i32_58 : i32
    %245 = tpu.assume_multiple %244, 16 : i32
    %246 = arith.index_cast %245 : i32 to index
    %c0_59 = arith.constant 0 : index
    %247 = vector.load %arg9[%246, %c0_59] : memref<128x384xbf16, #tpu.memory_space<vmem>>, vector<16x384xbf16>
    %248 = arith.truncf %240 : vector<16x128xf32> to vector<16x128xbf16>
    %cst_60 = arith.constant dense<0.000000e+00> : vector<16x384xf32>
    %249 = tpu.matmul %248, %11, %cst_60 {dimension_numbers = #tpu.dot_dimension_numbers<[1], [0], [0], [1], [0, 0, 1, 1], [], []>} : vector<16x128xbf16>, vector<128x384xbf16>, vector<16x384xf32> -> vector<16x384xf32>
    %250 = vector.extract_strided_slice %247 {offsets = [0, 0], sizes = [16, 128], strides = [1, 1]} : vector<16x384xbf16> to vector<16x128xbf16>
    %251 = vector.extract_strided_slice %249 {offsets = [0, 0], sizes = [16, 128], strides = [1, 1]} : vector<16x384xf32> to vector<16x128xf32>
    %252 = arith.extf %250 : vector<16x128xbf16> to vector<16x128xf32>
    %253 = arith.addf %252, %251 : vector<16x128xf32>
    %254 = arith.negf %253 : vector<16x128xf32>
    %255 = math.exp %254 : vector<16x128xf32>
    %cst_61 = arith.constant 1.000000e+00 : f32
    %256 = vector.broadcast %cst_61 : f32 to vector<16x128xf32>
    %257 = arith.addf %256, %255 : vector<16x128xf32>
    %258 = arith.divf %256, %257 : vector<16x128xf32>
    %259 = vector.extract_strided_slice %247 {offsets = [0, 128], sizes = [16, 128], strides = [1, 1]} : vector<16x384xbf16> to vector<16x128xbf16>
    %260 = vector.extract_strided_slice %249 {offsets = [0, 128], sizes = [16, 128], strides = [1, 1]} : vector<16x384xf32> to vector<16x128xf32>
    %261 = arith.extf %259 : vector<16x128xbf16> to vector<16x128xf32>
    %262 = arith.addf %261, %260 : vector<16x128xf32>
    %263 = arith.negf %262 : vector<16x128xf32>
    %264 = math.exp %263 : vector<16x128xf32>
    %cst_62 = arith.constant 1.000000e+00 : f32
    %265 = vector.broadcast %cst_62 : f32 to vector<16x128xf32>
    %266 = arith.addf %265, %264 : vector<16x128xf32>
    %267 = arith.divf %265, %266 : vector<16x128xf32>
    %268 = vector.extract_strided_slice %247 {offsets = [0, 256], sizes = [16, 128], strides = [1, 1]} : vector<16x384xbf16> to vector<16x128xbf16>
    %269 = vector.extract_strided_slice %249 {offsets = [0, 256], sizes = [16, 128], strides = [1, 1]} : vector<16x384xf32> to vector<16x128xf32>
    %270 = vector.broadcast %13 : vector<1x128xf32> to vector<16x128xf32>
    %271 = arith.addf %269, %270 : vector<16x128xf32>
    %272 = arith.mulf %258, %271 : vector<16x128xf32>
    %273 = arith.extf %268 : vector<16x128xbf16> to vector<16x128xf32>
    %274 = arith.addf %273, %272 : vector<16x128xf32>
    %275 = math.tanh %274 : vector<16x128xf32>
    %cst_63 = arith.constant 1.000000e+00 : f32
    %276 = vector.broadcast %cst_63 : f32 to vector<16x128xf32>
    %277 = arith.subf %276, %267 : vector<16x128xf32>
    %278 = arith.mulf %277, %275 : vector<16x128xf32>
    %279 = arith.mulf %267, %240 : vector<16x128xf32>
    %280 = arith.addf %278, %279 : vector<16x128xf32>
    %281 = vector.broadcast %243 : i32 to vector<16x1xi32>
    %282 = arith.cmpi slt, %281, %14 : vector<16x1xi32>
    %283 = vector.shape_cast %282 : vector<16x1xi1> to vector<16x1xi1>
    %284 = vector.broadcast %283 : vector<16x1xi1> to vector<16x128xi1>
    %285 = arith.select %284, %280, %240 : vector<16x128xi1>, vector<16x128xf32>
    %c6_i32 = arith.constant 6 : i32
    %c0_i32_64 = arith.constant 0 : i32
    %286 = arith.cmpi eq, %arg0, %c0_i32_64 : i32
    %c7_i32_65 = arith.constant 7 : i32
    %287 = arith.subi %c7_i32_65, %c6_i32 : i32
    %288 = arith.select %286, %c6_i32, %287 : i32
    %c16_i32_66 = arith.constant 16 : i32
    %289 = arith.muli %288, %c16_i32_66 : i32
    %290 = tpu.assume_multiple %289, 16 : i32
    %291 = arith.index_cast %290 : i32 to index
    %c0_67 = arith.constant 0 : index
    %292 = vector.load %arg9[%291, %c0_67] : memref<128x384xbf16, #tpu.memory_space<vmem>>, vector<16x384xbf16>
    %293 = arith.truncf %285 : vector<16x128xf32> to vector<16x128xbf16>
    %cst_68 = arith.constant dense<0.000000e+00> : vector<16x384xf32>
    %294 = tpu.matmul %293, %11, %cst_68 {dimension_numbers = #tpu.dot_dimension_numbers<[1], [0], [0], [1], [0, 0, 1, 1], [], []>} : vector<16x128xbf16>, vector<128x384xbf16>, vector<16x384xf32> -> vector<16x384xf32>
    %295 = vector.extract_strided_slice %292 {offsets = [0, 0], sizes = [16, 128], strides = [1, 1]} : vector<16x384xbf16> to vector<16x128xbf16>
    %296 = vector.extract_strided_slice %294 {offsets = [0, 0], sizes = [16, 128], strides = [1, 1]} : vector<16x384xf32> to vector<16x128xf32>
    %297 = arith.extf %295 : vector<16x128xbf16> to vector<16x128xf32>
    %298 = arith.addf %297, %296 : vector<16x128xf32>
    %299 = arith.negf %298 : vector<16x128xf32>
    %300 = math.exp %299 : vector<16x128xf32>
    %cst_69 = arith.constant 1.000000e+00 : f32
    %301 = vector.broadcast %cst_69 : f32 to vector<16x128xf32>
    %302 = arith.addf %301, %300 : vector<16x128xf32>
    %303 = arith.divf %301, %302 : vector<16x128xf32>
    %304 = vector.extract_strided_slice %292 {offsets = [0, 128], sizes = [16, 128], strides = [1, 1]} : vector<16x384xbf16> to vector<16x128xbf16>
    %305 = vector.extract_strided_slice %294 {offsets = [0, 128], sizes = [16, 128], strides = [1, 1]} : vector<16x384xf32> to vector<16x128xf32>
    %306 = arith.extf %304 : vector<16x128xbf16> to vector<16x128xf32>
    %307 = arith.addf %306, %305 : vector<16x128xf32>
    %308 = arith.negf %307 : vector<16x128xf32>
    %309 = math.exp %308 : vector<16x128xf32>
    %cst_70 = arith.constant 1.000000e+00 : f32
    %310 = vector.broadcast %cst_70 : f32 to vector<16x128xf32>
    %311 = arith.addf %310, %309 : vector<16x128xf32>
    %312 = arith.divf %310, %311 : vector<16x128xf32>
    %313 = vector.extract_strided_slice %292 {offsets = [0, 256], sizes = [16, 128], strides = [1, 1]} : vector<16x384xbf16> to vector<16x128xbf16>
    %314 = vector.extract_strided_slice %294 {offsets = [0, 256], sizes = [16, 128], strides = [1, 1]} : vector<16x384xf32> to vector<16x128xf32>
    %315 = vector.broadcast %13 : vector<1x128xf32> to vector<16x128xf32>
    %316 = arith.addf %314, %315 : vector<16x128xf32>
    %317 = arith.mulf %303, %316 : vector<16x128xf32>
    %318 = arith.extf %313 : vector<16x128xbf16> to vector<16x128xf32>
    %319 = arith.addf %318, %317 : vector<16x128xf32>
    %320 = math.tanh %319 : vector<16x128xf32>
    %cst_71 = arith.constant 1.000000e+00 : f32
    %321 = vector.broadcast %cst_71 : f32 to vector<16x128xf32>
    %322 = arith.subf %321, %312 : vector<16x128xf32>
    %323 = arith.mulf %322, %320 : vector<16x128xf32>
    %324 = arith.mulf %312, %285 : vector<16x128xf32>
    %325 = arith.addf %323, %324 : vector<16x128xf32>
    %326 = vector.broadcast %288 : i32 to vector<16x1xi32>
    %327 = arith.cmpi slt, %326, %14 : vector<16x1xi32>
    %328 = vector.shape_cast %327 : vector<16x1xi1> to vector<16x1xi1>
    %329 = vector.broadcast %328 : vector<16x1xi1> to vector<16x128xi1>
    %330 = arith.select %329, %325, %285 : vector<16x128xi1>, vector<16x128xf32>
    %c7_i32_72 = arith.constant 7 : i32
    %c0_i32_73 = arith.constant 0 : i32
    %331 = arith.cmpi eq, %arg0, %c0_i32_73 : i32
    %c7_i32_74 = arith.constant 7 : i32
    %332 = arith.subi %c7_i32_74, %c7_i32_72 : i32
    %333 = arith.select %331, %c7_i32_72, %332 : i32
    %c16_i32_75 = arith.constant 16 : i32
    %334 = arith.muli %333, %c16_i32_75 : i32
    %335 = tpu.assume_multiple %334, 16 : i32
    %336 = arith.index_cast %335 : i32 to index
    %c0_76 = arith.constant 0 : index
    %337 = vector.load %arg9[%336, %c0_76] : memref<128x384xbf16, #tpu.memory_space<vmem>>, vector<16x384xbf16>
    %338 = arith.truncf %330 : vector<16x128xf32> to vector<16x128xbf16>
    %cst_77 = arith.constant dense<0.000000e+00> : vector<16x384xf32>
    %339 = tpu.matmul %338, %11, %cst_77 {dimension_numbers = #tpu.dot_dimension_numbers<[1], [0], [0], [1], [0, 0, 1, 1], [], []>} : vector<16x128xbf16>, vector<128x384xbf16>, vector<16x384xf32> -> vector<16x384xf32>
    %340 = vector.extract_strided_slice %337 {offsets = [0, 0], sizes = [16, 128], strides = [1, 1]} : vector<16x384xbf16> to vector<16x128xbf16>
    %341 = vector.extract_strided_slice %339 {offsets = [0, 0], sizes = [16, 128], strides = [1, 1]} : vector<16x384xf32> to vector<16x128xf32>
    %342 = arith.extf %340 : vector<16x128xbf16> to vector<16x128xf32>
    %343 = arith.addf %342, %341 : vector<16x128xf32>
    %344 = arith.negf %343 : vector<16x128xf32>
    %345 = math.exp %344 : vector<16x128xf32>
    %cst_78 = arith.constant 1.000000e+00 : f32
    %346 = vector.broadcast %cst_78 : f32 to vector<16x128xf32>
    %347 = arith.addf %346, %345 : vector<16x128xf32>
    %348 = arith.divf %346, %347 : vector<16x128xf32>
    %349 = vector.extract_strided_slice %337 {offsets = [0, 128], sizes = [16, 128], strides = [1, 1]} : vector<16x384xbf16> to vector<16x128xbf16>
    %350 = vector.extract_strided_slice %339 {offsets = [0, 128], sizes = [16, 128], strides = [1, 1]} : vector<16x384xf32> to vector<16x128xf32>
    %351 = arith.extf %349 : vector<16x128xbf16> to vector<16x128xf32>
    %352 = arith.addf %351, %350 : vector<16x128xf32>
    %353 = arith.negf %352 : vector<16x128xf32>
    %354 = math.exp %353 : vector<16x128xf32>
    %cst_79 = arith.constant 1.000000e+00 : f32
    %355 = vector.broadcast %cst_79 : f32 to vector<16x128xf32>
    %356 = arith.addf %355, %354 : vector<16x128xf32>
    %357 = arith.divf %355, %356 : vector<16x128xf32>
    %358 = vector.extract_strided_slice %337 {offsets = [0, 256], sizes = [16, 128], strides = [1, 1]} : vector<16x384xbf16> to vector<16x128xbf16>
    %359 = vector.extract_strided_slice %339 {offsets = [0, 256], sizes = [16, 128], strides = [1, 1]} : vector<16x384xf32> to vector<16x128xf32>
    %360 = vector.broadcast %13 : vector<1x128xf32> to vector<16x128xf32>
    %361 = arith.addf %359, %360 : vector<16x128xf32>
    %362 = arith.mulf %348, %361 : vector<16x128xf32>
    %363 = arith.extf %358 : vector<16x128xbf16> to vector<16x128xf32>
    %364 = arith.addf %363, %362 : vector<16x128xf32>
    %365 = math.tanh %364 : vector<16x128xf32>
    %cst_80 = arith.constant 1.000000e+00 : f32
    %366 = vector.broadcast %cst_80 : f32 to vector<16x128xf32>
    %367 = arith.subf %366, %357 : vector<16x128xf32>
    %368 = arith.mulf %367, %365 : vector<16x128xf32>
    %369 = arith.mulf %357, %330 : vector<16x128xf32>
    %370 = arith.addf %368, %369 : vector<16x128xf32>
    %371 = vector.broadcast %333 : i32 to vector<16x1xi32>
    %372 = arith.cmpi slt, %371, %14 : vector<16x1xi32>
    %373 = vector.shape_cast %372 : vector<16x1xi1> to vector<16x1xi1>
    %374 = vector.broadcast %373 : vector<16x1xi1> to vector<16x128xi1>
    %375 = arith.select %374, %370, %330 : vector<16x128xi1>, vector<16x128xf32>
    %c8_i32 = arith.constant 8 : i32
    %376 = arith.truncf %375 : vector<16x128xf32> to vector<16x128xbf16>
    %c0_81 = arith.constant 0 : index
    %c0_82 = arith.constant 0 : index
    %c0_83 = arith.constant 0 : index
    %377 = vector.load %arg7[%c0_81, %c0_82, %c0_83] : memref<1x128x32xbf16, #tpu.memory_space<vmem>>, vector<1x128x32xbf16>
    %378 = vector.shape_cast %377 : vector<1x128x32xbf16> to vector<128x32xbf16>
    %cst_84 = arith.constant dense<0.000000e+00> : vector<16x32xf32>
    %379 = tpu.matmul %376, %378, %cst_84 {dimension_numbers = #tpu.dot_dimension_numbers<[1], [0], [0], [1], [0, 0, 1, 1], [], []>} : vector<16x128xbf16>, vector<128x32xbf16>, vector<16x32xf32> -> vector<16x32xf32>
    %c0_85 = arith.constant 0 : index
    %c0_86 = arith.constant 0 : index
    %c0_87 = arith.constant 0 : index
    %380 = vector.load %arg8[%c0_85, %c0_86, %c0_87] : memref<1x16x32xf32, #tpu.memory_space<vmem>>, vector<1x16x32xf32>
    %381 = vector.shape_cast %380 : vector<1x16x32xf32> to vector<16x32xf32>
    %382 = vector.shape_cast %379 : vector<16x32xf32> to vector<1x16x32xf32>
    tpu.vector_store %arg8[%c0_85, %c0_86, %c0_87], %382 {strides = array<i32>} : memref<1x16x32xf32, #tpu.memory_space<vmem>>, vector<1x16x32xf32>,
    return
  }
  func.func @transform_0(%arg0: i32) -> (i32, i32) {
    %c0_i32 = arith.constant 0 : i32
    %c0_i32_0 = arith.constant 0 : i32
    %c0_i32_1 = arith.constant 0 : i32
    return %c0_i32, %c0_i32_0 : i32, i32
  }
  func.func @transform_1(%arg0: i32) -> (i32, i32) {
    %c0_i32 = arith.constant 0 : i32
    %c0_i32_0 = arith.constant 0 : i32
    %c0_i32_1 = arith.constant 0 : i32
    return %c0_i32, %c0_i32_0 : i32, i32
  }
  func.func @transform_2(%arg0: i32) -> (i32, i32, i32) {
    %c0_i32 = arith.constant 0 : i32
    %c0_i32_0 = arith.constant 0 : i32
    %c0_i32_1 = arith.constant 0 : i32
    return %arg0, %c0_i32, %c0_i32_0 : i32, i32, i32
  }
  func.func @transform_3(%arg0: i32) -> (i32, i32, i32) {
    %c0_i32 = arith.constant 0 : i32
    %c0_i32_0 = arith.constant 0 : i32
    %c0_i32_1 = arith.constant 0 : i32
    return %arg0, %c0_i32, %c0_i32_0 : i32, i32, i32
  }
  func.func @transform_4(%arg0: i32) -> (i32, i32, i32) {
    %c0_i32 = arith.constant 0 : i32
    %c0_i32_0 = arith.constant 0 : i32
    %c0_i32_1 = arith.constant 0 : i32
    return %arg0, %c0_i32, %c0_i32_0 : i32, i32, i32
  }
  func.func @transform_5(%arg0: i32) -> (i32, i32, i32) {
    %c0_i32 = arith.constant 0 : i32
    %c0_i32_0 = arith.constant 0 : i32
    %c0_i32_1 = arith.constant 0 : i32
    return %arg0, %c0_i32, %c0_i32_0 : i32, i32, i32
  }
  func.func @transform_6(%arg0: i32) -> (i32, i32, i32) {
    %c0_i32 = arith.constant 0 : i32
    %c0_i32_0 = arith.constant 0 : i32
    %c0_i32_1 = arith.constant 0 : i32
    return %arg0, %c0_i32, %c0_i32_0 : i32, i32, i32
  }
  func.func @transform_7(%arg0: i32) -> (i32, i32, i32) {
    %c0_i32 = arith.constant 0 : i32
    %c0_i32_0 = arith.constant 0 : i32
    %c0_i32_1 = arith.constant 0 : i32
    return %arg0, %c0_i32, %c0_i32_0 : i32, i32, i32
  }
}

</mosaic_0001>

<llo_original>
// kernel: relation_encoder_forward.2
$region0: #{relation_encoder_forward.2}
  #allocation0 [shape = 'u32[]', space=smem, size = 0x4, offset = 0x4, fixed_abs, tag = 'smem constant byte address 0x4 - core index']
  #allocation1 [shape = 'u32[144,128]{1,0:T(1,128)}', space=vmem, size = 0x12000, scoped, tag = 'internal scratch']
  #allocation2 [shape = 'bf16[128,384]{1,0:T(16,128)(2,1)}', space=vmem, size = 0x18000, scoped, tag = 'scratch operand']
  %s0 = inlined_call_operand.vmem [shape: bf16[128,16], index: 0, kind: input, shape index: {}]
  %s1 = inlined_call_operand.vmem [shape: s32[16,1], index: 1, kind: input, shape index: {}]
  %s2 = inlined_call_operand.vmem [shape: bf16[2,16,384], index: 2, kind: input, shape index: {}]
  %s3 = inlined_call_operand.vmem [shape: bf16[2,128,384], index: 3, kind: input, shape index: {}]
  %s4 = inlined_call_operand.hbm [shape: f32[2,1,384], index: 4, kind: input, shape index: {}]
  %s5 = inlined_call_operand.hbm [shape: f32[2,1,128], index: 5, kind: input, shape index: {}]
  %s6 = inlined_call_operand.vmem [shape: bf16[128,256], index: 6, kind: output, shape index: {}]
  %s7 = sld [smem:[#allocation0]]
  $region102: #{relation_encoder_forward.2} parent=0
    _
  %s9 = ssub.s32 1, %s7
  %s10 = scalar_select 0, %s9, %s7
  $region1: #{relation_encoder_forward.2} parent=0
    #allocation3 [shape = 'u8[3072]{0}', space=vmem, size = 0xc00, scoped, tag = 'input window, operand 4']
    #allocation4 [shape = 's32[2]{0}', space=sflag, size = 0x8, scoped, tag = 'scoped memory for relation_encoder_forward.2']
    #allocation5 [shape = 'u8[1024]{0}', space=vmem, size = 0x400, scoped, tag = 'input window, operand 5']
    #allocation6 [shape = 's32[2]{0}', space=sflag, size = 0x8, scoped, tag = 'scoped memory for relation_encoder_forward.2']
    #allocation7 [shape = 'u8[65536]{0}', space=vmem, size = 0x10000, scoped, tag = 'output window, operand 0']
    %11 = vsyncpa [#allocation4], 0
    %s12 = scalar_lea.sflag [#allocation4], 1
    %13 = vsyncpa %s12, 0
    %14 = vsyncpa [#allocation6], 0
    %s15 = scalar_lea.sflag [#allocation6], 1
    %16 = vsyncpa %s15, 0
    loop: start=0, step=1, limit=4
    $region2: #{relation_encoder_forward.2} parent=1 // loop_pre_header
      _
    $region3: #{relation_encoder_forward.2} parent=1 // loop_header
      %s18 = sphi 0, %s22
      %p19 = scmp.ge.s32.totalorder %s18, 4
      %s26 = sphi 0, %s26
      %s28 = sphi 0, %s26
      %s29 = sphi 0, %s28
      %s43 = sphi 0, %s29
      %s47 = sphi 0, %s47
      %s49 = sphi 0, %s47
      %s50 = sphi 0, %s49
      %s64 = sphi 0, %s50
      %s70 = sphi 0, %s72
      %s73 = sphi 0, %s70
      %s74 = sphi 0, %s73
      %s90 = sphi 0, %s74
      %s96 = sphi 0, %s98
      %s99 = sphi 0, %s96
      %s100 = sphi 0, %s99
      %s116 = sphi 0, %s100
      %s122 = sphi 0, %s124
      %s125 = sphi 0, %s122
      %s126 = sphi 0, %s125
      %s142 = sphi 0, %s126
      %s148 = sphi 0, %s150
      %s151 = sphi 0, %s148
      %s152 = sphi 0, %s151
      %s168 = sphi 0, %s152
      %s174 = sphi 0, %s176
      %s177 = sphi 0, %s174
      %s178 = sphi 0, %s177
      %s194 = sphi 0, %s178
    $region4: #{relation_encoder_forward.2} parent=1 // loop_header_branch
      %21 = sbr.rel (%p19) target = $region8
    $region5: #{relation_encoder_forward.2} parent=1 // loop_body
      %s23 = ssub.s32 %s18, 1
      %s24 = ssub.s32 %s18, 2
      %s25 = sadd.s32 %s18, 1
      %s27 = sadd.s32 %s26, 1
      %p30 = scmp.eq.s32.totalorder %s18, 1
      %p31 = scmp.ne.s32.totalorder %s26, %s28
      %p32 = scmp.eq.s32.totalorder %s18, 0
      %p33 = por %p31, %p32
      %p34 = scmp.ne.s32.totalorder %s26, %s28
      %p35 = scmp.eq.s32.totalorder %s23, 1
      %p36 = por %p34, %p35
      %p37 = scmp.ne.s32.totalorder %s28, %s29
      %p38 = scmp.eq.s32.totalorder %s23, 0
      %p39 = por %p37, %p38
      %p40 = scmp.ne.s32.totalorder %s28, %s29
      %p41 = scmp.eq.s32.totalorder %s24, 1
      %p42 = por %p40, %p41
      %p44 = scmp.ne.s32.totalorder %s29, %s43
      %p45 = scmp.eq.s32.totalorder %s24, 0
      %p46 = por %p44, %p45
      %s48 = sadd.s32 %s47, 1
      %p51 = scmp.eq.s32.totalorder %s18, 1
      %p52 = scmp.ne.s32.totalorder %s47, %s49
      %p53 = scmp.eq.s32.totalorder %s18, 0
      %p54 = por %p52, %p53
      %p55 = scmp.ne.s32.totalorder %s47, %s49
      %p56 = scmp.eq.s32.totalorder %s23, 1
      %p57 = por %p55, %p56
      %p58 = scmp.ne.s32.totalorder %s49, %s50
      %p59 = scmp.eq.s32.totalorder %s23, 0
      %p60 = por %p58, %p59
      %p61 = scmp.ne.s32.totalorder %s49, %s50
      %p62 = scmp.eq.s32.totalorder %s24, 1
      %p63 = por %p61, %p62
      %p65 = scmp.ne.s32.totalorder %s50, %s64
      %p66 = scmp.eq.s32.totalorder %s24, 0
      %p67 = por %p65, %p66
      %s68 = ssub.s32 %s18, %s25
      %p69 = scmp.eq.s32.totalorder %s68, 0
      %s71 = sadd.s32 %s70, 1
      %s72 = scalar_select %p69, %s70, %s71
      %p75 = pneg %p69
      %p76 = scmp.eq.s32.totalorder %s18, 1
      %p77 = por %p75, %p76
      %p78 = scmp.ne.s32.totalorder %s70, %s73
      %p79 = scmp.eq.s32.totalorder %s18, 0
      %p80 = por %p78, %p79
      %p81 = scmp.ne.s32.totalorder %s70, %s73
      %p82 = scmp.eq.s32.totalorder %s23, 1
      %p83 = por %p81, %p82
      %p84 = scmp.ne.s32.totalorder %s73, %s74
      %p85 = scmp.eq.s32.totalorder %s23, 0
      %p86 = por %p84, %p85
      %p87 = scmp.ne.s32.totalorder %s73, %s74
      %p88 = scmp.eq.s32.totalorder %s24, 1
      %p89 = por %p87, %p88
      %p91 = scmp.ne.s32.totalorder %s74, %s90
      %p92 = scmp.eq.s32.totalorder %s24, 0
      %p93 = por %p91, %p92
      %s94 = ssub.s32 %s18, %s25
      %p95 = scmp.eq.s32.totalorder %s94, 0
      %s97 = sadd.s32 %s96, 1
      %s98 = scalar_select %p95, %s96, %s97
      %p101 = pneg %p95
      %p102 = scmp.eq.s32.totalorder %s18, 1
      %p103 = por %p101, %p102
      %p104 = scmp.ne.s32.totalorder %s96, %s99
      %p105 = scmp.eq.s32.totalorder %s18, 0
      %p106 = por %p104, %p105
      %p107 = scmp.ne.s32.totalorder %s96, %s99
      %p108 = scmp.eq.s32.totalorder %s23, 1
      %p109 = por %p107, %p108
      %p110 = scmp.ne.s32.totalorder %s99, %s100
      %p111 = scmp.eq.s32.totalorder %s23, 0
      %p112 = por %p110, %p111
      %p113 = scmp.ne.s32.totalorder %s99, %s100
      %p114 = scmp.eq.s32.totalorder %s24, 1
      %p115 = por %p113, %p114
      %p117 = scmp.ne.s32.totalorder %s100, %s116
      %p118 = scmp.eq.s32.totalorder %s24, 0
      %p119 = por %p117, %p118
      %s120 = ssub.s32 %s18, %s25
      %p121 = scmp.eq.s32.totalorder %s120, 0
      %s123 = sadd.s32 %s122, 1
      %s124 = scalar_select %p121, %s122, %s123
      %p127 = pneg %p121
      %p128 = scmp.eq.s32.totalorder %s18, 1
      %p129 = por %p127, %p128
      %p130 = scmp.ne.s32.totalorder %s122, %s125
      %p131 = scmp.eq.s32.totalorder %s18, 0
      %p132 = por %p130, %p131
      %p133 = scmp.ne.s32.totalorder %s122, %s125
      %p134 = scmp.eq.s32.totalorder %s23, 1
      %p135 = por %p133, %p134
      %p136 = scmp.ne.s32.totalorder %s125, %s126
      %p137 = scmp.eq.s32.totalorder %s23, 0
      %p138 = por %p136, %p137
      %p139 = scmp.ne.s32.totalorder %s125, %s126
      %p140 = scmp.eq.s32.totalorder %s24, 1
      %p141 = por %p139, %p140
      %p143 = scmp.ne.s32.totalorder %s126, %s142
      %p144 = scmp.eq.s32.totalorder %s24, 0
      %p145 = por %p143, %p144
      %s146 = ssub.s32 %s18, %s25
      %p147 = scmp.eq.s32.totalorder %s146, 0
      %s149 = sadd.s32 %s148, 1
      %s150 = scalar_select %p147, %s148, %s149
      %p153 = pneg %p147
      %p154 = scmp.eq.s32.totalorder %s18, 1
      %p155 = por %p153, %p154
      %p156 = scmp.ne.s32.totalorder %s148, %s151
      %p157 = scmp.eq.s32.totalorder %s18, 0
      %p158 = por %p156, %p157
      %p159 = scmp.ne.s32.totalorder %s148, %s151
      %p160 = scmp.eq.s32.totalorder %s23, 1
      %p161 = por %p159, %p160
      %p162 = scmp.ne.s32.totalorder %s151, %s152
      %p163 = scmp.eq.s32.totalorder %s23, 0
      %p164 = por %p162, %p163
      %p165 = scmp.ne.s32.totalorder %s151, %s152
      %p166 = scmp.eq.s32.totalorder %s24, 1
      %p167 = por %p165, %p166
      %p169 = scmp.ne.s32.totalorder %s152, %s168
      %p170 = scmp.eq.s32.totalorder %s24, 0
      %p171 = por %p169, %p170
      %s172 = ssub.s32 %s18, %s25
      %p173 = scmp.eq.s32.totalorder %s172, 0
      %s175 = sadd.s32 %s174, 1
      %s176 = scalar_select %p173, %s174, %s175
      %p179 = pneg %p173
      %p180 = scmp.eq.s32.totalorder %s18, 1
      %p181 = por %p179, %p180
      %p182 = scmp.ne.s32.totalorder %s174, %s177
      %p183 = scmp.eq.s32.totalorder %s18, 0
      %p184 = por %p182, %p183
      %p185 = scmp.ne.s32.totalorder %s174, %s177
      %p186 = scmp.eq.s32.totalorder %s23, 1
      %p187 = por %p185, %p186
      %p188 = scmp.ne.s32.totalorder %s177, %s178
      %p189 = scmp.eq.s32.totalorder %s23, 0
      %p190 = por %p188, %p189
      %p191 = scmp.ne.s32.totalorder %s177, %s178
      %p192 = scmp.eq.s32.totalorder %s24, 1
      %p193 = por %p191, %p192
      %p195 = scmp.ne.s32.totalorder %s178, %s194
      %p196 = scmp.eq.s32.totalorder %s24, 0
      %p197 = por %p195, %p196
      %p198 = scmp.le.s32.totalorder 1, %s18
      %p199 = scmp.lt.s32.totalorder %s18, 3
      %p200 = pnand %p198, %p199
      %p201 = pneg %p200
      // Predicated region
      $region9: #{relation_encoder_forward.2} parent=5 // pred_check
        _
      $region10: #{relation_encoder_forward.2} parent=5 // pred_check_branch
        %203 = sbr.rel (%p200) target = $region12
      $region11: #{relation_encoder_forward.2} parent=5 // pred_region
        %s204 = ssub.s32 %s18, 1
        // Predicated region
        $region13: #{relation_encoder_forward.2} parent=11 // pred_check
          %p205 = pneg %p39
        $region14: #{relation_encoder_forward.2} parent=11 // pred_check_branch
          %207 = sbr.rel (%p205) target = $region16
        $region15: #{relation_encoder_forward.2} parent=11 // pred_region
          _
        $region16: #{relation_encoder_forward.2} parent=11 // pred_fallthru
          _
        // Predicated region
        $region17: #{relation_encoder_forward.2} parent=11 // pred_check
          %p208 = pneg %p60
        $region18: #{relation_encoder_forward.2} parent=11 // pred_check_branch
          %210 = sbr.rel (%p208) target = $region20
        $region19: #{relation_encoder_forward.2} parent=11 // pred_region
          _
        $region20: #{relation_encoder_forward.2} parent=11 // pred_fallthru
          _
      $region12: #{relation_encoder_forward.2} parent=5 // pred_fallthru
        _
      %p211 = scmp.lt.s32.totalorder %s18, 2
      // Predicated region
      $region21: #{relation_encoder_forward.2} parent=5 // pred_check
        %p212 = pneg %p211
      $region22: #{relation_encoder_forward.2} parent=5 // pred_check_branch
        %214 = sbr.rel (%p212) target = $region24
      $region23: #{relation_encoder_forward.2} parent=5 // pred_region
        // Predicated region
        $region25: #{relation_encoder_forward.2} parent=23 // pred_check
          %p215 = pneg %p80
        $region26: #{relation_encoder_forward.2} parent=23 // pred_check_branch
          %217 = sbr.rel (%p215) target = $region28
        $region27: #{relation_encoder_forward.2} parent=23 // pred_region
          %p218 = scmp.lt.s32.totalorder %s18, 1
          %s219 = scalar_select %p218, %s18, 1
          %s220 = smul.addr %s219, 6
          %s221 = smul.addr %s220, 4
          %s222 = scalar_lea.vmem %s2, %s221
        $region28: #{relation_encoder_forward.2} parent=23 // pred_fallthru
          _
        // Predicated region
        $region29: #{relation_encoder_forward.2} parent=23 // pred_check
          %p223 = pneg %p106
        $region30: #{relation_encoder_forward.2} parent=23 // pred_check_branch
          %225 = sbr.rel (%p223) target = $region32
        $region31: #{relation_encoder_forward.2} parent=23 // pred_region
          %p226 = scmp.lt.s32.totalorder %s18, 1
          %s227 = scalar_select %p226, %s18, 1
          %s228 = smul.addr %s227, 48
          %s229 = smul.addr %s228, 4
          %s230 = scalar_lea.vmem %s3, %s229
        $region32: #{relation_encoder_forward.2} parent=23 // pred_fallthru
          _
        // Predicated region
        $region33: #{relation_encoder_forward.2} parent=23 // pred_check
          %p231 = pneg %p132
        $region34: #{relation_encoder_forward.2} parent=23 // pred_check_branch
          %233 = sbr.rel (%p231) target = $region36
        $region35: #{relation_encoder_forward.2} parent=23 // pred_region
          %s234 = sand.u32 %s122, 1
          %s235 = scalar_lea.sflag [#allocation4], %s234
          %s236 = sand.u32 %s122, 1
          %s237 = smul.addr %s236, 3
          %s238 = scalar_lea.vmem [#allocation3], %s237
          %s240 = ssub.s32 48, 48
          %241 = vsyncadd %s235, %s240
          %s242 = smul.addr %s18, 3
          %s243 = smul.addr %s242, 16
          %s244 = scalar_lea.hbm %s4, %s243
          %s246 = sshll.u32 %s238, 4
          %s247 = int_to_ptr.vmem [resolvable:$true] %s246
          %249 = dma.hbm_to_vmem [thread:$0]  %s244, 48, %s247, %s235
        $region36: #{relation_encoder_forward.2} parent=23 // pred_fallthru
          _
        // Predicated region
        $region37: #{relation_encoder_forward.2} parent=23 // pred_check
          %p250 = pneg %p158
        $region38: #{relation_encoder_forward.2} parent=23 // pred_check_branch
          %252 = sbr.rel (%p250) target = $region40
        $region39: #{relation_encoder_forward.2} parent=23 // pred_region
          %s253 = sand.u32 %s148, 1
          %s254 = scalar_lea.sflag [#allocation6], %s253
          %s255 = sand.u32 %s148, 1
          %s256 = scalar_lea.vmem [#allocation5], %s255
          %s258 = ssub.s32 16, 16
          %259 = vsyncadd %s254, %s258
          %s260 = smul.addr %s18, 16
          %s261 = scalar_lea.hbm %s5, %s260
          %s263 = sshll.u32 %s256, 4
          %s264 = int_to_ptr.vmem [resolvable:$true] %s263
          %266 = dma.hbm_to_vmem [thread:$0]  %s261, 16, %s264, %s254
        $region40: #{relation_encoder_forward.2} parent=23 // pred_fallthru
          _
      $region24: #{relation_encoder_forward.2} parent=5 // pred_fallthru
        _
      %p267 = scmp.le.s32.totalorder 1, %s18
      %p268 = scmp.lt.s32.totalorder %s18, 3
      %p269 = pnand %p267, %p268
      %p270 = pneg %p269
      // Predicated region
      $region41: #{relation_encoder_forward.2} parent=5 // pred_check
        _
      $region42: #{relation_encoder_forward.2} parent=5 // pred_check_branch
        %272 = sbr.rel (%p269) target = $region44
      $region43: #{relation_encoder_forward.2} parent=5 // pred_region
        %s273 = ssub.s32 %s18, 1
        %s274 = sand.u32 %s125, 1
        %s275 = scalar_lea.sflag [#allocation4], %s274
        %s276 = sand.u32 %s125, 1
        %s277 = smul.addr %s276, 3
        %s278 = scalar_lea.vmem [#allocation3], %s277
        // Predicated region
        $region45: #{relation_encoder_forward.2} parent=43 // pred_check
          %p279 = pneg %p138
        $region46: #{relation_encoder_forward.2} parent=43 // pred_check_branch
          %281 = sbr.rel (%p279) target = $region48
        $region47: #{relation_encoder_forward.2} parent=43 // pred_region
          %282 = dma.done %s275, 48
        $region48: #{relation_encoder_forward.2} parent=43 // pred_fallthru
          _
        %s283 = sand.u32 %s151, 1
        %s284 = scalar_lea.sflag [#allocation6], %s283
        %s285 = sand.u32 %s151, 1
        %s286 = scalar_lea.vmem [#allocation5], %s285
        // Predicated region
        $region49: #{relation_encoder_forward.2} parent=43 // pred_check
          %p287 = pneg %p164
        $region50: #{relation_encoder_forward.2} parent=43 // pred_check_branch
          %289 = sbr.rel (%p287) target = $region52
        $region51: #{relation_encoder_forward.2} parent=43 // pred_region
          %290 = dma.done %s284, 16
        $region52: #{relation_encoder_forward.2} parent=43 // pred_fallthru
          _
        %p291 = pneg %p39
        %p292 = pneg %p36
        %p293 = pneg %p60
        %p294 = pneg %p57
        %p295 = scmp.lt.s32.totalorder %s23, 1
        %s296 = scalar_select %p295, %s23, 1
        %s297 = smul.addr %s296, 6
        %s298 = smul.addr %s297, 4
        %s299 = scalar_lea.vmem %s2, %s298
        %p300 = pneg %p86
        %p301 = pneg %p83
        %p302 = scmp.lt.s32.totalorder %s23, 1
        %s303 = scalar_select %p302, %s23, 1
        %s304 = smul.addr %s303, 48
        %s305 = smul.addr %s304, 4
        %s306 = scalar_lea.vmem %s3, %s305
        %p307 = pneg %p112
        %p308 = pneg %p109
        %s309 = sand.u32 %s125, 1
        %s310 = scalar_lea.sflag [#allocation4], %s309
        %s311 = sand.u32 %s125, 1
        %s312 = smul.addr %s311, 3
        %s313 = scalar_lea.vmem [#allocation3], %s312
        %p314 = pneg %p138
        %p315 = pneg %p135
        %s316 = sand.u32 %s151, 1
        %s317 = scalar_lea.sflag [#allocation6], %s316
        %s318 = sand.u32 %s151, 1
        %s319 = scalar_lea.vmem [#allocation5], %s318
        %p320 = pneg %p164
        %p321 = pneg %p161
        %p322 = pneg %p190
        %p323 = pneg %p187
        %s324 = sand.u32 %s177, 1
        %s325 = sand.u32 %s177, 1
        %s326 = smul.addr %s325, 64
        %s327 = scalar_lea.vmem [#allocation7], %s326
        %p328 = scmp.lt.s32.totalorder %s23, 1
        %s329 = scalar_select %p328, %s23, 1
        %s330 = smul.addr %s329, 6
        %s331 = smul.addr %s330, 4
        %s332 = scalar_lea.vmem %s2, %s331
        %p333 = scmp.lt.s32.totalorder %s23, 1
        %s334 = scalar_select %p333, %s23, 1
        %s335 = smul.addr %s334, 48
        %s336 = smul.addr %s335, 4
        %s337 = scalar_lea.vmem %s3, %s336
        %v339 = vld [vmem:[%s332] sm:$0xff]
        %v340 = vld [vmem:[%s332 + $0x8] sm:$0xf]
        %v341 = vld [vmem:[%s332 + $0xc] sm:$0xff]
        %v342 = vld [vmem:[%s332 + $0x14] sm:$0xf]
        %v343 = vld [vmem:[%s278] sm:$0x7]
        %v344 = vld [vmem:[%s0] sm:$0xf]
        %v345 = vld [vmem:[%s0 + $0x4] sm:$0xf]
        %v346 = vld [vmem:[%s0 + $0x8] sm:$0xf]
        %v347 = vld [vmem:[%s0 + $0xc] sm:$0xf]
        %v348 = vld [vmem:[%s0 + $0x10] sm:$0xf]
        %v349 = vld [vmem:[%s0 + $0x14] sm:$0xf]
        %v350 = vld [vmem:[%s0 + $0x18] sm:$0xf]
        %v351 = vld [vmem:[%s0 + $0x1c] sm:$0xf]
        %v352 = vld [vmem:[%s0 + $0x20] sm:$0xf]
        %v353 = vld [vmem:[%s0 + $0x24] sm:$0xf]
        %v354 = vld [vmem:[%s0 + $0x28] sm:$0xf]
        %v355 = vld [vmem:[%s0 + $0x2c] sm:$0xf]
        %v356 = vld [vmem:[%s0 + $0x30] sm:$0xf]
        %v357 = vld [vmem:[%s0 + $0x34] sm:$0xf]
        %v358 = vld [vmem:[%s0 + $0x38] sm:$0xf]
        %v359 = vld [vmem:[%s0 + $0x3c] sm:$0xf]
        %v361 = vlaneseq
        %v362 = vshrl.u32 %v361, 7
        %v363 = vsub.s32 0, %v362
        %v364 = vrot.slane %v343, %v363
        %v365 = vlaneseq
        %v366 = vshrl.u32 %v365, 7
        %v367 = vsub.s32 1, %v366
        %v368 = vrot.slane %v343, %v367
        %v369 = vlaneseq
        %v370 = vshrl.u32 %v369, 7
        %v371 = vsub.s32 2, %v370
        %v372 = vrot.slane %v343, %v371
        %v392 = vunpack.c.l.b16 %v344
        %v393 = vunpack.c.l.b16 %v345
        %v394 = vunpack.c.l.b16 %v346
        %v395 = vunpack.c.l.b16 %v347
        %v396 = vunpack.c.l.b16 %v348
        %v397 = vunpack.c.l.b16 %v349
        %v398 = vunpack.c.l.b16 %v350
        %v399 = vunpack.c.l.b16 %v351
        %v400 = vunpack.c.l.b16 %v352
        %v401 = vunpack.c.l.b16 %v353
        %v402 = vunpack.c.l.b16 %v354
        %v403 = vunpack.c.l.b16 %v355
        %v404 = vunpack.c.l.b16 %v356
        %v405 = vunpack.c.l.b16 %v357
        %v406 = vunpack.c.l.b16 %v358
        %v407 = vunpack.c.l.b16 %v359
        %v408 = vpack.c.b16 %v393, %v392
        %v409 = vpack.c.b16 %v395, %v394
        %v410 = vpack.c.b16 %v397, %v396
        %v411 = vpack.c.b16 %v399, %v398
        %v412 = vpack.c.b16 %v401, %v400
        %v413 = vpack.c.b16 %v403, %v402
        %v414 = vpack.c.b16 %v405, %v404
        %v415 = vpack.c.b16 %v407, %v406
        %v420 = vunpack.c.l.b16 %v339
        %v421 = vunpack.c.h.b16 %v339
        %v422 = vunpack.c.l.b16 %v340
        %v423 = vunpack.c.l.b16 %v341
        %v424 = vunpack.c.h.b16 %v341
        %v425 = vunpack.c.l.b16 %v342
        %v426 = vpack.c.b16 %v423, %v420
        %v427 = vpack.c.b16 %v424, %v421
        %v428 = vpack.c.b16 %v425, %v422
        %vm432 = vcmask 130048
        %v434 = vsel %vm432, %v408, 0
        %v437 = vsel %vm432, %v409, 0
        %v440 = vsel %vm432, %v410, 0
        %v443 = vsel %vm432, %v411, 0
        %v446 = vsel %vm432, %v412, 0
        %v449 = vsel %vm432, %v413, 0
        %v452 = vsel %vm432, %v414, 0
        %v455 = vsel %vm432, %v415, 0
        %457 = vmatprep.subr.bf16.mxu0 %v427
        %458 = vmatpush1.bf16.msra.mxu0 %v426
        %459 = vmatprep.subr.bf16.mxu0 0
        %460 = vmatpush1.bf16.msra.mxu0 0
        %461 = vmatprep.subr.bf16.mxu0 0
        %462 = vmatpush1.bf16.msra.mxu0 0
        %463 = vmatprep.subr.bf16.mxu0 0
        %464 = vmatpush1.bf16.msra.mxu0 0
        %465 = vmatprep.subr.bf16.mxu0 0
        %466 = vmatpush1.bf16.msra.mxu0 0
        %467 = vmatprep.subr.bf16.mxu0 0
        %468 = vmatpush1.bf16.msra.mxu0 0
        %469 = vmatprep.subr.bf16.mxu0 0
        %470 = vmatpush1.bf16.msra.mxu0 0
        %471 = vmatprep.subr.bf16.mxu0 0
        %472 = vmatpush1.bf16.msra.mxu0 0
        %473 = vmatprep.subr.bf16.mxu0 0
        %474 = vmatpush1.bf16.msra.mxu0 0
        %475 = vmatprep.subr.bf16.mxu0 0
        %476 = vmatpush1.bf16.msra.mxu0 0
        %477 = vmatprep.subr.bf16.mxu0 0
        %478 = vmatpush1.bf16.msra.mxu0 0
        %479 = vmatprep.subr.bf16.mxu0 0
        %480 = vmatpush1.bf16.msra.mxu0 0
        %481 = vmatprep.subr.bf16.mxu0 0
        %482 = vmatpush1.bf16.msra.mxu0 0
        %483 = vmatprep.subr.bf16.mxu0 0
        %484 = vmatpush1.bf16.msra.mxu0 0
        %485 = vmatprep.subr.bf16.mxu0 0
        %486 = vmatpush1.bf16.msra.mxu0 0
        %487 = vmatprep.subr.bf16.mxu0 0
        %488 = vmatpush1.bf16.msra.mxu0 0
        %489 = vmatprep.mubr.bf16.mxu0 0
        %490 = vmatmul.mubr.bf16.gmra.mrb[0].mxu0 %v434
        %v491 = vpop.f32.mrb[0].mxu0
        %v492 = vadd.f32 %v364, %v491
        %v493 = vpop.f32.mrb[0].mxu0
        %v494 = vadd.f32 %v368, %v493
        %v495 = vpop.f32.mrb[0].mxu0
        %v496 = vadd.f32 %v364, %v495
        %v497 = vpop.f32.mrb[0].mxu0
        %v498 = vadd.f32 %v368, %v497
        %499 = vmatprep.mubr.bf16.mxu0 0
        %500 = vmatmul.mubr.bf16.gmra.mrb[0].mxu0 %v437
        %v501 = vpop.f32.mrb[0].mxu0
        %v502 = vadd.f32 %v364, %v501
        %v503 = vpop.f32.mrb[0].mxu0
        %v504 = vadd.f32 %v368, %v503
        %v505 = vpop.f32.mrb[0].mxu0
        %v506 = vadd.f32 %v364, %v505
        %v507 = vpop.f32.mrb[0].mxu0
        %v508 = vadd.f32 %v368, %v507
        %509 = vmatprep.mubr.bf16.mxu0 0
        %510 = vmatmul.mubr.bf16.gmra.mrb[0].mxu0 %v440
        %v511 = vpop.f32.mrb[0].mxu0
        %v512 = vadd.f32 %v364, %v511
        %v513 = vpop.f32.mrb[0].mxu0
        %v514 = vadd.f32 %v368, %v513
        %v515 = vpop.f32.mrb[0].mxu0
        %v516 = vadd.f32 %v364, %v515
        %v517 = vpop.f32.mrb[0].mxu0
        %v518 = vadd.f32 %v368, %v517
        %519 = vmatprep.mubr.bf16.mxu0 0
        %520 = vmatmul.mubr.bf16.gmra.mrb[0].mxu0 %v443
        %v521 = vpop.f32.mrb[0].mxu0
        %v522 = vadd.f32 %v364, %v521
        %v523 = vpop.f32.mrb[0].mxu0
        %v524 = vadd.f32 %v368, %v523
        %v525 = vpop.f32.mrb[0].mxu0
        %v526 = vadd.f32 %v364, %v525
        %v527 = vpop.f32.mrb[0].mxu0
        %v528 = vadd.f32 %v368, %v527
        %529 = vmatprep.mubr.bf16.mxu0 0
        %530 = vmatmul.mubr.bf16.gmra.mrb[0].mxu0 %v446
        %v531 = vpop.f32.mrb[0].mxu0
        %v532 = vadd.f32 %v364, %v531
        %v533 = vpop.f32.mrb[0].mxu0
        %v534 = vadd.f32 %v368, %v533
        %v535 = vpop.f32.mrb[0].mxu0
        %v536 = vadd.f32 %v364, %v535
        %v537 = vpop.f32.mrb[0].mxu0
        %v538 = vadd.f32 %v368, %v537
        %539 = vmatprep.mubr.bf16.mxu0 0
        %540 = vmatmul.mubr.bf16.gmra.mrb[0].mxu0 %v449
        %v541 = vpop.f32.mrb[0].mxu0
        %v542 = vadd.f32 %v364, %v541
        %v543 = vpop.f32.mrb[0].mxu0
        %v544 = vadd.f32 %v368, %v543
        %v545 = vpop.f32.mrb[0].mxu0
        %v546 = vadd.f32 %v364, %v545
        %v547 = vpop.f32.mrb[0].mxu0
        %v548 = vadd.f32 %v368, %v547
        %549 = vmatprep.mubr.bf16.mxu0 0
        %550 = vmatmul.mubr.bf16.gmra.mrb[0].mxu0 %v452
        %v551 = vpop.f32.mrb[0].mxu0
        %v552 = vadd.f32 %v364, %v551
        %v553 = vpop.f32.mrb[0].mxu0
        %v554 = vadd.f32 %v368, %v553
        %v555 = vpop.f32.mrb[0].mxu0
        %v556 = vadd.f32 %v364, %v555
        %v557 = vpop.f32.mrb[0].mxu0
        %v558 = vadd.f32 %v368, %v557
        %559 = vmatprep.mubr.bf16.mxu0 0
        %560 = vmatmul.mubr.bf16.gmra.mrb[0].mxu0 %v455
        %v561 = vpop.f32.mrb[0].mxu0
        %v562 = vadd.f32 %v364, %v561
        %v563 = vpop.f32.mrb[0].mxu0
        %v564 = vadd.f32 %v368, %v563
        %v565 = vpop.f32.mrb[0].mxu0
        %v566 = vadd.f32 %v364, %v565
        %v567 = vpop.f32.mrb[0].mxu0
        %v568 = vadd.f32 %v368, %v567
        %569 = vdwg.mxu0
        %570 = vmatprep.subr.bf16.mxu0 0
        %571 = vmatpush1.bf16.msra.mxu0 %v428
        %572 = vmatprep.subr.bf16.mxu0 0
        %573 = vmatpush1.bf16.msra.mxu0 0
        %574 = vmatprep.subr.bf16.mxu0 0
        %575 = vmatpush1.bf16.msra.mxu0 0
        %576 = vmatprep.subr.bf16.mxu0 0
        %577 = vmatpush1.bf16.msra.mxu0 0
        %578 = vmatprep.subr.bf16.mxu0 0
        %579 = vmatpush1.bf16.msra.mxu0 0
        %580 = vmatprep.subr.bf16.mxu0 0
        %581 = vmatpush1.bf16.msra.mxu0 0
        %582 = vmatprep.subr.bf16.mxu0 0
        %583 = vmatpush1.bf16.msra.mxu0 0
        %584 = vmatprep.subr.bf16.mxu0 0
        %585 = vmatpush1.bf16.msra.mxu0 0
        %586 = vmatprep.subr.bf16.mxu0 0
        %587 = vmatpush1.bf16.msra.mxu0 0
        %588 = vmatprep.subr.bf16.mxu0 0
        %589 = vmatpush1.bf16.msra.mxu0 0
        %590 = vmatprep.subr.bf16.mxu0 0
        %591 = vmatpush1.bf16.msra.mxu0 0
        %592 = vmatprep.subr.bf16.mxu0 0
        %593 = vmatpush1.bf16.msra.mxu0 0
        %594 = vmatprep.subr.bf16.mxu0 0
        %595 = vmatpush1.bf16.msra.mxu0 0
        %596 = vmatprep.subr.bf16.mxu0 0
        %597 = vmatpush1.bf16.msra.mxu0 0
        %598 = vmatprep.subr.bf16.mxu0 0
        %599 = vmatpush1.bf16.msra.mxu0 0
        %600 = vmatprep.subr.bf16.mxu0 0
        %601 = vmatpush1.bf16.msra.mxu0 0
        %602 = vmatprep.mubr.bf16.mxu0 0
        %603 = vmatmul.mubr.bf16.gmra.mrb[0].mxu0 %v434
        %v604 = vpop.f32.mrb[0].mxu0
        %v605 = vadd.f32 %v372, %v604
        %v606 = vpop.f32.mrb[0].mxu0
        %v607 = vpop.f32.mrb[0].mxu0
        %v608 = vadd.f32 %v372, %v607
        %v609 = vpop.f32.mrb[0].mxu0
        %610 = vmatprep.mubr.bf16.mxu0 0
        %611 = vmatmul.mubr.bf16.gmra.mrb[0].mxu0 %v437
        %v612 = vpop.f32.mrb[0].mxu0
        %v613 = vadd.f32 %v372, %v612
        %v614 = vpop.f32.mrb[0].mxu0
        %v615 = vpop.f32.mrb[0].mxu0
        %v616 = vadd.f32 %v372, %v615
        %v617 = vpop.f32.mrb[0].mxu0
        %618 = vmatprep.mubr.bf16.mxu0 0
        %619 = vmatmul.mubr.bf16.gmra.mrb[0].mxu0 %v440
        %v620 = vpop.f32.mrb[0].mxu0
        %v621 = vadd.f32 %v372, %v620
        %v622 = vpop.f32.mrb[0].mxu0
        %v623 = vpop.f32.mrb[0].mxu0
        %v624 = vadd.f32 %v372, %v623
        %v625 = vpop.f32.mrb[0].mxu0
        %626 = vmatprep.mubr.bf16.mxu0 0
        %627 = vmatmul.mubr.bf16.gmra.mrb[0].mxu0 %v443
        %v628 = vpop.f32.mrb[0].mxu0
        %v629 = vadd.f32 %v372, %v628
        %v630 = vpop.f32.mrb[0].mxu0
        %v631 = vpop.f32.mrb[0].mxu0
        %v632 = vadd.f32 %v372, %v631
        %v633 = vpop.f32.mrb[0].mxu0
        %634 = vmatprep.mubr.bf16.mxu0 0
        %635 = vmatmul.mubr.bf16.gmra.mrb[0].mxu0 %v446
        %v636 = vpop.f32.mrb[0].mxu0
        %v637 = vadd.f32 %v372, %v636
        %v638 = vpop.f32.mrb[0].mxu0
        %v639 = vpop.f32.mrb[0].mxu0
        %v640 = vadd.f32 %v372, %v639
        %v641 = vpop.f32.mrb[0].mxu0
        %642 = vmatprep.mubr.bf16.mxu0 0
        %643 = vmatmul.mubr.bf16.gmra.mrb[0].mxu0 %v449
        %v644 = vpop.f32.mrb[0].mxu0
        %v645 = vadd.f32 %v372, %v644
        %v646 = vpop.f32.mrb[0].mxu0
        %v647 = vpop.f32.mrb[0].mxu0
        %v648 = vadd.f32 %v372, %v647
        %v649 = vpop.f32.mrb[0].mxu0
        %650 = vmatprep.mubr.bf16.mxu0 0
        %651 = vmatmul.mubr.bf16.gmra.mrb[0].mxu0 %v452
        %v652 = vpop.f32.mrb[0].mxu0
        %v653 = vadd.f32 %v372, %v652
        %v654 = vpop.f32.mrb[0].mxu0
        %v655 = vpop.f32.mrb[0].mxu0
        %v656 = vadd.f32 %v372, %v655
        %v657 = vpop.f32.mrb[0].mxu0
        %658 = vmatprep.mubr.bf16.mxu0 0
        %659 = vmatmul.mubr.bf16.gmra.mrb[0].mxu0 %v455
        %v660 = vpop.f32.mrb[0].mxu0
        %v661 = vadd.f32 %v372, %v660
        %v662 = vpop.f32.mrb[0].mxu0
        %v663 = vpop.f32.mrb[0].mxu0
        %v664 = vadd.f32 %v372, %v663
        %v665 = vpop.f32.mrb[0].mxu0
        %666 = vdwg.mxu0
        %v667 = vpack.c.bf16 %v496, %v492
        %v668 = vpack.c.bf16 %v498, %v494
        %v669 = vpack.c.bf16 %v608, %v605
        %v670 = vpack.c.bf16 %v506, %v502
        %v671 = vpack.c.bf16 %v508, %v504
        %v672 = vpack.c.bf16 %v616, %v613
        %v673 = vpack.c.bf16 %v516, %v512
        %v674 = vpack.c.bf16 %v518, %v514
        %v675 = vpack.c.bf16 %v624, %v621
        %v676 = vpack.c.bf16 %v526, %v522
        %v677 = vpack.c.bf16 %v528, %v524
        %v678 = vpack.c.bf16 %v632, %v629
        %v679 = vpack.c.bf16 %v536, %v532
        %v680 = vpack.c.bf16 %v538, %v534
        %v681 = vpack.c.bf16 %v640, %v637
        %v682 = vpack.c.bf16 %v546, %v542
        %v683 = vpack.c.bf16 %v548, %v544
        %v684 = vpack.c.bf16 %v648, %v645
        %v685 = vpack.c.bf16 %v556, %v552
        %v686 = vpack.c.bf16 %v558, %v554
        %v687 = vpack.c.bf16 %v656, %v653
        %v688 = vpack.c.bf16 %v566, %v562
        %v689 = vpack.c.bf16 %v568, %v564
        %v690 = vpack.c.bf16 %v664, %v661
        %691 = vst [vmem:[#allocation2] sm:$0xff] %v667
        %692 = vst [vmem:[#allocation2 + $0x8] sm:$0xff] %v668
        %693 = vst [vmem:[#allocation2 + $0x10] sm:$0xff] %v669
        %694 = vst [vmem:[#allocation2 + $0x18] sm:$0xff] %v670
        %695 = vst [vmem:[#allocation2 + $0x20] sm:$0xff] %v671
        %696 = vst [vmem:[#allocation2 + $0x28] sm:$0xff] %v672
        %697 = vst [vmem:[#allocation2 + $0x30] sm:$0xff] %v673
        %698 = vst [vmem:[#allocation2 + $0x38] sm:$0xff] %v674
        %699 = vst [vmem:[#allocation2 + $0x40] sm:$0xff] %v675
        %700 = vst [vmem:[#allocation2 + $0x48] sm:$0xff] %v676
        %701 = vst [vmem:[#allocation2 + $0x50] sm:$0xff] %v677
        %702 = vst [vmem:[#allocation2 + $0x58] sm:$0xff] %v678
        %703 = vst [vmem:[#allocation2 + $0x60] sm:$0xff] %v679
        %704 = vst [vmem:[#allocation2 + $0x68] sm:$0xff] %v680
        %705 = vst [vmem:[#allocation2 + $0x70] sm:$0xff] %v681
        %706 = vst [vmem:[#allocation2 + $0x78] sm:$0xff] %v682
        %707 = vst [vmem:[#allocation2 + $0x80] sm:$0xff] %v683
        %708 = vst [vmem:[#allocation2 + $0x88] sm:$0xff] %v684
        %709 = vst [vmem:[#allocation2 + $0x90] sm:$0xff] %v685
        %710 = vst [vmem:[#allocation2 + $0x98] sm:$0xff] %v686
        %711 = vst [vmem:[#allocation2 + $0xa0] sm:$0xff] %v687
        %712 = vst [vmem:[#allocation2 + $0xa8] sm:$0xff] %v688
        %713 = vst [vmem:[#allocation2 + $0xb0] sm:$0xff] %v689
        %714 = vst [vmem:[#allocation2 + $0xb8] sm:$0xff] %v690
        %v715 = vld [vmem:[%s337] sm:$0xff]
        %v716 = vld [vmem:[%s337 + $0x8] sm:$0xf]
        %v717 = vld [vmem:[%s337 + $0xc] sm:$0xff]
        %v718 = vld [vmem:[%s337 + $0x14] sm:$0xf]
        %v719 = vld [vmem:[%s337 + $0x18] sm:$0xff]
        %v720 = vld [vmem:[%s337 + $0x20] sm:$0xf]
        %v721 = vld [vmem:[%s337 + $0x24] sm:$0xff]
        %v722 = vld [vmem:[%s337 + $0x2c] sm:$0xf]
        %v723 = vld [vmem:[%s337 + $0x30] sm:$0xff]
        %v724 = vld [vmem:[%s337 + $0x38] sm:$0xf]
        %v725 = vld [vmem:[%s337 + $0x3c] sm:$0xff]
        %v726 = vld [vmem:[%s337 + $0x44] sm:$0xf]
        %v727 = vld [vmem:[%s337 + $0x48] sm:$0xff]
        %v728 = vld [vmem:[%s337 + $0x50] sm:$0xf]
        %v729 = vld [vmem:[%s337 + $0x54] sm:$0xff]
        %v730 = vld [vmem:[%s337 + $0x5c] sm:$0xf]
        %v731 = vld [vmem:[%s337 + $0x60] sm:$0xff]
        %v732 = vld [vmem:[%s337 + $0x68] sm:$0xf]
        %v733 = vld [vmem:[%s337 + $0x6c] sm:$0xff]
        %v734 = vld [vmem:[%s337 + $0x74] sm:$0xf]
        %v735 = vld [vmem:[%s337 + $0x78] sm:$0xff]
        %v736 = vld [vmem:[%s337 + $0x80] sm:$0xf]
        %v737 = vld [vmem:[%s337 + $0x84] sm:$0xff]
        %v738 = vld [vmem:[%s337 + $0x8c] sm:$0xf]
        %v739 = vld [vmem:[%s337 + $0x90] sm:$0xff]
        %v740 = vld [vmem:[%s337 + $0x98] sm:$0xf]
        %v741 = vld [vmem:[%s337 + $0x9c] sm:$0xff]
        %v742 = vld [vmem:[%s337 + $0xa4] sm:$0xf]
        %v743 = vld [vmem:[%s337 + $0xa8] sm:$0xff]
        %v744 = vld [vmem:[%s337 + $0xb0] sm:$0xf]
        %v745 = vld [vmem:[%s337 + $0xb4] sm:$0xff]
        %v746 = vld [vmem:[%s337 + $0xbc] sm:$0xf]
        %v747 = vld [vmem:[%s286] sm:$0x1]
        %v748 = vld [vmem:[%s1] sm:$0xff]
        %v749 = vld [vmem:[%s1 + $0x8] sm:$0xff]
        %p750 = scmp.eq.s32.totalorder %s23, 0
        %s751 = scalar_select %p750, 0, 7
        %s752 = smul.u32 %s751, 16
        %s753 = sshra.s32 %s752, 4
        %s754 = sand.u32 %s752, 15
        %s755 = smul.u32 %s753, 3
        %s756 = smul.addr %s755, 8
        %s757 = scalar_lea.vmem [#allocation2], %s756
        %v758 = vld [vmem:[%s757] sm:$0xff]
        %v759 = vld [vmem:[%s757 + $0x8] sm:$0xff]
        %v760 = vld [vmem:[%s757 + $0x10] sm:$0xff]
        %v793 = vunpack.c.l.b16 %v715
        %v794 = vunpack.c.h.b16 %v715
        %v795 = vunpack.c.l.b16 %v716
        %v796 = vunpack.c.l.b16 %v717
        %v797 = vunpack.c.h.b16 %v717
        %v798 = vunpack.c.l.b16 %v718
        %v799 = vunpack.c.l.b16 %v719
        %v800 = vunpack.c.h.b16 %v719
        %v801 = vunpack.c.l.b16 %v720
        %v802 = vunpack.c.l.b16 %v721
        %v803 = vunpack.c.h.b16 %v721
        %v804 = vunpack.c.l.b16 %v722
        %v805 = vunpack.c.l.b16 %v723
        %v806 = vunpack.c.h.b16 %v723
        %v807 = vunpack.c.l.b16 %v724
        %v808 = vunpack.c.l.b16 %v725
        %v809 = vunpack.c.h.b16 %v725
        %v810 = vunpack.c.l.b16 %v726
        %v811 = vunpack.c.l.b16 %v727
        %v812 = vunpack.c.h.b16 %v727
        %v813 = vunpack.c.l.b16 %v728
        %v814 = vunpack.c.l.b16 %v729
        %v815 = vunpack.c.h.b16 %v729
        %v816 = vunpack.c.l.b16 %v730
        %v817 = vunpack.c.l.b16 %v731
        %v818 = vunpack.c.h.b16 %v731
        %v819 = vunpack.c.l.b16 %v732
        %v820 = vunpack.c.l.b16 %v733
        %v821 = vunpack.c.h.b16 %v733
        %v822 = vunpack.c.l.b16 %v734
        %v823 = vunpack.c.l.b16 %v735
        %v824 = vunpack.c.h.b16 %v735
        %v825 = vunpack.c.l.b16 %v736
        %v826 = vunpack.c.l.b16 %v737
        %v827 = vunpack.c.h.b16 %v737
        %v828 = vunpack.c.l.b16 %v738
        %v829 = vunpack.c.l.b16 %v739
        %v830 = vunpack.c.h.b16 %v739
        %v831 = vunpack.c.l.b16 %v740
        %v832 = vunpack.c.l.b16 %v741
        %v833 = vunpack.c.h.b16 %v741
        %v834 = vunpack.c.l.b16 %v742
        %v835 = vunpack.c.l.b16 %v743
        %v836 = vunpack.c.h.b16 %v743
        %v837 = vunpack.c.l.b16 %v744
        %v838 = vunpack.c.l.b16 %v745
        %v839 = vunpack.c.h.b16 %v745
        %v840 = vunpack.c.l.b16 %v746
        %v841 = vpack.c.b16 %v796, %v793
        %v842 = vpack.c.b16 %v797, %v794
        %v843 = vpack.c.b16 %v798, %v795
        %v844 = vpack.c.b16 %v802, %v799
        %v845 = vpack.c.b16 %v803, %v800
        %v846 = vpack.c.b16 %v804, %v801
        %v847 = vpack.c.b16 %v808, %v805
        %v848 = vpack.c.b16 %v809, %v806
        %v849 = vpack.c.b16 %v810, %v807
        %v850 = vpack.c.b16 %v814, %v811
        %v851 = vpack.c.b16 %v815, %v812
        %v852 = vpack.c.b16 %v816, %v813
        %v853 = vpack.c.b16 %v820, %v817
        %v854 = vpack.c.b16 %v821, %v818
        %v855 = vpack.c.b16 %v822, %v819
        %v856 = vpack.c.b16 %v826, %v823
        %v857 = vpack.c.b16 %v827, %v824
        %v858 = vpack.c.b16 %v828, %v825
        %v859 = vpack.c.b16 %v832, %v829
        %v860 = vpack.c.b16 %v833, %v830
        %v861 = vpack.c.b16 %v834, %v831
        %v862 = vpack.c.b16 %v838, %v835
        %v863 = vpack.c.b16 %v839, %v836
        %v864 = vpack.c.b16 %v840, %v837
        %889 = vmatprep.subr.bf16.mxu0 %v842
        %890 = vmatpush1.bf16.msra.mxu0 %v841
        %891 = vmatprep.subr.bf16.mxu0 %v845
        %892 = vmatpush1.bf16.msra.mxu0 %v844
        %893 = vmatprep.subr.bf16.mxu0 %v848
        %894 = vmatpush1.bf16.msra.mxu0 %v847
        %895 = vmatprep.subr.bf16.mxu0 %v851
        %896 = vmatpush1.bf16.msra.mxu0 %v850
        %897 = vmatprep.subr.bf16.mxu0 %v854
        %898 = vmatpush1.bf16.msra.mxu0 %v853
        %899 = vmatprep.subr.bf16.mxu0 %v857
        %900 = vmatpush1.bf16.msra.mxu0 %v856
        %901 = vmatprep.subr.bf16.mxu0 %v860
        %902 = vmatpush1.bf16.msra.mxu0 %v859
        %903 = vmatprep.subr.bf16.mxu0 %v863
        %904 = vmatpush1.bf16.msra.mxu0 %v862
        %905 = vmatprep.subr.bf16.mxu0 0
        %906 = vmatpush1.bf16.msra.mxu0 0
        %907 = vmatprep.subr.bf16.mxu0 0
        %908 = vmatpush1.bf16.msra.mxu0 0
        %909 = vmatprep.subr.bf16.mxu0 0
        %910 = vmatpush1.bf16.msra.mxu0 0
        %911 = vmatprep.subr.bf16.mxu0 0
        %912 = vmatpush1.bf16.msra.mxu0 0
        %913 = vmatprep.subr.bf16.mxu0 0
        %914 = vmatpush1.bf16.msra.mxu0 0
        %915 = vmatprep.subr.bf16.mxu0 0
        %916 = vmatpush1.bf16.msra.mxu0 0
        %917 = vmatprep.subr.bf16.mxu0 0
        %918 = vmatpush1.bf16.msra.mxu0 0
        %919 = vmatprep.subr.bf16.mxu0 0
        %920 = vmatpush1.bf16.msra.mxu0 0
        %921 = vmatprep.mubr.bf16.mxu0 0
        %922 = vmatmul.mubr.bf16.gmra.mrb[0].mxu0 0
        %v923 = vpop.f32.mrb[0].mxu0
        %v924 = vadd.f32 0.0, %v923
        %v925 = vpop.f32.mrb[0].mxu0
        %v926 = vadd.f32 0.0, %v925
        %v927 = vpop.f32.mrb[0].mxu0
        %v928 = vadd.f32 0.0, %v927
        %v929 = vpop.f32.mrb[0].mxu0
        %v930 = vadd.f32 0.0, %v929
        %931 = vdwg.mxu0
        %932 = vmatprep.subr.bf16.mxu0 0
        %933 = vmatpush1.bf16.msra.mxu0 %v843
        %934 = vmatprep.subr.bf16.mxu0 0
        %935 = vmatpush1.bf16.msra.mxu0 %v846
        %936 = vmatprep.subr.bf16.mxu0 0
        %937 = vmatpush1.bf16.msra.mxu0 %v849
        %938 = vmatprep.subr.bf16.mxu0 0
        %939 = vmatpush1.bf16.msra.mxu0 %v852
        %940 = vmatprep.subr.bf16.mxu0 0
        %941 = vmatpush1.bf16.msra.mxu0 %v855
        %942 = vmatprep.subr.bf16.mxu0 0
        %943 = vmatpush1.bf16.msra.mxu0 %v858
        %944 = vmatprep.subr.bf16.mxu0 0
        %945 = vmatpush1.bf16.msra.mxu0 %v861
        %946 = vmatprep.subr.bf16.mxu0 0
        %947 = vmatpush1.bf16.msra.mxu0 %v864
        %948 = vmatprep.subr.bf16.mxu0 0
        %949 = vmatpush1.bf16.msra.mxu0 0
        %950 = vmatprep.subr.bf16.mxu0 0
        %951 = vmatpush1.bf16.msra.mxu0 0
        %952 = vmatprep.subr.bf16.mxu0 0
        %953 = vmatpush1.bf16.msra.mxu0 0
        %954 = vmatprep.subr.bf16.mxu0 0
        %955 = vmatpush1.bf16.msra.mxu0 0
        %956 = vmatprep.subr.bf16.mxu0 0
        %957 = vmatpush1.bf16.msra.mxu0 0
        %958 = vmatprep.subr.bf16.mxu0 0
        %959 = vmatpush1.bf16.msra.mxu0 0
        %960 = vmatprep.subr.bf16.mxu0 0
        %961 = vmatpush1.bf16.msra.mxu0 0
        %962 = vmatprep.subr.bf16.mxu0 0
        %963 = vmatpush1.bf16.msra.mxu0 0
        %964 = vmatprep.mubr.bf16.mxu0 0
        %965 = vmatmul.mubr.bf16.gmra.mrb[0].mxu0 0
        %v966 = vpop.f32.mrb[0].mxu0
        %v967 = vadd.f32 0.0, %v966
        %v968 = vpop.f32.mrb[0].mxu0
        %v969 = vpop.f32.mrb[0].mxu0
        %v970 = vadd.f32 0.0, %v969
        %v971 = vpop.f32.mrb[0].mxu0
        %972 = vdwg.mxu0
        %v973 = vunpack.c.l.bf16 %v758
        %v974 = vunpack.c.h.bf16 %v758
        %v975 = vadd.f32 %v973, %v924
        %v976 = vadd.f32 %v974, %v928
        %v977 = vxor.u32 %v975, 2147483648
        %v978 = vxor.u32 %v976, 2147483648
        %v979 = vmul.f32 %v977, 1.442695
        %v980 = vpow.pop %v979
        %v981 = vmul.f32 %v978, 1.442695
        %v982 = vpow.pop %v981
        %v983 = vadd.f32 %v980, 1.0
        %v984 = vadd.f32 %v982, 1.0
        %v985 = vrcp.pop %v983
        %v986 = vmul.f32 1.0, %v985
        %v987 = vrcp.pop %v984
        %v988 = vmul.f32 1.0, %v987
        %v989 = vunpack.c.l.bf16 %v759
        %v990 = vunpack.c.h.bf16 %v759
        %v991 = vadd.f32 %v989, %v926
        %v992 = vadd.f32 %v990, %v930
        %v993 = vxor.u32 %v991, 2147483648
        %v994 = vxor.u32 %v992, 2147483648
        %v995 = vmul.f32 %v993, 1.442695
        %v996 = vpow.pop %v995
        %v997 = vmul.f32 %v994, 1.442695
        %v998 = vpow.pop %v997
        %v999 = vadd.f32 %v996, 1.0
        %v1000 = vadd.f32 %v998, 1.0
        %v1001 = vrcp.pop %v999
        %v1002 = vmul.f32 1.0, %v1001
        %v1003 = vrcp.pop %v1000
        %v1004 = vmul.f32 1.0, %v1003
        %v1006 = vlaneseq
        %v1007 = vshrl.u32 %v1006, 7
        %v1008 = vsub.s32 0, %v1007
        %v1009 = vrot.slane %v747, %v1008
        %v1011 = vadd.f32 %v967, %v1009
        %v1012 = vadd.f32 %v970, %v1009
        %v1013 = vmul.f32 %v986, %v1011
        %v1014 = vmul.f32 %v988, %v1012
        %v1015 = vunpack.c.l.bf16 %v760
        %v1016 = vunpack.c.h.bf16 %v760
        %v1017 = vadd.f32 %v1015, %v1013
        %v1018 = vadd.f32 %v1016, %v1014
        %v1019 = vtanh.pop %v1017
        %v1020 = vtanh.pop %v1018
        %v1021 = vsub.f32 1.0, %v1002
        %v1022 = vsub.f32 1.0, %v1004
        %v1023 = vmul.f32 %v1021, %v1019
        %v1024 = vmul.f32 %v1022, %v1020
        %v1025 = vmul.f32 %v1002, 0.0
        %v1026 = vmul.f32 %v1004, 0.0
        %v1027 = vadd.f32 %v1023, %v1025
        %v1028 = vadd.f32 %v1024, %v1026
        %v1029 = vstv %s751
        %vm1030 = vcmp.lt.s32.totalorder %v1029, %v748
        %vm1031 = vcmp.lt.s32.totalorder %v1029, %v749
        %v1032 = vsel %vm1030, 1, 0
        %v1033 = vsel %vm1031, 1, 0
        %1034 = vset.pattern.permute.xlu0 0
        %1035 = vperm.xlu0 %1034, %v1032
        %v1036 = vpop.permute.xlu0 %1035
        %1037 = vset.pattern.permute.xlu0 0
        %1038 = vperm.xlu0 %1037, %v1033
        %v1039 = vpop.permute.xlu0 %1038
        %vm1040 = vcmp.eq.s32.totalorder %v1036, 1
        %vm1041 = vcmp.eq.s32.totalorder %v1039, 1
        %v1042 = vsel %vm1040, %v1027, 0.0
        %v1043 = vsel %vm1041, %v1028, 0.0
        %v1044 = vpack.c.bf16 %v1043, %v1042
        %v1046 = vunpack.c.l.b16 %v1044
        %v1047 = vunpack.c.h.b16 %v1044
        %v1048 = vpack.c.b16 %v1046, %v1046
        %v1049 = vpack.c.b16 %v1047, %v1047
        %s1052 = sshra.s32 %s752, 3
        %s1053 = sand.u32 %s752, 7
        %s1054 = smul.addr %s1052, 4
        %s1055 = scalar_lea.vmem %s327, %s1054 [#allocation7]
        %1056 = vst [vmem:[%s1055] sm:$0xf] %v1048
        %1057 = vst [vmem:[%s1055 + $0x4] sm:$0xf] %v1049
        %s1058 = scalar_select %p750, 1, 6
        %s1059 = smul.u32 %s1058, 16
        %s1060 = sshra.s32 %s1059, 4
        %s1061 = sand.u32 %s1059, 15
        %s1062 = smul.u32 %s1060, 3
        %s1063 = smul.addr %s1062, 8
        %s1064 = scalar_lea.vmem [#allocation2], %s1063
        %v1065 = vld [vmem:[%s1064] sm:$0xff]
        %v1066 = vld [vmem:[%s1064 + $0x8] sm:$0xff]
        %v1067 = vld [vmem:[%s1064 + $0x10] sm:$0xff]
        %1068 = vmatprep.subr.bf16.mxu0 %v842
        %1069 = vmatpush1.bf16.msra.mxu0 %v841
        %1070 = vmatprep.subr.bf16.mxu0 %v845
        %1071 = vmatpush1.bf16.msra.mxu0 %v844
        %1072 = vmatprep.subr.bf16.mxu0 %v848
        %1073 = vmatpush1.bf16.msra.mxu0 %v847
        %1074 = vmatprep.subr.bf16.mxu0 %v851
        %1075 = vmatpush1.bf16.msra.mxu0 %v850
        %1076 = vmatprep.subr.bf16.mxu0 %v854
        %1077 = vmatpush1.bf16.msra.mxu0 %v853
        %1078 = vmatprep.subr.bf16.mxu0 %v857
        %1079 = vmatpush1.bf16.msra.mxu0 %v856
        %1080 = vmatprep.subr.bf16.mxu0 %v860
        %1081 = vmatpush1.bf16.msra.mxu0 %v859
        %1082 = vmatprep.subr.bf16.mxu0 %v863
        %1083 = vmatpush1.bf16.msra.mxu0 %v862
        %1084 = vmatprep.subr.bf16.mxu0 0
        %1085 = vmatpush1.bf16.msra.mxu0 0
        %1086 = vmatprep.subr.bf16.mxu0 0
        %1087 = vmatpush1.bf16.msra.mxu0 0
        %1088 = vmatprep.subr.bf16.mxu0 0
        %1089 = vmatpush1.bf16.msra.mxu0 0
        %1090 = vmatprep.subr.bf16.mxu0 0
        %1091 = vmatpush1.bf16.msra.mxu0 0
        %1092 = vmatprep.subr.bf16.mxu0 0
        %1093 = vmatpush1.bf16.msra.mxu0 0
        %1094 = vmatprep.subr.bf16.mxu0 0
        %1095 = vmatpush1.bf16.msra.mxu0 0
        %1096 = vmatprep.subr.bf16.mxu0 0
        %1097 = vmatpush1.bf16.msra.mxu0 0
        %1098 = vmatprep.subr.bf16.mxu0 0
        %1099 = vmatpush1.bf16.msra.mxu0 0
        %1100 = vmatprep.mubr.bf16.mxu0 0
        %1101 = vmatmul.mubr.bf16.gmra.mrb[0].mxu0 %v1044
        %v1102 = vpop.f32.mrb[0].mxu0
        %v1103 = vadd.f32 0.0, %v1102
        %v1104 = vpop.f32.mrb[0].mxu0
        %v1105 = vadd.f32 0.0, %v1104
        %v1106 = vpop.f32.mrb[0].mxu0
        %v1107 = vadd.f32 0.0, %v1106
        %v1108 = vpop.f32.mrb[0].mxu0
        %v1109 = vadd.f32 0.0, %v1108
        %1110 = vdwg.mxu0
        %1111 = vmatprep.subr.bf16.mxu0 0
        %1112 = vmatpush1.bf16.msra.mxu0 %v843
        %1113 = vmatprep.subr.bf16.mxu0 0
        %1114 = vmatpush1.bf16.msra.mxu0 %v846
        %1115 = vmatprep.subr.bf16.mxu0 0
        %1116 = vmatpush1.bf16.msra.mxu0 %v849
        %1117 = vmatprep.subr.bf16.mxu0 0
        %1118 = vmatpush1.bf16.msra.mxu0 %v852
        %1119 = vmatprep.subr.bf16.mxu0 0
        %1120 = vmatpush1.bf16.msra.mxu0 %v855
        %1121 = vmatprep.subr.bf16.mxu0 0
        %1122 = vmatpush1.bf16.msra.mxu0 %v858
        %1123 = vmatprep.subr.bf16.mxu0 0
        %1124 = vmatpush1.bf16.msra.mxu0 %v861
        %1125 = vmatprep.subr.bf16.mxu0 0
        %1126 = vmatpush1.bf16.msra.mxu0 %v864
        %1127 = vmatprep.subr.bf16.mxu0 0
        %1128 = vmatpush1.bf16.msra.mxu0 0
        %1129 = vmatprep.subr.bf16.mxu0 0
        %1130 = vmatpush1.bf16.msra.mxu0 0
        %1131 = vmatprep.subr.bf16.mxu0 0
        %1132 = vmatpush1.bf16.msra.mxu0 0
        %1133 = vmatprep.subr.bf16.mxu0 0
        %1134 = vmatpush1.bf16.msra.mxu0 0
        %1135 = vmatprep.subr.bf16.mxu0 0
        %1136 = vmatpush1.bf16.msra.mxu0 0
        %1137 = vmatprep.subr.bf16.mxu0 0
        %1138 = vmatpush1.bf16.msra.mxu0 0
        %1139 = vmatprep.subr.bf16.mxu0 0
        %1140 = vmatpush1.bf16.msra.mxu0 0
        %1141 = vmatprep.subr.bf16.mxu0 0
        %1142 = vmatpush1.bf16.msra.mxu0 0
        %1143 = vmatprep.mubr.bf16.mxu0 0
        %1144 = vmatmul.mubr.bf16.gmra.mrb[0].mxu0 %v1044
        %v1145 = vpop.f32.mrb[0].mxu0
        %v1146 = vadd.f32 0.0, %v1145
        %v1147 = vpop.f32.mrb[0].mxu0
        %v1148 = vpop.f32.mrb[0].mxu0
        %v1149 = vadd.f32 0.0, %v1148
        %v1150 = vpop.f32.mrb[0].mxu0
        %1151 = vdwg.mxu0
        %v1152 = vunpack.c.l.bf16 %v1065
        %v1153 = vunpack.c.h.bf16 %v1065
        %v1154 = vadd.f32 %v1152, %v1103
        %v1155 = vadd.f32 %v1153, %v1107
        %v1156 = vxor.u32 %v1154, 2147483648
        %v1157 = vxor.u32 %v1155, 2147483648
        %v1158 = vmul.f32 %v1156, 1.442695
        %v1159 = vpow.pop %v1158
        %v1160 = vmul.f32 %v1157, 1.442695
        %v1161 = vpow.pop %v1160
        %v1162 = vadd.f32 %v1159, 1.0
        %v1163 = vadd.f32 %v1161, 1.0
        %v1164 = vrcp.pop %v1162
        %v1165 = vmul.f32 1.0, %v1164
        %v1166 = vrcp.pop %v1163
        %v1167 = vmul.f32 1.0, %v1166
        %v1168 = vunpack.c.l.bf16 %v1066
        %v1169 = vunpack.c.h.bf16 %v1066
        %v1170 = vadd.f32 %v1168, %v1105
        %v1171 = vadd.f32 %v1169, %v1109
        %v1172 = vxor.u32 %v1170, 2147483648
        %v1173 = vxor.u32 %v1171, 2147483648
        %v1174 = vmul.f32 %v1172, 1.442695
        %v1175 = vpow.pop %v1174
        %v1176 = vmul.f32 %v1173, 1.442695
        %v1177 = vpow.pop %v1176
        %v1178 = vadd.f32 %v1175, 1.0
        %v1179 = vadd.f32 %v1177, 1.0
        %v1180 = vrcp.pop %v1178
        %v1181 = vmul.f32 1.0, %v1180
        %v1182 = vrcp.pop %v1179
        %v1183 = vmul.f32 1.0, %v1182
        %v1184 = vadd.f32 %v1146, %v1009
        %v1185 = vadd.f32 %v1149, %v1009
        %v1186 = vmul.f32 %v1165, %v1184
        %v1187 = vmul.f32 %v1167, %v1185
        %v1188 = vunpack.c.l.bf16 %v1067
        %v1189 = vunpack.c.h.bf16 %v1067
        %v1190 = vadd.f32 %v1188, %v1186
        %v1191 = vadd.f32 %v1189, %v1187
        %v1192 = vtanh.pop %v1190
        %v1193 = vtanh.pop %v1191
        %v1194 = vsub.f32 1.0, %v1181
        %v1195 = vsub.f32 1.0, %v1183
        %v1196 = vmul.f32 %v1194, %v1192
        %v1197 = vmul.f32 %v1195, %v1193
        %v1198 = vmul.f32 %v1181, %v1042
        %v1199 = vmul.f32 %v1183, %v1043
        %v1200 = vadd.f32 %v1196, %v1198
        %v1201 = vadd.f32 %v1197, %v1199
        %v1202 = vstv %s1058
        %vm1203 = vcmp.lt.s32.totalorder %v1202, %v748
        %vm1204 = vcmp.lt.s32.totalorder %v1202, %v749
        %v1205 = vsel %vm1203, 1, 0
        %v1206 = vsel %vm1204, 1, 0
        %1207 = vset.pattern.permute.xlu0 0
        %1208 = vperm.xlu0 %1207, %v1205
        %v1209 = vpop.permute.xlu0 %1208
        %1210 = vset.pattern.permute.xlu0 0
        %1211 = vperm.xlu0 %1210, %v1206
        %v1212 = vpop.permute.xlu0 %1211
        %vm1213 = vcmp.eq.s32.totalorder %v1209, 1
        %vm1214 = vcmp.eq.s32.totalorder %v1212, 1
        %v1215 = vsel %vm1213, %v1200, %v1042
        %v1216 = vsel %vm1214, %v1201, %v1043
        %v1217 = vpack.c.bf16 %v1216, %v1215
        %v1219 = vunpack.c.l.b16 %v1217
        %v1220 = vunpack.c.h.b16 %v1217
        %v1221 = vpack.c.b16 %v1219, %v1219
        %v1222 = vpack.c.b16 %v1220, %v1220
        %s1225 = sshra.s32 %s1059, 3
        %s1226 = sand.u32 %s1059, 7
        %s1227 = smul.addr %s1225, 4
        %s1228 = scalar_lea.vmem %s327, %s1227 [#allocation7]
        %1229 = vst [vmem:[%s1228] sm:$0xf] %v1221
        %1230 = vst [vmem:[%s1228 + $0x4] sm:$0xf] %v1222
        %s1231 = scalar_select %p750, 2, 5
        %s1232 = smul.u32 %s1231, 16
        %s1233 = sshra.s32 %s1232, 4
        %s1234 = sand.u32 %s1232, 15
        %s1235 = smul.u32 %s1233, 3
        %s1236 = smul.addr %s1235, 8
        %s1237 = scalar_lea.vmem [#allocation2], %s1236
        %v1238 = vld [vmem:[%s1237] sm:$0xff]
        %v1239 = vld [vmem:[%s1237 + $0x8] sm:$0xff]
        %v1240 = vld [vmem:[%s1237 + $0x10] sm:$0xff]
        %1241 = vmatprep.subr.bf16.mxu0 %v842
        %1242 = vmatpush1.bf16.msra.mxu0 %v841
        %1243 = vmatprep.subr.bf16.mxu0 %v845
        %1244 = vmatpush1.bf16.msra.mxu0 %v844
        %1245 = vmatprep.subr.bf16.mxu0 %v848
        %1246 = vmatpush1.bf16.msra.mxu0 %v847
        %1247 = vmatprep.subr.bf16.mxu0 %v851
        %1248 = vmatpush1.bf16.msra.mxu0 %v850
        %1249 = vmatprep.subr.bf16.mxu0 %v854
        %1250 = vmatpush1.bf16.msra.mxu0 %v853
        %1251 = vmatprep.subr.bf16.mxu0 %v857
        %1252 = vmatpush1.bf16.msra.mxu0 %v856
        %1253 = vmatprep.subr.bf16.mxu0 %v860
        %1254 = vmatpush1.bf16.msra.mxu0 %v859
        %1255 = vmatprep.subr.bf16.mxu0 %v863
        %1256 = vmatpush1.bf16.msra.mxu0 %v862
        %1257 = vmatprep.subr.bf16.mxu0 0
        %1258 = vmatpush1.bf16.msra.mxu0 0
        %1259 = vmatprep.subr.bf16.mxu0 0
        %1260 = vmatpush1.bf16.msra.mxu0 0
        %1261 = vmatprep.subr.bf16.mxu0 0
        %1262 = vmatpush1.bf16.msra.mxu0 0
        %1263 = vmatprep.subr.bf16.mxu0 0
        %1264 = vmatpush1.bf16.msra.mxu0 0
        %1265 = vmatprep.subr.bf16.mxu0 0
        %1266 = vmatpush1.bf16.msra.mxu0 0
        %1267 = vmatprep.subr.bf16.mxu0 0
        %1268 = vmatpush1.bf16.msra.mxu0 0
        %1269 = vmatprep.subr.bf16.mxu0 0
        %1270 = vmatpush1.bf16.msra.mxu0 0
        %1271 = vmatprep.subr.bf16.mxu0 0
        %1272 = vmatpush1.bf16.msra.mxu0 0
        %1273 = vmatprep.mubr.bf16.mxu0 0
        %1274 = vmatmul.mubr.bf16.gmra.mrb[0].mxu0 %v1217
        %v1275 = vpop.f32.mrb[0].mxu0
        %v1276 = vadd.f32 0.0, %v1275
        %v1277 = vpop.f32.mrb[0].mxu0
        %v1278 = vadd.f32 0.0, %v1277
        %v1279 = vpop.f32.mrb[0].mxu0
        %v1280 = vadd.f32 0.0, %v1279
        %v1281 = vpop.f32.mrb[0].mxu0
        %v1282 = vadd.f32 0.0, %v1281
        %1283 = vdwg.mxu0
        %1284 = vmatprep.subr.bf16.mxu0 0
        %1285 = vmatpush1.bf16.msra.mxu0 %v843
        %1286 = vmatprep.subr.bf16.mxu0 0
        %1287 = vmatpush1.bf16.msra.mxu0 %v846
        %1288 = vmatprep.subr.bf16.mxu0 0
        %1289 = vmatpush1.bf16.msra.mxu0 %v849
        %1290 = vmatprep.subr.bf16.mxu0 0
        %1291 = vmatpush1.bf16.msra.mxu0 %v852
        %1292 = vmatprep.subr.bf16.mxu0 0
        %1293 = vmatpush1.bf16.msra.mxu0 %v855
        %1294 = vmatprep.subr.bf16.mxu0 0
        %1295 = vmatpush1.bf16.msra.mxu0 %v858
        %1296 = vmatprep.subr.bf16.mxu0 0
        %1297 = vmatpush1.bf16.msra.mxu0 %v861
        %1298 = vmatprep.subr.bf16.mxu0 0
        %1299 = vmatpush1.bf16.msra.mxu0 %v864
        %1300 = vmatprep.subr.bf16.mxu0 0
        %1301 = vmatpush1.bf16.msra.mxu0 0
        %1302 = vmatprep.subr.bf16.mxu0 0
        %1303 = vmatpush1.bf16.msra.mxu0 0
        %1304 = vmatprep.subr.bf16.mxu0 0
        %1305 = vmatpush1.bf16.msra.mxu0 0
        %1306 = vmatprep.subr.bf16.mxu0 0
        %1307 = vmatpush1.bf16.msra.mxu0 0
        %1308 = vmatprep.subr.bf16.mxu0 0
        %1309 = vmatpush1.bf16.msra.mxu0 0
        %1310 = vmatprep.subr.bf16.mxu0 0
        %1311 = vmatpush1.bf16.msra.mxu0 0
        %1312 = vmatprep.subr.bf16.mxu0 0
        %1313 = vmatpush1.bf16.msra.mxu0 0
        %1314 = vmatprep.subr.bf16.mxu0 0
        %1315 = vmatpush1.bf16.msra.mxu0 0
        %1316 = vmatprep.mubr.bf16.mxu0 0
        %1317 = vmatmul.mubr.bf16.gmra.mrb[0].mxu0 %v1217
        %v1318 = vpop.f32.mrb[0].mxu0
        %v1319 = vadd.f32 0.0, %v1318
        %v1320 = vpop.f32.mrb[0].mxu0
        %v1321 = vpop.f32.mrb[0].mxu0
        %v1322 = vadd.f32 0.0, %v1321
        %v1323 = vpop.f32.mrb[0].mxu0
        %1324 = vdwg.mxu0
        %v1325 = vunpack.c.l.bf16 %v1238
        %v1326 = vunpack.c.h.bf16 %v1238
        %v1327 = vadd.f32 %v1325, %v1276
        %v1328 = vadd.f32 %v1326, %v1280
        %v1329 = vxor.u32 %v1327, 2147483648
        %v1330 = vxor.u32 %v1328, 2147483648
        %v1331 = vmul.f32 %v1329, 1.442695
        %v1332 = vpow.pop %v1331
        %v1333 = vmul.f32 %v1330, 1.442695
        %v1334 = vpow.pop %v1333
        %v1335 = vadd.f32 %v1332, 1.0
        %v1336 = vadd.f32 %v1334, 1.0
        %v1337 = vrcp.pop %v1335
        %v1338 = vmul.f32 1.0, %v1337
        %v1339 = vrcp.pop %v1336
        %v1340 = vmul.f32 1.0, %v1339
        %v1341 = vunpack.c.l.bf16 %v1239
        %v1342 = vunpack.c.h.bf16 %v1239
        %v1343 = vadd.f32 %v1341, %v1278
        %v1344 = vadd.f32 %v1342, %v1282
        %v1345 = vxor.u32 %v1343, 2147483648
        %v1346 = vxor.u32 %v1344, 2147483648
        %v1347 = vmul.f32 %v1345, 1.442695
        %v1348 = vpow.pop %v1347
        %v1349 = vmul.f32 %v1346, 1.442695
        %v1350 = vpow.pop %v1349
        %v1351 = vadd.f32 %v1348, 1.0
        %v1352 = vadd.f32 %v1350, 1.0
        %v1353 = vrcp.pop %v1351
        %v1354 = vmul.f32 1.0, %v1353
        %v1355 = vrcp.pop %v1352
        %v1356 = vmul.f32 1.0, %v1355
        %v1357 = vadd.f32 %v1319, %v1009
        %v1358 = vadd.f32 %v1322, %v1009
        %v1359 = vmul.f32 %v1338, %v1357
        %v1360 = vmul.f32 %v1340, %v1358
        %v1361 = vunpack.c.l.bf16 %v1240
        %v1362 = vunpack.c.h.bf16 %v1240
        %v1363 = vadd.f32 %v1361, %v1359
        %v1364 = vadd.f32 %v1362, %v1360
        %v1365 = vtanh.pop %v1363
        %v1366 = vtanh.pop %v1364
        %v1367 = vsub.f32 1.0, %v1354
        %v1368 = vsub.f32 1.0, %v1356
        %v1369 = vmul.f32 %v1367, %v1365
        %v1370 = vmul.f32 %v1368, %v1366
        %v1371 = vmul.f32 %v1354, %v1215
        %v1372 = vmul.f32 %v1356, %v1216
        %v1373 = vadd.f32 %v1369, %v1371
        %v1374 = vadd.f32 %v1370, %v1372
        %v1375 = vstv %s1231
        %vm1376 = vcmp.lt.s32.totalorder %v1375, %v748
        %vm1377 = vcmp.lt.s32.totalorder %v1375, %v749
        %v1378 = vsel %vm1376, 1, 0
        %v1379 = vsel %vm1377, 1, 0
        %1380 = vset.pattern.permute.xlu0 0
        %1381 = vperm.xlu0 %1380, %v1378
        %v1382 = vpop.permute.xlu0 %1381
        %1383 = vset.pattern.permute.xlu0 0
        %1384 = vperm.xlu0 %1383, %v1379
        %v1385 = vpop.permute.xlu0 %1384
        %vm1386 = vcmp.eq.s32.totalorder %v1382, 1
        %vm1387 = vcmp.eq.s32.totalorder %v1385, 1
        %v1388 = vsel %vm1386, %v1373, %v1215
        %v1389 = vsel %vm1387, %v1374, %v1216
        %v1390 = vpack.c.bf16 %v1389, %v1388
        %v1392 = vunpack.c.l.b16 %v1390
        %v1393 = vunpack.c.h.b16 %v1390
        %v1394 = vpack.c.b16 %v1392, %v1392
        %v1395 = vpack.c.b16 %v1393, %v1393
        %s1398 = sshra.s32 %s1232, 3
        %s1399 = sand.u32 %s1232, 7
        %s1400 = smul.addr %s1398, 4
        %s1401 = scalar_lea.vmem %s327, %s1400 [#allocation7]
        %1402 = vst [vmem:[%s1401] sm:$0xf] %v1394
        %1403 = vst [vmem:[%s1401 + $0x4] sm:$0xf] %v1395
        %s1404 = scalar_select %p750, 3, 4
        %s1405 = smul.u32 %s1404, 16
        %s1406 = sshra.s32 %s1405, 4
        %s1407 = sand.u32 %s1405, 15
        %s1408 = smul.u32 %s1406, 3
        %s1409 = smul.addr %s1408, 8
        %s1410 = scalar_lea.vmem [#allocation2], %s1409
        %v1411 = vld [vmem:[%s1410] sm:$0xff]
        %v1412 = vld [vmem:[%s1410 + $0x8] sm:$0xff]
        %v1413 = vld [vmem:[%s1410 + $0x10] sm:$0xff]
        %1414 = vmatprep.subr.bf16.mxu0 %v842
        %1415 = vmatpush1.bf16.msra.mxu0 %v841
        %1416 = vmatprep.subr.bf16.mxu0 %v845
        %1417 = vmatpush1.bf16.msra.mxu0 %v844
        %1418 = vmatprep.subr.bf16.mxu0 %v848
        %1419 = vmatpush1.bf16.msra.mxu0 %v847
        %1420 = vmatprep.subr.bf16.mxu0 %v851
        %1421 = vmatpush1.bf16.msra.mxu0 %v850
        %1422 = vmatprep.subr.bf16.mxu0 %v854
        %1423 = vmatpush1.bf16.msra.mxu0 %v853
        %1424 = vmatprep.subr.bf16.mxu0 %v857
        %1425 = vmatpush1.bf16.msra.mxu0 %v856
        %1426 = vmatprep.subr.bf16.mxu0 %v860
        %1427 = vmatpush1.bf16.msra.mxu0 %v859
        %1428 = vmatprep.subr.bf16.mxu0 %v863
        %1429 = vmatpush1.bf16.msra.mxu0 %v862
        %1430 = vmatprep.subr.bf16.mxu0 0
        %1431 = vmatpush1.bf16.msra.mxu0 0
        %1432 = vmatprep.subr.bf16.mxu0 0
        %1433 = vmatpush1.bf16.msra.mxu0 0
        %1434 = vmatprep.subr.bf16.mxu0 0
        %1435 = vmatpush1.bf16.msra.mxu0 0
        %1436 = vmatprep.subr.bf16.mxu0 0
        %1437 = vmatpush1.bf16.msra.mxu0 0
        %1438 = vmatprep.subr.bf16.mxu0 0
        %1439 = vmatpush1.bf16.msra.mxu0 0
        %1440 = vmatprep.subr.bf16.mxu0 0
        %1441 = vmatpush1.bf16.msra.mxu0 0
        %1442 = vmatprep.subr.bf16.mxu0 0
        %1443 = vmatpush1.bf16.msra.mxu0 0
        %1444 = vmatprep.subr.bf16.mxu0 0
        %1445 = vmatpush1.bf16.msra.mxu0 0
        %1446 = vmatprep.mubr.bf16.mxu0 0
        %1447 = vmatmul.mubr.bf16.gmra.mrb[0].mxu0 %v1390
        %v1448 = vpop.f32.mrb[0].mxu0
        %v1449 = vadd.f32 0.0, %v1448
        %v1450 = vpop.f32.mrb[0].mxu0
        %v1451 = vadd.f32 0.0, %v1450
        %v1452 = vpop.f32.mrb[0].mxu0
        %v1453 = vadd.f32 0.0, %v1452
        %v1454 = vpop.f32.mrb[0].mxu0
        %v1455 = vadd.f32 0.0, %v1454
        %1456 = vdwg.mxu0
        %1457 = vmatprep.subr.bf16.mxu0 0
        %1458 = vmatpush1.bf16.msra.mxu0 %v843
        %1459 = vmatprep.subr.bf16.mxu0 0
        %1460 = vmatpush1.bf16.msra.mxu0 %v846
        %1461 = vmatprep.subr.bf16.mxu0 0
        %1462 = vmatpush1.bf16.msra.mxu0 %v849
        %1463 = vmatprep.subr.bf16.mxu0 0
        %1464 = vmatpush1.bf16.msra.mxu0 %v852
        %1465 = vmatprep.subr.bf16.mxu0 0
        %1466 = vmatpush1.bf16.msra.mxu0 %v855
        %1467 = vmatprep.subr.bf16.mxu0 0
        %1468 = vmatpush1.bf16.msra.mxu0 %v858
        %1469 = vmatprep.subr.bf16.mxu0 0
        %1470 = vmatpush1.bf16.msra.mxu0 %v861
        %1471 = vmatprep.subr.bf16.mxu0 0
        %1472 = vmatpush1.bf16.msra.mxu0 %v864
        %1473 = vmatprep.subr.bf16.mxu0 0
        %1474 = vmatpush1.bf16.msra.mxu0 0
        %1475 = vmatprep.subr.bf16.mxu0 0
        %1476 = vmatpush1.bf16.msra.mxu0 0
        %1477 = vmatprep.subr.bf16.mxu0 0
        %1478 = vmatpush1.bf16.msra.mxu0 0
        %1479 = vmatprep.subr.bf16.mxu0 0
        %1480 = vmatpush1.bf16.msra.mxu0 0
        %1481 = vmatprep.subr.bf16.mxu0 0
        %1482 = vmatpush1.bf16.msra.mxu0 0
        %1483 = vmatprep.subr.bf16.mxu0 0
        %1484 = vmatpush1.bf16.msra.mxu0 0
        %1485 = vmatprep.subr.bf16.mxu0 0
        %1486 = vmatpush1.bf16.msra.mxu0 0
        %1487 = vmatprep.subr.bf16.mxu0 0
        %1488 = vmatpush1.bf16.msra.mxu0 0
        %1489 = vmatprep.mubr.bf16.mxu0 0
        %1490 = vmatmul.mubr.bf16.gmra.mrb[0].mxu0 %v1390
        %v1491 = vpop.f32.mrb[0].mxu0
        %v1492 = vadd.f32 0.0, %v1491
        %v1493 = vpop.f32.mrb[0].mxu0
        %v1494 = vpop.f32.mrb[0].mxu0
        %v1495 = vadd.f32 0.0, %v1494
        %v1496 = vpop.f32.mrb[0].mxu0
        %1497 = vdwg.mxu0
        %v1498 = vunpack.c.l.bf16 %v1411
        %v1499 = vunpack.c.h.bf16 %v1411
        %v1500 = vadd.f32 %v1498, %v1449
        %v1501 = vadd.f32 %v1499, %v1453
        %v1502 = vxor.u32 %v1500, 2147483648
        %v1503 = vxor.u32 %v1501, 2147483648
        %v1504 = vmul.f32 %v1502, 1.442695
        %v1505 = vpow.pop %v1504
        %v1506 = vmul.f32 %v1503, 1.442695
        %v1507 = vpow.pop %v1506
        %v1508 = vadd.f32 %v1505, 1.0
        %v1509 = vadd.f32 %v1507, 1.0
        %v1510 = vrcp.pop %v1508
        %v1511 = vmul.f32 1.0, %v1510
        %v1512 = vrcp.pop %v1509
        %v1513 = vmul.f32 1.0, %v1512
        %v1514 = vunpack.c.l.bf16 %v1412
        %v1515 = vunpack.c.h.bf16 %v1412
        %v1516 = vadd.f32 %v1514, %v1451
        %v1517 = vadd.f32 %v1515, %v1455
        %v1518 = vxor.u32 %v1516, 2147483648
        %v1519 = vxor.u32 %v1517, 2147483648
        %v1520 = vmul.f32 %v1518, 1.442695
        %v1521 = vpow.pop %v1520
        %v1522 = vmul.f32 %v1519, 1.442695
        %v1523 = vpow.pop %v1522
        %v1524 = vadd.f32 %v1521, 1.0
        %v1525 = vadd.f32 %v1523, 1.0
        %v1526 = vrcp.pop %v1524
        %v1527 = vmul.f32 1.0, %v1526
        %v1528 = vrcp.pop %v1525
        %v1529 = vmul.f32 1.0, %v1528
        %v1530 = vadd.f32 %v1492, %v1009
        %v1531 = vadd.f32 %v1495, %v1009
        %v1532 = vmul.f32 %v1511, %v1530
        %v1533 = vmul.f32 %v1513, %v1531
        %v1534 = vunpack.c.l.bf16 %v1413
        %v1535 = vunpack.c.h.bf16 %v1413
        %v1536 = vadd.f32 %v1534, %v1532
        %v1537 = vadd.f32 %v1535, %v1533
        %v1538 = vtanh.pop %v1536
        %v1539 = vtanh.pop %v1537
        %v1540 = vsub.f32 1.0, %v1527
        %v1541 = vsub.f32 1.0, %v1529
        %v1542 = vmul.f32 %v1540, %v1538
        %v1543 = vmul.f32 %v1541, %v1539
        %v1544 = vmul.f32 %v1527, %v1388
        %v1545 = vmul.f32 %v1529, %v1389
        %v1546 = vadd.f32 %v1542, %v1544
        %v1547 = vadd.f32 %v1543, %v1545
        %v1548 = vstv %s1404
        %vm1549 = vcmp.lt.s32.totalorder %v1548, %v748
        %vm1550 = vcmp.lt.s32.totalorder %v1548, %v749
        %v1551 = vsel %vm1549, 1, 0
        %v1552 = vsel %vm1550, 1, 0
        %1553 = vset.pattern.permute.xlu0 0
        %1554 = vperm.xlu0 %1553, %v1551
        %v1555 = vpop.permute.xlu0 %1554
        %1556 = vset.pattern.permute.xlu0 0
        %1557 = vperm.xlu0 %1556, %v1552
        %v1558 = vpop.permute.xlu0 %1557
        %vm1559 = vcmp.eq.s32.totalorder %v1555, 1
        %vm1560 = vcmp.eq.s32.totalorder %v1558, 1
        %v1561 = vsel %vm1559, %v1546, %v1388
        %v1562 = vsel %vm1560, %v1547, %v1389
        %v1563 = vpack.c.bf16 %v1562, %v1561
        %v1565 = vunpack.c.l.b16 %v1563
        %v1566 = vunpack.c.h.b16 %v1563
        %v1567 = vpack.c.b16 %v1565, %v1565
        %v1568 = vpack.c.b16 %v1566, %v1566
        %s1571 = sshra.s32 %s1405, 3
        %s1572 = sand.u32 %s1405, 7
        %s1573 = smul.addr %s1571, 4
        %s1574 = scalar_lea.vmem %s327, %s1573 [#allocation7]
        %1575 = vst [vmem:[%s1574] sm:$0xf] %v1567
        %1576 = vst [vmem:[%s1574 + $0x4] sm:$0xf] %v1568
        %s1577 = scalar_select %p750, 4, 3
        %s1578 = smul.u32 %s1577, 16
        %s1579 = sshra.s32 %s1578, 4
        %s1580 = sand.u32 %s1578, 15
        %s1581 = smul.u32 %s1579, 3
        %s1582 = smul.addr %s1581, 8
        %s1583 = scalar_lea.vmem [#allocation2], %s1582
        %v1584 = vld [vmem:[%s1583] sm:$0xff]
        %v1585 = vld [vmem:[%s1583 + $0x8] sm:$0xff]
        %v1586 = vld [vmem:[%s1583 + $0x10] sm:$0xff]
        %1587 = vmatprep.subr.bf16.mxu0 %v842
        %1588 = vmatpush1.bf16.msra.mxu0 %v841
        %1589 = vmatprep.subr.bf16.mxu0 %v845
        %1590 = vmatpush1.bf16.msra.mxu0 %v844
        %1591 = vmatprep.subr.bf16.mxu0 %v848
        %1592 = vmatpush1.bf16.msra.mxu0 %v847
        %1593 = vmatprep.subr.bf16.mxu0 %v851
        %1594 = vmatpush1.bf16.msra.mxu0 %v850
        %1595 = vmatprep.subr.bf16.mxu0 %v854
        %1596 = vmatpush1.bf16.msra.mxu0 %v853
        %1597 = vmatprep.subr.bf16.mxu0 %v857
        %1598 = vmatpush1.bf16.msra.mxu0 %v856
        %1599 = vmatprep.subr.bf16.mxu0 %v860
        %1600 = vmatpush1.bf16.msra.mxu0 %v859
        %1601 = vmatprep.subr.bf16.mxu0 %v863
        %1602 = vmatpush1.bf16.msra.mxu0 %v862
        %1603 = vmatprep.subr.bf16.mxu0 0
        %1604 = vmatpush1.bf16.msra.mxu0 0
        %1605 = vmatprep.subr.bf16.mxu0 0
        %1606 = vmatpush1.bf16.msra.mxu0 0
        %1607 = vmatprep.subr.bf16.mxu0 0
        %1608 = vmatpush1.bf16.msra.mxu0 0
        %1609 = vmatprep.subr.bf16.mxu0 0
        %1610 = vmatpush1.bf16.msra.mxu0 0
        %1611 = vmatprep.subr.bf16.mxu0 0
        %1612 = vmatpush1.bf16.msra.mxu0 0
        %1613 = vmatprep.subr.bf16.mxu0 0
        %1614 = vmatpush1.bf16.msra.mxu0 0
        %1615 = vmatprep.subr.bf16.mxu0 0
        %1616 = vmatpush1.bf16.msra.mxu0 0
        %1617 = vmatprep.subr.bf16.mxu0 0
        %1618 = vmatpush1.bf16.msra.mxu0 0
        %1619 = vmatprep.mubr.bf16.mxu0 0
        %1620 = vmatmul.mubr.bf16.gmra.mrb[0].mxu0 %v1563
        %v1621 = vpop.f32.mrb[0].mxu0
        %v1622 = vadd.f32 0.0, %v1621
        %v1623 = vpop.f32.mrb[0].mxu0
        %v1624 = vadd.f32 0.0, %v1623
        %v1625 = vpop.f32.mrb[0].mxu0
        %v1626 = vadd.f32 0.0, %v1625
        %v1627 = vpop.f32.mrb[0].mxu0
        %v1628 = vadd.f32 0.0, %v1627
        %1629 = vdwg.mxu0
        %1630 = vmatprep.subr.bf16.mxu0 0
        %1631 = vmatpush1.bf16.msra.mxu0 %v843
        %1632 = vmatprep.subr.bf16.mxu0 0
        %1633 = vmatpush1.bf16.msra.mxu0 %v846
        %1634 = vmatprep.subr.bf16.mxu0 0
        %1635 = vmatpush1.bf16.msra.mxu0 %v849
        %1636 = vmatprep.subr.bf16.mxu0 0
        %1637 = vmatpush1.bf16.msra.mxu0 %v852
        %1638 = vmatprep.subr.bf16.mxu0 0
        %1639 = vmatpush1.bf16.msra.mxu0 %v855
        %1640 = vmatprep.subr.bf16.mxu0 0
        %1641 = vmatpush1.bf16.msra.mxu0 %v858
        %1642 = vmatprep.subr.bf16.mxu0 0
        %1643 = vmatpush1.bf16.msra.mxu0 %v861
        %1644 = vmatprep.subr.bf16.mxu0 0
        %1645 = vmatpush1.bf16.msra.mxu0 %v864
        %1646 = vmatprep.subr.bf16.mxu0 0
        %1647 = vmatpush1.bf16.msra.mxu0 0
        %1648 = vmatprep.subr.bf16.mxu0 0
        %1649 = vmatpush1.bf16.msra.mxu0 0
        %1650 = vmatprep.subr.bf16.mxu0 0
        %1651 = vmatpush1.bf16.msra.mxu0 0
        %1652 = vmatprep.subr.bf16.mxu0 0
        %1653 = vmatpush1.bf16.msra.mxu0 0
        %1654 = vmatprep.subr.bf16.mxu0 0
        %1655 = vmatpush1.bf16.msra.mxu0 0
        %1656 = vmatprep.subr.bf16.mxu0 0
        %1657 = vmatpush1.bf16.msra.mxu0 0
        %1658 = vmatprep.subr.bf16.mxu0 0
        %1659 = vmatpush1.bf16.msra.mxu0 0
        %1660 = vmatprep.subr.bf16.mxu0 0
        %1661 = vmatpush1.bf16.msra.mxu0 0
        %1662 = vmatprep.mubr.bf16.mxu0 0
        %1663 = vmatmul.mubr.bf16.gmra.mrb[0].mxu0 %v1563
        %v1664 = vpop.f32.mrb[0].mxu0
        %v1665 = vadd.f32 0.0, %v1664
        %v1666 = vpop.f32.mrb[0].mxu0
        %v1667 = vpop.f32.mrb[0].mxu0
        %v1668 = vadd.f32 0.0, %v1667
        %v1669 = vpop.f32.mrb[0].mxu0
        %1670 = vdwg.mxu0
        %v1671 = vunpack.c.l.bf16 %v1584
        %v1672 = vunpack.c.h.bf16 %v1584
        %v1673 = vadd.f32 %v1671, %v1622
        %v1674 = vadd.f32 %v1672, %v1626
        %v1675 = vxor.u32 %v1673, 2147483648
        %v1676 = vxor.u32 %v1674, 2147483648
        %v1677 = vmul.f32 %v1675, 1.442695
        %v1678 = vpow.pop %v1677
        %v1679 = vmul.f32 %v1676, 1.442695
        %v1680 = vpow.pop %v1679
        %v1681 = vadd.f32 %v1678, 1.0
        %v1682 = vadd.f32 %v1680, 1.0
        %v1683 = vrcp.pop %v1681
        %v1684 = vmul.f32 1.0, %v1683
        %v1685 = vrcp.pop %v1682
        %v1686 = vmul.f32 1.0, %v1685
        %v1687 = vunpack.c.l.bf16 %v1585
        %v1688 = vunpack.c.h.bf16 %v1585
        %v1689 = vadd.f32 %v1687, %v1624
        %v1690 = vadd.f32 %v1688, %v1628
        %v1691 = vxor.u32 %v1689, 2147483648
        %v1692 = vxor.u32 %v1690, 2147483648
        %v1693 = vmul.f32 %v1691, 1.442695
        %v1694 = vpow.pop %v1693
        %v1695 = vmul.f32 %v1692, 1.442695
        %v1696 = vpow.pop %v1695
        %v1697 = vadd.f32 %v1694, 1.0
        %v1698 = vadd.f32 %v1696, 1.0
        %v1699 = vrcp.pop %v1697
        %v1700 = vmul.f32 1.0, %v1699
        %v1701 = vrcp.pop %v1698
        %v1702 = vmul.f32 1.0, %v1701
        %v1703 = vadd.f32 %v1665, %v1009
        %v1704 = vadd.f32 %v1668, %v1009
        %v1705 = vmul.f32 %v1684, %v1703
        %v1706 = vmul.f32 %v1686, %v1704
        %v1707 = vunpack.c.l.bf16 %v1586
        %v1708 = vunpack.c.h.bf16 %v1586
        %v1709 = vadd.f32 %v1707, %v1705
        %v1710 = vadd.f32 %v1708, %v1706
        %v1711 = vtanh.pop %v1709
        %v1712 = vtanh.pop %v1710
        %v1713 = vsub.f32 1.0, %v1700
        %v1714 = vsub.f32 1.0, %v1702
        %v1715 = vmul.f32 %v1713, %v1711
        %v1716 = vmul.f32 %v1714, %v1712
        %v1717 = vmul.f32 %v1700, %v1561
        %v1718 = vmul.f32 %v1702, %v1562
        %v1719 = vadd.f32 %v1715, %v1717
        %v1720 = vadd.f32 %v1716, %v1718
        %v1721 = vstv %s1577
        %vm1722 = vcmp.lt.s32.totalorder %v1721, %v748
        %vm1723 = vcmp.lt.s32.totalorder %v1721, %v749
        %v1724 = vsel %vm1722, 1, 0
        %v1725 = vsel %vm1723, 1, 0
        %1726 = vset.pattern.permute.xlu0 0
        %1727 = vperm.xlu0 %1726, %v1724
        %v1728 = vpop.permute.xlu0 %1727
        %1729 = vset.pattern.permute.xlu0 0
        %1730 = vperm.xlu0 %1729, %v1725
        %v1731 = vpop.permute.xlu0 %1730
        %vm1732 = vcmp.eq.s32.totalorder %v1728, 1
        %vm1733 = vcmp.eq.s32.totalorder %v1731, 1
        %v1734 = vsel %vm1732, %v1719, %v1561
        %v1735 = vsel %vm1733, %v1720, %v1562
        %v1736 = vpack.c.bf16 %v1735, %v1734
        %v1738 = vunpack.c.l.b16 %v1736
        %v1739 = vunpack.c.h.b16 %v1736
        %v1740 = vpack.c.b16 %v1738, %v1738
        %v1741 = vpack.c.b16 %v1739, %v1739
        %s1744 = sshra.s32 %s1578, 3
        %s1745 = sand.u32 %s1578, 7
        %s1746 = smul.addr %s1744, 4
        %s1747 = scalar_lea.vmem %s327, %s1746 [#allocation7]
        %1748 = vst [vmem:[%s1747] sm:$0xf] %v1740
        %1749 = vst [vmem:[%s1747 + $0x4] sm:$0xf] %v1741
        %s1750 = scalar_select %p750, 5, 2
        %s1751 = smul.u32 %s1750, 16
        %s1752 = sshra.s32 %s1751, 4
        %s1753 = sand.u32 %s1751, 15
        %s1754 = smul.u32 %s1752, 3
        %s1755 = smul.addr %s1754, 8
        %s1756 = scalar_lea.vmem [#allocation2], %s1755
        %v1757 = vld [vmem:[%s1756] sm:$0xff]
        %v1758 = vld [vmem:[%s1756 + $0x8] sm:$0xff]
        %v1759 = vld [vmem:[%s1756 + $0x10] sm:$0xff]
        %1760 = vmatprep.subr.bf16.mxu0 %v842
        %1761 = vmatpush1.bf16.msra.mxu0 %v841
        %1762 = vmatprep.subr.bf16.mxu0 %v845
        %1763 = vmatpush1.bf16.msra.mxu0 %v844
        %1764 = vmatprep.subr.bf16.mxu0 %v848
        %1765 = vmatpush1.bf16.msra.mxu0 %v847
        %1766 = vmatprep.subr.bf16.mxu0 %v851
        %1767 = vmatpush1.bf16.msra.mxu0 %v850
        %1768 = vmatprep.subr.bf16.mxu0 %v854
        %1769 = vmatpush1.bf16.msra.mxu0 %v853
        %1770 = vmatprep.subr.bf16.mxu0 %v857
        %1771 = vmatpush1.bf16.msra.mxu0 %v856
        %1772 = vmatprep.subr.bf16.mxu0 %v860
        %1773 = vmatpush1.bf16.msra.mxu0 %v859
        %1774 = vmatprep.subr.bf16.mxu0 %v863
        %1775 = vmatpush1.bf16.msra.mxu0 %v862
        %1776 = vmatprep.subr.bf16.mxu0 0
        %1777 = vmatpush1.bf16.msra.mxu0 0
        %1778 = vmatprep.subr.bf16.mxu0 0
        %1779 = vmatpush1.bf16.msra.mxu0 0
        %1780 = vmatprep.subr.bf16.mxu0 0
        %1781 = vmatpush1.bf16.msra.mxu0 0
        %1782 = vmatprep.subr.bf16.mxu0 0
        %1783 = vmatpush1.bf16.msra.mxu0 0
        %1784 = vmatprep.subr.bf16.mxu0 0
        %1785 = vmatpush1.bf16.msra.mxu0 0
        %1786 = vmatprep.subr.bf16.mxu0 0
        %1787 = vmatpush1.bf16.msra.mxu0 0
        %1788 = vmatprep.subr.bf16.mxu0 0
        %1789 = vmatpush1.bf16.msra.mxu0 0
        %1790 = vmatprep.subr.bf16.mxu0 0
        %1791 = vmatpush1.bf16.msra.mxu0 0
        %1792 = vmatprep.mubr.bf16.mxu0 0
        %1793 = vmatmul.mubr.bf16.gmra.mrb[0].mxu0 %v1736
        %v1794 = vpop.f32.mrb[0].mxu0
        %v1795 = vadd.f32 0.0, %v1794
        %v1796 = vpop.f32.mrb[0].mxu0
        %v1797 = vadd.f32 0.0, %v1796
        %v1798 = vpop.f32.mrb[0].mxu0
        %v1799 = vadd.f32 0.0, %v1798
        %v1800 = vpop.f32.mrb[0].mxu0
        %v1801 = vadd.f32 0.0, %v1800
        %1802 = vdwg.mxu0
        %1803 = vmatprep.subr.bf16.mxu0 0
        %1804 = vmatpush1.bf16.msra.mxu0 %v843
        %1805 = vmatprep.subr.bf16.mxu0 0
        %1806 = vmatpush1.bf16.msra.mxu0 %v846
        %1807 = vmatprep.subr.bf16.mxu0 0
        %1808 = vmatpush1.bf16.msra.mxu0 %v849
        %1809 = vmatprep.subr.bf16.mxu0 0
        %1810 = vmatpush1.bf16.msra.mxu0 %v852
        %1811 = vmatprep.subr.bf16.mxu0 0
        %1812 = vmatpush1.bf16.msra.mxu0 %v855
        %1813 = vmatprep.subr.bf16.mxu0 0
        %1814 = vmatpush1.bf16.msra.mxu0 %v858
        %1815 = vmatprep.subr.bf16.mxu0 0
        %1816 = vmatpush1.bf16.msra.mxu0 %v861
        %1817 = vmatprep.subr.bf16.mxu0 0
        %1818 = vmatpush1.bf16.msra.mxu0 %v864
        %1819 = vmatprep.subr.bf16.mxu0 0
        %1820 = vmatpush1.bf16.msra.mxu0 0
        %1821 = vmatprep.subr.bf16.mxu0 0
        %1822 = vmatpush1.bf16.msra.mxu0 0
        %1823 = vmatprep.subr.bf16.mxu0 0
        %1824 = vmatpush1.bf16.msra.mxu0 0
        %1825 = vmatprep.subr.bf16.mxu0 0
        %1826 = vmatpush1.bf16.msra.mxu0 0
        %1827 = vmatprep.subr.bf16.mxu0 0
        %1828 = vmatpush1.bf16.msra.mxu0 0
        %1829 = vmatprep.subr.bf16.mxu0 0
        %1830 = vmatpush1.bf16.msra.mxu0 0
        %1831 = vmatprep.subr.bf16.mxu0 0
        %1832 = vmatpush1.bf16.msra.mxu0 0
        %1833 = vmatprep.subr.bf16.mxu0 0
        %1834 = vmatpush1.bf16.msra.mxu0 0
        %1835 = vmatprep.mubr.bf16.mxu0 0
        %1836 = vmatmul.mubr.bf16.gmra.mrb[0].mxu0 %v1736
        %v1837 = vpop.f32.mrb[0].mxu0
        %v1838 = vadd.f32 0.0, %v1837
        %v1839 = vpop.f32.mrb[0].mxu0
        %v1840 = vpop.f32.mrb[0].mxu0
        %v1841 = vadd.f32 0.0, %v1840
        %v1842 = vpop.f32.mrb[0].mxu0
        %1843 = vdwg.mxu0
        %v1844 = vunpack.c.l.bf16 %v1757
        %v1845 = vunpack.c.h.bf16 %v1757
        %v1846 = vadd.f32 %v1844, %v1795
        %v1847 = vadd.f32 %v1845, %v1799
        %v1848 = vxor.u32 %v1846, 2147483648
        %v1849 = vxor.u32 %v1847, 2147483648
        %v1850 = vmul.f32 %v1848, 1.442695
        %v1851 = vpow.pop %v1850
        %v1852 = vmul.f32 %v1849, 1.442695
        %v1853 = vpow.pop %v1852
        %v1854 = vadd.f32 %v1851, 1.0
        %v1855 = vadd.f32 %v1853, 1.0
        %v1856 = vrcp.pop %v1854
        %v1857 = vmul.f32 1.0, %v1856
        %v1858 = vrcp.pop %v1855
        %v1859 = vmul.f32 1.0, %v1858
        %v1860 = vunpack.c.l.bf16 %v1758
        %v1861 = vunpack.c.h.bf16 %v1758
        %v1862 = vadd.f32 %v1860, %v1797
        %v1863 = vadd.f32 %v1861, %v1801
        %v1864 = vxor.u32 %v1862, 2147483648
        %v1865 = vxor.u32 %v1863, 2147483648
        %v1866 = vmul.f32 %v1864, 1.442695
        %v1867 = vpow.pop %v1866
        %v1868 = vmul.f32 %v1865, 1.442695
        %v1869 = vpow.pop %v1868
        %v1870 = vadd.f32 %v1867, 1.0
        %v1871 = vadd.f32 %v1869, 1.0
        %v1872 = vrcp.pop %v1870
        %v1873 = vmul.f32 1.0, %v1872
        %v1874 = vrcp.pop %v1871
        %v1875 = vmul.f32 1.0, %v1874
        %v1876 = vadd.f32 %v1838, %v1009
        %v1877 = vadd.f32 %v1841, %v1009
        %v1878 = vmul.f32 %v1857, %v1876
        %v1879 = vmul.f32 %v1859, %v1877
        %v1880 = vunpack.c.l.bf16 %v1759
        %v1881 = vunpack.c.h.bf16 %v1759
        %v1882 = vadd.f32 %v1880, %v1878
        %v1883 = vadd.f32 %v1881, %v1879
        %v1884 = vtanh.pop %v1882
        %v1885 = vtanh.pop %v1883
        %v1886 = vsub.f32 1.0, %v1873
        %v1887 = vsub.f32 1.0, %v1875
        %v1888 = vmul.f32 %v1886, %v1884
        %v1889 = vmul.f32 %v1887, %v1885
        %v1890 = vmul.f32 %v1873, %v1734
        %v1891 = vmul.f32 %v1875, %v1735
        %v1892 = vadd.f32 %v1888, %v1890
        %v1893 = vadd.f32 %v1889, %v1891
        %v1894 = vstv %s1750
        %vm1895 = vcmp.lt.s32.totalorder %v1894, %v748
        %vm1896 = vcmp.lt.s32.totalorder %v1894, %v749
        %v1897 = vsel %vm1895, 1, 0
        %v1898 = vsel %vm1896, 1, 0
        %1899 = vset.pattern.permute.xlu0 0
        %1900 = vperm.xlu0 %1899, %v1897
        %v1901 = vpop.permute.xlu0 %1900
        %1902 = vset.pattern.permute.xlu0 0
        %1903 = vperm.xlu0 %1902, %v1898
        %v1904 = vpop.permute.xlu0 %1903
        %vm1905 = vcmp.eq.s32.totalorder %v1901, 1
        %vm1906 = vcmp.eq.s32.totalorder %v1904, 1
        %v1907 = vsel %vm1905, %v1892, %v1734
        %v1908 = vsel %vm1906, %v1893, %v1735
        %v1909 = vpack.c.bf16 %v1908, %v1907
        %v1911 = vunpack.c.l.b16 %v1909
        %v1912 = vunpack.c.h.b16 %v1909
        %v1913 = vpack.c.b16 %v1911, %v1911
        %v1914 = vpack.c.b16 %v1912, %v1912
        %s1917 = sshra.s32 %s1751, 3
        %s1918 = sand.u32 %s1751, 7
        %s1919 = smul.addr %s1917, 4
        %s1920 = scalar_lea.vmem %s327, %s1919 [#allocation7]
        %1921 = vst [vmem:[%s1920] sm:$0xf] %v1913
        %1922 = vst [vmem:[%s1920 + $0x4] sm:$0xf] %v1914
        %s1923 = scalar_select %p750, 6, 1
        %s1924 = smul.u32 %s1923, 16
        %s1925 = sshra.s32 %s1924, 4
        %s1926 = sand.u32 %s1924, 15
        %s1927 = smul.u32 %s1925, 3
        %s1928 = smul.addr %s1927, 8
        %s1929 = scalar_lea.vmem [#allocation2], %s1928
        %v1930 = vld [vmem:[%s1929] sm:$0xff]
        %v1931 = vld [vmem:[%s1929 + $0x8] sm:$0xff]
        %v1932 = vld [vmem:[%s1929 + $0x10] sm:$0xff]
        %1933 = vmatprep.subr.bf16.mxu0 %v842
        %1934 = vmatpush1.bf16.msra.mxu0 %v841
        %1935 = vmatprep.subr.bf16.mxu0 %v845
        %1936 = vmatpush1.bf16.msra.mxu0 %v844
        %1937 = vmatprep.subr.bf16.mxu0 %v848
        %1938 = vmatpush1.bf16.msra.mxu0 %v847
        %1939 = vmatprep.subr.bf16.mxu0 %v851
        %1940 = vmatpush1.bf16.msra.mxu0 %v850
        %1941 = vmatprep.subr.bf16.mxu0 %v854
        %1942 = vmatpush1.bf16.msra.mxu0 %v853
        %1943 = vmatprep.subr.bf16.mxu0 %v857
        %1944 = vmatpush1.bf16.msra.mxu0 %v856
        %1945 = vmatprep.subr.bf16.mxu0 %v860
        %1946 = vmatpush1.bf16.msra.mxu0 %v859
        %1947 = vmatprep.subr.bf16.mxu0 %v863
        %1948 = vmatpush1.bf16.msra.mxu0 %v862
        %1949 = vmatprep.subr.bf16.mxu0 0
        %1950 = vmatpush1.bf16.msra.mxu0 0
        %1951 = vmatprep.subr.bf16.mxu0 0
        %1952 = vmatpush1.bf16.msra.mxu0 0
        %1953 = vmatprep.subr.bf16.mxu0 0
        %1954 = vmatpush1.bf16.msra.mxu0 0
        %1955 = vmatprep.subr.bf16.mxu0 0
        %1956 = vmatpush1.bf16.msra.mxu0 0
        %1957 = vmatprep.subr.bf16.mxu0 0
        %1958 = vmatpush1.bf16.msra.mxu0 0
        %1959 = vmatprep.subr.bf16.mxu0 0
        %1960 = vmatpush1.bf16.msra.mxu0 0
        %1961 = vmatprep.subr.bf16.mxu0 0
        %1962 = vmatpush1.bf16.msra.mxu0 0
        %1963 = vmatprep.subr.bf16.mxu0 0
        %1964 = vmatpush1.bf16.msra.mxu0 0
        %1965 = vmatprep.mubr.bf16.mxu0 0
        %1966 = vmatmul.mubr.bf16.gmra.mrb[0].mxu0 %v1909
        %v1967 = vpop.f32.mrb[0].mxu0
        %v1968 = vadd.f32 0.0, %v1967
        %v1969 = vpop.f32.mrb[0].mxu0
        %v1970 = vadd.f32 0.0, %v1969
        %v1971 = vpop.f32.mrb[0].mxu0
        %v1972 = vadd.f32 0.0, %v1971
        %v1973 = vpop.f32.mrb[0].mxu0
        %v1974 = vadd.f32 0.0, %v1973
        %1975 = vdwg.mxu0
        %1976 = vmatprep.subr.bf16.mxu0 0
        %1977 = vmatpush1.bf16.msra.mxu0 %v843
        %1978 = vmatprep.subr.bf16.mxu0 0
        %1979 = vmatpush1.bf16.msra.mxu0 %v846
        %1980 = vmatprep.subr.bf16.mxu0 0
        %1981 = vmatpush1.bf16.msra.mxu0 %v849
        %1982 = vmatprep.subr.bf16.mxu0 0
        %1983 = vmatpush1.bf16.msra.mxu0 %v852
        %1984 = vmatprep.subr.bf16.mxu0 0
        %1985 = vmatpush1.bf16.msra.mxu0 %v855
        %1986 = vmatprep.subr.bf16.mxu0 0
        %1987 = vmatpush1.bf16.msra.mxu0 %v858
        %1988 = vmatprep.subr.bf16.mxu0 0
        %1989 = vmatpush1.bf16.msra.mxu0 %v861
        %1990 = vmatprep.subr.bf16.mxu0 0
        %1991 = vmatpush1.bf16.msra.mxu0 %v864
        %1992 = vmatprep.subr.bf16.mxu0 0
        %1993 = vmatpush1.bf16.msra.mxu0 0
        %1994 = vmatprep.subr.bf16.mxu0 0
        %1995 = vmatpush1.bf16.msra.mxu0 0
        %1996 = vmatprep.subr.bf16.mxu0 0
        %1997 = vmatpush1.bf16.msra.mxu0 0
        %1998 = vmatprep.subr.bf16.mxu0 0
        %1999 = vmatpush1.bf16.msra.mxu0 0
        %2000 = vmatprep.subr.bf16.mxu0 0
        %2001 = vmatpush1.bf16.msra.mxu0 0
        %2002 = vmatprep.subr.bf16.mxu0 0
        %2003 = vmatpush1.bf16.msra.mxu0 0
        %2004 = vmatprep.subr.bf16.mxu0 0
        %2005 = vmatpush1.bf16.msra.mxu0 0
        %2006 = vmatprep.subr.bf16.mxu0 0
        %2007 = vmatpush1.bf16.msra.mxu0 0
        %2008 = vmatprep.mubr.bf16.mxu0 0
        %2009 = vmatmul.mubr.bf16.gmra.mrb[0].mxu0 %v1909
        %v2010 = vpop.f32.mrb[0].mxu0
        %v2011 = vadd.f32 0.0, %v2010
        %v2012 = vpop.f32.mrb[0].mxu0
        %v2013 = vpop.f32.mrb[0].mxu0
        %v2014 = vadd.f32 0.0, %v2013
        %v2015 = vpop.f32.mrb[0].mxu0
        %2016 = vdwg.mxu0
        %v2017 = vunpack.c.l.bf16 %v1930
        %v2018 = vunpack.c.h.bf16 %v1930
        %v2019 = vadd.f32 %v2017, %v1968
        %v2020 = vadd.f32 %v2018, %v1972
        %v2021 = vxor.u32 %v2019, 2147483648
        %v2022 = vxor.u32 %v2020, 2147483648
        %v2023 = vmul.f32 %v2021, 1.442695
        %v2024 = vpow.pop %v2023
        %v2025 = vmul.f32 %v2022, 1.442695
        %v2026 = vpow.pop %v2025
        %v2027 = vadd.f32 %v2024, 1.0
        %v2028 = vadd.f32 %v2026, 1.0
        %v2029 = vrcp.pop %v2027
        %v2030 = vmul.f32 1.0, %v2029
        %v2031 = vrcp.pop %v2028
        %v2032 = vmul.f32 1.0, %v2031
        %v2033 = vunpack.c.l.bf16 %v1931
        %v2034 = vunpack.c.h.bf16 %v1931
        %v2035 = vadd.f32 %v2033, %v1970
        %v2036 = vadd.f32 %v2034, %v1974
        %v2037 = vxor.u32 %v2035, 2147483648
        %v2038 = vxor.u32 %v2036, 2147483648
        %v2039 = vmul.f32 %v2037, 1.442695
        %v2040 = vpow.pop %v2039
        %v2041 = vmul.f32 %v2038, 1.442695
        %v2042 = vpow.pop %v2041
        %v2043 = vadd.f32 %v2040, 1.0
        %v2044 = vadd.f32 %v2042, 1.0
        %v2045 = vrcp.pop %v2043
        %v2046 = vmul.f32 1.0, %v2045
        %v2047 = vrcp.pop %v2044
        %v2048 = vmul.f32 1.0, %v2047
        %v2049 = vadd.f32 %v2011, %v1009
        %v2050 = vadd.f32 %v2014, %v1009
        %v2051 = vmul.f32 %v2030, %v2049
        %v2052 = vmul.f32 %v2032, %v2050
        %v2053 = vunpack.c.l.bf16 %v1932
        %v2054 = vunpack.c.h.bf16 %v1932
        %v2055 = vadd.f32 %v2053, %v2051
        %v2056 = vadd.f32 %v2054, %v2052
        %v2057 = vtanh.pop %v2055
        %v2058 = vtanh.pop %v2056
        %v2059 = vsub.f32 1.0, %v2046
        %v2060 = vsub.f32 1.0, %v2048
        %v2061 = vmul.f32 %v2059, %v2057
        %v2062 = vmul.f32 %v2060, %v2058
        %v2063 = vmul.f32 %v2046, %v1907
        %v2064 = vmul.f32 %v2048, %v1908
        %v2065 = vadd.f32 %v2061, %v2063
        %v2066 = vadd.f32 %v2062, %v2064
        %v2067 = vstv %s1923
        %vm2068 = vcmp.lt.s32.totalorder %v2067, %v748
        %vm2069 = vcmp.lt.s32.totalorder %v2067, %v749
        %v2070 = vsel %vm2068, 1, 0
        %v2071 = vsel %vm2069, 1, 0
        %2072 = vset.pattern.permute.xlu0 0
        %2073 = vperm.xlu0 %2072, %v2070
        %v2074 = vpop.permute.xlu0 %2073
        %2075 = vset.pattern.permute.xlu0 0
        %2076 = vperm.xlu0 %2075, %v2071
        %v2077 = vpop.permute.xlu0 %2076
        %vm2078 = vcmp.eq.s32.totalorder %v2074, 1
        %vm2079 = vcmp.eq.s32.totalorder %v2077, 1
        %v2080 = vsel %vm2078, %v2065, %v1907
        %v2081 = vsel %vm2079, %v2066, %v1908
        %v2082 = vpack.c.bf16 %v2081, %v2080
        %v2084 = vunpack.c.l.b16 %v2082
        %v2085 = vunpack.c.h.b16 %v2082
        %v2086 = vpack.c.b16 %v2084, %v2084
        %v2087 = vpack.c.b16 %v2085, %v2085
        %s2090 = sshra.s32 %s1924, 3
        %s2091 = sand.u32 %s1924, 7
        %s2092 = smul.addr %s2090, 4
        %s2093 = scalar_lea.vmem %s327, %s2092 [#allocation7]
        %2094 = vst [vmem:[%s2093] sm:$0xf] %v2086
        %2095 = vst [vmem:[%s2093 + $0x4] sm:$0xf] %v2087
        %s2096 = scalar_select %p750, 7, 0
        %s2097 = smul.u32 %s2096, 16
        %s2098 = sshra.s32 %s2097, 4
        %s2099 = sand.u32 %s2097, 15
        %s2100 = smul.u32 %s2098, 3
        %s2101 = smul.addr %s2100, 8
        %s2102 = scalar_lea.vmem [#allocation2], %s2101
        %v2103 = vld [vmem:[%s2102] sm:$0xff]
        %v2104 = vld [vmem:[%s2102 + $0x8] sm:$0xff]
        %v2105 = vld [vmem:[%s2102 + $0x10] sm:$0xff]
        %2106 = vmatprep.subr.bf16.mxu0 %v842
        %2107 = vmatpush1.bf16.msra.mxu0 %v841
        %2108 = vmatprep.subr.bf16.mxu0 %v845
        %2109 = vmatpush1.bf16.msra.mxu0 %v844
        %2110 = vmatprep.subr.bf16.mxu0 %v848
        %2111 = vmatpush1.bf16.msra.mxu0 %v847
        %2112 = vmatprep.subr.bf16.mxu0 %v851
        %2113 = vmatpush1.bf16.msra.mxu0 %v850
        %2114 = vmatprep.subr.bf16.mxu0 %v854
        %2115 = vmatpush1.bf16.msra.mxu0 %v853
        %2116 = vmatprep.subr.bf16.mxu0 %v857
        %2117 = vmatpush1.bf16.msra.mxu0 %v856
        %2118 = vmatprep.subr.bf16.mxu0 %v860
        %2119 = vmatpush1.bf16.msra.mxu0 %v859
        %2120 = vmatprep.subr.bf16.mxu0 %v863
        %2121 = vmatpush1.bf16.msra.mxu0 %v862
        %2122 = vmatprep.subr.bf16.mxu0 0
        %2123 = vmatpush1.bf16.msra.mxu0 0
        %2124 = vmatprep.subr.bf16.mxu0 0
        %2125 = vmatpush1.bf16.msra.mxu0 0
        %2126 = vmatprep.subr.bf16.mxu0 0
        %2127 = vmatpush1.bf16.msra.mxu0 0
        %2128 = vmatprep.subr.bf16.mxu0 0
        %2129 = vmatpush1.bf16.msra.mxu0 0
        %2130 = vmatprep.subr.bf16.mxu0 0
        %2131 = vmatpush1.bf16.msra.mxu0 0
        %2132 = vmatprep.subr.bf16.mxu0 0
        %2133 = vmatpush1.bf16.msra.mxu0 0
        %2134 = vmatprep.subr.bf16.mxu0 0
        %2135 = vmatpush1.bf16.msra.mxu0 0
        %2136 = vmatprep.subr.bf16.mxu0 0
        %2137 = vmatpush1.bf16.msra.mxu0 0
        %2138 = vmatprep.mubr.bf16.mxu0 0
        %2139 = vmatmul.mubr.bf16.gmra.mrb[0].mxu0 %v2082
        %v2140 = vpop.f32.mrb[0].mxu0
        %v2141 = vadd.f32 0.0, %v2140
        %v2142 = vpop.f32.mrb[0].mxu0
        %v2143 = vadd.f32 0.0, %v2142
        %v2144 = vpop.f32.mrb[0].mxu0
        %v2145 = vadd.f32 0.0, %v2144
        %v2146 = vpop.f32.mrb[0].mxu0
        %v2147 = vadd.f32 0.0, %v2146
        %2148 = vdwg.mxu0
        %2149 = vmatprep.subr.bf16.mxu0 0
        %2150 = vmatpush1.bf16.msra.mxu0 %v843
        %2151 = vmatprep.subr.bf16.mxu0 0
        %2152 = vmatpush1.bf16.msra.mxu0 %v846
        %2153 = vmatprep.subr.bf16.mxu0 0
        %2154 = vmatpush1.bf16.msra.mxu0 %v849
        %2155 = vmatprep.subr.bf16.mxu0 0
        %2156 = vmatpush1.bf16.msra.mxu0 %v852
        %2157 = vmatprep.subr.bf16.mxu0 0
        %2158 = vmatpush1.bf16.msra.mxu0 %v855
        %2159 = vmatprep.subr.bf16.mxu0 0
        %2160 = vmatpush1.bf16.msra.mxu0 %v858
        %2161 = vmatprep.subr.bf16.mxu0 0
        %2162 = vmatpush1.bf16.msra.mxu0 %v861
        %2163 = vmatprep.subr.bf16.mxu0 0
        %2164 = vmatpush1.bf16.msra.mxu0 %v864
        %2165 = vmatprep.subr.bf16.mxu0 0
        %2166 = vmatpush1.bf16.msra.mxu0 0
        %2167 = vmatprep.subr.bf16.mxu0 0
        %2168 = vmatpush1.bf16.msra.mxu0 0
        %2169 = vmatprep.subr.bf16.mxu0 0
        %2170 = vmatpush1.bf16.msra.mxu0 0
        %2171 = vmatprep.subr.bf16.mxu0 0
        %2172 = vmatpush1.bf16.msra.mxu0 0
        %2173 = vmatprep.subr.bf16.mxu0 0
        %2174 = vmatpush1.bf16.msra.mxu0 0
        %2175 = vmatprep.subr.bf16.mxu0 0
        %2176 = vmatpush1.bf16.msra.mxu0 0
        %2177 = vmatprep.subr.bf16.mxu0 0
        %2178 = vmatpush1.bf16.msra.mxu0 0
        %2179 = vmatprep.subr.bf16.mxu0 0
        %2180 = vmatpush1.bf16.msra.mxu0 0
        %2181 = vmatprep.mubr.bf16.mxu0 0
        %2182 = vmatmul.mubr.bf16.gmra.mrb[0].mxu0 %v2082
        %v2183 = vpop.f32.mrb[0].mxu0
        %v2184 = vadd.f32 0.0, %v2183
        %v2185 = vpop.f32.mrb[0].mxu0
        %v2186 = vpop.f32.mrb[0].mxu0
        %v2187 = vadd.f32 0.0, %v2186
        %v2188 = vpop.f32.mrb[0].mxu0
        %2189 = vdwg.mxu0
        %v2190 = vunpack.c.l.bf16 %v2103
        %v2191 = vunpack.c.h.bf16 %v2103
        %v2192 = vadd.f32 %v2190, %v2141
        %v2193 = vadd.f32 %v2191, %v2145
        %v2194 = vxor.u32 %v2192, 2147483648
        %v2195 = vxor.u32 %v2193, 2147483648
        %v2196 = vmul.f32 %v2194, 1.442695
        %v2197 = vpow.pop %v2196
        %v2198 = vmul.f32 %v2195, 1.442695
        %v2199 = vpow.pop %v2198
        %v2200 = vadd.f32 %v2197, 1.0
        %v2201 = vadd.f32 %v2199, 1.0
        %v2202 = vrcp.pop %v2200
        %v2203 = vmul.f32 1.0, %v2202
        %v2204 = vrcp.pop %v2201
        %v2205 = vmul.f32 1.0, %v2204
        %v2206 = vunpack.c.l.bf16 %v2104
        %v2207 = vunpack.c.h.bf16 %v2104
        %v2208 = vadd.f32 %v2206, %v2143
        %v2209 = vadd.f32 %v2207, %v2147
        %v2210 = vxor.u32 %v2208, 2147483648
        %v2211 = vxor.u32 %v2209, 2147483648
        %v2212 = vmul.f32 %v2210, 1.442695
        %v2213 = vpow.pop %v2212
        %v2214 = vmul.f32 %v2211, 1.442695
        %v2215 = vpow.pop %v2214
        %v2216 = vadd.f32 %v2213, 1.0
        %v2217 = vadd.f32 %v2215, 1.0
        %v2218 = vrcp.pop %v2216
        %v2219 = vmul.f32 1.0, %v2218
        %v2220 = vrcp.pop %v2217
        %v2221 = vmul.f32 1.0, %v2220
        %v2222 = vadd.f32 %v2184, %v1009
        %v2223 = vadd.f32 %v2187, %v1009
        %v2224 = vmul.f32 %v2203, %v2222
        %v2225 = vmul.f32 %v2205, %v2223
        %v2226 = vunpack.c.l.bf16 %v2105
        %v2227 = vunpack.c.h.bf16 %v2105
        %v2228 = vadd.f32 %v2226, %v2224
        %v2229 = vadd.f32 %v2227, %v2225
        %v2230 = vtanh.pop %v2228
        %v2231 = vtanh.pop %v2229
        %v2232 = vsub.f32 1.0, %v2219
        %v2233 = vsub.f32 1.0, %v2221
        %v2234 = vmul.f32 %v2232, %v2230
        %v2235 = vmul.f32 %v2233, %v2231
        %v2236 = vmul.f32 %v2219, %v2080
        %v2237 = vmul.f32 %v2221, %v2081
        %v2238 = vadd.f32 %v2234, %v2236
        %v2239 = vadd.f32 %v2235, %v2237
        %v2240 = vstv %s2096
        %vm2241 = vcmp.lt.s32.totalorder %v2240, %v748
        %vm2242 = vcmp.lt.s32.totalorder %v2240, %v749
        %v2243 = vsel %vm2241, 1, 0
        %v2244 = vsel %vm2242, 1, 0
        %2245 = vset.pattern.permute.xlu0 0
        %2246 = vperm.xlu0 %2245, %v2243
        %v2247 = vpop.permute.xlu0 %2246
        %2248 = vset.pattern.permute.xlu0 0
        %2249 = vperm.xlu0 %2248, %v2244
        %v2250 = vpop.permute.xlu0 %2249
        %vm2251 = vcmp.eq.s32.totalorder %v2247, 1
        %vm2252 = vcmp.eq.s32.totalorder %v2250, 1
        %v2253 = vsel %vm2251, %v2238, %v2080
        %v2254 = vsel %vm2252, %v2239, %v2081
        %v2255 = vpack.c.bf16 %v2254, %v2253
        %v2257 = vunpack.c.l.b16 %v2255
        %v2258 = vunpack.c.h.b16 %v2255
        %v2259 = vpack.c.b16 %v2257, %v2257
        %v2260 = vpack.c.b16 %v2258, %v2258
        %s2263 = sshra.s32 %s2097, 3
        %s2264 = sand.u32 %s2097, 7
        %s2265 = smul.addr %s2263, 4
        %s2266 = scalar_lea.vmem %s327, %s2265 [#allocation7]
        %2267 = vst [vmem:[%s2266] sm:$0xf] %v2259
        %2268 = vst [vmem:[%s2266 + $0x4] sm:$0xf] %v2260
        %s2269 = sand.u32 %s177, 1
        %s2270 = sand.u32 %s177, 1
        %s2271 = smul.addr %s2270, 64
        %s2272 = scalar_lea.vmem [#allocation7], %s2271
        // Predicated region
        $region53: #{relation_encoder_forward.2} parent=43 // pred_check
          %p2273 = pneg %p187
        $region54: #{relation_encoder_forward.2} parent=43 // pred_check_branch
          %2275 = sbr.rel (%p2273) target = $region56
        $region55: #{relation_encoder_forward.2} parent=43 // pred_region
          %s2276 = smul.addr %s23, 4
          %s2277 = scalar_lea.vmem %s6, %s2276
          // Predicated region
          $region57: #{relation_encoder_forward.2} parent=55 // pred_check
            _
          $region58: #{relation_encoder_forward.2} parent=55 // pred_check_branch
            %2279 = sbr.rel (0) target = $region60
          $region59: #{relation_encoder_forward.2} parent=55 // pred_region
            // Predicated region
            $region61: #{relation_encoder_forward.2} parent=59 // pred_check
              _
            $region62: #{relation_encoder_forward.2} parent=59 // pred_check_branch
              %2281 = sbr.rel target = $region64
            $region63: #{relation_encoder_forward.2} parent=59 // pred_region
              // Predicated region
              $region76: #{relation_encoder_forward.2} parent=63 // pred_check
                _
              $region77: #{relation_encoder_forward.2} parent=63 // pred_check_branch
                %2326 = sbr.rel (0) target = $region79
              $region78: #{relation_encoder_forward.2} parent=63 // pred_region
                loop: start=0, step=1, limit=1
                $region80: #{relation_encoder_forward.2} parent=78 // loop_pre_header
                  _
                $region81: #{relation_encoder_forward.2} parent=78 // loop_header
                  %s2328 = sphi 0, %s2332
                  %p2329 = scmp.ge.s32.totalorder %s2328, 1
                  %s2333 = sphi %s2272, %s2272
                  %s2334 = sphi %s2277, %s2277
                $region82: #{relation_encoder_forward.2} parent=78 // loop_header_branch
                  %2331 = sbr.rel (%p2329) target = $region86
                $region83: #{relation_encoder_forward.2} parent=78 // loop_body
                  _
                $region84: #{relation_encoder_forward.2} parent=78 // loop_footer
                  %s2332 = sadd.s32 1, %s2328
                $region85: #{relation_encoder_forward.2} parent=78 // loop_footer_branch
                  %2327 = sbr.rel target = $region81
                $region86: #{relation_encoder_forward.2} parent=78 // loop_exit
                  _
                loop: start=0, step=1, limit=1
                $region87: #{relation_encoder_forward.2} parent=78 // loop_pre_header
                  _
                $region88: #{relation_encoder_forward.2} parent=78 // loop_header
                  %s2337 = sphi 0, %s2341
                  %p2338 = scmp.ge.s32.totalorder %s2337, 1
                  %s2342 = sphi %s2272, %s2272
                  %s2343 = sphi %s2277, %s2277
                $region89: #{relation_encoder_forward.2} parent=78 // loop_header_branch
                  %2340 = sbr.rel (%p2338) target = $region93
                $region90: #{relation_encoder_forward.2} parent=78 // loop_body
                  %v2344 = vld [vmem:[%s2342] sm:$0xf]
                  %2345 = vst [vmem:[%s2343] sm:$0xf] %v2344
                  %v2346 = vld [vmem:[%s2342 + $0x4] sm:$0xf]
                  %2347 = vst [vmem:[%s2343 + $0x8] sm:$0xf] %v2346
                  %v2348 = vld [vmem:[%s2342 + $0x8] sm:$0xf]
                  %2349 = vst [vmem:[%s2343 + $0x10] sm:$0xf] %v2348
                  %v2350 = vld [vmem:[%s2342 + $0xc] sm:$0xf]
                  %2351 = vst [vmem:[%s2343 + $0x18] sm:$0xf] %v2350
                  %v2352 = vld [vmem:[%s2342 + $0x10] sm:$0xf]
                  %2353 = vst [vmem:[%s2343 + $0x20] sm:$0xf] %v2352
                  %v2354 = vld [vmem:[%s2342 + $0x14] sm:$0xf]
                  %2355 = vst [vmem:[%s2343 + $0x28] sm:$0xf] %v2354
                  %v2356 = vld [vmem:[%s2342 + $0x18] sm:$0xf]
                  %2357 = vst [vmem:[%s2343 + $0x30] sm:$0xf] %v2356
                  %v2358 = vld [vmem:[%s2342 + $0x1c] sm:$0xf]
                  %2359 = vst [vmem:[%s2343 + $0x38] sm:$0xf] %v2358
                  %v2360 = vld [vmem:[%s2342 + $0x20] sm:$0xf]
                  %2361 = vst [vmem:[%s2343 + $0x40] sm:$0xf] %v2360
                  %v2362 = vld [vmem:[%s2342 + $0x24] sm:$0xf]
                  %2363 = vst [vmem:[%s2343 + $0x48] sm:$0xf] %v2362
                  %v2364 = vld [vmem:[%s2342 + $0x28] sm:$0xf]
                  %2365 = vst [vmem:[%s2343 + $0x50] sm:$0xf] %v2364
                  %v2366 = vld [vmem:[%s2342 + $0x2c] sm:$0xf]
                  %2367 = vst [vmem:[%s2343 + $0x58] sm:$0xf] %v2366
                  %v2368 = vld [vmem:[%s2342 + $0x30] sm:$0xf]
                  %2369 = vst [vmem:[%s2343 + $0x60] sm:$0xf] %v2368
                  %v2370 = vld [vmem:[%s2342 + $0x34] sm:$0xf]
                  %2371 = vst [vmem:[%s2343 + $0x68] sm:$0xf] %v2370
                  %v2372 = vld [vmem:[%s2342 + $0x38] sm:$0xf]
                  %2373 = vst [vmem:[%s2343 + $0x70] sm:$0xf] %v2372
                  %v2374 = vld [vmem:[%s2342 + $0x3c] sm:$0xf]
                  %2375 = vst [vmem:[%s2343 + $0x78] sm:$0xf] %v2374
                $region91: #{relation_encoder_forward.2} parent=78 // loop_footer
                  %s2341 = sadd.s32 1, %s2337
                $region92: #{relation_encoder_forward.2} parent=78 // loop_footer_branch
                  %2336 = sbr.rel target = $region88
                $region93: #{relation_encoder_forward.2} parent=78 // loop_exit
                  _
              $region79: #{relation_encoder_forward.2} parent=63 // pred_fallthru
                _
            $region64: #{relation_encoder_forward.2} parent=59 // pred_fallthru
              _
            // Predicated region
            $region65: #{relation_encoder_forward.2} parent=59 // pred_check
              _
            $region66: #{relation_encoder_forward.2} parent=59 // pred_check_branch
              %2283 = sbr.rel (0) target = $region68
            $region67: #{relation_encoder_forward.2} parent=59 // pred_region
              loop: start=0, step=1, limit=1
              $region69: #{relation_encoder_forward.2} parent=67 // loop_pre_header
                _
              $region70: #{relation_encoder_forward.2} parent=67 // loop_header
                %s2286 = sphi 0, %s2290
                %p2287 = scmp.ge.s32.totalorder %s2286, 1
                %s2291 = sphi %s2272, %s2272
                %s2292 = sphi %s2277, %s2277
              $region71: #{relation_encoder_forward.2} parent=67 // loop_header_branch
                %2289 = sbr.rel (%p2287) target = $region75
              $region72: #{relation_encoder_forward.2} parent=67 // loop_body
                %v2293 = vld [vmem:[%s2291] sm:$0xf]
                %2294 = vst [vmem:[%s2292] sm:$0xf] %v2293
                %v2295 = vld [vmem:[%s2291 + $0x4] sm:$0xf]
                %2296 = vst [vmem:[%s2292 + $0x8] sm:$0xf] %v2295
                %v2297 = vld [vmem:[%s2291 + $0x8] sm:$0xf]
                %2298 = vst [vmem:[%s2292 + $0x10] sm:$0xf] %v2297
                %v2299 = vld [vmem:[%s2291 + $0xc] sm:$0xf]
                %2300 = vst [vmem:[%s2292 + $0x18] sm:$0xf] %v2299
                %v2301 = vld [vmem:[%s2291 + $0x10] sm:$0xf]
                %2302 = vst [vmem:[%s2292 + $0x20] sm:$0xf] %v2301
                %v2303 = vld [vmem:[%s2291 + $0x14] sm:$0xf]
                %2304 = vst [vmem:[%s2292 + $0x28] sm:$0xf] %v2303
                %v2305 = vld [vmem:[%s2291 + $0x18] sm:$0xf]
                %2306 = vst [vmem:[%s2292 + $0x30] sm:$0xf] %v2305
                %v2307 = vld [vmem:[%s2291 + $0x1c] sm:$0xf]
                %2308 = vst [vmem:[%s2292 + $0x38] sm:$0xf] %v2307
                %v2309 = vld [vmem:[%s2291 + $0x20] sm:$0xf]
                %2310 = vst [vmem:[%s2292 + $0x40] sm:$0xf] %v2309
                %v2311 = vld [vmem:[%s2291 + $0x24] sm:$0xf]
                %2312 = vst [vmem:[%s2292 + $0x48] sm:$0xf] %v2311
                %v2313 = vld [vmem:[%s2291 + $0x28] sm:$0xf]
                %2314 = vst [vmem:[%s2292 + $0x50] sm:$0xf] %v2313
                %v2315 = vld [vmem:[%s2291 + $0x2c] sm:$0xf]
                %2316 = vst [vmem:[%s2292 + $0x58] sm:$0xf] %v2315
                %v2317 = vld [vmem:[%s2291 + $0x30] sm:$0xf]
                %2318 = vst [vmem:[%s2292 + $0x60] sm:$0xf] %v2317
                %v2319 = vld [vmem:[%s2291 + $0x34] sm:$0xf]
                %2320 = vst [vmem:[%s2292 + $0x68] sm:$0xf] %v2319
                %v2321 = vld [vmem:[%s2291 + $0x38] sm:$0xf]
                %2322 = vst [vmem:[%s2292 + $0x70] sm:$0xf] %v2321
                %v2323 = vld [vmem:[%s2291 + $0x3c] sm:$0xf]
                %2324 = vst [vmem:[%s2292 + $0x78] sm:$0xf] %v2323
              $region73: #{relation_encoder_forward.2} parent=67 // loop_footer
                %s2290 = sadd.s32 1, %s2286
              $region74: #{relation_encoder_forward.2} parent=67 // loop_footer_branch
                %2285 = sbr.rel target = $region70
              $region75: #{relation_encoder_forward.2} parent=67 // loop_exit
                _
            $region68: #{relation_encoder_forward.2} parent=59 // pred_fallthru
              _
          $region60: #{relation_encoder_forward.2} parent=55 // pred_fallthru
            _
          %2376 = vnop
        $region56: #{relation_encoder_forward.2} parent=43 // pred_fallthru
          _
      $region44: #{relation_encoder_forward.2} parent=5 // pred_fallthru
        _
      %p2377 = scmp.le.s32.totalorder 2, %s18
      // Predicated region
      $region94: #{relation_encoder_forward.2} parent=5 // pred_check
        %p2378 = pneg %p2377
      $region95: #{relation_encoder_forward.2} parent=5 // pred_check_branch
        %2380 = sbr.rel (%p2378) target = $region97
      $region96: #{relation_encoder_forward.2} parent=5 // pred_region
        %s2381 = ssub.s32 %s18, 2
        // Predicated region
        $region98: #{relation_encoder_forward.2} parent=96 // pred_check
          %p2382 = pneg %p193
        $region99: #{relation_encoder_forward.2} parent=96 // pred_check_branch
          %2384 = sbr.rel (%p2382) target = $region101
        $region100: #{relation_encoder_forward.2} parent=96 // pred_region
          %s2385 = sand.u32 %s178, 1
          %s2386 = sand.u32 %s178, 1
          %s2387 = smul.addr %s2386, 64
          %s2388 = scalar_lea.vmem [#allocation7], %s2387
        $region101: #{relation_encoder_forward.2} parent=96 // pred_fallthru
          _
      $region97: #{relation_encoder_forward.2} parent=5 // pred_fallthru
        _
    $region6: #{relation_encoder_forward.2} parent=1 // loop_footer
      %s22 = sadd.s32 1, %s18
    $region7: #{relation_encoder_forward.2} parent=1 // loop_footer_branch
      %17 = sbr.rel target = $region3
    $region8: #{relation_encoder_forward.2} parent=1 // loop_exit
      _
    %2389 = vsyncpa [#allocation4], 1
    %s2390 = scalar_lea.sflag [#allocation4], 1
    %2391 = vsyncpa %s2390, 1
    %2392 = vsyncpa [#allocation6], 1
    %s2393 = scalar_lea.sflag [#allocation6], 1
    %2394 = vsyncpa %s2393, 1

// kernel: relation_encoder_forward.3
$region0: #{relation_encoder_forward.3}
  #allocation0 [shape = 'u32[]', space=smem, size = 0x4, offset = 0x4, fixed_abs, tag = 'smem constant byte address 0x4 - core index']
  #allocation1 [shape = 'u32[144,128]{1,0:T(1,128)}', space=vmem, size = 0x12000, scoped, tag = 'internal scratch']
  #allocation2 [shape = 'bf16[128,384]{1,0:T(16,128)(2,1)}', space=vmem, size = 0x18000, scoped, tag = 'scratch operand']
  %s0 = inlined_call_operand.vmem [shape: bf16[128,256], index: 0, kind: input, shape index: {}]
  %s1 = inlined_call_operand.vmem [shape: s32[16,1], index: 1, kind: input, shape index: {}]
  %s2 = inlined_call_operand.vmem [shape: bf16[2,256,384], index: 2, kind: input, shape index: {}]
  %s3 = inlined_call_operand.vmem [shape: bf16[2,128,384], index: 3, kind: input, shape index: {}]
  %s4 = inlined_call_operand.hbm [shape: f32[2,1,384], index: 4, kind: input, shape index: {}]
  %s5 = inlined_call_operand.hbm [shape: f32[2,1,128], index: 5, kind: input, shape index: {}]
  %s6 = inlined_call_operand.vmem [shape: bf16[2,128,32], index: 6, kind: input, shape index: {}]
  %s7 = inlined_call_operand.vmem [shape: f32[2,16,32], index: 7, kind: output, shape index: {}]
  %s8 = sld [smem:[#allocation0]]
  $region69: #{relation_encoder_forward.3} parent=0
    _
  %s10 = ssub.s32 1, %s8
  %s11 = scalar_select 0, %s10, %s8
  $region1: #{relation_encoder_forward.3} parent=0
    #allocation3 [shape = 'u8[3072]{0}', space=vmem, size = 0xc00, scoped, tag = 'input window, operand 4']
    #allocation4 [shape = 's32[2]{0}', space=sflag, size = 0x8, scoped, tag = 'scoped memory for relation_encoder_forward.3']
    #allocation5 [shape = 'u8[1024]{0}', space=vmem, size = 0x400, scoped, tag = 'input window, operand 5']
    #allocation6 [shape = 's32[2]{0}', space=sflag, size = 0x8, scoped, tag = 'scoped memory for relation_encoder_forward.3']
    %12 = vsyncpa [#allocation4], 0
    %s13 = scalar_lea.sflag [#allocation4], 1
    %14 = vsyncpa %s13, 0
    %15 = vsyncpa [#allocation6], 0
    %s16 = scalar_lea.sflag [#allocation6], 1
    %17 = vsyncpa %s16, 0
    loop: start=0, step=1, limit=4
    $region2: #{relation_encoder_forward.3} parent=1 // loop_pre_header
      _
    $region3: #{relation_encoder_forward.3} parent=1 // loop_header
      %s19 = sphi 0, %s23
      %p20 = scmp.ge.s32.totalorder %s19, 4
      %s27 = sphi 0, %s27
      %s29 = sphi 0, %s27
      %s30 = sphi 0, %s29
      %s44 = sphi 0, %s30
      %s48 = sphi 0, %s48
      %s50 = sphi 0, %s48
      %s51 = sphi 0, %s50
      %s65 = sphi 0, %s51
      %s71 = sphi 0, %s73
      %s74 = sphi 0, %s71
      %s75 = sphi 0, %s74
      %s91 = sphi 0, %s75
      %s97 = sphi 0, %s99
      %s100 = sphi 0, %s97
      %s101 = sphi 0, %s100
      %s117 = sphi 0, %s101
      %s123 = sphi 0, %s125
      %s126 = sphi 0, %s123
      %s127 = sphi 0, %s126
      %s143 = sphi 0, %s127
      %s149 = sphi 0, %s151
      %s152 = sphi 0, %s149
      %s153 = sphi 0, %s152
      %s169 = sphi 0, %s153
      %s175 = sphi 0, %s177
      %s178 = sphi 0, %s175
      %s179 = sphi 0, %s178
      %s195 = sphi 0, %s179
      %s201 = sphi 0, %s203
      %s204 = sphi 0, %s201
      %s205 = sphi 0, %s204
      %s221 = sphi 0, %s205
    $region4: #{relation_encoder_forward.3} parent=1 // loop_header_branch
      %22 = sbr.rel (%p20) target = $region8
    $region5: #{relation_encoder_forward.3} parent=1 // loop_body
      %s24 = ssub.s32 %s19, 1
      %s25 = ssub.s32 %s19, 2
      %s26 = sadd.s32 %s19, 1
      %s28 = sadd.s32 %s27, 1
      %p31 = scmp.eq.s32.totalorder %s19, 1
      %p32 = scmp.ne.s32.totalorder %s27, %s29
      %p33 = scmp.eq.s32.totalorder %s19, 0
      %p34 = por %p32, %p33
      %p35 = scmp.ne.s32.totalorder %s27, %s29
      %p36 = scmp.eq.s32.totalorder %s24, 1
      %p37 = por %p35, %p36
      %p38 = scmp.ne.s32.totalorder %s29, %s30
      %p39 = scmp.eq.s32.totalorder %s24, 0
      %p40 = por %p38, %p39
      %p41 = scmp.ne.s32.totalorder %s29, %s30
      %p42 = scmp.eq.s32.totalorder %s25, 1
      %p43 = por %p41, %p42
      %p45 = scmp.ne.s32.totalorder %s30, %s44
      %p46 = scmp.eq.s32.totalorder %s25, 0
      %p47 = por %p45, %p46
      %s49 = sadd.s32 %s48, 1
      %p52 = scmp.eq.s32.totalorder %s19, 1
      %p53 = scmp.ne.s32.totalorder %s48, %s50
      %p54 = scmp.eq.s32.totalorder %s19, 0
      %p55 = por %p53, %p54
      %p56 = scmp.ne.s32.totalorder %s48, %s50
      %p57 = scmp.eq.s32.totalorder %s24, 1
      %p58 = por %p56, %p57
      %p59 = scmp.ne.s32.totalorder %s50, %s51
      %p60 = scmp.eq.s32.totalorder %s24, 0
      %p61 = por %p59, %p60
      %p62 = scmp.ne.s32.totalorder %s50, %s51
      %p63 = scmp.eq.s32.totalorder %s25, 1
      %p64 = por %p62, %p63
      %p66 = scmp.ne.s32.totalorder %s51, %s65
      %p67 = scmp.eq.s32.totalorder %s25, 0
      %p68 = por %p66, %p67
      %s69 = ssub.s32 %s19, %s26
      %p70 = scmp.eq.s32.totalorder %s69, 0
      %s72 = sadd.s32 %s71, 1
      %s73 = scalar_select %p70, %s71, %s72
      %p76 = pneg %p70
      %p77 = scmp.eq.s32.totalorder %s19, 1
      %p78 = por %p76, %p77
      %p79 = scmp.ne.s32.totalorder %s71, %s74
      %p80 = scmp.eq.s32.totalorder %s19, 0
      %p81 = por %p79, %p80
      %p82 = scmp.ne.s32.totalorder %s71, %s74
      %p83 = scmp.eq.s32.totalorder %s24, 1
      %p84 = por %p82, %p83
      %p85 = scmp.ne.s32.totalorder %s74, %s75
      %p86 = scmp.eq.s32.totalorder %s24, 0
      %p87 = por %p85, %p86
      %p88 = scmp.ne.s32.totalorder %s74, %s75
      %p89 = scmp.eq.s32.totalorder %s25, 1
      %p90 = por %p88, %p89
      %p92 = scmp.ne.s32.totalorder %s75, %s91
      %p93 = scmp.eq.s32.totalorder %s25, 0
      %p94 = por %p92, %p93
      %s95 = ssub.s32 %s19, %s26
      %p96 = scmp.eq.s32.totalorder %s95, 0
      %s98 = sadd.s32 %s97, 1
      %s99 = scalar_select %p96, %s97, %s98
      %p102 = pneg %p96
      %p103 = scmp.eq.s32.totalorder %s19, 1
      %p104 = por %p102, %p103
      %p105 = scmp.ne.s32.totalorder %s97, %s100
      %p106 = scmp.eq.s32.totalorder %s19, 0
      %p107 = por %p105, %p106
      %p108 = scmp.ne.s32.totalorder %s97, %s100
      %p109 = scmp.eq.s32.totalorder %s24, 1
      %p110 = por %p108, %p109
      %p111 = scmp.ne.s32.totalorder %s100, %s101
      %p112 = scmp.eq.s32.totalorder %s24, 0
      %p113 = por %p111, %p112
      %p114 = scmp.ne.s32.totalorder %s100, %s101
      %p115 = scmp.eq.s32.totalorder %s25, 1
      %p116 = por %p114, %p115
      %p118 = scmp.ne.s32.totalorder %s101, %s117
      %p119 = scmp.eq.s32.totalorder %s25, 0
      %p120 = por %p118, %p119
      %s121 = ssub.s32 %s19, %s26
      %p122 = scmp.eq.s32.totalorder %s121, 0
      %s124 = sadd.s32 %s123, 1
      %s125 = scalar_select %p122, %s123, %s124
      %p128 = pneg %p122
      %p129 = scmp.eq.s32.totalorder %s19, 1
      %p130 = por %p128, %p129
      %p131 = scmp.ne.s32.totalorder %s123, %s126
      %p132 = scmp.eq.s32.totalorder %s19, 0
      %p133 = por %p131, %p132
      %p134 = scmp.ne.s32.totalorder %s123, %s126
      %p135 = scmp.eq.s32.totalorder %s24, 1
      %p136 = por %p134, %p135
      %p137 = scmp.ne.s32.totalorder %s126, %s127
      %p138 = scmp.eq.s32.totalorder %s24, 0
      %p139 = por %p137, %p138
      %p140 = scmp.ne.s32.totalorder %s126, %s127
      %p141 = scmp.eq.s32.totalorder %s25, 1
      %p142 = por %p140, %p141
      %p144 = scmp.ne.s32.totalorder %s127, %s143
      %p145 = scmp.eq.s32.totalorder %s25, 0
      %p146 = por %p144, %p145
      %s147 = ssub.s32 %s19, %s26
      %p148 = scmp.eq.s32.totalorder %s147, 0
      %s150 = sadd.s32 %s149, 1
      %s151 = scalar_select %p148, %s149, %s150
      %p154 = pneg %p148
      %p155 = scmp.eq.s32.totalorder %s19, 1
      %p156 = por %p154, %p155
      %p157 = scmp.ne.s32.totalorder %s149, %s152
      %p158 = scmp.eq.s32.totalorder %s19, 0
      %p159 = por %p157, %p158
      %p160 = scmp.ne.s32.totalorder %s149, %s152
      %p161 = scmp.eq.s32.totalorder %s24, 1
      %p162 = por %p160, %p161
      %p163 = scmp.ne.s32.totalorder %s152, %s153
      %p164 = scmp.eq.s32.totalorder %s24, 0
      %p165 = por %p163, %p164
      %p166 = scmp.ne.s32.totalorder %s152, %s153
      %p167 = scmp.eq.s32.totalorder %s25, 1
      %p168 = por %p166, %p167
      %p170 = scmp.ne.s32.totalorder %s153, %s169
      %p171 = scmp.eq.s32.totalorder %s25, 0
      %p172 = por %p170, %p171
      %s173 = ssub.s32 %s19, %s26
      %p174 = scmp.eq.s32.totalorder %s173, 0
      %s176 = sadd.s32 %s175, 1
      %s177 = scalar_select %p174, %s175, %s176
      %p180 = pneg %p174
      %p181 = scmp.eq.s32.totalorder %s19, 1
      %p182 = por %p180, %p181
      %p183 = scmp.ne.s32.totalorder %s175, %s178
      %p184 = scmp.eq.s32.totalorder %s19, 0
      %p185 = por %p183, %p184
      %p186 = scmp.ne.s32.totalorder %s175, %s178
      %p187 = scmp.eq.s32.totalorder %s24, 1
      %p188 = por %p186, %p187
      %p189 = scmp.ne.s32.totalorder %s178, %s179
      %p190 = scmp.eq.s32.totalorder %s24, 0
      %p191 = por %p189, %p190
      %p192 = scmp.ne.s32.totalorder %s178, %s179
      %p193 = scmp.eq.s32.totalorder %s25, 1
      %p194 = por %p192, %p193
      %p196 = scmp.ne.s32.totalorder %s179, %s195
      %p197 = scmp.eq.s32.totalorder %s25, 0
      %p198 = por %p196, %p197
      %s199 = ssub.s32 %s19, %s26
      %p200 = scmp.eq.s32.totalorder %s199, 0
      %s202 = sadd.s32 %s201, 1
      %s203 = scalar_select %p200, %s201, %s202
      %p206 = pneg %p200
      %p207 = scmp.eq.s32.totalorder %s19, 1
      %p208 = por %p206, %p207
      %p209 = scmp.ne.s32.totalorder %s201, %s204
      %p210 = scmp.eq.s32.totalorder %s19, 0
      %p211 = por %p209, %p210
      %p212 = scmp.ne.s32.totalorder %s201, %s204
      %p213 = scmp.eq.s32.totalorder %s24, 1
      %p214 = por %p212, %p213
      %p215 = scmp.ne.s32.totalorder %s204, %s205
      %p216 = scmp.eq.s32.totalorder %s24, 0
      %p217 = por %p215, %p216
      %p218 = scmp.ne.s32.totalorder %s204, %s205
      %p219 = scmp.eq.s32.totalorder %s25, 1
      %p220 = por %p218, %p219
      %p222 = scmp.ne.s32.totalorder %s205, %s221
      %p223 = scmp.eq.s32.totalorder %s25, 0
      %p224 = por %p222, %p223
      %p225 = scmp.le.s32.totalorder 1, %s19
      %p226 = scmp.lt.s32.totalorder %s19, 3
      %p227 = pnand %p225, %p226
      %p228 = pneg %p227
      // Predicated region
      $region9: #{relation_encoder_forward.3} parent=5 // pred_check
        _
      $region10: #{relation_encoder_forward.3} parent=5 // pred_check_branch
        %230 = sbr.rel (%p227) target = $region12
      $region11: #{relation_encoder_forward.3} parent=5 // pred_region
        %s231 = ssub.s32 %s19, 1
        // Predicated region
        $region13: #{relation_encoder_forward.3} parent=11 // pred_check
          %p232 = pneg %p40
        $region14: #{relation_encoder_forward.3} parent=11 // pred_check_branch
          %234 = sbr.rel (%p232) target = $region16
        $region15: #{relation_encoder_forward.3} parent=11 // pred_region
          _
        $region16: #{relation_encoder_forward.3} parent=11 // pred_fallthru
          _
        // Predicated region
        $region17: #{relation_encoder_forward.3} parent=11 // pred_check
          %p235 = pneg %p61
        $region18: #{relation_encoder_forward.3} parent=11 // pred_check_branch
          %237 = sbr.rel (%p235) target = $region20
        $region19: #{relation_encoder_forward.3} parent=11 // pred_region
          _
        $region20: #{relation_encoder_forward.3} parent=11 // pred_fallthru
          _
      $region12: #{relation_encoder_forward.3} parent=5 // pred_fallthru
        _
      %p238 = scmp.lt.s32.totalorder %s19, 2
      // Predicated region
      $region21: #{relation_encoder_forward.3} parent=5 // pred_check
        %p239 = pneg %p238
      $region22: #{relation_encoder_forward.3} parent=5 // pred_check_branch
        %241 = sbr.rel (%p239) target = $region24
      $region23: #{relation_encoder_forward.3} parent=5 // pred_region
        // Predicated region
        $region25: #{relation_encoder_forward.3} parent=23 // pred_check
          %p242 = pneg %p81
        $region26: #{relation_encoder_forward.3} parent=23 // pred_check_branch
          %244 = sbr.rel (%p242) target = $region28
        $region27: #{relation_encoder_forward.3} parent=23 // pred_region
          %p245 = scmp.lt.s32.totalorder %s19, 1
          %s246 = scalar_select %p245, %s19, 1
          %s247 = smul.addr %s246, 96
          %s248 = smul.addr %s247, 4
          %s249 = scalar_lea.vmem %s2, %s248
        $region28: #{relation_encoder_forward.3} parent=23 // pred_fallthru
          _
        // Predicated region
        $region29: #{relation_encoder_forward.3} parent=23 // pred_check
          %p250 = pneg %p107
        $region30: #{relation_encoder_forward.3} parent=23 // pred_check_branch
          %252 = sbr.rel (%p250) target = $region32
        $region31: #{relation_encoder_forward.3} parent=23 // pred_region
          %p253 = scmp.lt.s32.totalorder %s19, 1
          %s254 = scalar_select %p253, %s19, 1
          %s255 = smul.addr %s254, 48
          %s256 = smul.addr %s255, 4
          %s257 = scalar_lea.vmem %s3, %s256
        $region32: #{relation_encoder_forward.3} parent=23 // pred_fallthru
          _
        // Predicated region
        $region33: #{relation_encoder_forward.3} parent=23 // pred_check
          %p258 = pneg %p133
        $region34: #{relation_encoder_forward.3} parent=23 // pred_check_branch
          %260 = sbr.rel (%p258) target = $region36
        $region35: #{relation_encoder_forward.3} parent=23 // pred_region
          %s261 = sand.u32 %s123, 1
          %s262 = scalar_lea.sflag [#allocation4], %s261
          %s263 = sand.u32 %s123, 1
          %s264 = smul.addr %s263, 3
          %s265 = scalar_lea.vmem [#allocation3], %s264
          %s267 = ssub.s32 48, 48
          %268 = vsyncadd %s262, %s267
          %s269 = smul.addr %s19, 3
          %s270 = smul.addr %s269, 16
          %s271 = scalar_lea.hbm %s4, %s270
          %s273 = sshll.u32 %s265, 4
          %s274 = int_to_ptr.vmem [resolvable:$true] %s273
          %276 = dma.hbm_to_vmem [thread:$0]  %s271, 48, %s274, %s262
        $region36: #{relation_encoder_forward.3} parent=23 // pred_fallthru
          _
        // Predicated region
        $region37: #{relation_encoder_forward.3} parent=23 // pred_check
          %p277 = pneg %p159
        $region38: #{relation_encoder_forward.3} parent=23 // pred_check_branch
          %279 = sbr.rel (%p277) target = $region40
        $region39: #{relation_encoder_forward.3} parent=23 // pred_region
          %s280 = sand.u32 %s149, 1
          %s281 = scalar_lea.sflag [#allocation6], %s280
          %s282 = sand.u32 %s149, 1
          %s283 = scalar_lea.vmem [#allocation5], %s282
          %s285 = ssub.s32 16, 16
          %286 = vsyncadd %s281, %s285
          %s287 = smul.addr %s19, 16
          %s288 = scalar_lea.hbm %s5, %s287
          %s290 = sshll.u32 %s283, 4
          %s291 = int_to_ptr.vmem [resolvable:$true] %s290
          %293 = dma.hbm_to_vmem [thread:$0]  %s288, 16, %s291, %s281
        $region40: #{relation_encoder_forward.3} parent=23 // pred_fallthru
          _
        // Predicated region
        $region41: #{relation_encoder_forward.3} parent=23 // pred_check
          %p294 = pneg %p185
        $region42: #{relation_encoder_forward.3} parent=23 // pred_check_branch
          %296 = sbr.rel (%p294) target = $region44
        $region43: #{relation_encoder_forward.3} parent=23 // pred_region
          %p297 = scmp.lt.s32.totalorder %s19, 1
          %s298 = scalar_select %p297, %s19, 1
          %s299 = smul.addr %s298, 16
          %s300 = smul.addr %s299, 4
          %s301 = scalar_lea.vmem %s6, %s300
        $region44: #{relation_encoder_forward.3} parent=23 // pred_fallthru
          _
      $region24: #{relation_encoder_forward.3} parent=5 // pred_fallthru
        _
      %p302 = scmp.le.s32.totalorder 1, %s19
      %p303 = scmp.lt.s32.totalorder %s19, 3
      %p304 = pnand %p302, %p303
      %p305 = pneg %p304
      // Predicated region
      $region45: #{relation_encoder_forward.3} parent=5 // pred_check
        _
      $region46: #{relation_encoder_forward.3} parent=5 // pred_check_branch
        %307 = sbr.rel (%p304) target = $region48
      $region47: #{relation_encoder_forward.3} parent=5 // pred_region
        %s308 = ssub.s32 %s19, 1
        %s309 = sand.u32 %s126, 1
        %s310 = scalar_lea.sflag [#allocation4], %s309
        %s311 = sand.u32 %s126, 1
        %s312 = smul.addr %s311, 3
        %s313 = scalar_lea.vmem [#allocation3], %s312
        // Predicated region
        $region49: #{relation_encoder_forward.3} parent=47 // pred_check
          %p314 = pneg %p139
        $region50: #{relation_encoder_forward.3} parent=47 // pred_check_branch
          %316 = sbr.rel (%p314) target = $region52
        $region51: #{relation_encoder_forward.3} parent=47 // pred_region
          %317 = dma.done %s310, 48
        $region52: #{relation_encoder_forward.3} parent=47 // pred_fallthru
          _
        %s318 = sand.u32 %s152, 1
        %s319 = scalar_lea.sflag [#allocation6], %s318
        %s320 = sand.u32 %s152, 1
        %s321 = scalar_lea.vmem [#allocation5], %s320
        // Predicated region
        $region53: #{relation_encoder_forward.3} parent=47 // pred_check
          %p322 = pneg %p165
        $region54: #{relation_encoder_forward.3} parent=47 // pred_check_branch
          %324 = sbr.rel (%p322) target = $region56
        $region55: #{relation_encoder_forward.3} parent=47 // pred_region
          %325 = dma.done %s319, 16
        $region56: #{relation_encoder_forward.3} parent=47 // pred_fallthru
          _
        %p326 = pneg %p40
        %p327 = pneg %p37
        %p328 = pneg %p61
        %p329 = pneg %p58
        %p330 = scmp.lt.s32.totalorder %s24, 1
        %s331 = scalar_select %p330, %s24, 1
        %s332 = smul.addr %s331, 96
        %s333 = smul.addr %s332, 4
        %s334 = scalar_lea.vmem %s2, %s333
        %p335 = pneg %p87
        %p336 = pneg %p84
        %p337 = scmp.lt.s32.totalorder %s24, 1
        %s338 = scalar_select %p337, %s24, 1
        %s339 = smul.addr %s338, 48
        %s340 = smul.addr %s339, 4
        %s341 = scalar_lea.vmem %s3, %s340
        %p342 = pneg %p113
        %p343 = pneg %p110
        %s344 = sand.u32 %s126, 1
        %s345 = scalar_lea.sflag [#allocation4], %s344
        %s346 = sand.u32 %s126, 1
        %s347 = smul.addr %s346, 3
        %s348 = scalar_lea.vmem [#allocation3], %s347
        %p349 = pneg %p139
        %p350 = pneg %p136
        %s351 = sand.u32 %s152, 1
        %s352 = scalar_lea.sflag [#allocation6], %s351
        %s353 = sand.u32 %s152, 1
        %s354 = scalar_lea.vmem [#allocation5], %s353
        %p355 = pneg %p165
        %p356 = pneg %p162
        %p357 = scmp.lt.s32.totalorder %s24, 1
        %s358 = scalar_select %p357, %s24, 1
        %s359 = smul.addr %s358, 16
        %s360 = smul.addr %s359, 4
        %s361 = scalar_lea.vmem %s6, %s360
        %p362 = pneg %p191
        %p363 = pneg %p188
        %p364 = pneg %p217
        %p365 = pneg %p214
        %p366 = scmp.lt.s32.totalorder %s24, 1
        %s367 = scalar_select %p366, %s24, 1
        %s368 = smul.addr %s367, 2
        %s369 = smul.addr %s368, 8
        %s370 = scalar_lea.vmem %s7, %s369
        %p371 = scmp.lt.s32.totalorder %s24, 1
        %s372 = scalar_select %p371, %s24, 1
        %s373 = smul.addr %s372, 96
        %s374 = smul.addr %s373, 4
        %s375 = scalar_lea.vmem %s2, %s374
        %p376 = scmp.lt.s32.totalorder %s24, 1
        %s377 = scalar_select %p376, %s24, 1
        %s378 = smul.addr %s377, 48
        %s379 = smul.addr %s378, 4
        %s380 = scalar_lea.vmem %s3, %s379
        %p381 = scmp.lt.s32.totalorder %s24, 1
        %s382 = scalar_select %p381, %s24, 1
        %s383 = smul.addr %s382, 16
        %s384 = smul.addr %s383, 4
        %s385 = scalar_lea.vmem %s6, %s384
        %p386 = scmp.lt.s32.totalorder %s24, 1
        %s387 = scalar_select %p386, %s24, 1
        %s388 = smul.addr %s387, 2
        %s389 = smul.addr %s388, 8
        %s390 = scalar_lea.vmem %s7, %s389
        %v392 = vld [vmem:[%s375] sm:$0xff]
        %v393 = vld [vmem:[%s375 + $0x8] sm:$0xf]
        %v394 = vld [vmem:[%s375 + $0xc] sm:$0xff]
        %v395 = vld [vmem:[%s375 + $0x14] sm:$0xf]
        %v396 = vld [vmem:[%s375 + $0x18] sm:$0xff]
        %v397 = vld [vmem:[%s375 + $0x20] sm:$0xf]
        %v398 = vld [vmem:[%s375 + $0x24] sm:$0xff]
        %v399 = vld [vmem:[%s375 + $0x2c] sm:$0xf]
        %v400 = vld [vmem:[%s375 + $0x30] sm:$0xff]
        %v401 = vld [vmem:[%s375 + $0x38] sm:$0xf]
        %v402 = vld [vmem:[%s375 + $0x3c] sm:$0xff]
        %v403 = vld [vmem:[%s375 + $0x44] sm:$0xf]
        %v404 = vld [vmem:[%s375 + $0x48] sm:$0xff]
        %v405 = vld [vmem:[%s375 + $0x50] sm:$0xf]
        %v406 = vld [vmem:[%s375 + $0x54] sm:$0xff]
        %v407 = vld [vmem:[%s375 + $0x5c] sm:$0xf]
        %v408 = vld [vmem:[%s375 + $0x60] sm:$0xff]
        %v409 = vld [vmem:[%s375 + $0x68] sm:$0xf]
        %v410 = vld [vmem:[%s375 + $0x6c] sm:$0xff]
        %v411 = vld [vmem:[%s375 + $0x74] sm:$0xf]
        %v412 = vld [vmem:[%s375 + $0x78] sm:$0xff]
        %v413 = vld [vmem:[%s375 + $0x80] sm:$0xf]
        %v414 = vld [vmem:[%s375 + $0x84] sm:$0xff]
        %v415 = vld [vmem:[%s375 + $0x8c] sm:$0xf]
        %v416 = vld [vmem:[%s375 + $0x90] sm:$0xff]
        %v417 = vld [vmem:[%s375 + $0x98] sm:$0xf]
        %v418 = vld [vmem:[%s375 + $0x9c] sm:$0xff]
        %v419 = vld [vmem:[%s375 + $0xa4] sm:$0xf]
        %v420 = vld [vmem:[%s375 + $0xa8] sm:$0xff]
        %v421 = vld [vmem:[%s375 + $0xb0] sm:$0xf]
        %v422 = vld [vmem:[%s375 + $0xb4] sm:$0xff]
        %v423 = vld [vmem:[%s375 + $0xbc] sm:$0xf]
        %v424 = vld [vmem:[%s375 + $0xc0] sm:$0xff]
        %v425 = vld [vmem:[%s375 + $0xc8] sm:$0xf]
        %v426 = vld [vmem:[%s375 + $0xcc] sm:$0xff]
        %v427 = vld [vmem:[%s375 + $0xd4] sm:$0xf]
        %v428 = vld [vmem:[%s375 + $0xd8] sm:$0xff]
        %v429 = vld [vmem:[%s375 + $0xe0] sm:$0xf]
        %v430 = vld [vmem:[%s375 + $0xe4] sm:$0xff]
        %v431 = vld [vmem:[%s375 + $0xec] sm:$0xf]
        %v432 = vld [vmem:[%s375 + $0xf0] sm:$0xff]
        %v433 = vld [vmem:[%s375 + $0xf8] sm:$0xf]
        %v434 = vld [vmem:[%s375 + $0xfc] sm:$0xff]
        %v435 = vld [vmem:[%s375 + $0x104] sm:$0xf]
        %v436 = vld [vmem:[%s375 + $0x108] sm:$0xff]
        %v437 = vld [vmem:[%s375 + $0x110] sm:$0xf]
        %v438 = vld [vmem:[%s375 + $0x114] sm:$0xff]
        %v439 = vld [vmem:[%s375 + $0x11c] sm:$0xf]
        %v440 = vld [vmem:[%s375 + $0x120] sm:$0xff]
        %v441 = vld [vmem:[%s375 + $0x128] sm:$0xf]
        %v442 = vld [vmem:[%s375 + $0x12c] sm:$0xff]
        %v443 = vld [vmem:[%s375 + $0x134] sm:$0xf]
        %v444 = vld [vmem:[%s375 + $0x138] sm:$0xff]
        %v445 = vld [vmem:[%s375 + $0x140] sm:$0xf]
        %v446 = vld [vmem:[%s375 + $0x144] sm:$0xff]
        %v447 = vld [vmem:[%s375 + $0x14c] sm:$0xf]
        %v448 = vld [vmem:[%s375 + $0x150] sm:$0xff]
        %v449 = vld [vmem:[%s375 + $0x158] sm:$0xf]
        %v450 = vld [vmem:[%s375 + $0x15c] sm:$0xff]
        %v451 = vld [vmem:[%s375 + $0x164] sm:$0xf]
        %v452 = vld [vmem:[%s375 + $0x168] sm:$0xff]
        %v453 = vld [vmem:[%s375 + $0x170] sm:$0xf]
        %v454 = vld [vmem:[%s375 + $0x174] sm:$0xff]
        %v455 = vld [vmem:[%s375 + $0x17c] sm:$0xf]
        %v456 = vld [vmem:[%s313] sm:$0x7]
        %v457 = vld [vmem:[%s0] sm:$0xff]
        %v458 = vld [vmem:[%s0 + $0x8] sm:$0xff]
        %v459 = vld [vmem:[%s0 + $0x10] sm:$0xff]
        %v460 = vld [vmem:[%s0 + $0x18] sm:$0xff]
        %v461 = vld [vmem:[%s0 + $0x20] sm:$0xff]
        %v462 = vld [vmem:[%s0 + $0x28] sm:$0xff]
        %v463 = vld [vmem:[%s0 + $0x30] sm:$0xff]
        %v464 = vld [vmem:[%s0 + $0x38] sm:$0xff]
        %v465 = vld [vmem:[%s0 + $0x40] sm:$0xff]
        %v466 = vld [vmem:[%s0 + $0x48] sm:$0xff]
        %v467 = vld [vmem:[%s0 + $0x50] sm:$0xff]
        %v468 = vld [vmem:[%s0 + $0x58] sm:$0xff]
        %v469 = vld [vmem:[%s0 + $0x60] sm:$0xff]
        %v470 = vld [vmem:[%s0 + $0x68] sm:$0xff]
        %v471 = vld [vmem:[%s0 + $0x70] sm:$0xff]
        %v472 = vld [vmem:[%s0 + $0x78] sm:$0xff]
        %v474 = vlaneseq
        %v475 = vshrl.u32 %v474, 7
        %v476 = vsub.s32 0, %v475
        %v477 = vrot.slane %v456, %v476
        %v478 = vlaneseq
        %v479 = vshrl.u32 %v478, 7
        %v480 = vsub.s32 1, %v479
        %v481 = vrot.slane %v456, %v480
        %v482 = vlaneseq
        %v483 = vshrl.u32 %v482, 7
        %v484 = vsub.s32 2, %v483
        %v485 = vrot.slane %v456, %v484
        %v505 = vunpack.c.l.b16 %v457
        %v506 = vunpack.c.h.b16 %v457
        %v507 = vunpack.c.l.b16 %v458
        %v508 = vunpack.c.h.b16 %v458
        %v509 = vunpack.c.l.b16 %v459
        %v510 = vunpack.c.h.b16 %v459
        %v511 = vunpack.c.l.b16 %v460
        %v512 = vunpack.c.h.b16 %v460
        %v513 = vunpack.c.l.b16 %v461
        %v514 = vunpack.c.h.b16 %v461
        %v515 = vunpack.c.l.b16 %v462
        %v516 = vunpack.c.h.b16 %v462
        %v517 = vunpack.c.l.b16 %v463
        %v518 = vunpack.c.h.b16 %v463
        %v519 = vunpack.c.l.b16 %v464
        %v520 = vunpack.c.h.b16 %v464
        %v521 = vunpack.c.l.b16 %v465
        %v522 = vunpack.c.h.b16 %v465
        %v523 = vunpack.c.l.b16 %v466
        %v524 = vunpack.c.h.b16 %v466
        %v525 = vunpack.c.l.b16 %v467
        %v526 = vunpack.c.h.b16 %v467
        %v527 = vunpack.c.l.b16 %v468
        %v528 = vunpack.c.h.b16 %v468
        %v529 = vunpack.c.l.b16 %v469
        %v530 = vunpack.c.h.b16 %v469
        %v531 = vunpack.c.l.b16 %v470
        %v532 = vunpack.c.h.b16 %v470
        %v533 = vunpack.c.l.b16 %v471
        %v534 = vunpack.c.h.b16 %v471
        %v535 = vunpack.c.l.b16 %v472
        %v536 = vunpack.c.h.b16 %v472
        %v537 = vpack.c.b16 %v507, %v505
        %v538 = vpack.c.b16 %v508, %v506
        %v539 = vpack.c.b16 %v511, %v509
        %v540 = vpack.c.b16 %v512, %v510
        %v541 = vpack.c.b16 %v515, %v513
        %v542 = vpack.c.b16 %v516, %v514
        %v543 = vpack.c.b16 %v519, %v517
        %v544 = vpack.c.b16 %v520, %v518
        %v545 = vpack.c.b16 %v523, %v521
        %v546 = vpack.c.b16 %v524, %v522
        %v547 = vpack.c.b16 %v527, %v525
        %v548 = vpack.c.b16 %v528, %v526
        %v549 = vpack.c.b16 %v531, %v529
        %v550 = vpack.c.b16 %v532, %v530
        %v551 = vpack.c.b16 %v535, %v533
        %v552 = vpack.c.b16 %v536, %v534
        %v633 = vunpack.c.l.b16 %v392
        %v634 = vunpack.c.h.b16 %v392
        %v635 = vunpack.c.l.b16 %v393
        %v636 = vunpack.c.l.b16 %v394
        %v637 = vunpack.c.h.b16 %v394
        %v638 = vunpack.c.l.b16 %v395
        %v639 = vunpack.c.l.b16 %v396
        %v640 = vunpack.c.h.b16 %v396
        %v641 = vunpack.c.l.b16 %v397
        %v642 = vunpack.c.l.b16 %v398
        %v643 = vunpack.c.h.b16 %v398
        %v644 = vunpack.c.l.b16 %v399
        %v645 = vunpack.c.l.b16 %v400
        %v646 = vunpack.c.h.b16 %v400
        %v647 = vunpack.c.l.b16 %v401
        %v648 = vunpack.c.l.b16 %v402
        %v649 = vunpack.c.h.b16 %v402
        %v650 = vunpack.c.l.b16 %v403
        %v651 = vunpack.c.l.b16 %v404
        %v652 = vunpack.c.h.b16 %v404
        %v653 = vunpack.c.l.b16 %v405
        %v654 = vunpack.c.l.b16 %v406
        %v655 = vunpack.c.h.b16 %v406
        %v656 = vunpack.c.l.b16 %v407
        %v657 = vunpack.c.l.b16 %v408
        %v658 = vunpack.c.h.b16 %v408
        %v659 = vunpack.c.l.b16 %v409
        %v660 = vunpack.c.l.b16 %v410
        %v661 = vunpack.c.h.b16 %v410
        %v662 = vunpack.c.l.b16 %v411
        %v663 = vunpack.c.l.b16 %v412
        %v664 = vunpack.c.h.b16 %v412
        %v665 = vunpack.c.l.b16 %v413
        %v666 = vunpack.c.l.b16 %v414
        %v667 = vunpack.c.h.b16 %v414
        %v668 = vunpack.c.l.b16 %v415
        %v669 = vunpack.c.l.b16 %v416
        %v670 = vunpack.c.h.b16 %v416
        %v671 = vunpack.c.l.b16 %v417
        %v672 = vunpack.c.l.b16 %v418
        %v673 = vunpack.c.h.b16 %v418
        %v674 = vunpack.c.l.b16 %v419
        %v675 = vunpack.c.l.b16 %v420
        %v676 = vunpack.c.h.b16 %v420
        %v677 = vunpack.c.l.b16 %v421
        %v678 = vunpack.c.l.b16 %v422
        %v679 = vunpack.c.h.b16 %v422
        %v680 = vunpack.c.l.b16 %v423
        %v681 = vunpack.c.l.b16 %v424
        %v682 = vunpack.c.h.b16 %v424
        %v683 = vunpack.c.l.b16 %v425
        %v684 = vunpack.c.l.b16 %v426
        %v685 = vunpack.c.h.b16 %v426
        %v686 = vunpack.c.l.b16 %v427
        %v687 = vunpack.c.l.b16 %v428
        %v688 = vunpack.c.h.b16 %v428
        %v689 = vunpack.c.l.b16 %v429
        %v690 = vunpack.c.l.b16 %v430
        %v691 = vunpack.c.h.b16 %v430
        %v692 = vunpack.c.l.b16 %v431
        %v693 = vunpack.c.l.b16 %v432
        %v694 = vunpack.c.h.b16 %v432
        %v695 = vunpack.c.l.b16 %v433
        %v696 = vunpack.c.l.b16 %v434
        %v697 = vunpack.c.h.b16 %v434
        %v698 = vunpack.c.l.b16 %v435
        %v699 = vunpack.c.l.b16 %v436
        %v700 = vunpack.c.h.b16 %v436
        %v701 = vunpack.c.l.b16 %v437
        %v702 = vunpack.c.l.b16 %v438
        %v703 = vunpack.c.h.b16 %v438
        %v704 = vunpack.c.l.b16 %v439
        %v705 = vunpack.c.l.b16 %v440
        %v706 = vunpack.c.h.b16 %v440
        %v707 = vunpack.c.l.b16 %v441
        %v708 = vunpack.c.l.b16 %v442
        %v709 = vunpack.c.h.b16 %v442
        %v710 = vunpack.c.l.b16 %v443
        %v711 = vunpack.c.l.b16 %v444
        %v712 = vunpack.c.h.b16 %v444
        %v713 = vunpack.c.l.b16 %v445
        %v714 = vunpack.c.l.b16 %v446
        %v715 = vunpack.c.h.b16 %v446
        %v716 = vunpack.c.l.b16 %v447
        %v717 = vunpack.c.l.b16 %v448
        %v718 = vunpack.c.h.b16 %v448
        %v719 = vunpack.c.l.b16 %v449
        %v720 = vunpack.c.l.b16 %v450
        %v721 = vunpack.c.h.b16 %v450
        %v722 = vunpack.c.l.b16 %v451
        %v723 = vunpack.c.l.b16 %v452
        %v724 = vunpack.c.h.b16 %v452
        %v725 = vunpack.c.l.b16 %v453
        %v726 = vunpack.c.l.b16 %v454
        %v727 = vunpack.c.h.b16 %v454
        %v728 = vunpack.c.l.b16 %v455
        %v729 = vpack.c.b16 %v636, %v633
        %v730 = vpack.c.b16 %v637, %v634
        %v731 = vpack.c.b16 %v638, %v635
        %v732 = vpack.c.b16 %v642, %v639
        %v733 = vpack.c.b16 %v643, %v640
        %v734 = vpack.c.b16 %v644, %v641
        %v735 = vpack.c.b16 %v648, %v645
        %v736 = vpack.c.b16 %v649, %v646
        %v737 = vpack.c.b16 %v650, %v647
        %v738 = vpack.c.b16 %v654, %v651
        %v739 = vpack.c.b16 %v655, %v652
        %v740 = vpack.c.b16 %v656, %v653
        %v741 = vpack.c.b16 %v660, %v657
        %v742 = vpack.c.b16 %v661, %v658
        %v743 = vpack.c.b16 %v662, %v659
        %v744 = vpack.c.b16 %v666, %v663
        %v745 = vpack.c.b16 %v667, %v664
        %v746 = vpack.c.b16 %v668, %v665
        %v747 = vpack.c.b16 %v672, %v669
        %v748 = vpack.c.b16 %v673, %v670
        %v749 = vpack.c.b16 %v674, %v671
        %v750 = vpack.c.b16 %v678, %v675
        %v751 = vpack.c.b16 %v679, %v676
        %v752 = vpack.c.b16 %v680, %v677
        %v753 = vpack.c.b16 %v684, %v681
        %v754 = vpack.c.b16 %v685, %v682
        %v755 = vpack.c.b16 %v686, %v683
        %v756 = vpack.c.b16 %v690, %v687
        %v757 = vpack.c.b16 %v691, %v688
        %v758 = vpack.c.b16 %v692, %v689
        %v759 = vpack.c.b16 %v696, %v693
        %v760 = vpack.c.b16 %v697, %v694
        %v761 = vpack.c.b16 %v698, %v695
        %v762 = vpack.c.b16 %v702, %v699
        %v763 = vpack.c.b16 %v703, %v700
        %v764 = vpack.c.b16 %v704, %v701
        %v765 = vpack.c.b16 %v708, %v705
        %v766 = vpack.c.b16 %v709, %v706
        %v767 = vpack.c.b16 %v710, %v707
        %v768 = vpack.c.b16 %v714, %v711
        %v769 = vpack.c.b16 %v715, %v712
        %v770 = vpack.c.b16 %v716, %v713
        %v771 = vpack.c.b16 %v720, %v717
        %v772 = vpack.c.b16 %v721, %v718
        %v773 = vpack.c.b16 %v722, %v719
        %v774 = vpack.c.b16 %v726, %v723
        %v775 = vpack.c.b16 %v727, %v724
        %v776 = vpack.c.b16 %v728, %v725
        %825 = vmatprep.subr.bf16.mxu0 %v730
        %826 = vmatpush1.bf16.msra.mxu0 %v729
        %827 = vmatprep.subr.bf16.mxu0 %v733
        %828 = vmatpush1.bf16.msra.mxu0 %v732
        %829 = vmatprep.subr.bf16.mxu0 %v736
        %830 = vmatpush1.bf16.msra.mxu0 %v735
        %831 = vmatprep.subr.bf16.mxu0 %v739
        %832 = vmatpush1.bf16.msra.mxu0 %v738
        %833 = vmatprep.subr.bf16.mxu0 %v742
        %834 = vmatpush1.bf16.msra.mxu0 %v741
        %835 = vmatprep.subr.bf16.mxu0 %v745
        %836 = vmatpush1.bf16.msra.mxu0 %v744
        %837 = vmatprep.subr.bf16.mxu0 %v748
        %838 = vmatpush1.bf16.msra.mxu0 %v747
        %839 = vmatprep.subr.bf16.mxu0 %v751
        %840 = vmatpush1.bf16.msra.mxu0 %v750
        %841 = vmatprep.subr.bf16.mxu0 %v754
        %842 = vmatpush1.bf16.msra.mxu0 %v753
        %843 = vmatprep.subr.bf16.mxu0 %v757
        %844 = vmatpush1.bf16.msra.mxu0 %v756
        %845 = vmatprep.subr.bf16.mxu0 %v760
        %846 = vmatpush1.bf16.msra.mxu0 %v759
        %847 = vmatprep.subr.bf16.mxu0 %v763
        %848 = vmatpush1.bf16.msra.mxu0 %v762
        %849 = vmatprep.subr.bf16.mxu0 %v766
        %850 = vmatpush1.bf16.msra.mxu0 %v765
        %851 = vmatprep.subr.bf16.mxu0 %v769
        %852 = vmatpush1.bf16.msra.mxu0 %v768
        %853 = vmatprep.subr.bf16.mxu0 %v772
        %854 = vmatpush1.bf16.msra.mxu0 %v771
        %855 = vmatprep.subr.bf16.mxu0 %v775
        %856 = vmatpush1.bf16.msra.mxu0 %v774
        %857 = vmatprep.mubr.bf16.mxu0 %v538
        %858 = vmatmul.mubr.bf16.gmra.mrb[0].mxu0 %v537
        %v859 = vpop.f32.mrb[0].mxu0
        %v860 = vadd.f32 %v477, %v859
        %v861 = vpop.f32.mrb[0].mxu0
        %v862 = vadd.f32 %v481, %v861
        %v863 = vpop.f32.mrb[0].mxu0
        %v864 = vadd.f32 %v477, %v863
        %v865 = vpop.f32.mrb[0].mxu0
        %v866 = vadd.f32 %v481, %v865
        %867 = vmatprep.mubr.bf16.mxu0 %v540
        %868 = vmatmul.mubr.bf16.gmra.mrb[0].mxu0 %v539
        %v869 = vpop.f32.mrb[0].mxu0
        %v870 = vadd.f32 %v477, %v869
        %v871 = vpop.f32.mrb[0].mxu0
        %v872 = vadd.f32 %v481, %v871
        %v873 = vpop.f32.mrb[0].mxu0
        %v874 = vadd.f32 %v477, %v873
        %v875 = vpop.f32.mrb[0].mxu0
        %v876 = vadd.f32 %v481, %v875
        %877 = vmatprep.mubr.bf16.mxu0 %v542
        %878 = vmatmul.mubr.bf16.gmra.mrb[0].mxu0 %v541
        %v879 = vpop.f32.mrb[0].mxu0
        %v880 = vadd.f32 %v477, %v879
        %v881 = vpop.f32.mrb[0].mxu0
        %v882 = vadd.f32 %v481, %v881
        %v883 = vpop.f32.mrb[0].mxu0
        %v884 = vadd.f32 %v477, %v883
        %v885 = vpop.f32.mrb[0].mxu0
        %v886 = vadd.f32 %v481, %v885
        %887 = vmatprep.mubr.bf16.mxu0 %v544
        %888 = vmatmul.mubr.bf16.gmra.mrb[0].mxu0 %v543
        %v889 = vpop.f32.mrb[0].mxu0
        %v890 = vadd.f32 %v477, %v889
        %v891 = vpop.f32.mrb[0].mxu0
        %v892 = vadd.f32 %v481, %v891
        %v893 = vpop.f32.mrb[0].mxu0
        %v894 = vadd.f32 %v477, %v893
        %v895 = vpop.f32.mrb[0].mxu0
        %v896 = vadd.f32 %v481, %v895
        %897 = vmatprep.mubr.bf16.mxu0 %v546
        %898 = vmatmul.mubr.bf16.gmra.mrb[0].mxu0 %v545
        %v899 = vpop.f32.mrb[0].mxu0
        %v900 = vadd.f32 %v477, %v899
        %v901 = vpop.f32.mrb[0].mxu0
        %v902 = vadd.f32 %v481, %v901
        %v903 = vpop.f32.mrb[0].mxu0
        %v904 = vadd.f32 %v477, %v903
        %v905 = vpop.f32.mrb[0].mxu0
        %v906 = vadd.f32 %v481, %v905
        %907 = vmatprep.mubr.bf16.mxu0 %v548
        %908 = vmatmul.mubr.bf16.gmra.mrb[0].mxu0 %v547
        %v909 = vpop.f32.mrb[0].mxu0
        %v910 = vadd.f32 %v477, %v909
        %v911 = vpop.f32.mrb[0].mxu0
        %v912 = vadd.f32 %v481, %v911
        %v913 = vpop.f32.mrb[0].mxu0
        %v914 = vadd.f32 %v477, %v913
        %v915 = vpop.f32.mrb[0].mxu0
        %v916 = vadd.f32 %v481, %v915
        %917 = vmatprep.mubr.bf16.mxu0 %v550
        %918 = vmatmul.mubr.bf16.gmra.mrb[0].mxu0 %v549
        %v919 = vpop.f32.mrb[0].mxu0
        %v920 = vadd.f32 %v477, %v919
        %v921 = vpop.f32.mrb[0].mxu0
        %v922 = vadd.f32 %v481, %v921
        %v923 = vpop.f32.mrb[0].mxu0
        %v924 = vadd.f32 %v477, %v923
        %v925 = vpop.f32.mrb[0].mxu0
        %v926 = vadd.f32 %v481, %v925
        %927 = vmatprep.mubr.bf16.mxu0 %v552
        %928 = vmatmul.mubr.bf16.gmra.mrb[0].mxu0 %v551
        %v929 = vpop.f32.mrb[0].mxu0
        %v930 = vadd.f32 %v477, %v929
        %v931 = vpop.f32.mrb[0].mxu0
        %v932 = vadd.f32 %v481, %v931
        %v933 = vpop.f32.mrb[0].mxu0
        %v934 = vadd.f32 %v477, %v933
        %v935 = vpop.f32.mrb[0].mxu0
        %v936 = vadd.f32 %v481, %v935
        %937 = vdwg.mxu0
        %938 = vmatprep.subr.bf16.mxu0 0
        %939 = vmatpush1.bf16.msra.mxu0 %v731
        %940 = vmatprep.subr.bf16.mxu0 0
        %941 = vmatpush1.bf16.msra.mxu0 %v734
        %942 = vmatprep.subr.bf16.mxu0 0
        %943 = vmatpush1.bf16.msra.mxu0 %v737
        %944 = vmatprep.subr.bf16.mxu0 0
        %945 = vmatpush1.bf16.msra.mxu0 %v740
        %946 = vmatprep.subr.bf16.mxu0 0
        %947 = vmatpush1.bf16.msra.mxu0 %v743
        %948 = vmatprep.subr.bf16.mxu0 0
        %949 = vmatpush1.bf16.msra.mxu0 %v746
        %950 = vmatprep.subr.bf16.mxu0 0
        %951 = vmatpush1.bf16.msra.mxu0 %v749
        %952 = vmatprep.subr.bf16.mxu0 0
        %953 = vmatpush1.bf16.msra.mxu0 %v752
        %954 = vmatprep.subr.bf16.mxu0 0
        %955 = vmatpush1.bf16.msra.mxu0 %v755
        %956 = vmatprep.subr.bf16.mxu0 0
        %957 = vmatpush1.bf16.msra.mxu0 %v758
        %958 = vmatprep.subr.bf16.mxu0 0
        %959 = vmatpush1.bf16.msra.mxu0 %v761
        %960 = vmatprep.subr.bf16.mxu0 0
        %961 = vmatpush1.bf16.msra.mxu0 %v764
        %962 = vmatprep.subr.bf16.mxu0 0
        %963 = vmatpush1.bf16.msra.mxu0 %v767
        %964 = vmatprep.subr.bf16.mxu0 0
        %965 = vmatpush1.bf16.msra.mxu0 %v770
        %966 = vmatprep.subr.bf16.mxu0 0
        %967 = vmatpush1.bf16.msra.mxu0 %v773
        %968 = vmatprep.subr.bf16.mxu0 0
        %969 = vmatpush1.bf16.msra.mxu0 %v776
        %970 = vmatprep.mubr.bf16.mxu0 %v538
        %971 = vmatmul.mubr.bf16.gmra.mrb[0].mxu0 %v537
        %v972 = vpop.f32.mrb[0].mxu0
        %v973 = vadd.f32 %v485, %v972
        %v974 = vpop.f32.mrb[0].mxu0
        %v975 = vpop.f32.mrb[0].mxu0
        %v976 = vadd.f32 %v485, %v975
        %v977 = vpop.f32.mrb[0].mxu0
        %978 = vmatprep.mubr.bf16.mxu0 %v540
        %979 = vmatmul.mubr.bf16.gmra.mrb[0].mxu0 %v539
        %v980 = vpop.f32.mrb[0].mxu0
        %v981 = vadd.f32 %v485, %v980
        %v982 = vpop.f32.mrb[0].mxu0
        %v983 = vpop.f32.mrb[0].mxu0
        %v984 = vadd.f32 %v485, %v983
        %v985 = vpop.f32.mrb[0].mxu0
        %986 = vmatprep.mubr.bf16.mxu0 %v542
        %987 = vmatmul.mubr.bf16.gmra.mrb[0].mxu0 %v541
        %v988 = vpop.f32.mrb[0].mxu0
        %v989 = vadd.f32 %v485, %v988
        %v990 = vpop.f32.mrb[0].mxu0
        %v991 = vpop.f32.mrb[0].mxu0
        %v992 = vadd.f32 %v485, %v991
        %v993 = vpop.f32.mrb[0].mxu0
        %994 = vmatprep.mubr.bf16.mxu0 %v544
        %995 = vmatmul.mubr.bf16.gmra.mrb[0].mxu0 %v543
        %v996 = vpop.f32.mrb[0].mxu0
        %v997 = vadd.f32 %v485, %v996
        %v998 = vpop.f32.mrb[0].mxu0
        %v999 = vpop.f32.mrb[0].mxu0
        %v1000 = vadd.f32 %v485, %v999
        %v1001 = vpop.f32.mrb[0].mxu0
        %1002 = vmatprep.mubr.bf16.mxu0 %v546
        %1003 = vmatmul.mubr.bf16.gmra.mrb[0].mxu0 %v545
        %v1004 = vpop.f32.mrb[0].mxu0
        %v1005 = vadd.f32 %v485, %v1004
        %v1006 = vpop.f32.mrb[0].mxu0
        %v1007 = vpop.f32.mrb[0].mxu0
        %v1008 = vadd.f32 %v485, %v1007
        %v1009 = vpop.f32.mrb[0].mxu0
        %1010 = vmatprep.mubr.bf16.mxu0 %v548
        %1011 = vmatmul.mubr.bf16.gmra.mrb[0].mxu0 %v547
        %v1012 = vpop.f32.mrb[0].mxu0
        %v1013 = vadd.f32 %v485, %v1012
        %v1014 = vpop.f32.mrb[0].mxu0
        %v1015 = vpop.f32.mrb[0].mxu0
        %v1016 = vadd.f32 %v485, %v1015
        %v1017 = vpop.f32.mrb[0].mxu0
        %1018 = vmatprep.mubr.bf16.mxu0 %v550
        %1019 = vmatmul.mubr.bf16.gmra.mrb[0].mxu0 %v549
        %v1020 = vpop.f32.mrb[0].mxu0
        %v1021 = vadd.f32 %v485, %v1020
        %v1022 = vpop.f32.mrb[0].mxu0
        %v1023 = vpop.f32.mrb[0].mxu0
        %v1024 = vadd.f32 %v485, %v1023
        %v1025 = vpop.f32.mrb[0].mxu0
        %1026 = vmatprep.mubr.bf16.mxu0 %v552
        %1027 = vmatmul.mubr.bf16.gmra.mrb[0].mxu0 %v551
        %v1028 = vpop.f32.mrb[0].mxu0
        %v1029 = vadd.f32 %v485, %v1028
        %v1030 = vpop.f32.mrb[0].mxu0
        %v1031 = vpop.f32.mrb[0].mxu0
        %v1032 = vadd.f32 %v485, %v1031
        %v1033 = vpop.f32.mrb[0].mxu0
        %1034 = vdwg.mxu0
        %v1035 = vpack.c.bf16 %v864, %v860
        %v1036 = vpack.c.bf16 %v866, %v862
        %v1037 = vpack.c.bf16 %v976, %v973
        %v1038 = vpack.c.bf16 %v874, %v870
        %v1039 = vpack.c.bf16 %v876, %v872
        %v1040 = vpack.c.bf16 %v984, %v981
        %v1041 = vpack.c.bf16 %v884, %v880
        %v1042 = vpack.c.bf16 %v886, %v882
        %v1043 = vpack.c.bf16 %v992, %v989
        %v1044 = vpack.c.bf16 %v894, %v890
        %v1045 = vpack.c.bf16 %v896, %v892
        %v1046 = vpack.c.bf16 %v1000, %v997
        %v1047 = vpack.c.bf16 %v904, %v900
        %v1048 = vpack.c.bf16 %v906, %v902
        %v1049 = vpack.c.bf16 %v1008, %v1005
        %v1050 = vpack.c.bf16 %v914, %v910
        %v1051 = vpack.c.bf16 %v916, %v912
        %v1052 = vpack.c.bf16 %v1016, %v1013
        %v1053 = vpack.c.bf16 %v924, %v920
        %v1054 = vpack.c.bf16 %v926, %v922
        %v1055 = vpack.c.bf16 %v1024, %v1021
        %v1056 = vpack.c.bf16 %v934, %v930
        %v1057 = vpack.c.bf16 %v936, %v932
        %v1058 = vpack.c.bf16 %v1032, %v1029
        %1059 = vst [vmem:[#allocation2] sm:$0xff] %v1035
        %1060 = vst [vmem:[#allocation2 + $0x8] sm:$0xff] %v1036
        %1061 = vst [vmem:[#allocation2 + $0x10] sm:$0xff] %v1037
        %1062 = vst [vmem:[#allocation2 + $0x18] sm:$0xff] %v1038
        %1063 = vst [vmem:[#allocation2 + $0x20] sm:$0xff] %v1039
        %1064 = vst [vmem:[#allocation2 + $0x28] sm:$0xff] %v1040
        %1065 = vst [vmem:[#allocation2 + $0x30] sm:$0xff] %v1041
        %1066 = vst [vmem:[#allocation2 + $0x38] sm:$0xff] %v1042
        %1067 = vst [vmem:[#allocation2 + $0x40] sm:$0xff] %v1043
        %1068 = vst [vmem:[#allocation2 + $0x48] sm:$0xff] %v1044
        %1069 = vst [vmem:[#allocation2 + $0x50] sm:$0xff] %v1045
        %1070 = vst [vmem:[#allocation2 + $0x58] sm:$0xff] %v1046
        %1071 = vst [vmem:[#allocation2 + $0x60] sm:$0xff] %v1047
        %1072 = vst [vmem:[#allocation2 + $0x68] sm:$0xff] %v1048
        %1073 = vst [vmem:[#allocation2 + $0x70] sm:$0xff] %v1049
        %1074 = vst [vmem:[#allocation2 + $0x78] sm:$0xff] %v1050
        %1075 = vst [vmem:[#allocation2 + $0x80] sm:$0xff] %v1051
        %1076 = vst [vmem:[#allocation2 + $0x88] sm:$0xff] %v1052
        %1077 = vst [vmem:[#allocation2 + $0x90] sm:$0xff] %v1053
        %1078 = vst [vmem:[#allocation2 + $0x98] sm:$0xff] %v1054
        %1079 = vst [vmem:[#allocation2 + $0xa0] sm:$0xff] %v1055
        %1080 = vst [vmem:[#allocation2 + $0xa8] sm:$0xff] %v1056
        %1081 = vst [vmem:[#allocation2 + $0xb0] sm:$0xff] %v1057
        %1082 = vst [vmem:[#allocation2 + $0xb8] sm:$0xff] %v1058
        %v1083 = vld [vmem:[%s380] sm:$0xff]
        %v1084 = vld [vmem:[%s380 + $0x8] sm:$0xf]
        %v1085 = vld [vmem:[%s380 + $0xc] sm:$0xff]
        %v1086 = vld [vmem:[%s380 + $0x14] sm:$0xf]
        %v1087 = vld [vmem:[%s380 + $0x18] sm:$0xff]
        %v1088 = vld [vmem:[%s380 + $0x20] sm:$0xf]
        %v1089 = vld [vmem:[%s380 + $0x24] sm:$0xff]
        %v1090 = vld [vmem:[%s380 + $0x2c] sm:$0xf]
        %v1091 = vld [vmem:[%s380 + $0x30] sm:$0xff]
        %v1092 = vld [vmem:[%s380 + $0x38] sm:$0xf]
        %v1093 = vld [vmem:[%s380 + $0x3c] sm:$0xff]
        %v1094 = vld [vmem:[%s380 + $0x44] sm:$0xf]
        %v1095 = vld [vmem:[%s380 + $0x48] sm:$0xff]
        %v1096 = vld [vmem:[%s380 + $0x50] sm:$0xf]
        %v1097 = vld [vmem:[%s380 + $0x54] sm:$0xff]
        %v1098 = vld [vmem:[%s380 + $0x5c] sm:$0xf]
        %v1099 = vld [vmem:[%s380 + $0x60] sm:$0xff]
        %v1100 = vld [vmem:[%s380 + $0x68] sm:$0xf]
        %v1101 = vld [vmem:[%s380 + $0x6c] sm:$0xff]
        %v1102 = vld [vmem:[%s380 + $0x74] sm:$0xf]
        %v1103 = vld [vmem:[%s380 + $0x78] sm:$0xff]
        %v1104 = vld [vmem:[%s380 + $0x80] sm:$0xf]
        %v1105 = vld [vmem:[%s380 + $0x84] sm:$0xff]
        %v1106 = vld [vmem:[%s380 + $0x8c] sm:$0xf]
        %v1107 = vld [vmem:[%s380 + $0x90] sm:$0xff]
        %v1108 = vld [vmem:[%s380 + $0x98] sm:$0xf]
        %v1109 = vld [vmem:[%s380 + $0x9c] sm:$0xff]
        %v1110 = vld [vmem:[%s380 + $0xa4] sm:$0xf]
        %v1111 = vld [vmem:[%s380 + $0xa8] sm:$0xff]
        %v1112 = vld [vmem:[%s380 + $0xb0] sm:$0xf]
        %v1113 = vld [vmem:[%s380 + $0xb4] sm:$0xff]
        %v1114 = vld [vmem:[%s380 + $0xbc] sm:$0xf]
        %v1115 = vld [vmem:[%s321] sm:$0x1]
        %v1116 = vld [vmem:[%s1] sm:$0xff]
        %v1117 = vld [vmem:[%s1 + $0x8] sm:$0xff]
        %p1118 = scmp.eq.s32.totalorder %s24, 0
        %s1119 = scalar_select %p1118, 0, 7
        %s1120 = smul.u32 %s1119, 16
        %s1121 = sshra.s32 %s1120, 4
        %s1122 = sand.u32 %s1120, 15
        %s1123 = smul.u32 %s1121, 3
        %s1124 = smul.addr %s1123, 8
        %s1125 = scalar_lea.vmem [#allocation2], %s1124
        %v1126 = vld [vmem:[%s1125] sm:$0xff]
        %v1127 = vld [vmem:[%s1125 + $0x8] sm:$0xff]
        %v1128 = vld [vmem:[%s1125 + $0x10] sm:$0xff]
        %v1161 = vunpack.c.l.b16 %v1083
        %v1162 = vunpack.c.h.b16 %v1083
        %v1163 = vunpack.c.l.b16 %v1084
        %v1164 = vunpack.c.l.b16 %v1085
        %v1165 = vunpack.c.h.b16 %v1085
        %v1166 = vunpack.c.l.b16 %v1086
        %v1167 = vunpack.c.l.b16 %v1087
        %v1168 = vunpack.c.h.b16 %v1087
        %v1169 = vunpack.c.l.b16 %v1088
        %v1170 = vunpack.c.l.b16 %v1089
        %v1171 = vunpack.c.h.b16 %v1089
        %v1172 = vunpack.c.l.b16 %v1090
        %v1173 = vunpack.c.l.b16 %v1091
        %v1174 = vunpack.c.h.b16 %v1091
        %v1175 = vunpack.c.l.b16 %v1092
        %v1176 = vunpack.c.l.b16 %v1093
        %v1177 = vunpack.c.h.b16 %v1093
        %v1178 = vunpack.c.l.b16 %v1094
        %v1179 = vunpack.c.l.b16 %v1095
        %v1180 = vunpack.c.h.b16 %v1095
        %v1181 = vunpack.c.l.b16 %v1096
        %v1182 = vunpack.c.l.b16 %v1097
        %v1183 = vunpack.c.h.b16 %v1097
        %v1184 = vunpack.c.l.b16 %v1098
        %v1185 = vunpack.c.l.b16 %v1099
        %v1186 = vunpack.c.h.b16 %v1099
        %v1187 = vunpack.c.l.b16 %v1100
        %v1188 = vunpack.c.l.b16 %v1101
        %v1189 = vunpack.c.h.b16 %v1101
        %v1190 = vunpack.c.l.b16 %v1102
        %v1191 = vunpack.c.l.b16 %v1103
        %v1192 = vunpack.c.h.b16 %v1103
        %v1193 = vunpack.c.l.b16 %v1104
        %v1194 = vunpack.c.l.b16 %v1105
        %v1195 = vunpack.c.h.b16 %v1105
        %v1196 = vunpack.c.l.b16 %v1106
        %v1197 = vunpack.c.l.b16 %v1107
        %v1198 = vunpack.c.h.b16 %v1107
        %v1199 = vunpack.c.l.b16 %v1108
        %v1200 = vunpack.c.l.b16 %v1109
        %v1201 = vunpack.c.h.b16 %v1109
        %v1202 = vunpack.c.l.b16 %v1110
        %v1203 = vunpack.c.l.b16 %v1111
        %v1204 = vunpack.c.h.b16 %v1111
        %v1205 = vunpack.c.l.b16 %v1112
        %v1206 = vunpack.c.l.b16 %v1113
        %v1207 = vunpack.c.h.b16 %v1113
        %v1208 = vunpack.c.l.b16 %v1114
        %v1209 = vpack.c.b16 %v1164, %v1161
        %v1210 = vpack.c.b16 %v1165, %v1162
        %v1211 = vpack.c.b16 %v1166, %v1163
        %v1212 = vpack.c.b16 %v1170, %v1167
        %v1213 = vpack.c.b16 %v1171, %v1168
        %v1214 = vpack.c.b16 %v1172, %v1169
        %v1215 = vpack.c.b16 %v1176, %v1173
        %v1216 = vpack.c.b16 %v1177, %v1174
        %v1217 = vpack.c.b16 %v1178, %v1175
        %v1218 = vpack.c.b16 %v1182, %v1179
        %v1219 = vpack.c.b16 %v1183, %v1180
        %v1220 = vpack.c.b16 %v1184, %v1181
        %v1221 = vpack.c.b16 %v1188, %v1185
        %v1222 = vpack.c.b16 %v1189, %v1186
        %v1223 = vpack.c.b16 %v1190, %v1187
        %v1224 = vpack.c.b16 %v1194, %v1191
        %v1225 = vpack.c.b16 %v1195, %v1192
        %v1226 = vpack.c.b16 %v1196, %v1193
        %v1227 = vpack.c.b16 %v1200, %v1197
        %v1228 = vpack.c.b16 %v1201, %v1198
        %v1229 = vpack.c.b16 %v1202, %v1199
        %v1230 = vpack.c.b16 %v1206, %v1203
        %v1231 = vpack.c.b16 %v1207, %v1204
        %v1232 = vpack.c.b16 %v1208, %v1205
        %1257 = vmatprep.subr.bf16.mxu0 %v1210
        %1258 = vmatpush1.bf16.msra.mxu0 %v1209
        %1259 = vmatprep.subr.bf16.mxu0 %v1213
        %1260 = vmatpush1.bf16.msra.mxu0 %v1212
        %1261 = vmatprep.subr.bf16.mxu0 %v1216
        %1262 = vmatpush1.bf16.msra.mxu0 %v1215
        %1263 = vmatprep.subr.bf16.mxu0 %v1219
        %1264 = vmatpush1.bf16.msra.mxu0 %v1218
        %1265 = vmatprep.subr.bf16.mxu0 %v1222
        %1266 = vmatpush1.bf16.msra.mxu0 %v1221
        %1267 = vmatprep.subr.bf16.mxu0 %v1225
        %1268 = vmatpush1.bf16.msra.mxu0 %v1224
        %1269 = vmatprep.subr.bf16.mxu0 %v1228
        %1270 = vmatpush1.bf16.msra.mxu0 %v1227
        %1271 = vmatprep.subr.bf16.mxu0 %v1231
        %1272 = vmatpush1.bf16.msra.mxu0 %v1230
        %1273 = vmatprep.subr.bf16.mxu0 0
        %1274 = vmatpush1.bf16.msra.mxu0 0
        %1275 = vmatprep.subr.bf16.mxu0 0
        %1276 = vmatpush1.bf16.msra.mxu0 0
        %1277 = vmatprep.subr.bf16.mxu0 0
        %1278 = vmatpush1.bf16.msra.mxu0 0
        %1279 = vmatprep.subr.bf16.mxu0 0
        %1280 = vmatpush1.bf16.msra.mxu0 0
        %1281 = vmatprep.subr.bf16.mxu0 0
        %1282 = vmatpush1.bf16.msra.mxu0 0
        %1283 = vmatprep.subr.bf16.mxu0 0
        %1284 = vmatpush1.bf16.msra.mxu0 0
        %1285 = vmatprep.subr.bf16.mxu0 0
        %1286 = vmatpush1.bf16.msra.mxu0 0
        %1287 = vmatprep.subr.bf16.mxu0 0
        %1288 = vmatpush1.bf16.msra.mxu0 0
        %1289 = vmatprep.mubr.bf16.mxu0 0
        %1290 = vmatmul.mubr.bf16.gmra.mrb[0].mxu0 0
        %v1291 = vpop.f32.mrb[0].mxu0
        %v1292 = vadd.f32 0.0, %v1291
        %v1293 = vpop.f32.mrb[0].mxu0
        %v1294 = vadd.f32 0.0, %v1293
        %v1295 = vpop.f32.mrb[0].mxu0
        %v1296 = vadd.f32 0.0, %v1295
        %v1297 = vpop.f32.mrb[0].mxu0
        %v1298 = vadd.f32 0.0, %v1297
        %1299 = vdwg.mxu0
        %1300 = vmatprep.subr.bf16.mxu0 0
        %1301 = vmatpush1.bf16.msra.mxu0 %v1211
        %1302 = vmatprep.subr.bf16.mxu0 0
        %1303 = vmatpush1.bf16.msra.mxu0 %v1214
        %1304 = vmatprep.subr.bf16.mxu0 0
        %1305 = vmatpush1.bf16.msra.mxu0 %v1217
        %1306 = vmatprep.subr.bf16.mxu0 0
        %1307 = vmatpush1.bf16.msra.mxu0 %v1220
        %1308 = vmatprep.subr.bf16.mxu0 0
        %1309 = vmatpush1.bf16.msra.mxu0 %v1223
        %1310 = vmatprep.subr.bf16.mxu0 0
        %1311 = vmatpush1.bf16.msra.mxu0 %v1226
        %1312 = vmatprep.subr.bf16.mxu0 0
        %1313 = vmatpush1.bf16.msra.mxu0 %v1229
        %1314 = vmatprep.subr.bf16.mxu0 0
        %1315 = vmatpush1.bf16.msra.mxu0 %v1232
        %1316 = vmatprep.subr.bf16.mxu0 0
        %1317 = vmatpush1.bf16.msra.mxu0 0
        %1318 = vmatprep.subr.bf16.mxu0 0
        %1319 = vmatpush1.bf16.msra.mxu0 0
        %1320 = vmatprep.subr.bf16.mxu0 0
        %1321 = vmatpush1.bf16.msra.mxu0 0
        %1322 = vmatprep.subr.bf16.mxu0 0
        %1323 = vmatpush1.bf16.msra.mxu0 0
        %1324 = vmatprep.subr.bf16.mxu0 0
        %1325 = vmatpush1.bf16.msra.mxu0 0
        %1326 = vmatprep.subr.bf16.mxu0 0
        %1327 = vmatpush1.bf16.msra.mxu0 0
        %1328 = vmatprep.subr.bf16.mxu0 0
        %1329 = vmatpush1.bf16.msra.mxu0 0
        %1330 = vmatprep.subr.bf16.mxu0 0
        %1331 = vmatpush1.bf16.msra.mxu0 0
        %1332 = vmatprep.mubr.bf16.mxu0 0
        %1333 = vmatmul.mubr.bf16.gmra.mrb[0].mxu0 0
        %v1334 = vpop.f32.mrb[0].mxu0
        %v1335 = vadd.f32 0.0, %v1334
        %v1336 = vpop.f32.mrb[0].mxu0
        %v1337 = vpop.f32.mrb[0].mxu0
        %v1338 = vadd.f32 0.0, %v1337
        %v1339 = vpop.f32.mrb[0].mxu0
        %1340 = vdwg.mxu0
        %v1341 = vunpack.c.l.bf16 %v1126
        %v1342 = vunpack.c.h.bf16 %v1126
        %v1343 = vadd.f32 %v1341, %v1292
        %v1344 = vadd.f32 %v1342, %v1296
        %v1345 = vxor.u32 %v1343, 2147483648
        %v1346 = vxor.u32 %v1344, 2147483648
        %v1347 = vmul.f32 %v1345, 1.442695
        %v1348 = vpow.pop %v1347
        %v1349 = vmul.f32 %v1346, 1.442695
        %v1350 = vpow.pop %v1349
        %v1351 = vadd.f32 %v1348, 1.0
        %v1352 = vadd.f32 %v1350, 1.0
        %v1353 = vrcp.pop %v1351
        %v1354 = vmul.f32 1.0, %v1353
        %v1355 = vrcp.pop %v1352
        %v1356 = vmul.f32 1.0, %v1355
        %v1357 = vunpack.c.l.bf16 %v1127
        %v1358 = vunpack.c.h.bf16 %v1127
        %v1359 = vadd.f32 %v1357, %v1294
        %v1360 = vadd.f32 %v1358, %v1298
        %v1361 = vxor.u32 %v1359, 2147483648
        %v1362 = vxor.u32 %v1360, 2147483648
        %v1363 = vmul.f32 %v1361, 1.442695
        %v1364 = vpow.pop %v1363
        %v1365 = vmul.f32 %v1362, 1.442695
        %v1366 = vpow.pop %v1365
        %v1367 = vadd.f32 %v1364, 1.0
        %v1368 = vadd.f32 %v1366, 1.0
        %v1369 = vrcp.pop %v1367
        %v1370 = vmul.f32 1.0, %v1369
        %v1371 = vrcp.pop %v1368
        %v1372 = vmul.f32 1.0, %v1371
        %v1374 = vlaneseq
        %v1375 = vshrl.u32 %v1374, 7
        %v1376 = vsub.s32 0, %v1375
        %v1377 = vrot.slane %v1115, %v1376
        %v1379 = vadd.f32 %v1335, %v1377
        %v1380 = vadd.f32 %v1338, %v1377
        %v1381 = vmul.f32 %v1354, %v1379
        %v1382 = vmul.f32 %v1356, %v1380
        %v1383 = vunpack.c.l.bf16 %v1128
        %v1384 = vunpack.c.h.bf16 %v1128
        %v1385 = vadd.f32 %v1383, %v1381
        %v1386 = vadd.f32 %v1384, %v1382
        %v1387 = vtanh.pop %v1385
        %v1388 = vtanh.pop %v1386
        %v1389 = vsub.f32 1.0, %v1370
        %v1390 = vsub.f32 1.0, %v1372
        %v1391 = vmul.f32 %v1389, %v1387
        %v1392 = vmul.f32 %v1390, %v1388
        %v1393 = vmul.f32 %v1370, 0.0
        %v1394 = vmul.f32 %v1372, 0.0
        %v1395 = vadd.f32 %v1391, %v1393
        %v1396 = vadd.f32 %v1392, %v1394
        %v1397 = vstv %s1119
        %vm1398 = vcmp.lt.s32.totalorder %v1397, %v1116
        %vm1399 = vcmp.lt.s32.totalorder %v1397, %v1117
        %v1400 = vsel %vm1398, 1, 0
        %v1401 = vsel %vm1399, 1, 0
        %1402 = vset.pattern.permute.xlu0 0
        %1403 = vperm.xlu0 %1402, %v1400
        %v1404 = vpop.permute.xlu0 %1403
        %1405 = vset.pattern.permute.xlu0 0
        %1406 = vperm.xlu0 %1405, %v1401
        %v1407 = vpop.permute.xlu0 %1406
        %vm1408 = vcmp.eq.s32.totalorder %v1404, 1
        %vm1409 = vcmp.eq.s32.totalorder %v1407, 1
        %v1410 = vsel %vm1408, %v1395, 0.0
        %v1411 = vsel %vm1409, %v1396, 0.0
        %s1412 = scalar_select %p1118, 1, 6
        %s1413 = smul.u32 %s1412, 16
        %s1414 = sshra.s32 %s1413, 4
        %s1415 = sand.u32 %s1413, 15
        %s1416 = smul.u32 %s1414, 3
        %s1417 = smul.addr %s1416, 8
        %s1418 = scalar_lea.vmem [#allocation2], %s1417
        %v1419 = vld [vmem:[%s1418] sm:$0xff]
        %v1420 = vld [vmem:[%s1418 + $0x8] sm:$0xff]
        %v1421 = vld [vmem:[%s1418 + $0x10] sm:$0xff]
        %v1422 = vpack.c.bf16 %v1411, %v1410
        %1423 = vmatprep.subr.bf16.mxu0 %v1210
        %1424 = vmatpush1.bf16.msra.mxu0 %v1209
        %1425 = vmatprep.subr.bf16.mxu0 %v1213
        %1426 = vmatpush1.bf16.msra.mxu0 %v1212
        %1427 = vmatprep.subr.bf16.mxu0 %v1216
        %1428 = vmatpush1.bf16.msra.mxu0 %v1215
        %1429 = vmatprep.subr.bf16.mxu0 %v1219
        %1430 = vmatpush1.bf16.msra.mxu0 %v1218
        %1431 = vmatprep.subr.bf16.mxu0 %v1222
        %1432 = vmatpush1.bf16.msra.mxu0 %v1221
        %1433 = vmatprep.subr.bf16.mxu0 %v1225
        %1434 = vmatpush1.bf16.msra.mxu0 %v1224
        %1435 = vmatprep.subr.bf16.mxu0 %v1228
        %1436 = vmatpush1.bf16.msra.mxu0 %v1227
        %1437 = vmatprep.subr.bf16.mxu0 %v1231
        %1438 = vmatpush1.bf16.msra.mxu0 %v1230
        %1439 = vmatprep.subr.bf16.mxu0 0
        %1440 = vmatpush1.bf16.msra.mxu0 0
        %1441 = vmatprep.subr.bf16.mxu0 0
        %1442 = vmatpush1.bf16.msra.mxu0 0
        %1443 = vmatprep.subr.bf16.mxu0 0
        %1444 = vmatpush1.bf16.msra.mxu0 0
        %1445 = vmatprep.subr.bf16.mxu0 0
        %1446 = vmatpush1.bf16.msra.mxu0 0
        %1447 = vmatprep.subr.bf16.mxu0 0
        %1448 = vmatpush1.bf16.msra.mxu0 0
        %1449 = vmatprep.subr.bf16.mxu0 0
        %1450 = vmatpush1.bf16.msra.mxu0 0
        %1451 = vmatprep.subr.bf16.mxu0 0
        %1452 = vmatpush1.bf16.msra.mxu0 0
        %1453 = vmatprep.subr.bf16.mxu0 0
        %1454 = vmatpush1.bf16.msra.mxu0 0
        %1455 = vmatprep.mubr.bf16.mxu0 0
        %1456 = vmatmul.mubr.bf16.gmra.mrb[0].mxu0 %v1422
        %v1457 = vpop.f32.mrb[0].mxu0
        %v1458 = vadd.f32 0.0, %v1457
        %v1459 = vpop.f32.mrb[0].mxu0
        %v1460 = vadd.f32 0.0, %v1459
        %v1461 = vpop.f32.mrb[0].mxu0
        %v1462 = vadd.f32 0.0, %v1461
        %v1463 = vpop.f32.mrb[0].mxu0
        %v1464 = vadd.f32 0.0, %v1463
        %1465 = vdwg.mxu0
        %1466 = vmatprep.subr.bf16.mxu0 0
        %1467 = vmatpush1.bf16.msra.mxu0 %v1211
        %1468 = vmatprep.subr.bf16.mxu0 0
        %1469 = vmatpush1.bf16.msra.mxu0 %v1214
        %1470 = vmatprep.subr.bf16.mxu0 0
        %1471 = vmatpush1.bf16.msra.mxu0 %v1217
        %1472 = vmatprep.subr.bf16.mxu0 0
        %1473 = vmatpush1.bf16.msra.mxu0 %v1220
        %1474 = vmatprep.subr.bf16.mxu0 0
        %1475 = vmatpush1.bf16.msra.mxu0 %v1223
        %1476 = vmatprep.subr.bf16.mxu0 0
        %1477 = vmatpush1.bf16.msra.mxu0 %v1226
        %1478 = vmatprep.subr.bf16.mxu0 0
        %1479 = vmatpush1.bf16.msra.mxu0 %v1229
        %1480 = vmatprep.subr.bf16.mxu0 0
        %1481 = vmatpush1.bf16.msra.mxu0 %v1232
        %1482 = vmatprep.subr.bf16.mxu0 0
        %1483 = vmatpush1.bf16.msra.mxu0 0
        %1484 = vmatprep.subr.bf16.mxu0 0
        %1485 = vmatpush1.bf16.msra.mxu0 0
        %1486 = vmatprep.subr.bf16.mxu0 0
        %1487 = vmatpush1.bf16.msra.mxu0 0
        %1488 = vmatprep.subr.bf16.mxu0 0
        %1489 = vmatpush1.bf16.msra.mxu0 0
        %1490 = vmatprep.subr.bf16.mxu0 0
        %1491 = vmatpush1.bf16.msra.mxu0 0
        %1492 = vmatprep.subr.bf16.mxu0 0
        %1493 = vmatpush1.bf16.msra.mxu0 0
        %1494 = vmatprep.subr.bf16.mxu0 0
        %1495 = vmatpush1.bf16.msra.mxu0 0
        %1496 = vmatprep.subr.bf16.mxu0 0
        %1497 = vmatpush1.bf16.msra.mxu0 0
        %1498 = vmatprep.mubr.bf16.mxu0 0
        %1499 = vmatmul.mubr.bf16.gmra.mrb[0].mxu0 %v1422
        %v1500 = vpop.f32.mrb[0].mxu0
        %v1501 = vadd.f32 0.0, %v1500
        %v1502 = vpop.f32.mrb[0].mxu0
        %v1503 = vpop.f32.mrb[0].mxu0
        %v1504 = vadd.f32 0.0, %v1503
        %v1505 = vpop.f32.mrb[0].mxu0
        %1506 = vdwg.mxu0
        %v1507 = vunpack.c.l.bf16 %v1419
        %v1508 = vunpack.c.h.bf16 %v1419
        %v1509 = vadd.f32 %v1507, %v1458
        %v1510 = vadd.f32 %v1508, %v1462
        %v1511 = vxor.u32 %v1509, 2147483648
        %v1512 = vxor.u32 %v1510, 2147483648
        %v1513 = vmul.f32 %v1511, 1.442695
        %v1514 = vpow.pop %v1513
        %v1515 = vmul.f32 %v1512, 1.442695
        %v1516 = vpow.pop %v1515
        %v1517 = vadd.f32 %v1514, 1.0
        %v1518 = vadd.f32 %v1516, 1.0
        %v1519 = vrcp.pop %v1517
        %v1520 = vmul.f32 1.0, %v1519
        %v1521 = vrcp.pop %v1518
        %v1522 = vmul.f32 1.0, %v1521
        %v1523 = vunpack.c.l.bf16 %v1420
        %v1524 = vunpack.c.h.bf16 %v1420
        %v1525 = vadd.f32 %v1523, %v1460
        %v1526 = vadd.f32 %v1524, %v1464
        %v1527 = vxor.u32 %v1525, 2147483648
        %v1528 = vxor.u32 %v1526, 2147483648
        %v1529 = vmul.f32 %v1527, 1.442695
        %v1530 = vpow.pop %v1529
        %v1531 = vmul.f32 %v1528, 1.442695
        %v1532 = vpow.pop %v1531
        %v1533 = vadd.f32 %v1530, 1.0
        %v1534 = vadd.f32 %v1532, 1.0
        %v1535 = vrcp.pop %v1533
        %v1536 = vmul.f32 1.0, %v1535
        %v1537 = vrcp.pop %v1534
        %v1538 = vmul.f32 1.0, %v1537
        %v1539 = vadd.f32 %v1501, %v1377
        %v1540 = vadd.f32 %v1504, %v1377
        %v1541 = vmul.f32 %v1520, %v1539
        %v1542 = vmul.f32 %v1522, %v1540
        %v1543 = vunpack.c.l.bf16 %v1421
        %v1544 = vunpack.c.h.bf16 %v1421
        %v1545 = vadd.f32 %v1543, %v1541
        %v1546 = vadd.f32 %v1544, %v1542
        %v1547 = vtanh.pop %v1545
        %v1548 = vtanh.pop %v1546
        %v1549 = vsub.f32 1.0, %v1536
        %v1550 = vsub.f32 1.0, %v1538
        %v1551 = vmul.f32 %v1549, %v1547
        %v1552 = vmul.f32 %v1550, %v1548
        %v1553 = vmul.f32 %v1536, %v1410
        %v1554 = vmul.f32 %v1538, %v1411
        %v1555 = vadd.f32 %v1551, %v1553
        %v1556 = vadd.f32 %v1552, %v1554
        %v1557 = vstv %s1412
        %vm1558 = vcmp.lt.s32.totalorder %v1557, %v1116
        %vm1559 = vcmp.lt.s32.totalorder %v1557, %v1117
        %v1560 = vsel %vm1558, 1, 0
        %v1561 = vsel %vm1559, 1, 0
        %1562 = vset.pattern.permute.xlu0 0
        %1563 = vperm.xlu0 %1562, %v1560
        %v1564 = vpop.permute.xlu0 %1563
        %1565 = vset.pattern.permute.xlu0 0
        %1566 = vperm.xlu0 %1565, %v1561
        %v1567 = vpop.permute.xlu0 %1566
        %vm1568 = vcmp.eq.s32.totalorder %v1564, 1
        %vm1569 = vcmp.eq.s32.totalorder %v1567, 1
        %v1570 = vsel %vm1568, %v1555, %v1410
        %v1571 = vsel %vm1569, %v1556, %v1411
        %s1572 = scalar_select %p1118, 2, 5
        %s1573 = smul.u32 %s1572, 16
        %s1574 = sshra.s32 %s1573, 4
        %s1575 = sand.u32 %s1573, 15
        %s1576 = smul.u32 %s1574, 3
        %s1577 = smul.addr %s1576, 8
        %s1578 = scalar_lea.vmem [#allocation2], %s1577
        %v1579 = vld [vmem:[%s1578] sm:$0xff]
        %v1580 = vld [vmem:[%s1578 + $0x8] sm:$0xff]
        %v1581 = vld [vmem:[%s1578 + $0x10] sm:$0xff]
        %v1582 = vpack.c.bf16 %v1571, %v1570
        %1583 = vmatprep.subr.bf16.mxu0 %v1210
        %1584 = vmatpush1.bf16.msra.mxu0 %v1209
        %1585 = vmatprep.subr.bf16.mxu0 %v1213
        %1586 = vmatpush1.bf16.msra.mxu0 %v1212
        %1587 = vmatprep.subr.bf16.mxu0 %v1216
        %1588 = vmatpush1.bf16.msra.mxu0 %v1215
        %1589 = vmatprep.subr.bf16.mxu0 %v1219
        %1590 = vmatpush1.bf16.msra.mxu0 %v1218
        %1591 = vmatprep.subr.bf16.mxu0 %v1222
        %1592 = vmatpush1.bf16.msra.mxu0 %v1221
        %1593 = vmatprep.subr.bf16.mxu0 %v1225
        %1594 = vmatpush1.bf16.msra.mxu0 %v1224
        %1595 = vmatprep.subr.bf16.mxu0 %v1228
        %1596 = vmatpush1.bf16.msra.mxu0 %v1227
        %1597 = vmatprep.subr.bf16.mxu0 %v1231
        %1598 = vmatpush1.bf16.msra.mxu0 %v1230
        %1599 = vmatprep.subr.bf16.mxu0 0
        %1600 = vmatpush1.bf16.msra.mxu0 0
        %1601 = vmatprep.subr.bf16.mxu0 0
        %1602 = vmatpush1.bf16.msra.mxu0 0
        %1603 = vmatprep.subr.bf16.mxu0 0
        %1604 = vmatpush1.bf16.msra.mxu0 0
        %1605 = vmatprep.subr.bf16.mxu0 0
        %1606 = vmatpush1.bf16.msra.mxu0 0
        %1607 = vmatprep.subr.bf16.mxu0 0
        %1608 = vmatpush1.bf16.msra.mxu0 0
        %1609 = vmatprep.subr.bf16.mxu0 0
        %1610 = vmatpush1.bf16.msra.mxu0 0
        %1611 = vmatprep.subr.bf16.mxu0 0
        %1612 = vmatpush1.bf16.msra.mxu0 0
        %1613 = vmatprep.subr.bf16.mxu0 0
        %1614 = vmatpush1.bf16.msra.mxu0 0
        %1615 = vmatprep.mubr.bf16.mxu0 0
        %1616 = vmatmul.mubr.bf16.gmra.mrb[0].mxu0 %v1582
        %v1617 = vpop.f32.mrb[0].mxu0
        %v1618 = vadd.f32 0.0, %v1617
        %v1619 = vpop.f32.mrb[0].mxu0
        %v1620 = vadd.f32 0.0, %v1619
        %v1621 = vpop.f32.mrb[0].mxu0
        %v1622 = vadd.f32 0.0, %v1621
        %v1623 = vpop.f32.mrb[0].mxu0
        %v1624 = vadd.f32 0.0, %v1623
        %1625 = vdwg.mxu0
        %1626 = vmatprep.subr.bf16.mxu0 0
        %1627 = vmatpush1.bf16.msra.mxu0 %v1211
        %1628 = vmatprep.subr.bf16.mxu0 0
        %1629 = vmatpush1.bf16.msra.mxu0 %v1214
        %1630 = vmatprep.subr.bf16.mxu0 0
        %1631 = vmatpush1.bf16.msra.mxu0 %v1217
        %1632 = vmatprep.subr.bf16.mxu0 0
        %1633 = vmatpush1.bf16.msra.mxu0 %v1220
        %1634 = vmatprep.subr.bf16.mxu0 0
        %1635 = vmatpush1.bf16.msra.mxu0 %v1223
        %1636 = vmatprep.subr.bf16.mxu0 0
        %1637 = vmatpush1.bf16.msra.mxu0 %v1226
        %1638 = vmatprep.subr.bf16.mxu0 0
        %1639 = vmatpush1.bf16.msra.mxu0 %v1229
        %1640 = vmatprep.subr.bf16.mxu0 0
        %1641 = vmatpush1.bf16.msra.mxu0 %v1232
        %1642 = vmatprep.subr.bf16.mxu0 0
        %1643 = vmatpush1.bf16.msra.mxu0 0
        %1644 = vmatprep.subr.bf16.mxu0 0
        %1645 = vmatpush1.bf16.msra.mxu0 0
        %1646 = vmatprep.subr.bf16.mxu0 0
        %1647 = vmatpush1.bf16.msra.mxu0 0
        %1648 = vmatprep.subr.bf16.mxu0 0
        %1649 = vmatpush1.bf16.msra.mxu0 0
        %1650 = vmatprep.subr.bf16.mxu0 0
        %1651 = vmatpush1.bf16.msra.mxu0 0
        %1652 = vmatprep.subr.bf16.mxu0 0
        %1653 = vmatpush1.bf16.msra.mxu0 0
        %1654 = vmatprep.subr.bf16.mxu0 0
        %1655 = vmatpush1.bf16.msra.mxu0 0
        %1656 = vmatprep.subr.bf16.mxu0 0
        %1657 = vmatpush1.bf16.msra.mxu0 0
        %1658 = vmatprep.mubr.bf16.mxu0 0
        %1659 = vmatmul.mubr.bf16.gmra.mrb[0].mxu0 %v1582
        %v1660 = vpop.f32.mrb[0].mxu0
        %v1661 = vadd.f32 0.0, %v1660
        %v1662 = vpop.f32.mrb[0].mxu0
        %v1663 = vpop.f32.mrb[0].mxu0
        %v1664 = vadd.f32 0.0, %v1663
        %v1665 = vpop.f32.mrb[0].mxu0
        %1666 = vdwg.mxu0
        %v1667 = vunpack.c.l.bf16 %v1579
        %v1668 = vunpack.c.h.bf16 %v1579
        %v1669 = vadd.f32 %v1667, %v1618
        %v1670 = vadd.f32 %v1668, %v1622
        %v1671 = vxor.u32 %v1669, 2147483648
        %v1672 = vxor.u32 %v1670, 2147483648
        %v1673 = vmul.f32 %v1671, 1.442695
        %v1674 = vpow.pop %v1673
        %v1675 = vmul.f32 %v1672, 1.442695
        %v1676 = vpow.pop %v1675
        %v1677 = vadd.f32 %v1674, 1.0
        %v1678 = vadd.f32 %v1676, 1.0
        %v1679 = vrcp.pop %v1677
        %v1680 = vmul.f32 1.0, %v1679
        %v1681 = vrcp.pop %v1678
        %v1682 = vmul.f32 1.0, %v1681
        %v1683 = vunpack.c.l.bf16 %v1580
        %v1684 = vunpack.c.h.bf16 %v1580
        %v1685 = vadd.f32 %v1683, %v1620
        %v1686 = vadd.f32 %v1684, %v1624
        %v1687 = vxor.u32 %v1685, 2147483648
        %v1688 = vxor.u32 %v1686, 2147483648
        %v1689 = vmul.f32 %v1687, 1.442695
        %v1690 = vpow.pop %v1689
        %v1691 = vmul.f32 %v1688, 1.442695
        %v1692 = vpow.pop %v1691
        %v1693 = vadd.f32 %v1690, 1.0
        %v1694 = vadd.f32 %v1692, 1.0
        %v1695 = vrcp.pop %v1693
        %v1696 = vmul.f32 1.0, %v1695
        %v1697 = vrcp.pop %v1694
        %v1698 = vmul.f32 1.0, %v1697
        %v1699 = vadd.f32 %v1661, %v1377
        %v1700 = vadd.f32 %v1664, %v1377
        %v1701 = vmul.f32 %v1680, %v1699
        %v1702 = vmul.f32 %v1682, %v1700
        %v1703 = vunpack.c.l.bf16 %v1581
        %v1704 = vunpack.c.h.bf16 %v1581
        %v1705 = vadd.f32 %v1703, %v1701
        %v1706 = vadd.f32 %v1704, %v1702
        %v1707 = vtanh.pop %v1705
        %v1708 = vtanh.pop %v1706
        %v1709 = vsub.f32 1.0, %v1696
        %v1710 = vsub.f32 1.0, %v1698
        %v1711 = vmul.f32 %v1709, %v1707
        %v1712 = vmul.f32 %v1710, %v1708
        %v1713 = vmul.f32 %v1696, %v1570
        %v1714 = vmul.f32 %v1698, %v1571
        %v1715 = vadd.f32 %v1711, %v1713
        %v1716 = vadd.f32 %v1712, %v1714
        %v1717 = vstv %s1572
        %vm1718 = vcmp.lt.s32.totalorder %v1717, %v1116
        %vm1719 = vcmp.lt.s32.totalorder %v1717, %v1117
        %v1720 = vsel %vm1718, 1, 0
        %v1721 = vsel %vm1719, 1, 0
        %1722 = vset.pattern.permute.xlu0 0
        %1723 = vperm.xlu0 %1722, %v1720
        %v1724 = vpop.permute.xlu0 %1723
        %1725 = vset.pattern.permute.xlu0 0
        %1726 = vperm.xlu0 %1725, %v1721
        %v1727 = vpop.permute.xlu0 %1726
        %vm1728 = vcmp.eq.s32.totalorder %v1724, 1
        %vm1729 = vcmp.eq.s32.totalorder %v1727, 1
        %v1730 = vsel %vm1728, %v1715, %v1570
        %v1731 = vsel %vm1729, %v1716, %v1571
        %s1732 = scalar_select %p1118, 3, 4
        %s1733 = smul.u32 %s1732, 16
        %s1734 = sshra.s32 %s1733, 4
        %s1735 = sand.u32 %s1733, 15
        %s1736 = smul.u32 %s1734, 3
        %s1737 = smul.addr %s1736, 8
        %s1738 = scalar_lea.vmem [#allocation2], %s1737
        %v1739 = vld [vmem:[%s1738] sm:$0xff]
        %v1740 = vld [vmem:[%s1738 + $0x8] sm:$0xff]
        %v1741 = vld [vmem:[%s1738 + $0x10] sm:$0xff]
        %v1742 = vpack.c.bf16 %v1731, %v1730
        %1743 = vmatprep.subr.bf16.mxu0 %v1210
        %1744 = vmatpush1.bf16.msra.mxu0 %v1209
        %1745 = vmatprep.subr.bf16.mxu0 %v1213
        %1746 = vmatpush1.bf16.msra.mxu0 %v1212
        %1747 = vmatprep.subr.bf16.mxu0 %v1216
        %1748 = vmatpush1.bf16.msra.mxu0 %v1215
        %1749 = vmatprep.subr.bf16.mxu0 %v1219
        %1750 = vmatpush1.bf16.msra.mxu0 %v1218
        %1751 = vmatprep.subr.bf16.mxu0 %v1222
        %1752 = vmatpush1.bf16.msra.mxu0 %v1221
        %1753 = vmatprep.subr.bf16.mxu0 %v1225
        %1754 = vmatpush1.bf16.msra.mxu0 %v1224
        %1755 = vmatprep.subr.bf16.mxu0 %v1228
        %1756 = vmatpush1.bf16.msra.mxu0 %v1227
        %1757 = vmatprep.subr.bf16.mxu0 %v1231
        %1758 = vmatpush1.bf16.msra.mxu0 %v1230
        %1759 = vmatprep.subr.bf16.mxu0 0
        %1760 = vmatpush1.bf16.msra.mxu0 0
        %1761 = vmatprep.subr.bf16.mxu0 0
        %1762 = vmatpush1.bf16.msra.mxu0 0
        %1763 = vmatprep.subr.bf16.mxu0 0
        %1764 = vmatpush1.bf16.msra.mxu0 0
        %1765 = vmatprep.subr.bf16.mxu0 0
        %1766 = vmatpush1.bf16.msra.mxu0 0
        %1767 = vmatprep.subr.bf16.mxu0 0
        %1768 = vmatpush1.bf16.msra.mxu0 0
        %1769 = vmatprep.subr.bf16.mxu0 0
        %1770 = vmatpush1.bf16.msra.mxu0 0
        %1771 = vmatprep.subr.bf16.mxu0 0
        %1772 = vmatpush1.bf16.msra.mxu0 0
        %1773 = vmatprep.subr.bf16.mxu0 0
        %1774 = vmatpush1.bf16.msra.mxu0 0
        %1775 = vmatprep.mubr.bf16.mxu0 0
        %1776 = vmatmul.mubr.bf16.gmra.mrb[0].mxu0 %v1742
        %v1777 = vpop.f32.mrb[0].mxu0
        %v1778 = vadd.f32 0.0, %v1777
        %v1779 = vpop.f32.mrb[0].mxu0
        %v1780 = vadd.f32 0.0, %v1779
        %v1781 = vpop.f32.mrb[0].mxu0
        %v1782 = vadd.f32 0.0, %v1781
        %v1783 = vpop.f32.mrb[0].mxu0
        %v1784 = vadd.f32 0.0, %v1783
        %1785 = vdwg.mxu0
        %1786 = vmatprep.subr.bf16.mxu0 0
        %1787 = vmatpush1.bf16.msra.mxu0 %v1211
        %1788 = vmatprep.subr.bf16.mxu0 0
        %1789 = vmatpush1.bf16.msra.mxu0 %v1214
        %1790 = vmatprep.subr.bf16.mxu0 0
        %1791 = vmatpush1.bf16.msra.mxu0 %v1217
        %1792 = vmatprep.subr.bf16.mxu0 0
        %1793 = vmatpush1.bf16.msra.mxu0 %v1220
        %1794 = vmatprep.subr.bf16.mxu0 0
        %1795 = vmatpush1.bf16.msra.mxu0 %v1223
        %1796 = vmatprep.subr.bf16.mxu0 0
        %1797 = vmatpush1.bf16.msra.mxu0 %v1226
        %1798 = vmatprep.subr.bf16.mxu0 0
        %1799 = vmatpush1.bf16.msra.mxu0 %v1229
        %1800 = vmatprep.subr.bf16.mxu0 0
        %1801 = vmatpush1.bf16.msra.mxu0 %v1232
        %1802 = vmatprep.subr.bf16.mxu0 0
        %1803 = vmatpush1.bf16.msra.mxu0 0
        %1804 = vmatprep.subr.bf16.mxu0 0
        %1805 = vmatpush1.bf16.msra.mxu0 0
        %1806 = vmatprep.subr.bf16.mxu0 0
        %1807 = vmatpush1.bf16.msra.mxu0 0
        %1808 = vmatprep.subr.bf16.mxu0 0
        %1809 = vmatpush1.bf16.msra.mxu0 0
        %1810 = vmatprep.subr.bf16.mxu0 0
        %1811 = vmatpush1.bf16.msra.mxu0 0
        %1812 = vmatprep.subr.bf16.mxu0 0
        %1813 = vmatpush1.bf16.msra.mxu0 0
        %1814 = vmatprep.subr.bf16.mxu0 0
        %1815 = vmatpush1.bf16.msra.mxu0 0
        %1816 = vmatprep.subr.bf16.mxu0 0
        %1817 = vmatpush1.bf16.msra.mxu0 0
        %1818 = vmatprep.mubr.bf16.mxu0 0
        %1819 = vmatmul.mubr.bf16.gmra.mrb[0].mxu0 %v1742
        %v1820 = vpop.f32.mrb[0].mxu0
        %v1821 = vadd.f32 0.0, %v1820
        %v1822 = vpop.f32.mrb[0].mxu0
        %v1823 = vpop.f32.mrb[0].mxu0
        %v1824 = vadd.f32 0.0, %v1823
        %v1825 = vpop.f32.mrb[0].mxu0
        %1826 = vdwg.mxu0
        %v1827 = vunpack.c.l.bf16 %v1739
        %v1828 = vunpack.c.h.bf16 %v1739
        %v1829 = vadd.f32 %v1827, %v1778
        %v1830 = vadd.f32 %v1828, %v1782
        %v1831 = vxor.u32 %v1829, 2147483648
        %v1832 = vxor.u32 %v1830, 2147483648
        %v1833 = vmul.f32 %v1831, 1.442695
        %v1834 = vpow.pop %v1833
        %v1835 = vmul.f32 %v1832, 1.442695
        %v1836 = vpow.pop %v1835
        %v1837 = vadd.f32 %v1834, 1.0
        %v1838 = vadd.f32 %v1836, 1.0
        %v1839 = vrcp.pop %v1837
        %v1840 = vmul.f32 1.0, %v1839
        %v1841 = vrcp.pop %v1838
        %v1842 = vmul.f32 1.0, %v1841
        %v1843 = vunpack.c.l.bf16 %v1740
        %v1844 = vunpack.c.h.bf16 %v1740
        %v1845 = vadd.f32 %v1843, %v1780
        %v1846 = vadd.f32 %v1844, %v1784
        %v1847 = vxor.u32 %v1845, 2147483648
        %v1848 = vxor.u32 %v1846, 2147483648
        %v1849 = vmul.f32 %v1847, 1.442695
        %v1850 = vpow.pop %v1849
        %v1851 = vmul.f32 %v1848, 1.442695
        %v1852 = vpow.pop %v1851
        %v1853 = vadd.f32 %v1850, 1.0
        %v1854 = vadd.f32 %v1852, 1.0
        %v1855 = vrcp.pop %v1853
        %v1856 = vmul.f32 1.0, %v1855
        %v1857 = vrcp.pop %v1854
        %v1858 = vmul.f32 1.0, %v1857
        %v1859 = vadd.f32 %v1821, %v1377
        %v1860 = vadd.f32 %v1824, %v1377
        %v1861 = vmul.f32 %v1840, %v1859
        %v1862 = vmul.f32 %v1842, %v1860
        %v1863 = vunpack.c.l.bf16 %v1741
        %v1864 = vunpack.c.h.bf16 %v1741
        %v1865 = vadd.f32 %v1863, %v1861
        %v1866 = vadd.f32 %v1864, %v1862
        %v1867 = vtanh.pop %v1865
        %v1868 = vtanh.pop %v1866
        %v1869 = vsub.f32 1.0, %v1856
        %v1870 = vsub.f32 1.0, %v1858
        %v1871 = vmul.f32 %v1869, %v1867
        %v1872 = vmul.f32 %v1870, %v1868
        %v1873 = vmul.f32 %v1856, %v1730
        %v1874 = vmul.f32 %v1858, %v1731
        %v1875 = vadd.f32 %v1871, %v1873
        %v1876 = vadd.f32 %v1872, %v1874
        %v1877 = vstv %s1732
        %vm1878 = vcmp.lt.s32.totalorder %v1877, %v1116
        %vm1879 = vcmp.lt.s32.totalorder %v1877, %v1117
        %v1880 = vsel %vm1878, 1, 0
        %v1881 = vsel %vm1879, 1, 0
        %1882 = vset.pattern.permute.xlu0 0
        %1883 = vperm.xlu0 %1882, %v1880
        %v1884 = vpop.permute.xlu0 %1883
        %1885 = vset.pattern.permute.xlu0 0
        %1886 = vperm.xlu0 %1885, %v1881
        %v1887 = vpop.permute.xlu0 %1886
        %vm1888 = vcmp.eq.s32.totalorder %v1884, 1
        %vm1889 = vcmp.eq.s32.totalorder %v1887, 1
        %v1890 = vsel %vm1888, %v1875, %v1730
        %v1891 = vsel %vm1889, %v1876, %v1731
        %s1892 = scalar_select %p1118, 4, 3
        %s1893 = smul.u32 %s1892, 16
        %s1894 = sshra.s32 %s1893, 4
        %s1895 = sand.u32 %s1893, 15
        %s1896 = smul.u32 %s1894, 3
        %s1897 = smul.addr %s1896, 8
        %s1898 = scalar_lea.vmem [#allocation2], %s1897
        %v1899 = vld [vmem:[%s1898] sm:$0xff]
        %v1900 = vld [vmem:[%s1898 + $0x8] sm:$0xff]
        %v1901 = vld [vmem:[%s1898 + $0x10] sm:$0xff]
        %v1902 = vpack.c.bf16 %v1891, %v1890
        %1903 = vmatprep.subr.bf16.mxu0 %v1210
        %1904 = vmatpush1.bf16.msra.mxu0 %v1209
        %1905 = vmatprep.subr.bf16.mxu0 %v1213
        %1906 = vmatpush1.bf16.msra.mxu0 %v1212
        %1907 = vmatprep.subr.bf16.mxu0 %v1216
        %1908 = vmatpush1.bf16.msra.mxu0 %v1215
        %1909 = vmatprep.subr.bf16.mxu0 %v1219
        %1910 = vmatpush1.bf16.msra.mxu0 %v1218
        %1911 = vmatprep.subr.bf16.mxu0 %v1222
        %1912 = vmatpush1.bf16.msra.mxu0 %v1221
        %1913 = vmatprep.subr.bf16.mxu0 %v1225
        %1914 = vmatpush1.bf16.msra.mxu0 %v1224
        %1915 = vmatprep.subr.bf16.mxu0 %v1228
        %1916 = vmatpush1.bf16.msra.mxu0 %v1227
        %1917 = vmatprep.subr.bf16.mxu0 %v1231
        %1918 = vmatpush1.bf16.msra.mxu0 %v1230
        %1919 = vmatprep.subr.bf16.mxu0 0
        %1920 = vmatpush1.bf16.msra.mxu0 0
        %1921 = vmatprep.subr.bf16.mxu0 0
        %1922 = vmatpush1.bf16.msra.mxu0 0
        %1923 = vmatprep.subr.bf16.mxu0 0
        %1924 = vmatpush1.bf16.msra.mxu0 0
        %1925 = vmatprep.subr.bf16.mxu0 0
        %1926 = vmatpush1.bf16.msra.mxu0 0
        %1927 = vmatprep.subr.bf16.mxu0 0
        %1928 = vmatpush1.bf16.msra.mxu0 0
        %1929 = vmatprep.subr.bf16.mxu0 0
        %1930 = vmatpush1.bf16.msra.mxu0 0
        %1931 = vmatprep.subr.bf16.mxu0 0
        %1932 = vmatpush1.bf16.msra.mxu0 0
        %1933 = vmatprep.subr.bf16.mxu0 0
        %1934 = vmatpush1.bf16.msra.mxu0 0
        %1935 = vmatprep.mubr.bf16.mxu0 0
        %1936 = vmatmul.mubr.bf16.gmra.mrb[0].mxu0 %v1902
        %v1937 = vpop.f32.mrb[0].mxu0
        %v1938 = vadd.f32 0.0, %v1937
        %v1939 = vpop.f32.mrb[0].mxu0
        %v1940 = vadd.f32 0.0, %v1939
        %v1941 = vpop.f32.mrb[0].mxu0
        %v1942 = vadd.f32 0.0, %v1941
        %v1943 = vpop.f32.mrb[0].mxu0
        %v1944 = vadd.f32 0.0, %v1943
        %1945 = vdwg.mxu0
        %1946 = vmatprep.subr.bf16.mxu0 0
        %1947 = vmatpush1.bf16.msra.mxu0 %v1211
        %1948 = vmatprep.subr.bf16.mxu0 0
        %1949 = vmatpush1.bf16.msra.mxu0 %v1214
        %1950 = vmatprep.subr.bf16.mxu0 0
        %1951 = vmatpush1.bf16.msra.mxu0 %v1217
        %1952 = vmatprep.subr.bf16.mxu0 0
        %1953 = vmatpush1.bf16.msra.mxu0 %v1220
        %1954 = vmatprep.subr.bf16.mxu0 0
        %1955 = vmatpush1.bf16.msra.mxu0 %v1223
        %1956 = vmatprep.subr.bf16.mxu0 0
        %1957 = vmatpush1.bf16.msra.mxu0 %v1226
        %1958 = vmatprep.subr.bf16.mxu0 0
        %1959 = vmatpush1.bf16.msra.mxu0 %v1229
        %1960 = vmatprep.subr.bf16.mxu0 0
        %1961 = vmatpush1.bf16.msra.mxu0 %v1232
        %1962 = vmatprep.subr.bf16.mxu0 0
        %1963 = vmatpush1.bf16.msra.mxu0 0
        %1964 = vmatprep.subr.bf16.mxu0 0
        %1965 = vmatpush1.bf16.msra.mxu0 0
        %1966 = vmatprep.subr.bf16.mxu0 0
        %1967 = vmatpush1.bf16.msra.mxu0 0
        %1968 = vmatprep.subr.bf16.mxu0 0
        %1969 = vmatpush1.bf16.msra.mxu0 0
        %1970 = vmatprep.subr.bf16.mxu0 0
        %1971 = vmatpush1.bf16.msra.mxu0 0
        %1972 = vmatprep.subr.bf16.mxu0 0
        %1973 = vmatpush1.bf16.msra.mxu0 0
        %1974 = vmatprep.subr.bf16.mxu0 0
        %1975 = vmatpush1.bf16.msra.mxu0 0
        %1976 = vmatprep.subr.bf16.mxu0 0
        %1977 = vmatpush1.bf16.msra.mxu0 0
        %1978 = vmatprep.mubr.bf16.mxu0 0
        %1979 = vmatmul.mubr.bf16.gmra.mrb[0].mxu0 %v1902
        %v1980 = vpop.f32.mrb[0].mxu0
        %v1981 = vadd.f32 0.0, %v1980
        %v1982 = vpop.f32.mrb[0].mxu0
        %v1983 = vpop.f32.mrb[0].mxu0
        %v1984 = vadd.f32 0.0, %v1983
        %v1985 = vpop.f32.mrb[0].mxu0
        %1986 = vdwg.mxu0
        %v1987 = vunpack.c.l.bf16 %v1899
        %v1988 = vunpack.c.h.bf16 %v1899
        %v1989 = vadd.f32 %v1987, %v1938
        %v1990 = vadd.f32 %v1988, %v1942
        %v1991 = vxor.u32 %v1989, 2147483648
        %v1992 = vxor.u32 %v1990, 2147483648
        %v1993 = vmul.f32 %v1991, 1.442695
        %v1994 = vpow.pop %v1993
        %v1995 = vmul.f32 %v1992, 1.442695
        %v1996 = vpow.pop %v1995
        %v1997 = vadd.f32 %v1994, 1.0
        %v1998 = vadd.f32 %v1996, 1.0
        %v1999 = vrcp.pop %v1997
        %v2000 = vmul.f32 1.0, %v1999
        %v2001 = vrcp.pop %v1998
        %v2002 = vmul.f32 1.0, %v2001
        %v2003 = vunpack.c.l.bf16 %v1900
        %v2004 = vunpack.c.h.bf16 %v1900
        %v2005 = vadd.f32 %v2003, %v1940
        %v2006 = vadd.f32 %v2004, %v1944
        %v2007 = vxor.u32 %v2005, 2147483648
        %v2008 = vxor.u32 %v2006, 2147483648
        %v2009 = vmul.f32 %v2007, 1.442695
        %v2010 = vpow.pop %v2009
        %v2011 = vmul.f32 %v2008, 1.442695
        %v2012 = vpow.pop %v2011
        %v2013 = vadd.f32 %v2010, 1.0
        %v2014 = vadd.f32 %v2012, 1.0
        %v2015 = vrcp.pop %v2013
        %v2016 = vmul.f32 1.0, %v2015
        %v2017 = vrcp.pop %v2014
        %v2018 = vmul.f32 1.0, %v2017
        %v2019 = vadd.f32 %v1981, %v1377
        %v2020 = vadd.f32 %v1984, %v1377
        %v2021 = vmul.f32 %v2000, %v2019
        %v2022 = vmul.f32 %v2002, %v2020
        %v2023 = vunpack.c.l.bf16 %v1901
        %v2024 = vunpack.c.h.bf16 %v1901
        %v2025 = vadd.f32 %v2023, %v2021
        %v2026 = vadd.f32 %v2024, %v2022
        %v2027 = vtanh.pop %v2025
        %v2028 = vtanh.pop %v2026
        %v2029 = vsub.f32 1.0, %v2016
        %v2030 = vsub.f32 1.0, %v2018
        %v2031 = vmul.f32 %v2029, %v2027
        %v2032 = vmul.f32 %v2030, %v2028
        %v2033 = vmul.f32 %v2016, %v1890
        %v2034 = vmul.f32 %v2018, %v1891
        %v2035 = vadd.f32 %v2031, %v2033
        %v2036 = vadd.f32 %v2032, %v2034
        %v2037 = vstv %s1892
        %vm2038 = vcmp.lt.s32.totalorder %v2037, %v1116
        %vm2039 = vcmp.lt.s32.totalorder %v2037, %v1117
        %v2040 = vsel %vm2038, 1, 0
        %v2041 = vsel %vm2039, 1, 0
        %2042 = vset.pattern.permute.xlu0 0
        %2043 = vperm.xlu0 %2042, %v2040
        %v2044 = vpop.permute.xlu0 %2043
        %2045 = vset.pattern.permute.xlu0 0
        %2046 = vperm.xlu0 %2045, %v2041
        %v2047 = vpop.permute.xlu0 %2046
        %vm2048 = vcmp.eq.s32.totalorder %v2044, 1
        %vm2049 = vcmp.eq.s32.totalorder %v2047, 1
        %v2050 = vsel %vm2048, %v2035, %v1890
        %v2051 = vsel %vm2049, %v2036, %v1891
        %s2052 = scalar_select %p1118, 5, 2
        %s2053 = smul.u32 %s2052, 16
        %s2054 = sshra.s32 %s2053, 4
        %s2055 = sand.u32 %s2053, 15
        %s2056 = smul.u32 %s2054, 3
        %s2057 = smul.addr %s2056, 8
        %s2058 = scalar_lea.vmem [#allocation2], %s2057
        %v2059 = vld [vmem:[%s2058] sm:$0xff]
        %v2060 = vld [vmem:[%s2058 + $0x8] sm:$0xff]
        %v2061 = vld [vmem:[%s2058 + $0x10] sm:$0xff]
        %v2062 = vpack.c.bf16 %v2051, %v2050
        %2063 = vmatprep.subr.bf16.mxu0 %v1210
        %2064 = vmatpush1.bf16.msra.mxu0 %v1209
        %2065 = vmatprep.subr.bf16.mxu0 %v1213
        %2066 = vmatpush1.bf16.msra.mxu0 %v1212
        %2067 = vmatprep.subr.bf16.mxu0 %v1216
        %2068 = vmatpush1.bf16.msra.mxu0 %v1215
        %2069 = vmatprep.subr.bf16.mxu0 %v1219
        %2070 = vmatpush1.bf16.msra.mxu0 %v1218
        %2071 = vmatprep.subr.bf16.mxu0 %v1222
        %2072 = vmatpush1.bf16.msra.mxu0 %v1221
        %2073 = vmatprep.subr.bf16.mxu0 %v1225
        %2074 = vmatpush1.bf16.msra.mxu0 %v1224
        %2075 = vmatprep.subr.bf16.mxu0 %v1228
        %2076 = vmatpush1.bf16.msra.mxu0 %v1227
        %2077 = vmatprep.subr.bf16.mxu0 %v1231
        %2078 = vmatpush1.bf16.msra.mxu0 %v1230
        %2079 = vmatprep.subr.bf16.mxu0 0
        %2080 = vmatpush1.bf16.msra.mxu0 0
        %2081 = vmatprep.subr.bf16.mxu0 0
        %2082 = vmatpush1.bf16.msra.mxu0 0
        %2083 = vmatprep.subr.bf16.mxu0 0
        %2084 = vmatpush1.bf16.msra.mxu0 0
        %2085 = vmatprep.subr.bf16.mxu0 0
        %2086 = vmatpush1.bf16.msra.mxu0 0
        %2087 = vmatprep.subr.bf16.mxu0 0
        %2088 = vmatpush1.bf16.msra.mxu0 0
        %2089 = vmatprep.subr.bf16.mxu0 0
        %2090 = vmatpush1.bf16.msra.mxu0 0
        %2091 = vmatprep.subr.bf16.mxu0 0
        %2092 = vmatpush1.bf16.msra.mxu0 0
        %2093 = vmatprep.subr.bf16.mxu0 0
        %2094 = vmatpush1.bf16.msra.mxu0 0
        %2095 = vmatprep.mubr.bf16.mxu0 0
        %2096 = vmatmul.mubr.bf16.gmra.mrb[0].mxu0 %v2062
        %v2097 = vpop.f32.mrb[0].mxu0
        %v2098 = vadd.f32 0.0, %v2097
        %v2099 = vpop.f32.mrb[0].mxu0
        %v2100 = vadd.f32 0.0, %v2099
        %v2101 = vpop.f32.mrb[0].mxu0
        %v2102 = vadd.f32 0.0, %v2101
        %v2103 = vpop.f32.mrb[0].mxu0
        %v2104 = vadd.f32 0.0, %v2103
        %2105 = vdwg.mxu0
        %2106 = vmatprep.subr.bf16.mxu0 0
        %2107 = vmatpush1.bf16.msra.mxu0 %v1211
        %2108 = vmatprep.subr.bf16.mxu0 0
        %2109 = vmatpush1.bf16.msra.mxu0 %v1214
        %2110 = vmatprep.subr.bf16.mxu0 0
        %2111 = vmatpush1.bf16.msra.mxu0 %v1217
        %2112 = vmatprep.subr.bf16.mxu0 0
        %2113 = vmatpush1.bf16.msra.mxu0 %v1220
        %2114 = vmatprep.subr.bf16.mxu0 0
        %2115 = vmatpush1.bf16.msra.mxu0 %v1223
        %2116 = vmatprep.subr.bf16.mxu0 0
        %2117 = vmatpush1.bf16.msra.mxu0 %v1226
        %2118 = vmatprep.subr.bf16.mxu0 0
        %2119 = vmatpush1.bf16.msra.mxu0 %v1229
        %2120 = vmatprep.subr.bf16.mxu0 0
        %2121 = vmatpush1.bf16.msra.mxu0 %v1232
        %2122 = vmatprep.subr.bf16.mxu0 0
        %2123 = vmatpush1.bf16.msra.mxu0 0
        %2124 = vmatprep.subr.bf16.mxu0 0
        %2125 = vmatpush1.bf16.msra.mxu0 0
        %2126 = vmatprep.subr.bf16.mxu0 0
        %2127 = vmatpush1.bf16.msra.mxu0 0
        %2128 = vmatprep.subr.bf16.mxu0 0
        %2129 = vmatpush1.bf16.msra.mxu0 0
        %2130 = vmatprep.subr.bf16.mxu0 0
        %2131 = vmatpush1.bf16.msra.mxu0 0
        %2132 = vmatprep.subr.bf16.mxu0 0
        %2133 = vmatpush1.bf16.msra.mxu0 0
        %2134 = vmatprep.subr.bf16.mxu0 0
        %2135 = vmatpush1.bf16.msra.mxu0 0
        %2136 = vmatprep.subr.bf16.mxu0 0
        %2137 = vmatpush1.bf16.msra.mxu0 0
        %2138 = vmatprep.mubr.bf16.mxu0 0
        %2139 = vmatmul.mubr.bf16.gmra.mrb[0].mxu0 %v2062
        %v2140 = vpop.f32.mrb[0].mxu0
        %v2141 = vadd.f32 0.0, %v2140
        %v2142 = vpop.f32.mrb[0].mxu0
        %v2143 = vpop.f32.mrb[0].mxu0
        %v2144 = vadd.f32 0.0, %v2143
        %v2145 = vpop.f32.mrb[0].mxu0
        %2146 = vdwg.mxu0
        %v2147 = vunpack.c.l.bf16 %v2059
        %v2148 = vunpack.c.h.bf16 %v2059
        %v2149 = vadd.f32 %v2147, %v2098
        %v2150 = vadd.f32 %v2148, %v2102
        %v2151 = vxor.u32 %v2149, 2147483648
        %v2152 = vxor.u32 %v2150, 2147483648
        %v2153 = vmul.f32 %v2151, 1.442695
        %v2154 = vpow.pop %v2153
        %v2155 = vmul.f32 %v2152, 1.442695
        %v2156 = vpow.pop %v2155
        %v2157 = vadd.f32 %v2154, 1.0
        %v2158 = vadd.f32 %v2156, 1.0
        %v2159 = vrcp.pop %v2157
        %v2160 = vmul.f32 1.0, %v2159
        %v2161 = vrcp.pop %v2158
        %v2162 = vmul.f32 1.0, %v2161
        %v2163 = vunpack.c.l.bf16 %v2060
        %v2164 = vunpack.c.h.bf16 %v2060
        %v2165 = vadd.f32 %v2163, %v2100
        %v2166 = vadd.f32 %v2164, %v2104
        %v2167 = vxor.u32 %v2165, 2147483648
        %v2168 = vxor.u32 %v2166, 2147483648
        %v2169 = vmul.f32 %v2167, 1.442695
        %v2170 = vpow.pop %v2169
        %v2171 = vmul.f32 %v2168, 1.442695
        %v2172 = vpow.pop %v2171
        %v2173 = vadd.f32 %v2170, 1.0
        %v2174 = vadd.f32 %v2172, 1.0
        %v2175 = vrcp.pop %v2173
        %v2176 = vmul.f32 1.0, %v2175
        %v2177 = vrcp.pop %v2174
        %v2178 = vmul.f32 1.0, %v2177
        %v2179 = vadd.f32 %v2141, %v1377
        %v2180 = vadd.f32 %v2144, %v1377
        %v2181 = vmul.f32 %v2160, %v2179
        %v2182 = vmul.f32 %v2162, %v2180
        %v2183 = vunpack.c.l.bf16 %v2061
        %v2184 = vunpack.c.h.bf16 %v2061
        %v2185 = vadd.f32 %v2183, %v2181
        %v2186 = vadd.f32 %v2184, %v2182
        %v2187 = vtanh.pop %v2185
        %v2188 = vtanh.pop %v2186
        %v2189 = vsub.f32 1.0, %v2176
        %v2190 = vsub.f32 1.0, %v2178
        %v2191 = vmul.f32 %v2189, %v2187
        %v2192 = vmul.f32 %v2190, %v2188
        %v2193 = vmul.f32 %v2176, %v2050
        %v2194 = vmul.f32 %v2178, %v2051
        %v2195 = vadd.f32 %v2191, %v2193
        %v2196 = vadd.f32 %v2192, %v2194
        %v2197 = vstv %s2052
        %vm2198 = vcmp.lt.s32.totalorder %v2197, %v1116
        %vm2199 = vcmp.lt.s32.totalorder %v2197, %v1117
        %v2200 = vsel %vm2198, 1, 0
        %v2201 = vsel %vm2199, 1, 0
        %2202 = vset.pattern.permute.xlu0 0
        %2203 = vperm.xlu0 %2202, %v2200
        %v2204 = vpop.permute.xlu0 %2203
        %2205 = vset.pattern.permute.xlu0 0
        %2206 = vperm.xlu0 %2205, %v2201
        %v2207 = vpop.permute.xlu0 %2206
        %vm2208 = vcmp.eq.s32.totalorder %v2204, 1
        %vm2209 = vcmp.eq.s32.totalorder %v2207, 1
        %v2210 = vsel %vm2208, %v2195, %v2050
        %v2211 = vsel %vm2209, %v2196, %v2051
        %s2212 = scalar_select %p1118, 6, 1
        %s2213 = smul.u32 %s2212, 16
        %s2214 = sshra.s32 %s2213, 4
        %s2215 = sand.u32 %s2213, 15
        %s2216 = smul.u32 %s2214, 3
        %s2217 = smul.addr %s2216, 8
        %s2218 = scalar_lea.vmem [#allocation2], %s2217
        %v2219 = vld [vmem:[%s2218] sm:$0xff]
        %v2220 = vld [vmem:[%s2218 + $0x8] sm:$0xff]
        %v2221 = vld [vmem:[%s2218 + $0x10] sm:$0xff]
        %v2222 = vpack.c.bf16 %v2211, %v2210
        %2223 = vmatprep.subr.bf16.mxu0 %v1210
        %2224 = vmatpush1.bf16.msra.mxu0 %v1209
        %2225 = vmatprep.subr.bf16.mxu0 %v1213
        %2226 = vmatpush1.bf16.msra.mxu0 %v1212
        %2227 = vmatprep.subr.bf16.mxu0 %v1216
        %2228 = vmatpush1.bf16.msra.mxu0 %v1215
        %2229 = vmatprep.subr.bf16.mxu0 %v1219
        %2230 = vmatpush1.bf16.msra.mxu0 %v1218
        %2231 = vmatprep.subr.bf16.mxu0 %v1222
        %2232 = vmatpush1.bf16.msra.mxu0 %v1221
        %2233 = vmatprep.subr.bf16.mxu0 %v1225
        %2234 = vmatpush1.bf16.msra.mxu0 %v1224
        %2235 = vmatprep.subr.bf16.mxu0 %v1228
        %2236 = vmatpush1.bf16.msra.mxu0 %v1227
        %2237 = vmatprep.subr.bf16.mxu0 %v1231
        %2238 = vmatpush1.bf16.msra.mxu0 %v1230
        %2239 = vmatprep.subr.bf16.mxu0 0
        %2240 = vmatpush1.bf16.msra.mxu0 0
        %2241 = vmatprep.subr.bf16.mxu0 0
        %2242 = vmatpush1.bf16.msra.mxu0 0
        %2243 = vmatprep.subr.bf16.mxu0 0
        %2244 = vmatpush1.bf16.msra.mxu0 0
        %2245 = vmatprep.subr.bf16.mxu0 0
        %2246 = vmatpush1.bf16.msra.mxu0 0
        %2247 = vmatprep.subr.bf16.mxu0 0
        %2248 = vmatpush1.bf16.msra.mxu0 0
        %2249 = vmatprep.subr.bf16.mxu0 0
        %2250 = vmatpush1.bf16.msra.mxu0 0
        %2251 = vmatprep.subr.bf16.mxu0 0
        %2252 = vmatpush1.bf16.msra.mxu0 0
        %2253 = vmatprep.subr.bf16.mxu0 0
        %2254 = vmatpush1.bf16.msra.mxu0 0
        %2255 = vmatprep.mubr.bf16.mxu0 0
        %2256 = vmatmul.mubr.bf16.gmra.mrb[0].mxu0 %v2222
        %v2257 = vpop.f32.mrb[0].mxu0
        %v2258 = vadd.f32 0.0, %v2257
        %v2259 = vpop.f32.mrb[0].mxu0
        %v2260 = vadd.f32 0.0, %v2259
        %v2261 = vpop.f32.mrb[0].mxu0
        %v2262 = vadd.f32 0.0, %v2261
        %v2263 = vpop.f32.mrb[0].mxu0
        %v2264 = vadd.f32 0.0, %v2263
        %2265 = vdwg.mxu0
        %2266 = vmatprep.subr.bf16.mxu0 0
        %2267 = vmatpush1.bf16.msra.mxu0 %v1211
        %2268 = vmatprep.subr.bf16.mxu0 0
        %2269 = vmatpush1.bf16.msra.mxu0 %v1214
        %2270 = vmatprep.subr.bf16.mxu0 0
        %2271 = vmatpush1.bf16.msra.mxu0 %v1217
        %2272 = vmatprep.subr.bf16.mxu0 0
        %2273 = vmatpush1.bf16.msra.mxu0 %v1220
        %2274 = vmatprep.subr.bf16.mxu0 0
        %2275 = vmatpush1.bf16.msra.mxu0 %v1223
        %2276 = vmatprep.subr.bf16.mxu0 0
        %2277 = vmatpush1.bf16.msra.mxu0 %v1226
        %2278 = vmatprep.subr.bf16.mxu0 0
        %2279 = vmatpush1.bf16.msra.mxu0 %v1229
        %2280 = vmatprep.subr.bf16.mxu0 0
        %2281 = vmatpush1.bf16.msra.mxu0 %v1232
        %2282 = vmatprep.subr.bf16.mxu0 0
        %2283 = vmatpush1.bf16.msra.mxu0 0
        %2284 = vmatprep.subr.bf16.mxu0 0
        %2285 = vmatpush1.bf16.msra.mxu0 0
        %2286 = vmatprep.subr.bf16.mxu0 0
        %2287 = vmatpush1.bf16.msra.mxu0 0
        %2288 = vmatprep.subr.bf16.mxu0 0
        %2289 = vmatpush1.bf16.msra.mxu0 0
        %2290 = vmatprep.subr.bf16.mxu0 0
        %2291 = vmatpush1.bf16.msra.mxu0 0
        %2292 = vmatprep.subr.bf16.mxu0 0
        %2293 = vmatpush1.bf16.msra.mxu0 0
        %2294 = vmatprep.subr.bf16.mxu0 0
        %2295 = vmatpush1.bf16.msra.mxu0 0
        %2296 = vmatprep.subr.bf16.mxu0 0
        %2297 = vmatpush1.bf16.msra.mxu0 0
        %2298 = vmatprep.mubr.bf16.mxu0 0
        %2299 = vmatmul.mubr.bf16.gmra.mrb[0].mxu0 %v2222
        %v2300 = vpop.f32.mrb[0].mxu0
        %v2301 = vadd.f32 0.0, %v2300
        %v2302 = vpop.f32.mrb[0].mxu0
        %v2303 = vpop.f32.mrb[0].mxu0
        %v2304 = vadd.f32 0.0, %v2303
        %v2305 = vpop.f32.mrb[0].mxu0
        %2306 = vdwg.mxu0
        %v2307 = vunpack.c.l.bf16 %v2219
        %v2308 = vunpack.c.h.bf16 %v2219
        %v2309 = vadd.f32 %v2307, %v2258
        %v2310 = vadd.f32 %v2308, %v2262
        %v2311 = vxor.u32 %v2309, 2147483648
        %v2312 = vxor.u32 %v2310, 2147483648
        %v2313 = vmul.f32 %v2311, 1.442695
        %v2314 = vpow.pop %v2313
        %v2315 = vmul.f32 %v2312, 1.442695
        %v2316 = vpow.pop %v2315
        %v2317 = vadd.f32 %v2314, 1.0
        %v2318 = vadd.f32 %v2316, 1.0
        %v2319 = vrcp.pop %v2317
        %v2320 = vmul.f32 1.0, %v2319
        %v2321 = vrcp.pop %v2318
        %v2322 = vmul.f32 1.0, %v2321
        %v2323 = vunpack.c.l.bf16 %v2220
        %v2324 = vunpack.c.h.bf16 %v2220
        %v2325 = vadd.f32 %v2323, %v2260
        %v2326 = vadd.f32 %v2324, %v2264
        %v2327 = vxor.u32 %v2325, 2147483648
        %v2328 = vxor.u32 %v2326, 2147483648
        %v2329 = vmul.f32 %v2327, 1.442695
        %v2330 = vpow.pop %v2329
        %v2331 = vmul.f32 %v2328, 1.442695
        %v2332 = vpow.pop %v2331
        %v2333 = vadd.f32 %v2330, 1.0
        %v2334 = vadd.f32 %v2332, 1.0
        %v2335 = vrcp.pop %v2333
        %v2336 = vmul.f32 1.0, %v2335
        %v2337 = vrcp.pop %v2334
        %v2338 = vmul.f32 1.0, %v2337
        %v2339 = vadd.f32 %v2301, %v1377
        %v2340 = vadd.f32 %v2304, %v1377
        %v2341 = vmul.f32 %v2320, %v2339
        %v2342 = vmul.f32 %v2322, %v2340
        %v2343 = vunpack.c.l.bf16 %v2221
        %v2344 = vunpack.c.h.bf16 %v2221
        %v2345 = vadd.f32 %v2343, %v2341
        %v2346 = vadd.f32 %v2344, %v2342
        %v2347 = vtanh.pop %v2345
        %v2348 = vtanh.pop %v2346
        %v2349 = vsub.f32 1.0, %v2336
        %v2350 = vsub.f32 1.0, %v2338
        %v2351 = vmul.f32 %v2349, %v2347
        %v2352 = vmul.f32 %v2350, %v2348
        %v2353 = vmul.f32 %v2336, %v2210
        %v2354 = vmul.f32 %v2338, %v2211
        %v2355 = vadd.f32 %v2351, %v2353
        %v2356 = vadd.f32 %v2352, %v2354
        %v2357 = vstv %s2212
        %vm2358 = vcmp.lt.s32.totalorder %v2357, %v1116
        %vm2359 = vcmp.lt.s32.totalorder %v2357, %v1117
        %v2360 = vsel %vm2358, 1, 0
        %v2361 = vsel %vm2359, 1, 0
        %2362 = vset.pattern.permute.xlu0 0
        %2363 = vperm.xlu0 %2362, %v2360
        %v2364 = vpop.permute.xlu0 %2363
        %2365 = vset.pattern.permute.xlu0 0
        %2366 = vperm.xlu0 %2365, %v2361
        %v2367 = vpop.permute.xlu0 %2366
        %vm2368 = vcmp.eq.s32.totalorder %v2364, 1
        %vm2369 = vcmp.eq.s32.totalorder %v2367, 1
        %v2370 = vsel %vm2368, %v2355, %v2210
        %v2371 = vsel %vm2369, %v2356, %v2211
        %s2372 = scalar_select %p1118, 7, 0
        %s2373 = smul.u32 %s2372, 16
        %s2374 = sshra.s32 %s2373, 4
        %s2375 = sand.u32 %s2373, 15
        %s2376 = smul.u32 %s2374, 3
        %s2377 = smul.addr %s2376, 8
        %s2378 = scalar_lea.vmem [#allocation2], %s2377
        %v2379 = vld [vmem:[%s2378] sm:$0xff]
        %v2380 = vld [vmem:[%s2378 + $0x8] sm:$0xff]
        %v2381 = vld [vmem:[%s2378 + $0x10] sm:$0xff]
        %v2382 = vpack.c.bf16 %v2371, %v2370
        %2383 = vmatprep.subr.bf16.mxu0 %v1210
        %2384 = vmatpush1.bf16.msra.mxu0 %v1209
        %2385 = vmatprep.subr.bf16.mxu0 %v1213
        %2386 = vmatpush1.bf16.msra.mxu0 %v1212
        %2387 = vmatprep.subr.bf16.mxu0 %v1216
        %2388 = vmatpush1.bf16.msra.mxu0 %v1215
        %2389 = vmatprep.subr.bf16.mxu0 %v1219
        %2390 = vmatpush1.bf16.msra.mxu0 %v1218
        %2391 = vmatprep.subr.bf16.mxu0 %v1222
        %2392 = vmatpush1.bf16.msra.mxu0 %v1221
        %2393 = vmatprep.subr.bf16.mxu0 %v1225
        %2394 = vmatpush1.bf16.msra.mxu0 %v1224
        %2395 = vmatprep.subr.bf16.mxu0 %v1228
        %2396 = vmatpush1.bf16.msra.mxu0 %v1227
        %2397 = vmatprep.subr.bf16.mxu0 %v1231
        %2398 = vmatpush1.bf16.msra.mxu0 %v1230
        %2399 = vmatprep.subr.bf16.mxu0 0
        %2400 = vmatpush1.bf16.msra.mxu0 0
        %2401 = vmatprep.subr.bf16.mxu0 0
        %2402 = vmatpush1.bf16.msra.mxu0 0
        %2403 = vmatprep.subr.bf16.mxu0 0
        %2404 = vmatpush1.bf16.msra.mxu0 0
        %2405 = vmatprep.subr.bf16.mxu0 0
        %2406 = vmatpush1.bf16.msra.mxu0 0
        %2407 = vmatprep.subr.bf16.mxu0 0
        %2408 = vmatpush1.bf16.msra.mxu0 0
        %2409 = vmatprep.subr.bf16.mxu0 0
        %2410 = vmatpush1.bf16.msra.mxu0 0
        %2411 = vmatprep.subr.bf16.mxu0 0
        %2412 = vmatpush1.bf16.msra.mxu0 0
        %2413 = vmatprep.subr.bf16.mxu0 0
        %2414 = vmatpush1.bf16.msra.mxu0 0
        %2415 = vmatprep.mubr.bf16.mxu0 0
        %2416 = vmatmul.mubr.bf16.gmra.mrb[0].mxu0 %v2382
        %v2417 = vpop.f32.mrb[0].mxu0
        %v2418 = vadd.f32 0.0, %v2417
        %v2419 = vpop.f32.mrb[0].mxu0
        %v2420 = vadd.f32 0.0, %v2419
        %v2421 = vpop.f32.mrb[0].mxu0
        %v2422 = vadd.f32 0.0, %v2421
        %v2423 = vpop.f32.mrb[0].mxu0
        %v2424 = vadd.f32 0.0, %v2423
        %2425 = vdwg.mxu0
        %2426 = vmatprep.subr.bf16.mxu0 0
        %2427 = vmatpush1.bf16.msra.mxu0 %v1211
        %2428 = vmatprep.subr.bf16.mxu0 0
        %2429 = vmatpush1.bf16.msra.mxu0 %v1214
        %2430 = vmatprep.subr.bf16.mxu0 0
        %2431 = vmatpush1.bf16.msra.mxu0 %v1217
        %2432 = vmatprep.subr.bf16.mxu0 0
        %2433 = vmatpush1.bf16.msra.mxu0 %v1220
        %2434 = vmatprep.subr.bf16.mxu0 0
        %2435 = vmatpush1.bf16.msra.mxu0 %v1223
        %2436 = vmatprep.subr.bf16.mxu0 0
        %2437 = vmatpush1.bf16.msra.mxu0 %v1226
        %2438 = vmatprep.subr.bf16.mxu0 0
        %2439 = vmatpush1.bf16.msra.mxu0 %v1229
        %2440 = vmatprep.subr.bf16.mxu0 0
        %2441 = vmatpush1.bf16.msra.mxu0 %v1232
        %2442 = vmatprep.subr.bf16.mxu0 0
        %2443 = vmatpush1.bf16.msra.mxu0 0
        %2444 = vmatprep.subr.bf16.mxu0 0
        %2445 = vmatpush1.bf16.msra.mxu0 0
        %2446 = vmatprep.subr.bf16.mxu0 0
        %2447 = vmatpush1.bf16.msra.mxu0 0
        %2448 = vmatprep.subr.bf16.mxu0 0
        %2449 = vmatpush1.bf16.msra.mxu0 0
        %2450 = vmatprep.subr.bf16.mxu0 0
        %2451 = vmatpush1.bf16.msra.mxu0 0
        %2452 = vmatprep.subr.bf16.mxu0 0
        %2453 = vmatpush1.bf16.msra.mxu0 0
        %2454 = vmatprep.subr.bf16.mxu0 0
        %2455 = vmatpush1.bf16.msra.mxu0 0
        %2456 = vmatprep.subr.bf16.mxu0 0
        %2457 = vmatpush1.bf16.msra.mxu0 0
        %2458 = vmatprep.mubr.bf16.mxu0 0
        %2459 = vmatmul.mubr.bf16.gmra.mrb[0].mxu0 %v2382
        %v2460 = vpop.f32.mrb[0].mxu0
        %v2461 = vadd.f32 0.0, %v2460
        %v2462 = vpop.f32.mrb[0].mxu0
        %v2463 = vpop.f32.mrb[0].mxu0
        %v2464 = vadd.f32 0.0, %v2463
        %v2465 = vpop.f32.mrb[0].mxu0
        %2466 = vdwg.mxu0
        %v2467 = vunpack.c.l.bf16 %v2379
        %v2468 = vunpack.c.h.bf16 %v2379
        %v2469 = vadd.f32 %v2467, %v2418
        %v2470 = vadd.f32 %v2468, %v2422
        %v2471 = vxor.u32 %v2469, 2147483648
        %v2472 = vxor.u32 %v2470, 2147483648
        %v2473 = vmul.f32 %v2471, 1.442695
        %v2474 = vpow.pop %v2473
        %v2475 = vmul.f32 %v2472, 1.442695
        %v2476 = vpow.pop %v2475
        %v2477 = vadd.f32 %v2474, 1.0
        %v2478 = vadd.f32 %v2476, 1.0
        %v2479 = vrcp.pop %v2477
        %v2480 = vmul.f32 1.0, %v2479
        %v2481 = vrcp.pop %v2478
        %v2482 = vmul.f32 1.0, %v2481
        %v2483 = vunpack.c.l.bf16 %v2380
        %v2484 = vunpack.c.h.bf16 %v2380
        %v2485 = vadd.f32 %v2483, %v2420
        %v2486 = vadd.f32 %v2484, %v2424
        %v2487 = vxor.u32 %v2485, 2147483648
        %v2488 = vxor.u32 %v2486, 2147483648
        %v2489 = vmul.f32 %v2487, 1.442695
        %v2490 = vpow.pop %v2489
        %v2491 = vmul.f32 %v2488, 1.442695
        %v2492 = vpow.pop %v2491
        %v2493 = vadd.f32 %v2490, 1.0
        %v2494 = vadd.f32 %v2492, 1.0
        %v2495 = vrcp.pop %v2493
        %v2496 = vmul.f32 1.0, %v2495
        %v2497 = vrcp.pop %v2494
        %v2498 = vmul.f32 1.0, %v2497
        %v2499 = vadd.f32 %v2461, %v1377
        %v2500 = vadd.f32 %v2464, %v1377
        %v2501 = vmul.f32 %v2480, %v2499
        %v2502 = vmul.f32 %v2482, %v2500
        %v2503 = vunpack.c.l.bf16 %v2381
        %v2504 = vunpack.c.h.bf16 %v2381
        %v2505 = vadd.f32 %v2503, %v2501
        %v2506 = vadd.f32 %v2504, %v2502
        %v2507 = vtanh.pop %v2505
        %v2508 = vtanh.pop %v2506
        %v2509 = vsub.f32 1.0, %v2496
        %v2510 = vsub.f32 1.0, %v2498
        %v2511 = vmul.f32 %v2509, %v2507
        %v2512 = vmul.f32 %v2510, %v2508
        %v2513 = vmul.f32 %v2496, %v2370
        %v2514 = vmul.f32 %v2498, %v2371
        %v2515 = vadd.f32 %v2511, %v2513
        %v2516 = vadd.f32 %v2512, %v2514
        %v2517 = vstv %s2372
        %vm2518 = vcmp.lt.s32.totalorder %v2517, %v1116
        %vm2519 = vcmp.lt.s32.totalorder %v2517, %v1117
        %v2520 = vsel %vm2518, 1, 0
        %v2521 = vsel %vm2519, 1, 0
        %2522 = vset.pattern.permute.xlu0 0
        %2523 = vperm.xlu0 %2522, %v2520
        %v2524 = vpop.permute.xlu0 %2523
        %2525 = vset.pattern.permute.xlu0 0
        %2526 = vperm.xlu0 %2525, %v2521
        %v2527 = vpop.permute.xlu0 %2526
        %vm2528 = vcmp.eq.s32.totalorder %v2524, 1
        %vm2529 = vcmp.eq.s32.totalorder %v2527, 1
        %v2530 = vsel %vm2528, %v2515, %v2370
        %v2531 = vsel %vm2529, %v2516, %v2371
        %v2532 = vpack.c.bf16 %v2531, %v2530
        %v2533 = vld [vmem:[%s385] sm:$0xf]
        %v2534 = vld [vmem:[%s385 + $0x4] sm:$0xf]
        %v2535 = vld [vmem:[%s385 + $0x8] sm:$0xf]
        %v2536 = vld [vmem:[%s385 + $0xc] sm:$0xf]
        %v2537 = vld [vmem:[%s385 + $0x10] sm:$0xf]
        %v2538 = vld [vmem:[%s385 + $0x14] sm:$0xf]
        %v2539 = vld [vmem:[%s385 + $0x18] sm:$0xf]
        %v2540 = vld [vmem:[%s385 + $0x1c] sm:$0xf]
        %v2541 = vld [vmem:[%s385 + $0x20] sm:$0xf]
        %v2542 = vld [vmem:[%s385 + $0x24] sm:$0xf]
        %v2543 = vld [vmem:[%s385 + $0x28] sm:$0xf]
        %v2544 = vld [vmem:[%s385 + $0x2c] sm:$0xf]
        %v2545 = vld [vmem:[%s385 + $0x30] sm:$0xf]
        %v2546 = vld [vmem:[%s385 + $0x34] sm:$0xf]
        %v2547 = vld [vmem:[%s385 + $0x38] sm:$0xf]
        %v2548 = vld [vmem:[%s385 + $0x3c] sm:$0xf]
        %v2565 = vunpack.c.l.b16 %v2533
        %v2566 = vunpack.c.l.b16 %v2534
        %v2567 = vunpack.c.l.b16 %v2535
        %v2568 = vunpack.c.l.b16 %v2536
        %v2569 = vunpack.c.l.b16 %v2537
        %v2570 = vunpack.c.l.b16 %v2538
        %v2571 = vunpack.c.l.b16 %v2539
        %v2572 = vunpack.c.l.b16 %v2540
        %v2573 = vunpack.c.l.b16 %v2541
        %v2574 = vunpack.c.l.b16 %v2542
        %v2575 = vunpack.c.l.b16 %v2543
        %v2576 = vunpack.c.l.b16 %v2544
        %v2577 = vunpack.c.l.b16 %v2545
        %v2578 = vunpack.c.l.b16 %v2546
        %v2579 = vunpack.c.l.b16 %v2547
        %v2580 = vunpack.c.l.b16 %v2548
        %v2581 = vpack.c.b16 %v2566, %v2565
        %v2582 = vpack.c.b16 %v2568, %v2567
        %v2583 = vpack.c.b16 %v2570, %v2569
        %v2584 = vpack.c.b16 %v2572, %v2571
        %v2585 = vpack.c.b16 %v2574, %v2573
        %v2586 = vpack.c.b16 %v2576, %v2575
        %v2587 = vpack.c.b16 %v2578, %v2577
        %v2588 = vpack.c.b16 %v2580, %v2579
        %2597 = vmatprep.subr.bf16.mxu0 0
        %2598 = vmatpush1.bf16.msra.mxu0 %v2581
        %2599 = vmatprep.subr.bf16.mxu0 0
        %2600 = vmatpush1.bf16.msra.mxu0 %v2582
        %2601 = vmatprep.subr.bf16.mxu0 0
        %2602 = vmatpush1.bf16.msra.mxu0 %v2583
        %2603 = vmatprep.subr.bf16.mxu0 0
        %2604 = vmatpush1.bf16.msra.mxu0 %v2584
        %2605 = vmatprep.subr.bf16.mxu0 0
        %2606 = vmatpush1.bf16.msra.mxu0 %v2585
        %2607 = vmatprep.subr.bf16.mxu0 0
        %2608 = vmatpush1.bf16.msra.mxu0 %v2586
        %2609 = vmatprep.subr.bf16.mxu0 0
        %2610 = vmatpush1.bf16.msra.mxu0 %v2587
        %2611 = vmatprep.subr.bf16.mxu0 0
        %2612 = vmatpush1.bf16.msra.mxu0 %v2588
        %2613 = vmatprep.subr.bf16.mxu0 0
        %2614 = vmatpush1.bf16.msra.mxu0 0
        %2615 = vmatprep.subr.bf16.mxu0 0
        %2616 = vmatpush1.bf16.msra.mxu0 0
        %2617 = vmatprep.subr.bf16.mxu0 0
        %2618 = vmatpush1.bf16.msra.mxu0 0
        %2619 = vmatprep.subr.bf16.mxu0 0
        %2620 = vmatpush1.bf16.msra.mxu0 0
        %2621 = vmatprep.subr.bf16.mxu0 0
        %2622 = vmatpush1.bf16.msra.mxu0 0
        %2623 = vmatprep.subr.bf16.mxu0 0
        %2624 = vmatpush1.bf16.msra.mxu0 0
        %2625 = vmatprep.subr.bf16.mxu0 0
        %2626 = vmatpush1.bf16.msra.mxu0 0
        %2627 = vmatprep.subr.bf16.mxu0 0
        %2628 = vmatpush1.bf16.msra.mxu0 0
        %2629 = vmatprep.mubr.bf16.mxu0 0
        %2630 = vmatmul.mubr.bf16.gmra.mrb[0].mxu0 %v2532
        %v2631 = vpop.f32.mrb[0].mxu0
        %v2632 = vadd.f32 0.0, %v2631
        %v2633 = vpop.f32.mrb[0].mxu0
        %v2634 = vpop.f32.mrb[0].mxu0
        %v2635 = vadd.f32 0.0, %v2634
        %v2636 = vpop.f32.mrb[0].mxu0
        %2637 = vdwg.mxu0
        %vm2638 = vcmask 261120
        %2639 = vst.msk [vmem:[%s390] sm:$0xff] %vm2638, %v2632
        %2640 = vst.msk [vmem:[%s390 + $0x8] sm:$0xff] %vm2638, %v2635
        %p2641 = scmp.lt.s32.totalorder %s24, 1
        %s2642 = scalar_select %p2641, %s24, 1
        %s2643 = smul.addr %s2642, 2
        %s2644 = smul.addr %s2643, 8
        %s2645 = scalar_lea.vmem %s7, %s2644
        // Predicated region
        $region57: #{relation_encoder_forward.3} parent=47 // pred_check
          %p2646 = pneg %p214
        $region58: #{relation_encoder_forward.3} parent=47 // pred_check_branch
          %2648 = sbr.rel (%p2646) target = $region60
        $region59: #{relation_encoder_forward.3} parent=47 // pred_region
          _
        $region60: #{relation_encoder_forward.3} parent=47 // pred_fallthru
          _
      $region48: #{relation_encoder_forward.3} parent=5 // pred_fallthru
        _
      %p2649 = scmp.le.s32.totalorder 2, %s19
      // Predicated region
      $region61: #{relation_encoder_forward.3} parent=5 // pred_check
        %p2650 = pneg %p2649
      $region62: #{relation_encoder_forward.3} parent=5 // pred_check_branch
        %2652 = sbr.rel (%p2650) target = $region64
      $region63: #{relation_encoder_forward.3} parent=5 // pred_region
        %s2653 = ssub.s32 %s19, 2
        // Predicated region
        $region65: #{relation_encoder_forward.3} parent=63 // pred_check
          %p2654 = pneg %p220
        $region66: #{relation_encoder_forward.3} parent=63 // pred_check_branch
          %2656 = sbr.rel (%p2654) target = $region68
        $region67: #{relation_encoder_forward.3} parent=63 // pred_region
          %p2657 = scmp.lt.s32.totalorder %s25, 1
          %s2658 = scalar_select %p2657, %s25, 1
          %s2659 = smul.addr %s2658, 2
          %s2660 = smul.addr %s2659, 8
          %s2661 = scalar_lea.vmem %s7, %s2660
        $region68: #{relation_encoder_forward.3} parent=63 // pred_fallthru
          _
      $region64: #{relation_encoder_forward.3} parent=5 // pred_fallthru
        _
    $region6: #{relation_encoder_forward.3} parent=1 // loop_footer
      %s23 = sadd.s32 1, %s19
    $region7: #{relation_encoder_forward.3} parent=1 // loop_footer_branch
      %18 = sbr.rel target = $region3
    $region8: #{relation_encoder_forward.3} parent=1 // loop_exit
      _
    %2662 = vsyncpa [#allocation4], 1
    %s2663 = scalar_lea.sflag [#allocation4], 1
    %2664 = vsyncpa %s2663, 1
    %2665 = vsyncpa [#allocation6], 1
    %s2666 = scalar_lea.sflag [#allocation6], 1
    %2667 = vsyncpa %s2666, 1

</llo_original>
